<compile_context>
chip_gen: v7x
topology: tpu7x:2x2x1
jax: 0.10.0
libtpu: 0.0.40
codegen_flags: <defaults>
</compile_context>

<pallas_src>
import functools
import math

import jax
import jax.numpy as jnp
from jax.experimental import pallas as pl
from jax.experimental.pallas import tpu as pltpu


def _round_up(n, m):
    return ((n + m - 1) // m) * m


def _compiler_params(block_bytes):
    # Double-buffered in/out blocks plus weights, with headroom; capped at a
    # ceiling that is safe on every generation (v7x has 64 MiB physical VMEM).
    limit = int(min(56 * 2**20, max(32 * 2**20, 4 * block_bytes)))
    return pltpu.CompilerParams(
        dimension_semantics=("parallel",),
        vmem_limit_bytes=limit,
    )


def _fold_weight(weight):
    """Torch-layout [Cout, Cin, k, k] -> equalized, tap-folded [k*k*Cin, Cout]."""
    cout, cin, k, _ = weight.shape
    c = 1.0 / math.sqrt(cin * k * k)
    return (jnp.transpose(weight, (2, 3, 1, 0)) * c).reshape(k * k * cin, cout)


def _pad_flatten(x_nhwc, padding, k):
    """Zero-pad spatially, pad the row stride to a multiple of 8, flatten.

    Returns (xf [B, Lp, Cin], (Ws, Mo, Lp, Ho, Wo)).
    """
    B, H, W, Cin = x_nhwc.shape
    p = padding
    Hp, Wp = H + 2 * p, W + 2 * p
    Ho, Wo = Hp - k + 1, Wp - k + 1
    Ws = _round_up(Wp, 8)                        # sublane-aligned row stride
    Mo = Ho * Ws                                 # wide output rows (mult of 8)
    max_delta = (k - 1) * Ws + (k - 1)
    Lp = _round_up(max(Hp * Ws, Mo + max_delta), 8)
    xp = jnp.pad(x_nhwc, ((0, 0), (p, p), (p, p + (Ws - Wp)), (0, 0)))
    xf = xp.reshape(B, Hp * Ws, Cin)
    xf = jnp.pad(xf, ((0, 0), (0, Lp - Hp * Ws), (0, 0)))
    return xf, (Ws, Mo, Lp, Ho, Wo)


def _leaky(x, slope):
    return jnp.where(x >= 0.0, x, slope * x)


def _conv_taps(x_ref, k, ws, mo):
    """Concatenate the k*k shifted tap slices -> [Mo, k*k*Cin] (K-folded)."""
    taps = []
    for kh in range(k):
        for kw in range(k):
            d = kh * ws + kw                     # kh*ws is sublane-aligned
            taps.append(x_ref[0, d:d + mo, :])
    if len(taps) == 1:
        return taps[0]
    return jnp.concatenate(taps, axis=-1)


# ---------------------------------------------------------------------------
# Kernel 1: equalized conv (+bias, +optional LeakyReLU) -- one matmul / sample
# ---------------------------------------------------------------------------
def _conv_kernel(x_ref, w_ref, b_ref, o_ref, *, k, ws, mo, slope, act):
    xt = _conv_taps(x_ref, k, ws, mo)                       # (Mo, k*k*Cin)
    acc = jnp.dot(xt, w_ref[...], preferred_element_type=jnp.float32)
    acc = acc + b_ref[...].astype(jnp.float32)
    if act:
        acc = _leaky(acc, slope)
    o_ref[0] = acc.astype(o_ref.dtype)


def equalized_conv2d(x_nhwc, weight, bias, *, padding, act, slope=0.2):
    """EqualizedConv2d (NHWC in / NHWC out), grid over batch."""
    B, H, W, Cin = x_nhwc.shape
    Cout, Cin_w, k, _ = weight.shape
    assert Cin_w == Cin
    xf, (Ws, Mo, Lp, Ho, Wo) = _pad_flatten(x_nhwc, padding, k)
    w_f = _fold_weight(weight)
    b2 = bias.reshape(1, Cout)

    block_bytes = (Lp * Cin + Mo * Cout) * xf.dtype.itemsize + w_f.size * 4
    kern = functools.partial(_conv_kernel, k=k, ws=Ws, mo=Mo, slope=slope, act=act)
    out_wide = pl.pallas_call(
        kern,
        out_shape=jax.ShapeDtypeStruct((B, Mo, Cout), x_nhwc.dtype),
        grid_spec=pltpu.PrefetchScalarGridSpec(
            num_scalar_prefetch=0,
            grid=(B,),
            in_specs=[
                pl.BlockSpec((1, Lp, Cin), lambda b: (b, 0, 0)),         # input rows
                pl.BlockSpec((k * k * Cin, Cout), lambda b: (0, 0)),     # folded weights
                pl.BlockSpec((1, Cout), lambda b: (0, 0)),               # bias
            ],
            out_specs=pl.BlockSpec((1, Mo, Cout), lambda b: (b, 0, 0)),
        ),
        compiler_params=_compiler_params(block_bytes),
    )(xf, w_f, b2)
    # TODO(synk): store the compact / next-layer padded layout from inside the
    # kernel to drop this XLA crop pass entirely.
    return out_wide.reshape(B, Ho, Ws, Cout)[:, :, :Wo, :]


# ---------------------------------------------------------------------------
# Kernel 2: fused DiscriminatorBlock tail
#   conv2(3x3,'same') + bias + LeakyReLU + 2x2 avg-pool + residual(1x1 conv on
#   pooled block input) + add + 1/sqrt(2) scale  -> compact (H/2, W/2, Cout)
# ---------------------------------------------------------------------------
def _block_tail_kernel(h_ref, w_ref, b_ref, xp_ref, rw_ref, rb_ref, o_ref, *,
                       ws, mo, img_h, img_w, slope):
    cout = o_ref.shape[2]
    xt = _conv_taps(h_ref, 3, ws, mo)                        # (Mo, 9*Cin)
    acc = jnp.dot(xt, w_ref[...], preferred_element_type=jnp.float32)
    acc = _leaky(acc + b_ref[...].astype(jnp.float32), slope)
    # 2x2 avg-pool fused in the epilogue.  Width pairs are adjacent rows of the
    # flattened wide grid because the row stride Ws is even.
    a = acc.reshape(mo // 2, 2, cout)
    wsum = a[:, 0, :] + a[:, 1, :]                           # (img_h*Ws/2, Cout)
    b4 = wsum.reshape(img_h // 2, 2, ws // 2, cout)
    pooled = (b4[:, 0, :, :] + b4[:, 1, :, :]) * 0.25        # (H/2, Ws/2, Cout)
    pooled = pooled[:, : img_w // 2, :].reshape((img_h // 2) * (img_w // 2), cout)
    # Residual: equalized 1x1 conv on the pooled block input (also on the MXU).
    res = jnp.dot(xp_ref[0], rw_ref[...], preferred_element_type=jnp.float32)
    res = res + rb_ref[...].astype(jnp.float32)
    o_ref[0] = ((pooled + res) * (1.0 / math.sqrt(2.0))).astype(o_ref.dtype)


def discriminator_block(x_nhwc, p, slope=0.2):
    B, H, W, Cin = x_nhwc.shape
    Cout = p['c2_w'].shape[0]
    H2, W2 = H // 2, W // 2

    # conv1 (3x3 'same') + LeakyReLU  (Pallas)
    h = equalized_conv2d(x_nhwc, p['c1_w'], p['c1_b'], padding=1, act=True, slope=slope)

    # Pooled block input for the residual path (quarter-size, cheap XLA pass).
    xpool = x_nhwc.reshape(B, H2, 2, W2, 2, Cin).mean(axis=(2, 4))
    xpf = xpool.reshape(B, H2 * W2, Cin)

    hf, (Ws, Mo, Lp, _Ho, _Wo) = _pad_flatten(h, 1, 3)
    w_f = _fold_weight(p['c2_w'])
    b2 = p['c2_b'].reshape(1, Cout)
    rw = (p['res_w'][:, :, 0, 0] * (1.0 / math.sqrt(Cin))).T          # (Cin, Cout)
    rb = p['res_b'].reshape(1, Cout)

    block_bytes = ((Lp * Cin + H2 * W2 * (Cin + Cout)) * hf.dtype.itemsize
                   + (w_f.size + rw.size) * 4 + Mo * Cout * 4)
    kern = functools.partial(_block_tail_kernel, ws=Ws, mo=Mo,
                             img_h=H, img_w=W, slope=slope)
    out = pl.pallas_call(
        kern,
        out_shape=jax.ShapeDtypeStruct((B, H2 * W2, Cout), x_nhwc.dtype),
        grid_spec=pltpu.PrefetchScalarGridSpec(
            num_scalar_prefetch=0,
            grid=(B,),
            in_specs=[
                pl.BlockSpec((1, Lp, Cin), lambda b: (b, 0, 0)),          # padded h rows
                pl.BlockSpec((9 * Cin, Cout), lambda b: (0, 0)),          # folded c2 w
                pl.BlockSpec((1, Cout), lambda b: (0, 0)),                # c2 bias
                pl.BlockSpec((1, H2 * W2, Cin), lambda b: (b, 0, 0)),     # pooled input
                pl.BlockSpec((Cin, Cout), lambda b: (0, 0)),              # residual w
                pl.BlockSpec((1, Cout), lambda b: (0, 0)),                # residual bias
            ],
            out_specs=pl.BlockSpec((1, H2 * W2, Cout), lambda b: (b, 0, 0)),
        ),
        compiler_params=_compiler_params(block_bytes),
    )(hf, w_f, b2, xpf, rw, rb)
    return out.reshape(B, H2, W2, Cout)


# ---------------------------------------------------------------------------
# Discriminator forward (Pallas path)
# ---------------------------------------------------------------------------
def discriminator_forward(x_nchw, params, slope=0.2):
    x = jnp.transpose(x_nchw, (0, 2, 3, 1))                   # NHWC
    # from_rgb: 1x1 conv (Cin=3) + LeakyReLU -- below pallas_call overhead.
    c = 1.0 / math.sqrt(3.0)
    x = jnp.einsum('bhwc,fc->bhwf', x, params['rgb_w'][:, :, 0, 0] * c) + params['rgb_b']
    x = _leaky(x, slope)
    for blk in params['blocks']:
        x = discriminator_block(x, blk, slope=slope)
    # minibatch std (cross-batch statistic, left in XLA; torch.std is ddof=1)
    std = jnp.std(x, axis=0, ddof=1).mean()
    x = jnp.concatenate([x, jnp.full(x.shape[:3] + (1,), std, x.dtype)], axis=-1)
    # final 3x3 'valid' conv (Pallas), flatten in torch (C,H,W) order, linear.
    x = equalized_conv2d(x, params['conv_w'], params['conv_b'], padding=0, act=False)
    xf = jnp.transpose(x, (0, 3, 1, 2)).reshape(x.shape[0], -1)
    cl = 1.0 / math.sqrt(params['final_w'].shape[1])
    return xf @ (params['final_w'] * cl).T + params['final_b'][None, :]


# ---------------------------------------------------------------------------
# Pure-JAX reference (matches the PyTorch module semantics)
# ---------------------------------------------------------------------------
def ref_forward(x, params):
    def conv(v, w, b, pad):
        c = 1.0 / math.sqrt(w.shape[1] * w.shape[2] * w.shape[3])
        y = jax.lax.conv_general_dilated(
            v, w * c, window_strides=(1, 1),
            padding=((pad, pad), (pad, pad)),
            dimension_numbers=('NCHW', 'OIHW', 'NCHW'))
        return y + b[None, :, None, None]

    def lrelu(v):
        return jnp.where(v >= 0, v, 0.2 * v)

    def pool(v):
        B, C, H, W = v.shape
        return v.reshape(B, C, H // 2, 2, W // 2, 2).mean(axis=(3, 5))

    scale = 1.0 / math.sqrt(2.0)
    x = lrelu(conv(x, params['rgb_w'], params['rgb_b'], 0))
    for blk in params['blocks']:
        res = conv(pool(x), blk['res_w'], blk['res_b'], 0)
        h = lrelu(conv(x, blk['c1_w'], blk['c1_b'], 1))
        h = lrelu(conv(h, blk['c2_w'], blk['c2_b'], 1))
        x = (pool(h) + res) * scale
    std = jnp.std(x, axis=0, ddof=1).mean()
    stat = jnp.full((x.shape[0], 1, x.shape[2], x.shape[3]), std, x.dtype)
    x = jnp.concatenate([x, stat], axis=1)
    x = conv(x, params['conv_w'], params['conv_b'], 0)
    xf = x.reshape(x.shape[0], -1)
    c = 1.0 / math.sqrt(params['final_w'].shape[1])
    return xf @ (params['final_w'] * c).T + params['final_b'][None, :]


# ---------------------------------------------------------------------------
# Parameter init (matches the module's torch.randn weights / ones biases)
# ---------------------------------------------------------------------------
def init_params(key, log_resolution=4, n_features=4, max_features=8):
    feats = [min(max_features, n_features * 2 ** i)
             for i in range(log_resolution - 1)]
    keys = iter(jax.random.split(key, 64))

    def randn(shape):
        return jax.random.normal(next(keys), shape, jnp.float32)

    params = {
        'rgb_w': randn((feats[0], 3, 1, 1)),
        'rgb_b': jnp.ones((feats[0],), jnp.float32),
        'blocks': [],
    }
    for i in range(len(feats) - 1):
        cin, cout = feats[i], feats[i + 1]
        params['blocks'].append({
            'res_w': randn((cout, cin, 1, 1)),
            'res_b': jnp.ones((cout,), jnp.float32),
            'c1_w': randn((cin, cin, 3, 3)),
            'c1_b': jnp.ones((cin,), jnp.float32),
            'c2_w': randn((cout, cin, 3, 3)),
            'c2_b': jnp.ones((cout,), jnp.float32),
        })
    ff = feats[-1] + 1                                    # + minibatch-std channel
    params['conv_w'] = randn((ff, ff, 3, 3))
    params['conv_b'] = jnp.ones((ff,), jnp.float32)
    params['final_w'] = randn((1, 2 * 2 * ff))
    params['final_b'] = jnp.zeros((1,), jnp.float32)      # bias arg defaults to 0.0
    return params


if __name__ == "__main__":
    key = jax.random.PRNGKey(0)
    kp, kx = jax.random.split(key)
    log_resolution = 4                                    # 16x16 RGB input
    params = init_params(kp, log_resolution=log_resolution,
                         n_features=4, max_features=8)
    x = jax.random.normal(
        kx, (2, 3, 2 ** log_resolution, 2 ** log_resolution), jnp.float32)

    fwd = jax.jit(discriminator_forward)
    out = jax.block_until_ready(fwd(x, params))
    ref = jax.block_until_ready(ref_forward(x, params))

    assert out.shape == (2, 1), out.shape
    err = float(jnp.max(jnp.abs(out - ref)))
    assert jnp.allclose(out, ref, atol=1e-3, rtol=1e-3), err
    print("KERNEL_OK")
</pallas_src>

<mosaic_0001>
module attributes {stable_mosaic.version = 11 : i64} {
  func.func @_conv_kernel(%arg0: i32, %arg1: memref<1x440x4xf32, #tpu.memory_space<vmem>>, %arg2: memref<36x4xf32, #tpu.memory_space<vmem>>, %arg3: memref<1x4xf32, #tpu.memory_space<vmem>>, %arg4: memref<1x384x4xf32, #tpu.memory_space<vmem>>) attributes {dimension_semantics = [#tpu.dimension_semantics<parallel>], iteration_bounds = array<i64: 2>, scalar_prefetch = 0 : i64, scratch_operands = 0 : i64, tpu.core_type = #tpu.core_type<tc>, window_params = [{transform_indices = @transform_0, window_bounds = array<i64: 1, 440, 4>}, {pipeline_mode = #tpu.pipeline_mode<synchronous>, transform_indices = @transform_1, window_bounds = array<i64: 36, 4>}, {pipeline_mode = #tpu.pipeline_mode<synchronous>, transform_indices = @transform_2, window_bounds = array<i64: 1, 4>}, {transform_indices = @transform_3, window_bounds = array<i64: 1, 384, 4>}]} {
    %c0 = arith.constant 0 : index
    %c0_0 = arith.constant 0 : index
    %c0_1 = arith.constant 0 : index
    %0 = vector.load %arg1[%c0, %c0_0, %c0_1] : memref<1x440x4xf32, #tpu.memory_space<vmem>>, vector<1x384x4xf32>
    %1 = vector.shape_cast %0 : vector<1x384x4xf32> to vector<384x4xf32>
    %c0_2 = arith.constant 0 : index
    %c1 = arith.constant 1 : index
    %c0_3 = arith.constant 0 : index
    %2 = vector.load %arg1[%c0_2, %c1, %c0_3] : memref<1x440x4xf32, #tpu.memory_space<vmem>>, vector<1x384x4xf32>
    %3 = vector.shape_cast %2 : vector<1x384x4xf32> to vector<384x4xf32>
    %c0_4 = arith.constant 0 : index
    %c2 = arith.constant 2 : index
    %c0_5 = arith.constant 0 : index
    %4 = vector.load %arg1[%c0_4, %c2, %c0_5] : memref<1x440x4xf32, #tpu.memory_space<vmem>>, vector<1x384x4xf32>
    %5 = vector.shape_cast %4 : vector<1x384x4xf32> to vector<384x4xf32>
    %c0_6 = arith.constant 0 : index
    %c24 = arith.constant 24 : index
    %c0_7 = arith.constant 0 : index
    %6 = vector.load %arg1[%c0_6, %c24, %c0_7] : memref<1x440x4xf32, #tpu.memory_space<vmem>>, vector<1x384x4xf32>
    %7 = vector.shape_cast %6 : vector<1x384x4xf32> to vector<384x4xf32>
    %c0_8 = arith.constant 0 : index
    %c25 = arith.constant 25 : index
    %c0_9 = arith.constant 0 : index
    %8 = vector.load %arg1[%c0_8, %c25, %c0_9] : memref<1x440x4xf32, #tpu.memory_space<vmem>>, vector<1x384x4xf32>
    %9 = vector.shape_cast %8 : vector<1x384x4xf32> to vector<384x4xf32>
    %c0_10 = arith.constant 0 : index
    %c26 = arith.constant 26 : index
    %c0_11 = arith.constant 0 : index
    %10 = vector.load %arg1[%c0_10, %c26, %c0_11] : memref<1x440x4xf32, #tpu.memory_space<vmem>>, vector<1x384x4xf32>
    %11 = vector.shape_cast %10 : vector<1x384x4xf32> to vector<384x4xf32>
    %c0_12 = arith.constant 0 : index
    %c48 = arith.constant 48 : index
    %c0_13 = arith.constant 0 : index
    %12 = vector.load %arg1[%c0_12, %c48, %c0_13] : memref<1x440x4xf32, #tpu.memory_space<vmem>>, vector<1x384x4xf32>
    %13 = vector.shape_cast %12 : vector<1x384x4xf32> to vector<384x4xf32>
    %c0_14 = arith.constant 0 : index
    %c49 = arith.constant 49 : index
    %c0_15 = arith.constant 0 : index
    %14 = vector.load %arg1[%c0_14, %c49, %c0_15] : memref<1x440x4xf32, #tpu.memory_space<vmem>>, vector<1x384x4xf32>
    %15 = vector.shape_cast %14 : vector<1x384x4xf32> to vector<384x4xf32>
    %c0_16 = arith.constant 0 : index
    %c50 = arith.constant 50 : index
    %c0_17 = arith.constant 0 : index
    %16 = vector.load %arg1[%c0_16, %c50, %c0_17] : memref<1x440x4xf32, #tpu.memory_space<vmem>>, vector<1x384x4xf32>
    %17 = vector.shape_cast %16 : vector<1x384x4xf32> to vector<384x4xf32>
    %18 = tpu.concatenate %1, %3, %5, %7, %9, %11, %13, %15, %17 in 1 : vector<384x4xf32>, vector<384x4xf32>, vector<384x4xf32>, vector<384x4xf32>, vector<384x4xf32>, vector<384x4xf32>, vector<384x4xf32>, vector<384x4xf32>, vector<384x4xf32> -> vector<384x36xf32>
    %c0_18 = arith.constant 0 : index
    %c0_19 = arith.constant 0 : index
    %19 = vector.load %arg2[%c0_18, %c0_19] : memref<36x4xf32, #tpu.memory_space<vmem>>, vector<36x4xf32>
    %cst = arith.constant dense<0.000000e+00> : vector<384x4xf32>
    %20 = tpu.matmul %18, %19, %cst {dimension_numbers = #tpu.dot_dimension_numbers<[1], [0], [0], [1], [0, 0, 1, 1], [], []>} : vector<384x36xf32>, vector<36x4xf32>, vector<384x4xf32> -> vector<384x4xf32>
    %c0_20 = arith.constant 0 : index
    %c0_21 = arith.constant 0 : index
    %21 = vector.load %arg3[%c0_20, %c0_21] : memref<1x4xf32, #tpu.memory_space<vmem>>, vector<1x4xf32>
    %22 = vector.broadcast %21 : vector<1x4xf32> to vector<384x4xf32>
    %23 = arith.addf %20, %22 : vector<384x4xf32>
    %cst_22 = arith.constant 0.000000e+00 : f32
    %24 = vector.broadcast %cst_22 : f32 to vector<384x4xf32>
    %25 = arith.cmpf oge, %23, %24 : vector<384x4xf32>
    %cst_23 = arith.constant 2.000000e-01 : f32
    %26 = vector.broadcast %cst_23 : f32 to vector<384x4xf32>
    %27 = arith.mulf %26, %23 : vector<384x4xf32>
    %28 = arith.select %25, %23, %27 : vector<384x4xi1>, vector<384x4xf32>
    %c0_24 = arith.constant 0 : index
    %c0_25 = arith.constant 0 : index
    %c0_26 = arith.constant 0 : index
    %29 = vector.load %arg4[%c0_24, %c0_25, %c0_26] : memref<1x384x4xf32, #tpu.memory_space<vmem>>, vector<1x384x4xf32>
    %30 = vector.shape_cast %29 : vector<1x384x4xf32> to vector<384x4xf32>
    %31 = vector.shape_cast %28 : vector<384x4xf32> to vector<1x384x4xf32>
    tpu.vector_store %arg4[%c0_24, %c0_25, %c0_26], %31 {strides = array<i32>} : memref<1x384x4xf32, #tpu.memory_space<vmem>>, vector<1x384x4xf32>,
    return
  }
  func.func @transform_0(%arg0: i32) -> (i32, i32, i32) {
    %c0_i32 = arith.constant 0 : i32
    %c0_i32_0 = arith.constant 0 : i32
    %c0_i32_1 = arith.constant 0 : i32
    return %arg0, %c0_i32, %c0_i32_0 : i32, i32, i32
  }
  func.func @transform_1(%arg0: i32) -> (i32, i32) {
    %c0_i32 = arith.constant 0 : i32
    %c0_i32_0 = arith.constant 0 : i32
    %c0_i32_1 = arith.constant 0 : i32
    return %c0_i32, %c0_i32_0 : i32, i32
  }
  func.func @transform_2(%arg0: i32) -> (i32, i32) {
    %c0_i32 = arith.constant 0 : i32
    %c0_i32_0 = arith.constant 0 : i32
    %c0_i32_1 = arith.constant 0 : i32
    return %c0_i32, %c0_i32_0 : i32, i32
  }
  func.func @transform_3(%arg0: i32) -> (i32, i32, i32) {
    %c0_i32 = arith.constant 0 : i32
    %c0_i32_0 = arith.constant 0 : i32
    %c0_i32_1 = arith.constant 0 : i32
    return %arg0, %c0_i32, %c0_i32_0 : i32, i32, i32
  }
}

module attributes {stable_mosaic.version = 11 : i64} {
  func.func @_block_tail_kernel(%arg0: i32, %arg1: memref<1x440x4xf32, #tpu.memory_space<vmem>>, %arg2: memref<36x8xf32, #tpu.memory_space<vmem>>, %arg3: memref<1x8xf32, #tpu.memory_space<vmem>>, %arg4: memref<1x64x4xf32, #tpu.memory_space<vmem>>, %arg5: memref<4x8xf32, #tpu.memory_space<vmem>>, %arg6: memref<1x8xf32, #tpu.memory_space<vmem>>, %arg7: memref<1x64x8xf32, #tpu.memory_space<vmem>>) attributes {dimension_semantics = [#tpu.dimension_semantics<parallel>], iteration_bounds = array<i64: 2>, scalar_prefetch = 0 : i64, scratch_operands = 0 : i64, tpu.core_type = #tpu.core_type<tc>, window_params = [{transform_indices = @transform_0, window_bounds = array<i64: 1, 440, 4>}, {pipeline_mode = #tpu.pipeline_mode<synchronous>, transform_indices = @transform_1, window_bounds = array<i64: 36, 8>}, {pipeline_mode = #tpu.pipeline_mode<synchronous>, transform_indices = @transform_2, window_bounds = array<i64: 1, 8>}, {transform_indices = @transform_3, window_bounds = array<i64: 1, 64, 4>}, {pipeline_mode = #tpu.pipeline_mode<synchronous>, transform_indices = @transform_4, window_bounds = array<i64: 4, 8>}, {pipeline_mode = #tpu.pipeline_mode<synchronous>, transform_indices = @transform_5, window_bounds = array<i64: 1, 8>}, {transform_indices = @transform_6, window_bounds = array<i64: 1, 64, 8>}]} {
    %c0 = arith.constant 0 : index
    %c0_0 = arith.constant 0 : index
    %c0_1 = arith.constant 0 : index
    %0 = vector.load %arg1[%c0, %c0_0, %c0_1] : memref<1x440x4xf32, #tpu.memory_space<vmem>>, vector<1x384x4xf32>
    %1 = vector.shape_cast %0 : vector<1x384x4xf32> to vector<384x4xf32>
    %c0_2 = arith.constant 0 : index
    %c1 = arith.constant 1 : index
    %c0_3 = arith.constant 0 : index
    %2 = vector.load %arg1[%c0_2, %c1, %c0_3] : memref<1x440x4xf32, #tpu.memory_space<vmem>>, vector<1x384x4xf32>
    %3 = vector.shape_cast %2 : vector<1x384x4xf32> to vector<384x4xf32>
    %c0_4 = arith.constant 0 : index
    %c2 = arith.constant 2 : index
    %c0_5 = arith.constant 0 : index
    %4 = vector.load %arg1[%c0_4, %c2, %c0_5] : memref<1x440x4xf32, #tpu.memory_space<vmem>>, vector<1x384x4xf32>
    %5 = vector.shape_cast %4 : vector<1x384x4xf32> to vector<384x4xf32>
    %c0_6 = arith.constant 0 : index
    %c24 = arith.constant 24 : index
    %c0_7 = arith.constant 0 : index
    %6 = vector.load %arg1[%c0_6, %c24, %c0_7] : memref<1x440x4xf32, #tpu.memory_space<vmem>>, vector<1x384x4xf32>
    %7 = vector.shape_cast %6 : vector<1x384x4xf32> to vector<384x4xf32>
    %c0_8 = arith.constant 0 : index
    %c25 = arith.constant 25 : index
    %c0_9 = arith.constant 0 : index
    %8 = vector.load %arg1[%c0_8, %c25, %c0_9] : memref<1x440x4xf32, #tpu.memory_space<vmem>>, vector<1x384x4xf32>
    %9 = vector.shape_cast %8 : vector<1x384x4xf32> to vector<384x4xf32>
    %c0_10 = arith.constant 0 : index
    %c26 = arith.constant 26 : index
    %c0_11 = arith.constant 0 : index
    %10 = vector.load %arg1[%c0_10, %c26, %c0_11] : memref<1x440x4xf32, #tpu.memory_space<vmem>>, vector<1x384x4xf32>
    %11 = vector.shape_cast %10 : vector<1x384x4xf32> to vector<384x4xf32>
    %c0_12 = arith.constant 0 : index
    %c48 = arith.constant 48 : index
    %c0_13 = arith.constant 0 : index
    %12 = vector.load %arg1[%c0_12, %c48, %c0_13] : memref<1x440x4xf32, #tpu.memory_space<vmem>>, vector<1x384x4xf32>
    %13 = vector.shape_cast %12 : vector<1x384x4xf32> to vector<384x4xf32>
    %c0_14 = arith.constant 0 : index
    %c49 = arith.constant 49 : index
    %c0_15 = arith.constant 0 : index
    %14 = vector.load %arg1[%c0_14, %c49, %c0_15] : memref<1x440x4xf32, #tpu.memory_space<vmem>>, vector<1x384x4xf32>
    %15 = vector.shape_cast %14 : vector<1x384x4xf32> to vector<384x4xf32>
    %c0_16 = arith.constant 0 : index
    %c50 = arith.constant 50 : index
    %c0_17 = arith.constant 0 : index
    %16 = vector.load %arg1[%c0_16, %c50, %c0_17] : memref<1x440x4xf32, #tpu.memory_space<vmem>>, vector<1x384x4xf32>
    %17 = vector.shape_cast %16 : vector<1x384x4xf32> to vector<384x4xf32>
    %18 = tpu.concatenate %1, %3, %5, %7, %9, %11, %13, %15, %17 in 1 : vector<384x4xf32>, vector<384x4xf32>, vector<384x4xf32>, vector<384x4xf32>, vector<384x4xf32>, vector<384x4xf32>, vector<384x4xf32>, vector<384x4xf32>, vector<384x4xf32> -> vector<384x36xf32>
    %c0_18 = arith.constant 0 : index
    %c0_19 = arith.constant 0 : index
    %19 = vector.load %arg2[%c0_18, %c0_19] : memref<36x8xf32, #tpu.memory_space<vmem>>, vector<36x8xf32>
    %cst = arith.constant dense<0.000000e+00> : vector<384x8xf32>
    %20 = tpu.matmul %18, %19, %cst {dimension_numbers = #tpu.dot_dimension_numbers<[1], [0], [0], [1], [0, 0, 1, 1], [], []>} : vector<384x36xf32>, vector<36x8xf32>, vector<384x8xf32> -> vector<384x8xf32>
    %c0_20 = arith.constant 0 : index
    %c0_21 = arith.constant 0 : index
    %21 = vector.load %arg3[%c0_20, %c0_21] : memref<1x8xf32, #tpu.memory_space<vmem>>, vector<1x8xf32>
    %22 = vector.broadcast %21 : vector<1x8xf32> to vector<384x8xf32>
    %23 = arith.addf %20, %22 : vector<384x8xf32>
    %cst_22 = arith.constant 0.000000e+00 : f32
    %24 = vector.broadcast %cst_22 : f32 to vector<384x8xf32>
    %25 = arith.cmpf oge, %23, %24 : vector<384x8xf32>
    %cst_23 = arith.constant 2.000000e-01 : f32
    %26 = vector.broadcast %cst_23 : f32 to vector<384x8xf32>
    %27 = arith.mulf %26, %23 : vector<384x8xf32>
    %28 = arith.select %25, %23, %27 : vector<384x8xi1>, vector<384x8xf32>
    %29 = vector.shape_cast %28 : vector<384x8xf32> to vector<192x2x8xf32>
    %30 = vector.extract_strided_slice %29 {offsets = [0, 0, 0], sizes = [192, 1, 8], strides = [1, 1, 1]} : vector<192x2x8xf32> to vector<192x1x8xf32>
    %31 = vector.shape_cast %30 : vector<192x1x8xf32> to vector<192x8xf32>
    %32 = vector.extract_strided_slice %29 {offsets = [0, 1, 0], sizes = [192, 1, 8], strides = [1, 1, 1]} : vector<192x2x8xf32> to vector<192x1x8xf32>
    %33 = vector.shape_cast %32 : vector<192x1x8xf32> to vector<192x8xf32>
    %34 = arith.addf %31, %33 : vector<192x8xf32>
    %35 = vector.shape_cast %34 : vector<192x8xf32> to vector<8x2x12x8xf32>
    %36 = vector.extract_strided_slice %35 {offsets = [0, 0, 0, 0], sizes = [8, 1, 12, 8], strides = [1, 1, 1, 1]} : vector<8x2x12x8xf32> to vector<8x1x12x8xf32>
    %37 = vector.shape_cast %36 : vector<8x1x12x8xf32> to vector<8x12x8xf32>
    %38 = vector.extract_strided_slice %35 {offsets = [0, 1, 0, 0], sizes = [8, 1, 12, 8], strides = [1, 1, 1, 1]} : vector<8x2x12x8xf32> to vector<8x1x12x8xf32>
    %39 = vector.shape_cast %38 : vector<8x1x12x8xf32> to vector<8x12x8xf32>
    %40 = arith.addf %37, %39 : vector<8x12x8xf32>
    %cst_24 = arith.constant 2.500000e-01 : f32
    %41 = vector.broadcast %cst_24 : f32 to vector<8x12x8xf32>
    %42 = arith.mulf %40, %41 : vector<8x12x8xf32>
    %43 = vector.extract_strided_slice %42 {offsets = [0, 0, 0], sizes = [8, 8, 8], strides = [1, 1, 1]} : vector<8x12x8xf32> to vector<8x8x8xf32>
    %44 = vector.shape_cast %43 : vector<8x8x8xf32> to vector<64x8xf32>
    %c0_25 = arith.constant 0 : index
    %c0_26 = arith.constant 0 : index
    %c0_27 = arith.constant 0 : index
    %45 = vector.load %arg4[%c0_25, %c0_26, %c0_27] : memref<1x64x4xf32, #tpu.memory_space<vmem>>, vector<1x64x4xf32>
    %46 = vector.shape_cast %45 : vector<1x64x4xf32> to vector<64x4xf32>
    %c0_28 = arith.constant 0 : index
    %c0_29 = arith.constant 0 : index
    %47 = vector.load %arg5[%c0_28, %c0_29] : memref<4x8xf32, #tpu.memory_space<vmem>>, vector<4x8xf32>
    %cst_30 = arith.constant dense<0.000000e+00> : vector<64x8xf32>
    %48 = tpu.matmul %46, %47, %cst_30 {dimension_numbers = #tpu.dot_dimension_numbers<[1], [0], [0], [1], [0, 0, 1, 1], [], []>} : vector<64x4xf32>, vector<4x8xf32>, vector<64x8xf32> -> vector<64x8xf32>
    %c0_31 = arith.constant 0 : index
    %c0_32 = arith.constant 0 : index
    %49 = vector.load %arg6[%c0_31, %c0_32] : memref<1x8xf32, #tpu.memory_space<vmem>>, vector<1x8xf32>
    %50 = vector.broadcast %49 : vector<1x8xf32> to vector<64x8xf32>
    %51 = arith.addf %48, %50 : vector<64x8xf32>
    %52 = arith.addf %44, %51 : vector<64x8xf32>
    %cst_33 = arith.constant 0.707106769 : f32
    %53 = vector.broadcast %cst_33 : f32 to vector<64x8xf32>
    %54 = arith.mulf %52, %53 : vector<64x8xf32>
    %c0_34 = arith.constant 0 : index
    %c0_35 = arith.constant 0 : index
    %c0_36 = arith.constant 0 : index
    %55 = vector.load %arg7[%c0_34, %c0_35, %c0_36] : memref<1x64x8xf32, #tpu.memory_space<vmem>>, vector<1x64x8xf32>
    %56 = vector.shape_cast %55 : vector<1x64x8xf32> to vector<64x8xf32>
    %57 = vector.shape_cast %54 : vector<64x8xf32> to vector<1x64x8xf32>
    tpu.vector_store %arg7[%c0_34, %c0_35, %c0_36], %57 {strides = array<i32>} : memref<1x64x8xf32, #tpu.memory_space<vmem>>, vector<1x64x8xf32>,
    return
  }
  func.func @transform_0(%arg0: i32) -> (i32, i32, i32) {
    %c0_i32 = arith.constant 0 : i32
    %c0_i32_0 = arith.constant 0 : i32
    %c0_i32_1 = arith.constant 0 : i32
    return %arg0, %c0_i32, %c0_i32_0 : i32, i32, i32
  }
  func.func @transform_1(%arg0: i32) -> (i32, i32) {
    %c0_i32 = arith.constant 0 : i32
    %c0_i32_0 = arith.constant 0 : i32
    %c0_i32_1 = arith.constant 0 : i32
    return %c0_i32, %c0_i32_0 : i32, i32
  }
  func.func @transform_2(%arg0: i32) -> (i32, i32) {
    %c0_i32 = arith.constant 0 : i32
    %c0_i32_0 = arith.constant 0 : i32
    %c0_i32_1 = arith.constant 0 : i32
    return %c0_i32, %c0_i32_0 : i32, i32
  }
  func.func @transform_3(%arg0: i32) -> (i32, i32, i32) {
    %c0_i32 = arith.constant 0 : i32
    %c0_i32_0 = arith.constant 0 : i32
    %c0_i32_1 = arith.constant 0 : i32
    return %arg0, %c0_i32, %c0_i32_0 : i32, i32, i32
  }
  func.func @transform_4(%arg0: i32) -> (i32, i32) {
    %c0_i32 = arith.constant 0 : i32
    %c0_i32_0 = arith.constant 0 : i32
    %c0_i32_1 = arith.constant 0 : i32
    return %c0_i32, %c0_i32_0 : i32, i32
  }
  func.func @transform_5(%arg0: i32) -> (i32, i32) {
    %c0_i32 = arith.constant 0 : i32
    %c0_i32_0 = arith.constant 0 : i32
    %c0_i32_1 = arith.constant 0 : i32
    return %c0_i32, %c0_i32_0 : i32, i32
  }
  func.func @transform_6(%arg0: i32) -> (i32, i32, i32) {
    %c0_i32 = arith.constant 0 : i32
    %c0_i32_0 = arith.constant 0 : i32
    %c0_i32_1 = arith.constant 0 : i32
    return %arg0, %c0_i32, %c0_i32_0 : i32, i32, i32
  }
}

module attributes {stable_mosaic.version = 11 : i64} {
  func.func @_conv_kernel(%arg0: i32, %arg1: memref<1x168x8xf32, #tpu.memory_space<vmem>>, %arg2: memref<72x8xf32, #tpu.memory_space<vmem>>, %arg3: memref<1x8xf32, #tpu.memory_space<vmem>>, %arg4: memref<1x128x8xf32, #tpu.memory_space<vmem>>) attributes {dimension_semantics = [#tpu.dimension_semantics<parallel>], iteration_bounds = array<i64: 2>, scalar_prefetch = 0 : i64, scratch_operands = 0 : i64, tpu.core_type = #tpu.core_type<tc>, window_params = [{transform_indices = @transform_0, window_bounds = array<i64: 1, 168, 8>}, {pipeline_mode = #tpu.pipeline_mode<synchronous>, transform_indices = @transform_1, window_bounds = array<i64: 72, 8>}, {pipeline_mode = #tpu.pipeline_mode<synchronous>, transform_indices = @transform_2, window_bounds = array<i64: 1, 8>}, {transform_indices = @transform_3, window_bounds = array<i64: 1, 128, 8>}]} {
    %c0 = arith.constant 0 : index
    %c0_0 = arith.constant 0 : index
    %c0_1 = arith.constant 0 : index
    %0 = vector.load %arg1[%c0, %c0_0, %c0_1] : memref<1x168x8xf32, #tpu.memory_space<vmem>>, vector<1x128x8xf32>
    %1 = vector.shape_cast %0 : vector<1x128x8xf32> to vector<128x8xf32>
    %c0_2 = arith.constant 0 : index
    %c1 = arith.constant 1 : index
    %c0_3 = arith.constant 0 : index
    %2 = vector.load %arg1[%c0_2, %c1, %c0_3] : memref<1x168x8xf32, #tpu.memory_space<vmem>>, vector<1x128x8xf32>
    %3 = vector.shape_cast %2 : vector<1x128x8xf32> to vector<128x8xf32>
    %c0_4 = arith.constant 0 : index
    %c2 = arith.constant 2 : index
    %c0_5 = arith.constant 0 : index
    %4 = vector.load %arg1[%c0_4, %c2, %c0_5] : memref<1x168x8xf32, #tpu.memory_space<vmem>>, vector<1x128x8xf32>
    %5 = vector.shape_cast %4 : vector<1x128x8xf32> to vector<128x8xf32>
    %c0_6 = arith.constant 0 : index
    %c16 = arith.constant 16 : index
    %c0_7 = arith.constant 0 : index
    %6 = vector.load %arg1[%c0_6, %c16, %c0_7] : memref<1x168x8xf32, #tpu.memory_space<vmem>>, vector<1x128x8xf32>
    %7 = vector.shape_cast %6 : vector<1x128x8xf32> to vector<128x8xf32>
    %c0_8 = arith.constant 0 : index
    %c17 = arith.constant 17 : index
    %c0_9 = arith.constant 0 : index
    %8 = vector.load %arg1[%c0_8, %c17, %c0_9] : memref<1x168x8xf32, #tpu.memory_space<vmem>>, vector<1x128x8xf32>
    %9 = vector.shape_cast %8 : vector<1x128x8xf32> to vector<128x8xf32>
    %c0_10 = arith.constant 0 : index
    %c18 = arith.constant 18 : index
    %c0_11 = arith.constant 0 : index
    %10 = vector.load %arg1[%c0_10, %c18, %c0_11] : memref<1x168x8xf32, #tpu.memory_space<vmem>>, vector<1x128x8xf32>
    %11 = vector.shape_cast %10 : vector<1x128x8xf32> to vector<128x8xf32>
    %c0_12 = arith.constant 0 : index
    %c32 = arith.constant 32 : index
    %c0_13 = arith.constant 0 : index
    %12 = vector.load %arg1[%c0_12, %c32, %c0_13] : memref<1x168x8xf32, #tpu.memory_space<vmem>>, vector<1x128x8xf32>
    %13 = vector.shape_cast %12 : vector<1x128x8xf32> to vector<128x8xf32>
    %c0_14 = arith.constant 0 : index
    %c33 = arith.constant 33 : index
    %c0_15 = arith.constant 0 : index
    %14 = vector.load %arg1[%c0_14, %c33, %c0_15] : memref<1x168x8xf32, #tpu.memory_space<vmem>>, vector<1x128x8xf32>
    %15 = vector.shape_cast %14 : vector<1x128x8xf32> to vector<128x8xf32>
    %c0_16 = arith.constant 0 : index
    %c34 = arith.constant 34 : index
    %c0_17 = arith.constant 0 : index
    %16 = vector.load %arg1[%c0_16, %c34, %c0_17] : memref<1x168x8xf32, #tpu.memory_space<vmem>>, vector<1x128x8xf32>
    %17 = vector.shape_cast %16 : vector<1x128x8xf32> to vector<128x8xf32>
    %18 = tpu.concatenate %1, %3, %5, %7, %9, %11, %13, %15, %17 in 1 : vector<128x8xf32>, vector<128x8xf32>, vector<128x8xf32>, vector<128x8xf32>, vector<128x8xf32>, vector<128x8xf32>, vector<128x8xf32>, vector<128x8xf32>, vector<128x8xf32> -> vector<128x72xf32>
    %c0_18 = arith.constant 0 : index
    %c0_19 = arith.constant 0 : index
    %19 = vector.load %arg2[%c0_18, %c0_19] : memref<72x8xf32, #tpu.memory_space<vmem>>, vector<72x8xf32>
    %cst = arith.constant dense<0.000000e+00> : vector<128x8xf32>
    %20 = tpu.matmul %18, %19, %cst {dimension_numbers = #tpu.dot_dimension_numbers<[1], [0], [0], [1], [0, 0, 1, 1], [], []>} : vector<128x72xf32>, vector<72x8xf32>, vector<128x8xf32> -> vector<128x8xf32>
    %c0_20 = arith.constant 0 : index
    %c0_21 = arith.constant 0 : index
    %21 = vector.load %arg3[%c0_20, %c0_21] : memref<1x8xf32, #tpu.memory_space<vmem>>, vector<1x8xf32>
    %22 = vector.broadcast %21 : vector<1x8xf32> to vector<128x8xf32>
    %23 = arith.addf %20, %22 : vector<128x8xf32>
    %cst_22 = arith.constant 0.000000e+00 : f32
    %24 = vector.broadcast %cst_22 : f32 to vector<128x8xf32>
    %25 = arith.cmpf oge, %23, %24 : vector<128x8xf32>
    %cst_23 = arith.constant 2.000000e-01 : f32
    %26 = vector.broadcast %cst_23 : f32 to vector<128x8xf32>
    %27 = arith.mulf %26, %23 : vector<128x8xf32>
    %28 = arith.select %25, %23, %27 : vector<128x8xi1>, vector<128x8xf32>
    %c0_24 = arith.constant 0 : index
    %c0_25 = arith.constant 0 : index
    %c0_26 = arith.constant 0 : index
    %29 = vector.load %arg4[%c0_24, %c0_25, %c0_26] : memref<1x128x8xf32, #tpu.memory_space<vmem>>, vector<1x128x8xf32>
    %30 = vector.shape_cast %29 : vector<1x128x8xf32> to vector<128x8xf32>
    %31 = vector.shape_cast %28 : vector<128x8xf32> to vector<1x128x8xf32>
    tpu.vector_store %arg4[%c0_24, %c0_25, %c0_26], %31 {strides = array<i32>} : memref<1x128x8xf32, #tpu.memory_space<vmem>>, vector<1x128x8xf32>,
    return
  }
  func.func @transform_0(%arg0: i32) -> (i32, i32, i32) {
    %c0_i32 = arith.constant 0 : i32
    %c0_i32_0 = arith.constant 0 : i32
    %c0_i32_1 = arith.constant 0 : i32
    return %arg0, %c0_i32, %c0_i32_0 : i32, i32, i32
  }
  func.func @transform_1(%arg0: i32) -> (i32, i32) {
    %c0_i32 = arith.constant 0 : i32
    %c0_i32_0 = arith.constant 0 : i32
    %c0_i32_1 = arith.constant 0 : i32
    return %c0_i32, %c0_i32_0 : i32, i32
  }
  func.func @transform_2(%arg0: i32) -> (i32, i32) {
    %c0_i32 = arith.constant 0 : i32
    %c0_i32_0 = arith.constant 0 : i32
    %c0_i32_1 = arith.constant 0 : i32
    return %c0_i32, %c0_i32_0 : i32, i32
  }
  func.func @transform_3(%arg0: i32) -> (i32, i32, i32) {
    %c0_i32 = arith.constant 0 : i32
    %c0_i32_0 = arith.constant 0 : i32
    %c0_i32_1 = arith.constant 0 : i32
    return %arg0, %c0_i32, %c0_i32_0 : i32, i32, i32
  }
}

module attributes {stable_mosaic.version = 11 : i64} {
  func.func @_block_tail_kernel(%arg0: i32, %arg1: memref<1x168x8xf32, #tpu.memory_space<vmem>>, %arg2: memref<72x8xf32, #tpu.memory_space<vmem>>, %arg3: memref<1x8xf32, #tpu.memory_space<vmem>>, %arg4: memref<1x16x8xf32, #tpu.memory_space<vmem>>, %arg5: memref<8x8xf32, #tpu.memory_space<vmem>>, %arg6: memref<1x8xf32, #tpu.memory_space<vmem>>, %arg7: memref<1x16x8xf32, #tpu.memory_space<vmem>>) attributes {dimension_semantics = [#tpu.dimension_semantics<parallel>], iteration_bounds = array<i64: 2>, scalar_prefetch = 0 : i64, scratch_operands = 0 : i64, tpu.core_type = #tpu.core_type<tc>, window_params = [{transform_indices = @transform_0, window_bounds = array<i64: 1, 168, 8>}, {pipeline_mode = #tpu.pipeline_mode<synchronous>, transform_indices = @transform_1, window_bounds = array<i64: 72, 8>}, {pipeline_mode = #tpu.pipeline_mode<synchronous>, transform_indices = @transform_2, window_bounds = array<i64: 1, 8>}, {transform_indices = @transform_3, window_bounds = array<i64: 1, 16, 8>}, {pipeline_mode = #tpu.pipeline_mode<synchronous>, transform_indices = @transform_4, window_bounds = array<i64: 8, 8>}, {pipeline_mode = #tpu.pipeline_mode<synchronous>, transform_indices = @transform_5, window_bounds = array<i64: 1, 8>}, {transform_indices = @transform_6, window_bounds = array<i64: 1, 16, 8>}]} {
    %c0 = arith.constant 0 : index
    %c0_0 = arith.constant 0 : index
    %c0_1 = arith.constant 0 : index
    %0 = vector.load %arg1[%c0, %c0_0, %c0_1] : memref<1x168x8xf32, #tpu.memory_space<vmem>>, vector<1x128x8xf32>
    %1 = vector.shape_cast %0 : vector<1x128x8xf32> to vector<128x8xf32>
    %c0_2 = arith.constant 0 : index
    %c1 = arith.constant 1 : index
    %c0_3 = arith.constant 0 : index
    %2 = vector.load %arg1[%c0_2, %c1, %c0_3] : memref<1x168x8xf32, #tpu.memory_space<vmem>>, vector<1x128x8xf32>
    %3 = vector.shape_cast %2 : vector<1x128x8xf32> to vector<128x8xf32>
    %c0_4 = arith.constant 0 : index
    %c2 = arith.constant 2 : index
    %c0_5 = arith.constant 0 : index
    %4 = vector.load %arg1[%c0_4, %c2, %c0_5] : memref<1x168x8xf32, #tpu.memory_space<vmem>>, vector<1x128x8xf32>
    %5 = vector.shape_cast %4 : vector<1x128x8xf32> to vector<128x8xf32>
    %c0_6 = arith.constant 0 : index
    %c16 = arith.constant 16 : index
    %c0_7 = arith.constant 0 : index
    %6 = vector.load %arg1[%c0_6, %c16, %c0_7] : memref<1x168x8xf32, #tpu.memory_space<vmem>>, vector<1x128x8xf32>
    %7 = vector.shape_cast %6 : vector<1x128x8xf32> to vector<128x8xf32>
    %c0_8 = arith.constant 0 : index
    %c17 = arith.constant 17 : index
    %c0_9 = arith.constant 0 : index
    %8 = vector.load %arg1[%c0_8, %c17, %c0_9] : memref<1x168x8xf32, #tpu.memory_space<vmem>>, vector<1x128x8xf32>
    %9 = vector.shape_cast %8 : vector<1x128x8xf32> to vector<128x8xf32>
    %c0_10 = arith.constant 0 : index
    %c18 = arith.constant 18 : index
    %c0_11 = arith.constant 0 : index
    %10 = vector.load %arg1[%c0_10, %c18, %c0_11] : memref<1x168x8xf32, #tpu.memory_space<vmem>>, vector<1x128x8xf32>
    %11 = vector.shape_cast %10 : vector<1x128x8xf32> to vector<128x8xf32>
    %c0_12 = arith.constant 0 : index
    %c32 = arith.constant 32 : index
    %c0_13 = arith.constant 0 : index
    %12 = vector.load %arg1[%c0_12, %c32, %c0_13] : memref<1x168x8xf32, #tpu.memory_space<vmem>>, vector<1x128x8xf32>
    %13 = vector.shape_cast %12 : vector<1x128x8xf32> to vector<128x8xf32>
    %c0_14 = arith.constant 0 : index
    %c33 = arith.constant 33 : index
    %c0_15 = arith.constant 0 : index
    %14 = vector.load %arg1[%c0_14, %c33, %c0_15] : memref<1x168x8xf32, #tpu.memory_space<vmem>>, vector<1x128x8xf32>
    %15 = vector.shape_cast %14 : vector<1x128x8xf32> to vector<128x8xf32>
    %c0_16 = arith.constant 0 : index
    %c34 = arith.constant 34 : index
    %c0_17 = arith.constant 0 : index
    %16 = vector.load %arg1[%c0_16, %c34, %c0_17] : memref<1x168x8xf32, #tpu.memory_space<vmem>>, vector<1x128x8xf32>
    %17 = vector.shape_cast %16 : vector<1x128x8xf32> to vector<128x8xf32>
    %18 = tpu.concatenate %1, %3, %5, %7, %9, %11, %13, %15, %17 in 1 : vector<128x8xf32>, vector<128x8xf32>, vector<128x8xf32>, vector<128x8xf32>, vector<128x8xf32>, vector<128x8xf32>, vector<128x8xf32>, vector<128x8xf32>, vector<128x8xf32> -> vector<128x72xf32>
    %c0_18 = arith.constant 0 : index
    %c0_19 = arith.constant 0 : index
    %19 = vector.load %arg2[%c0_18, %c0_19] : memref<72x8xf32, #tpu.memory_space<vmem>>, vector<72x8xf32>
    %cst = arith.constant dense<0.000000e+00> : vector<128x8xf32>
    %20 = tpu.matmul %18, %19, %cst {dimension_numbers = #tpu.dot_dimension_numbers<[1], [0], [0], [1], [0, 0, 1, 1], [], []>} : vector<128x72xf32>, vector<72x8xf32>, vector<128x8xf32> -> vector<128x8xf32>
    %c0_20 = arith.constant 0 : index
    %c0_21 = arith.constant 0 : index
    %21 = vector.load %arg3[%c0_20, %c0_21] : memref<1x8xf32, #tpu.memory_space<vmem>>, vector<1x8xf32>
    %22 = vector.broadcast %21 : vector<1x8xf32> to vector<128x8xf32>
    %23 = arith.addf %20, %22 : vector<128x8xf32>
    %cst_22 = arith.constant 0.000000e+00 : f32
    %24 = vector.broadcast %cst_22 : f32 to vector<128x8xf32>
    %25 = arith.cmpf oge, %23, %24 : vector<128x8xf32>
    %cst_23 = arith.constant 2.000000e-01 : f32
    %26 = vector.broadcast %cst_23 : f32 to vector<128x8xf32>
    %27 = arith.mulf %26, %23 : vector<128x8xf32>
    %28 = arith.select %25, %23, %27 : vector<128x8xi1>, vector<128x8xf32>
    %29 = vector.shape_cast %28 : vector<128x8xf32> to vector<64x2x8xf32>
    %30 = vector.extract_strided_slice %29 {offsets = [0, 0, 0], sizes = [64, 1, 8], strides = [1, 1, 1]} : vector<64x2x8xf32> to vector<64x1x8xf32>
    %31 = vector.shape_cast %30 : vector<64x1x8xf32> to vector<64x8xf32>
    %32 = vector.extract_strided_slice %29 {offsets = [0, 1, 0], sizes = [64, 1, 8], strides = [1, 1, 1]} : vector<64x2x8xf32> to vector<64x1x8xf32>
    %33 = vector.shape_cast %32 : vector<64x1x8xf32> to vector<64x8xf32>
    %34 = arith.addf %31, %33 : vector<64x8xf32>
    %35 = vector.shape_cast %34 : vector<64x8xf32> to vector<4x2x8x8xf32>
    %36 = vector.extract_strided_slice %35 {offsets = [0, 0, 0, 0], sizes = [4, 1, 8, 8], strides = [1, 1, 1, 1]} : vector<4x2x8x8xf32> to vector<4x1x8x8xf32>
    %37 = vector.shape_cast %36 : vector<4x1x8x8xf32> to vector<4x8x8xf32>
    %38 = vector.extract_strided_slice %35 {offsets = [0, 1, 0, 0], sizes = [4, 1, 8, 8], strides = [1, 1, 1, 1]} : vector<4x2x8x8xf32> to vector<4x1x8x8xf32>
    %39 = vector.shape_cast %38 : vector<4x1x8x8xf32> to vector<4x8x8xf32>
    %40 = arith.addf %37, %39 : vector<4x8x8xf32>
    %cst_24 = arith.constant 2.500000e-01 : f32
    %41 = vector.broadcast %cst_24 : f32 to vector<4x8x8xf32>
    %42 = arith.mulf %40, %41 : vector<4x8x8xf32>
    %43 = vector.extract_strided_slice %42 {offsets = [0, 0, 0], sizes = [4, 4, 8], strides = [1, 1, 1]} : vector<4x8x8xf32> to vector<4x4x8xf32>
    %44 = vector.shape_cast %43 : vector<4x4x8xf32> to vector<16x8xf32>
    %c0_25 = arith.constant 0 : index
    %c0_26 = arith.constant 0 : index
    %c0_27 = arith.constant 0 : index
    %45 = vector.load %arg4[%c0_25, %c0_26, %c0_27] : memref<1x16x8xf32, #tpu.memory_space<vmem>>, vector<1x16x8xf32>
    %46 = vector.shape_cast %45 : vector<1x16x8xf32> to vector<16x8xf32>
    %c0_28 = arith.constant 0 : index
    %c0_29 = arith.constant 0 : index
    %47 = vector.load %arg5[%c0_28, %c0_29] : memref<8x8xf32, #tpu.memory_space<vmem>>, vector<8x8xf32>
    %cst_30 = arith.constant dense<0.000000e+00> : vector<16x8xf32>
    %48 = tpu.matmul %46, %47, %cst_30 {dimension_numbers = #tpu.dot_dimension_numbers<[1], [0], [0], [1], [0, 0, 1, 1], [], []>} : vector<16x8xf32>, vector<8x8xf32>, vector<16x8xf32> -> vector<16x8xf32>
    %c0_31 = arith.constant 0 : index
    %c0_32 = arith.constant 0 : index
    %49 = vector.load %arg6[%c0_31, %c0_32] : memref<1x8xf32, #tpu.memory_space<vmem>>, vector<1x8xf32>
    %50 = vector.broadcast %49 : vector<1x8xf32> to vector<16x8xf32>
    %51 = arith.addf %48, %50 : vector<16x8xf32>
    %52 = arith.addf %44, %51 : vector<16x8xf32>
    %cst_33 = arith.constant 0.707106769 : f32
    %53 = vector.broadcast %cst_33 : f32 to vector<16x8xf32>
    %54 = arith.mulf %52, %53 : vector<16x8xf32>
    %c0_34 = arith.constant 0 : index
    %c0_35 = arith.constant 0 : index
    %c0_36 = arith.constant 0 : index
    %55 = vector.load %arg7[%c0_34, %c0_35, %c0_36] : memref<1x16x8xf32, #tpu.memory_space<vmem>>, vector<1x16x8xf32>
    %56 = vector.shape_cast %55 : vector<1x16x8xf32> to vector<16x8xf32>
    %57 = vector.shape_cast %54 : vector<16x8xf32> to vector<1x16x8xf32>
    tpu.vector_store %arg7[%c0_34, %c0_35, %c0_36], %57 {strides = array<i32>} : memref<1x16x8xf32, #tpu.memory_space<vmem>>, vector<1x16x8xf32>,
    return
  }
  func.func @transform_0(%arg0: i32) -> (i32, i32, i32) {
    %c0_i32 = arith.constant 0 : i32
    %c0_i32_0 = arith.constant 0 : i32
    %c0_i32_1 = arith.constant 0 : i32
    return %arg0, %c0_i32, %c0_i32_0 : i32, i32, i32
  }
  func.func @transform_1(%arg0: i32) -> (i32, i32) {
    %c0_i32 = arith.constant 0 : i32
    %c0_i32_0 = arith.constant 0 : i32
    %c0_i32_1 = arith.constant 0 : i32
    return %c0_i32, %c0_i32_0 : i32, i32
  }
  func.func @transform_2(%arg0: i32) -> (i32, i32) {
    %c0_i32 = arith.constant 0 : i32
    %c0_i32_0 = arith.constant 0 : i32
    %c0_i32_1 = arith.constant 0 : i32
    return %c0_i32, %c0_i32_0 : i32, i32
  }
  func.func @transform_3(%arg0: i32) -> (i32, i32, i32) {
    %c0_i32 = arith.constant 0 : i32
    %c0_i32_0 = arith.constant 0 : i32
    %c0_i32_1 = arith.constant 0 : i32
    return %arg0, %c0_i32, %c0_i32_0 : i32, i32, i32
  }
  func.func @transform_4(%arg0: i32) -> (i32, i32) {
    %c0_i32 = arith.constant 0 : i32
    %c0_i32_0 = arith.constant 0 : i32
    %c0_i32_1 = arith.constant 0 : i32
    return %c0_i32, %c0_i32_0 : i32, i32
  }
  func.func @transform_5(%arg0: i32) -> (i32, i32) {
    %c0_i32 = arith.constant 0 : i32
    %c0_i32_0 = arith.constant 0 : i32
    %c0_i32_1 = arith.constant 0 : i32
    return %c0_i32, %c0_i32_0 : i32, i32
  }
  func.func @transform_6(%arg0: i32) -> (i32, i32, i32) {
    %c0_i32 = arith.constant 0 : i32
    %c0_i32_0 = arith.constant 0 : i32
    %c0_i32_1 = arith.constant 0 : i32
    return %arg0, %c0_i32, %c0_i32_0 : i32, i32, i32
  }
}

module attributes {stable_mosaic.version = 11 : i64} {
  func.func @_conv_kernel(%arg0: i32, %arg1: memref<1x40x9xf32, #tpu.memory_space<vmem>>, %arg2: memref<81x9xf32, #tpu.memory_space<vmem>>, %arg3: memref<1x9xf32, #tpu.memory_space<vmem>>, %arg4: memref<1x16x9xf32, #tpu.memory_space<vmem>>) attributes {dimension_semantics = [#tpu.dimension_semantics<parallel>], iteration_bounds = array<i64: 2>, scalar_prefetch = 0 : i64, scratch_operands = 0 : i64, tpu.core_type = #tpu.core_type<tc>, window_params = [{transform_indices = @transform_0, window_bounds = array<i64: 1, 40, 9>}, {pipeline_mode = #tpu.pipeline_mode<synchronous>, transform_indices = @transform_1, window_bounds = array<i64: 81, 9>}, {pipeline_mode = #tpu.pipeline_mode<synchronous>, transform_indices = @transform_2, window_bounds = array<i64: 1, 9>}, {transform_indices = @transform_3, window_bounds = array<i64: 1, 16, 9>}]} {
    %c0 = arith.constant 0 : index
    %c0_0 = arith.constant 0 : index
    %c0_1 = arith.constant 0 : index
    %0 = vector.load %arg1[%c0, %c0_0, %c0_1] : memref<1x40x9xf32, #tpu.memory_space<vmem>>, vector<1x16x9xf32>
    %1 = vector.shape_cast %0 : vector<1x16x9xf32> to vector<16x9xf32>
    %c0_2 = arith.constant 0 : index
    %c1 = arith.constant 1 : index
    %c0_3 = arith.constant 0 : index
    %2 = vector.load %arg1[%c0_2, %c1, %c0_3] : memref<1x40x9xf32, #tpu.memory_space<vmem>>, vector<1x16x9xf32>
    %3 = vector.shape_cast %2 : vector<1x16x9xf32> to vector<16x9xf32>
    %c0_4 = arith.constant 0 : index
    %c2 = arith.constant 2 : index
    %c0_5 = arith.constant 0 : index
    %4 = vector.load %arg1[%c0_4, %c2, %c0_5] : memref<1x40x9xf32, #tpu.memory_space<vmem>>, vector<1x16x9xf32>
    %5 = vector.shape_cast %4 : vector<1x16x9xf32> to vector<16x9xf32>
    %c0_6 = arith.constant 0 : index
    %c8 = arith.constant 8 : index
    %c0_7 = arith.constant 0 : index
    %6 = vector.load %arg1[%c0_6, %c8, %c0_7] : memref<1x40x9xf32, #tpu.memory_space<vmem>>, vector<1x16x9xf32>
    %7 = vector.shape_cast %6 : vector<1x16x9xf32> to vector<16x9xf32>
    %c0_8 = arith.constant 0 : index
    %c9 = arith.constant 9 : index
    %c0_9 = arith.constant 0 : index
    %8 = vector.load %arg1[%c0_8, %c9, %c0_9] : memref<1x40x9xf32, #tpu.memory_space<vmem>>, vector<1x16x9xf32>
    %9 = vector.shape_cast %8 : vector<1x16x9xf32> to vector<16x9xf32>
    %c0_10 = arith.constant 0 : index
    %c10 = arith.constant 10 : index
    %c0_11 = arith.constant 0 : index
    %10 = vector.load %arg1[%c0_10, %c10, %c0_11] : memref<1x40x9xf32, #tpu.memory_space<vmem>>, vector<1x16x9xf32>
    %11 = vector.shape_cast %10 : vector<1x16x9xf32> to vector<16x9xf32>
    %c0_12 = arith.constant 0 : index
    %c16 = arith.constant 16 : index
    %c0_13 = arith.constant 0 : index
    %12 = vector.load %arg1[%c0_12, %c16, %c0_13] : memref<1x40x9xf32, #tpu.memory_space<vmem>>, vector<1x16x9xf32>
    %13 = vector.shape_cast %12 : vector<1x16x9xf32> to vector<16x9xf32>
    %c0_14 = arith.constant 0 : index
    %c17 = arith.constant 17 : index
    %c0_15 = arith.constant 0 : index
    %14 = vector.load %arg1[%c0_14, %c17, %c0_15] : memref<1x40x9xf32, #tpu.memory_space<vmem>>, vector<1x16x9xf32>
    %15 = vector.shape_cast %14 : vector<1x16x9xf32> to vector<16x9xf32>
    %c0_16 = arith.constant 0 : index
    %c18 = arith.constant 18 : index
    %c0_17 = arith.constant 0 : index
    %16 = vector.load %arg1[%c0_16, %c18, %c0_17] : memref<1x40x9xf32, #tpu.memory_space<vmem>>, vector<1x16x9xf32>
    %17 = vector.shape_cast %16 : vector<1x16x9xf32> to vector<16x9xf32>
    %18 = tpu.concatenate %1, %3, %5, %7, %9, %11, %13, %15, %17 in 1 : vector<16x9xf32>, vector<16x9xf32>, vector<16x9xf32>, vector<16x9xf32>, vector<16x9xf32>, vector<16x9xf32>, vector<16x9xf32>, vector<16x9xf32>, vector<16x9xf32> -> vector<16x81xf32>
    %c0_18 = arith.constant 0 : index
    %c0_19 = arith.constant 0 : index
    %19 = vector.load %arg2[%c0_18, %c0_19] : memref<81x9xf32, #tpu.memory_space<vmem>>, vector<81x9xf32>
    %cst = arith.constant dense<0.000000e+00> : vector<16x9xf32>
    %20 = tpu.matmul %18, %19, %cst {dimension_numbers = #tpu.dot_dimension_numbers<[1], [0], [0], [1], [0, 0, 1, 1], [], []>} : vector<16x81xf32>, vector<81x9xf32>, vector<16x9xf32> -> vector<16x9xf32>
    %c0_20 = arith.constant 0 : index
    %c0_21 = arith.constant 0 : index
    %21 = vector.load %arg3[%c0_20, %c0_21] : memref<1x9xf32, #tpu.memory_space<vmem>>, vector<1x9xf32>
    %22 = vector.broadcast %21 : vector<1x9xf32> to vector<16x9xf32>
    %23 = arith.addf %20, %22 : vector<16x9xf32>
    %c0_22 = arith.constant 0 : index
    %c0_23 = arith.constant 0 : index
    %c0_24 = arith.constant 0 : index
    %24 = vector.load %arg4[%c0_22, %c0_23, %c0_24] : memref<1x16x9xf32, #tpu.memory_space<vmem>>, vector<1x16x9xf32>
    %25 = vector.shape_cast %24 : vector<1x16x9xf32> to vector<16x9xf32>
    %26 = vector.shape_cast %23 : vector<16x9xf32> to vector<1x16x9xf32>
    tpu.vector_store %arg4[%c0_22, %c0_23, %c0_24], %26 {strides = array<i32>} : memref<1x16x9xf32, #tpu.memory_space<vmem>>, vector<1x16x9xf32>,
    return
  }
  func.func @transform_0(%arg0: i32) -> (i32, i32, i32) {
    %c0_i32 = arith.constant 0 : i32
    %c0_i32_0 = arith.constant 0 : i32
    %c0_i32_1 = arith.constant 0 : i32
    return %arg0, %c0_i32, %c0_i32_0 : i32, i32, i32
  }
  func.func @transform_1(%arg0: i32) -> (i32, i32) {
    %c0_i32 = arith.constant 0 : i32
    %c0_i32_0 = arith.constant 0 : i32
    %c0_i32_1 = arith.constant 0 : i32
    return %c0_i32, %c0_i32_0 : i32, i32
  }
  func.func @transform_2(%arg0: i32) -> (i32, i32) {
    %c0_i32 = arith.constant 0 : i32
    %c0_i32_0 = arith.constant 0 : i32
    %c0_i32_1 = arith.constant 0 : i32
    return %c0_i32, %c0_i32_0 : i32, i32
  }
  func.func @transform_3(%arg0: i32) -> (i32, i32, i32) {
    %c0_i32 = arith.constant 0 : i32
    %c0_i32_0 = arith.constant 0 : i32
    %c0_i32_1 = arith.constant 0 : i32
    return %arg0, %c0_i32, %c0_i32_0 : i32, i32, i32
  }
}

</mosaic_0001>

<llo_original>
// kernel: discriminator_forward.7
$region0: #{discriminator_forward.7}
  #allocation0 [shape = 'u32[]', space=smem, size = 0x4, offset = 0x4, fixed_abs, tag = 'smem constant byte address 0x4 - core index']
  #allocation1 [shape = 'u32[144,128]{1,0:T(1,128)}', space=vmem, size = 0x12000, scoped, tag = 'internal scratch']
  %s0 = inlined_call_operand.vmem [shape: f32[2,168,8], index: 0, kind: input, shape index: {}]
  %s1 = inlined_call_operand.vmem [shape: f32[72,8], index: 1, kind: input, shape index: {}]
  %s2 = inlined_call_operand.vmem [shape: f32[1,8], index: 2, kind: input, shape index: {}]
  %s3 = inlined_call_operand.vmem [shape: f32[2,128,8], index: 3, kind: output, shape index: {}]
  %s4 = sld [smem:[#allocation0]]
  $region45: #{discriminator_forward.7} parent=0
    _
  %s6 = ssub.s32 1, %s4
  %s7 = scalar_select 0, %s6, %s4
  loop: start=0, step=1, limit=4
  $region2: #{discriminator_forward.7} parent=0 // loop_pre_header
    _
  $region3: #{discriminator_forward.7} parent=0 // loop_header
    %s9 = sphi 0, %s13
    %p10 = scmp.ge.s32.totalorder %s9, 4
    %s19 = sphi 0, %s21
    %s22 = sphi 0, %s19
    %s23 = sphi 0, %s22
    %s39 = sphi 0, %s23
    %s43 = sphi 0, %s43
    %s45 = sphi 0, %s43
    %s46 = sphi 0, %s45
    %s60 = sphi 0, %s46
    %s64 = sphi 0, %s64
    %s66 = sphi 0, %s64
    %s67 = sphi 0, %s66
    %s81 = sphi 0, %s67
    %s87 = sphi 0, %s89
    %s90 = sphi 0, %s87
    %s91 = sphi 0, %s90
    %s107 = sphi 0, %s91
  $region4: #{discriminator_forward.7} parent=0 // loop_header_branch
    %12 = sbr.rel (%p10) target = $region8
  $region5: #{discriminator_forward.7} parent=0 // loop_body
    %s14 = ssub.s32 %s9, 1
    %s15 = ssub.s32 %s9, 2
    %s16 = sadd.s32 %s9, 1
    %s17 = ssub.s32 %s9, %s16
    %p18 = scmp.eq.s32.totalorder %s17, 0
    %s20 = sadd.s32 %s19, 1
    %s21 = scalar_select %p18, %s19, %s20
    %p24 = pneg %p18
    %p25 = scmp.eq.s32.totalorder %s9, 1
    %p26 = por %p24, %p25
    %p27 = scmp.ne.s32.totalorder %s19, %s22
    %p28 = scmp.eq.s32.totalorder %s9, 0
    %p29 = por %p27, %p28
    %p30 = scmp.ne.s32.totalorder %s19, %s22
    %p31 = scmp.eq.s32.totalorder %s14, 1
    %p32 = por %p30, %p31
    %p33 = scmp.ne.s32.totalorder %s22, %s23
    %p34 = scmp.eq.s32.totalorder %s14, 0
    %p35 = por %p33, %p34
    %p36 = scmp.ne.s32.totalorder %s22, %s23
    %p37 = scmp.eq.s32.totalorder %s15, 1
    %p38 = por %p36, %p37
    %p40 = scmp.ne.s32.totalorder %s23, %s39
    %p41 = scmp.eq.s32.totalorder %s15, 0
    %p42 = por %p40, %p41
    %s44 = sadd.s32 %s43, 1
    %p47 = scmp.eq.s32.totalorder %s9, 1
    %p48 = scmp.ne.s32.totalorder %s43, %s45
    %p49 = scmp.eq.s32.totalorder %s9, 0
    %p50 = por %p48, %p49
    %p51 = scmp.ne.s32.totalorder %s43, %s45
    %p52 = scmp.eq.s32.totalorder %s14, 1
    %p53 = por %p51, %p52
    %p54 = scmp.ne.s32.totalorder %s45, %s46
    %p55 = scmp.eq.s32.totalorder %s14, 0
    %p56 = por %p54, %p55
    %p57 = scmp.ne.s32.totalorder %s45, %s46
    %p58 = scmp.eq.s32.totalorder %s15, 1
    %p59 = por %p57, %p58
    %p61 = scmp.ne.s32.totalorder %s46, %s60
    %p62 = scmp.eq.s32.totalorder %s15, 0
    %p63 = por %p61, %p62
    %s65 = sadd.s32 %s64, 1
    %p68 = scmp.eq.s32.totalorder %s9, 1
    %p69 = scmp.ne.s32.totalorder %s64, %s66
    %p70 = scmp.eq.s32.totalorder %s9, 0
    %p71 = por %p69, %p70
    %p72 = scmp.ne.s32.totalorder %s64, %s66
    %p73 = scmp.eq.s32.totalorder %s14, 1
    %p74 = por %p72, %p73
    %p75 = scmp.ne.s32.totalorder %s66, %s67
    %p76 = scmp.eq.s32.totalorder %s14, 0
    %p77 = por %p75, %p76
    %p78 = scmp.ne.s32.totalorder %s66, %s67
    %p79 = scmp.eq.s32.totalorder %s15, 1
    %p80 = por %p78, %p79
    %p82 = scmp.ne.s32.totalorder %s67, %s81
    %p83 = scmp.eq.s32.totalorder %s15, 0
    %p84 = por %p82, %p83
    %s85 = ssub.s32 %s9, %s16
    %p86 = scmp.eq.s32.totalorder %s85, 0
    %s88 = sadd.s32 %s87, 1
    %s89 = scalar_select %p86, %s87, %s88
    %p92 = pneg %p86
    %p93 = scmp.eq.s32.totalorder %s9, 1
    %p94 = por %p92, %p93
    %p95 = scmp.ne.s32.totalorder %s87, %s90
    %p96 = scmp.eq.s32.totalorder %s9, 0
    %p97 = por %p95, %p96
    %p98 = scmp.ne.s32.totalorder %s87, %s90
    %p99 = scmp.eq.s32.totalorder %s14, 1
    %p100 = por %p98, %p99
    %p101 = scmp.ne.s32.totalorder %s90, %s91
    %p102 = scmp.eq.s32.totalorder %s14, 0
    %p103 = por %p101, %p102
    %p104 = scmp.ne.s32.totalorder %s90, %s91
    %p105 = scmp.eq.s32.totalorder %s15, 1
    %p106 = por %p104, %p105
    %p108 = scmp.ne.s32.totalorder %s91, %s107
    %p109 = scmp.eq.s32.totalorder %s15, 0
    %p110 = por %p108, %p109
    %p111 = scmp.le.s32.totalorder 1, %s9
    %p112 = scmp.lt.s32.totalorder %s9, 3
    %p113 = pnand %p111, %p112
    %p114 = pneg %p113
    // Predicated region
    $region9: #{discriminator_forward.7} parent=5 // pred_check
      _
    $region10: #{discriminator_forward.7} parent=5 // pred_check_branch
      %116 = sbr.rel (%p113) target = $region12
    $region11: #{discriminator_forward.7} parent=5 // pred_region
      %s117 = ssub.s32 %s9, 1
      // Predicated region
      $region13: #{discriminator_forward.7} parent=11 // pred_check
        %p118 = pneg %p56
      $region14: #{discriminator_forward.7} parent=11 // pred_check_branch
        %120 = sbr.rel (%p118) target = $region16
      $region15: #{discriminator_forward.7} parent=11 // pred_region
        _
      $region16: #{discriminator_forward.7} parent=11 // pred_fallthru
        _
      // Predicated region
      $region17: #{discriminator_forward.7} parent=11 // pred_check
        %p121 = pneg %p77
      $region18: #{discriminator_forward.7} parent=11 // pred_check_branch
        %123 = sbr.rel (%p121) target = $region20
      $region19: #{discriminator_forward.7} parent=11 // pred_region
        _
      $region20: #{discriminator_forward.7} parent=11 // pred_fallthru
        _
    $region12: #{discriminator_forward.7} parent=5 // pred_fallthru
      _
    %p124 = scmp.lt.s32.totalorder %s9, 2
    // Predicated region
    $region21: #{discriminator_forward.7} parent=5 // pred_check
      %p125 = pneg %p124
    $region22: #{discriminator_forward.7} parent=5 // pred_check_branch
      %127 = sbr.rel (%p125) target = $region24
    $region23: #{discriminator_forward.7} parent=5 // pred_region
      // Predicated region
      $region25: #{discriminator_forward.7} parent=23 // pred_check
        %p128 = pneg %p29
      $region26: #{discriminator_forward.7} parent=23 // pred_check_branch
        %130 = sbr.rel (%p128) target = $region28
      $region27: #{discriminator_forward.7} parent=23 // pred_region
        %p131 = scmp.lt.s32.totalorder %s9, 1
        %s132 = scalar_select %p131, %s9, 1
        %s133 = smul.addr %s132, 21
        %s134 = smul.addr %s133, 8
        %s135 = scalar_lea.vmem %s0, %s134
      $region28: #{discriminator_forward.7} parent=23 // pred_fallthru
        _
    $region24: #{discriminator_forward.7} parent=5 // pred_fallthru
      _
    %p136 = scmp.le.s32.totalorder 1, %s9
    %p137 = scmp.lt.s32.totalorder %s9, 3
    %p138 = pnand %p136, %p137
    %p139 = pneg %p138
    // Predicated region
    $region29: #{discriminator_forward.7} parent=5 // pred_check
      _
    $region30: #{discriminator_forward.7} parent=5 // pred_check_branch
      %141 = sbr.rel (%p138) target = $region32
    $region31: #{discriminator_forward.7} parent=5 // pred_region
      %s142 = ssub.s32 %s9, 1
      %p143 = scmp.lt.s32.totalorder %s14, 1
      %s144 = scalar_select %p143, %s14, 1
      %s145 = smul.addr %s144, 21
      %s146 = smul.addr %s145, 8
      %s147 = scalar_lea.vmem %s0, %s146
      %p148 = pneg %p35
      %p149 = pneg %p32
      %p150 = pneg %p56
      %p151 = pneg %p53
      %p152 = pneg %p77
      %p153 = pneg %p74
      %p154 = pneg %p103
      %p155 = pneg %p100
      %p156 = scmp.lt.s32.totalorder %s14, 1
      %s157 = scalar_select %p156, %s14, 1
      %s158 = smul.addr %s157, 16
      %s159 = smul.addr %s158, 8
      %s160 = scalar_lea.vmem %s3, %s159
      %p161 = scmp.lt.s32.totalorder %s14, 1
      %s162 = scalar_select %p161, %s14, 1
      %s163 = smul.addr %s162, 21
      %s164 = smul.addr %s163, 8
      %s165 = scalar_lea.vmem %s0, %s164
      %p166 = scmp.lt.s32.totalorder %s14, 1
      %s167 = scalar_select %p166, %s14, 1
      %s168 = smul.addr %s167, 16
      %s169 = smul.addr %s168, 8
      %s170 = scalar_lea.vmem %s3, %s169
      %v171 = vld [vmem:[%s165] sm:$0xff]
      %v172 = vld [vmem:[%s165 + $0x8] sm:$0xff]
      %v173 = vld [vmem:[%s165 + $0x10] sm:$0xff]
      %v174 = vld [vmem:[%s165 + $0x18] sm:$0xff]
      %v175 = vld [vmem:[%s165 + $0x20] sm:$0xff]
      %v176 = vld [vmem:[%s165 + $0x28] sm:$0xff]
      %v177 = vld [vmem:[%s165 + $0x30] sm:$0xff]
      %v178 = vld [vmem:[%s165 + $0x38] sm:$0xff]
      %v179 = vld [vmem:[%s165 + $0x40] sm:$0xff]
      %v180 = vld [vmem:[%s165 + $0x48] sm:$0xff]
      %v181 = vld [vmem:[%s165 + $0x50] sm:$0xff]
      %v182 = vld [vmem:[%s165 + $0x58] sm:$0xff]
      %v183 = vld [vmem:[%s165 + $0x60] sm:$0xff]
      %v184 = vld [vmem:[%s165 + $0x68] sm:$0xff]
      %v185 = vld [vmem:[%s165 + $0x70] sm:$0xff]
      %v186 = vld [vmem:[%s165 + $0x78] sm:$0xff]
      %v187 = vld [vmem:[%s165 + $0x1] sm:$0xff]
      %v188 = vld [vmem:[%s165 + $0x9] sm:$0xff]
      %v189 = vld [vmem:[%s165 + $0x11] sm:$0xff]
      %v190 = vld [vmem:[%s165 + $0x19] sm:$0xff]
      %v191 = vld [vmem:[%s165 + $0x21] sm:$0xff]
      %v192 = vld [vmem:[%s165 + $0x29] sm:$0xff]
      %v193 = vld [vmem:[%s165 + $0x31] sm:$0xff]
      %v194 = vld [vmem:[%s165 + $0x39] sm:$0xff]
      %v195 = vld [vmem:[%s165 + $0x41] sm:$0xff]
      %v196 = vld [vmem:[%s165 + $0x49] sm:$0xff]
      %v197 = vld [vmem:[%s165 + $0x51] sm:$0xff]
      %v198 = vld [vmem:[%s165 + $0x59] sm:$0xff]
      %v199 = vld [vmem:[%s165 + $0x61] sm:$0xff]
      %v200 = vld [vmem:[%s165 + $0x69] sm:$0xff]
      %v201 = vld [vmem:[%s165 + $0x71] sm:$0xff]
      %v202 = vld [vmem:[%s165 + $0x79] sm:$0xff]
      %v203 = vld [vmem:[%s165 + $0x2] sm:$0xff]
      %v204 = vld [vmem:[%s165 + $0xa] sm:$0xff]
      %v205 = vld [vmem:[%s165 + $0x12] sm:$0xff]
      %v206 = vld [vmem:[%s165 + $0x1a] sm:$0xff]
      %v207 = vld [vmem:[%s165 + $0x22] sm:$0xff]
      %v208 = vld [vmem:[%s165 + $0x2a] sm:$0xff]
      %v209 = vld [vmem:[%s165 + $0x32] sm:$0xff]
      %v210 = vld [vmem:[%s165 + $0x3a] sm:$0xff]
      %v211 = vld [vmem:[%s165 + $0x42] sm:$0xff]
      %v212 = vld [vmem:[%s165 + $0x4a] sm:$0xff]
      %v213 = vld [vmem:[%s165 + $0x52] sm:$0xff]
      %v214 = vld [vmem:[%s165 + $0x5a] sm:$0xff]
      %v215 = vld [vmem:[%s165 + $0x62] sm:$0xff]
      %v216 = vld [vmem:[%s165 + $0x6a] sm:$0xff]
      %v217 = vld [vmem:[%s165 + $0x72] sm:$0xff]
      %v218 = vld [vmem:[%s165 + $0x7a] sm:$0xff]
      %v219 = vld [vmem:[%s165 + $0x80] sm:$0xff]
      %v220 = vld [vmem:[%s165 + $0x88] sm:$0xff]
      %v221 = vld [vmem:[%s165 + $0x81] sm:$0xff]
      %v222 = vld [vmem:[%s165 + $0x89] sm:$0xff]
      %v223 = vld [vmem:[%s165 + $0x82] sm:$0xff]
      %v224 = vld [vmem:[%s165 + $0x8a] sm:$0xff]
      %v225 = vld [vmem:[%s165 + $0x90] sm:$0xff]
      %v226 = vld [vmem:[%s165 + $0x98] sm:$0xff]
      %v227 = vld [vmem:[%s165 + $0x91] sm:$0xff]
      %v228 = vld [vmem:[%s165 + $0x99] sm:$0xff]
      %v229 = vld [vmem:[%s165 + $0x92] sm:$0xff]
      %v230 = vld [vmem:[%s165 + $0x9a] sm:$0xff]
      %247 = vrot.lane.b32.xlu0 %v187, 8
      %v248 = vpop.permute.xlu0 %247
      %249 = vrot.lane.b32.xlu0 %v188, 8
      %v250 = vpop.permute.xlu0 %249
      %251 = vrot.lane.b32.xlu0 %v189, 8
      %v252 = vpop.permute.xlu0 %251
      %253 = vrot.lane.b32.xlu0 %v190, 8
      %v254 = vpop.permute.xlu0 %253
      %255 = vrot.lane.b32.xlu0 %v191, 8
      %v256 = vpop.permute.xlu0 %255
      %257 = vrot.lane.b32.xlu0 %v192, 8
      %v258 = vpop.permute.xlu0 %257
      %259 = vrot.lane.b32.xlu0 %v193, 8
      %v260 = vpop.permute.xlu0 %259
      %261 = vrot.lane.b32.xlu0 %v194, 8
      %v262 = vpop.permute.xlu0 %261
      %263 = vrot.lane.b32.xlu0 %v195, 8
      %v264 = vpop.permute.xlu0 %263
      %265 = vrot.lane.b32.xlu0 %v196, 8
      %v266 = vpop.permute.xlu0 %265
      %267 = vrot.lane.b32.xlu0 %v197, 8
      %v268 = vpop.permute.xlu0 %267
      %269 = vrot.lane.b32.xlu0 %v198, 8
      %v270 = vpop.permute.xlu0 %269
      %271 = vrot.lane.b32.xlu0 %v199, 8
      %v272 = vpop.permute.xlu0 %271
      %273 = vrot.lane.b32.xlu0 %v200, 8
      %v274 = vpop.permute.xlu0 %273
      %275 = vrot.lane.b32.xlu0 %v201, 8
      %v276 = vpop.permute.xlu0 %275
      %277 = vrot.lane.b32.xlu0 %v202, 8
      %v278 = vpop.permute.xlu0 %277
      %311 = vrot.lane.b32.xlu0 %v203, 16
      %v312 = vpop.permute.xlu0 %311
      %313 = vrot.lane.b32.xlu0 %v204, 16
      %v314 = vpop.permute.xlu0 %313
      %315 = vrot.lane.b32.xlu0 %v205, 16
      %v316 = vpop.permute.xlu0 %315
      %317 = vrot.lane.b32.xlu0 %v206, 16
      %v318 = vpop.permute.xlu0 %317
      %319 = vrot.lane.b32.xlu0 %v207, 16
      %v320 = vpop.permute.xlu0 %319
      %321 = vrot.lane.b32.xlu0 %v208, 16
      %v322 = vpop.permute.xlu0 %321
      %323 = vrot.lane.b32.xlu0 %v209, 16
      %v324 = vpop.permute.xlu0 %323
      %325 = vrot.lane.b32.xlu0 %v210, 16
      %v326 = vpop.permute.xlu0 %325
      %327 = vrot.lane.b32.xlu0 %v211, 16
      %v328 = vpop.permute.xlu0 %327
      %329 = vrot.lane.b32.xlu0 %v212, 16
      %v330 = vpop.permute.xlu0 %329
      %331 = vrot.lane.b32.xlu0 %v213, 16
      %v332 = vpop.permute.xlu0 %331
      %333 = vrot.lane.b32.xlu0 %v214, 16
      %v334 = vpop.permute.xlu0 %333
      %335 = vrot.lane.b32.xlu0 %v215, 16
      %v336 = vpop.permute.xlu0 %335
      %337 = vrot.lane.b32.xlu0 %v216, 16
      %v338 = vpop.permute.xlu0 %337
      %339 = vrot.lane.b32.xlu0 %v217, 16
      %v340 = vpop.permute.xlu0 %339
      %341 = vrot.lane.b32.xlu0 %v218, 16
      %v342 = vpop.permute.xlu0 %341
      %375 = vrot.lane.b32.xlu0 %v173, 24
      %v376 = vpop.permute.xlu0 %375
      %377 = vrot.lane.b32.xlu0 %v174, 24
      %v378 = vpop.permute.xlu0 %377
      %379 = vrot.lane.b32.xlu0 %v175, 24
      %v380 = vpop.permute.xlu0 %379
      %381 = vrot.lane.b32.xlu0 %v176, 24
      %v382 = vpop.permute.xlu0 %381
      %383 = vrot.lane.b32.xlu0 %v177, 24
      %v384 = vpop.permute.xlu0 %383
      %385 = vrot.lane.b32.xlu0 %v178, 24
      %v386 = vpop.permute.xlu0 %385
      %387 = vrot.lane.b32.xlu0 %v179, 24
      %v388 = vpop.permute.xlu0 %387
      %389 = vrot.lane.b32.xlu0 %v180, 24
      %v390 = vpop.permute.xlu0 %389
      %391 = vrot.lane.b32.xlu0 %v181, 24
      %v392 = vpop.permute.xlu0 %391
      %393 = vrot.lane.b32.xlu0 %v182, 24
      %v394 = vpop.permute.xlu0 %393
      %395 = vrot.lane.b32.xlu0 %v183, 24
      %v396 = vpop.permute.xlu0 %395
      %397 = vrot.lane.b32.xlu0 %v184, 24
      %v398 = vpop.permute.xlu0 %397
      %399 = vrot.lane.b32.xlu0 %v185, 24
      %v400 = vpop.permute.xlu0 %399
      %401 = vrot.lane.b32.xlu0 %v186, 24
      %v402 = vpop.permute.xlu0 %401
      %403 = vrot.lane.b32.xlu0 %v219, 24
      %v404 = vpop.permute.xlu0 %403
      %405 = vrot.lane.b32.xlu0 %v220, 24
      %v406 = vpop.permute.xlu0 %405
      %425 = vrot.lane.b32.xlu0 %v189, 32
      %v426 = vpop.permute.xlu0 %425
      %427 = vrot.lane.b32.xlu0 %v190, 32
      %v428 = vpop.permute.xlu0 %427
      %429 = vrot.lane.b32.xlu0 %v191, 32
      %v430 = vpop.permute.xlu0 %429
      %431 = vrot.lane.b32.xlu0 %v192, 32
      %v432 = vpop.permute.xlu0 %431
      %433 = vrot.lane.b32.xlu0 %v193, 32
      %v434 = vpop.permute.xlu0 %433
      %435 = vrot.lane.b32.xlu0 %v194, 32
      %v436 = vpop.permute.xlu0 %435
      %437 = vrot.lane.b32.xlu0 %v195, 32
      %v438 = vpop.permute.xlu0 %437
      %439 = vrot.lane.b32.xlu0 %v196, 32
      %v440 = vpop.permute.xlu0 %439
      %441 = vrot.lane.b32.xlu0 %v197, 32
      %v442 = vpop.permute.xlu0 %441
      %443 = vrot.lane.b32.xlu0 %v198, 32
      %v444 = vpop.permute.xlu0 %443
      %445 = vrot.lane.b32.xlu0 %v199, 32
      %v446 = vpop.permute.xlu0 %445
      %447 = vrot.lane.b32.xlu0 %v200, 32
      %v448 = vpop.permute.xlu0 %447
      %449 = vrot.lane.b32.xlu0 %v201, 32
      %v450 = vpop.permute.xlu0 %449
      %451 = vrot.lane.b32.xlu0 %v202, 32
      %v452 = vpop.permute.xlu0 %451
      %453 = vrot.lane.b32.xlu0 %v221, 32
      %v454 = vpop.permute.xlu0 %453
      %455 = vrot.lane.b32.xlu0 %v222, 32
      %v456 = vpop.permute.xlu0 %455
      %475 = vrot.lane.b32.xlu0 %v205, 40
      %v476 = vpop.permute.xlu0 %475
      %477 = vrot.lane.b32.xlu0 %v206, 40
      %v478 = vpop.permute.xlu0 %477
      %479 = vrot.lane.b32.xlu0 %v207, 40
      %v480 = vpop.permute.xlu0 %479
      %481 = vrot.lane.b32.xlu0 %v208, 40
      %v482 = vpop.permute.xlu0 %481
      %483 = vrot.lane.b32.xlu0 %v209, 40
      %v484 = vpop.permute.xlu0 %483
      %485 = vrot.lane.b32.xlu0 %v210, 40
      %v486 = vpop.permute.xlu0 %485
      %487 = vrot.lane.b32.xlu0 %v211, 40
      %v488 = vpop.permute.xlu0 %487
      %489 = vrot.lane.b32.xlu0 %v212, 40
      %v490 = vpop.permute.xlu0 %489
      %491 = vrot.lane.b32.xlu0 %v213, 40
      %v492 = vpop.permute.xlu0 %491
      %493 = vrot.lane.b32.xlu0 %v214, 40
      %v494 = vpop.permute.xlu0 %493
      %495 = vrot.lane.b32.xlu0 %v215, 40
      %v496 = vpop.permute.xlu0 %495
      %497 = vrot.lane.b32.xlu0 %v216, 40
      %v498 = vpop.permute.xlu0 %497
      %499 = vrot.lane.b32.xlu0 %v217, 40
      %v500 = vpop.permute.xlu0 %499
      %501 = vrot.lane.b32.xlu0 %v218, 40
      %v502 = vpop.permute.xlu0 %501
      %503 = vrot.lane.b32.xlu0 %v223, 40
      %v504 = vpop.permute.xlu0 %503
      %505 = vrot.lane.b32.xlu0 %v224, 40
      %v506 = vpop.permute.xlu0 %505
      %525 = vrot.lane.b32.xlu0 %v175, 48
      %v526 = vpop.permute.xlu0 %525
      %527 = vrot.lane.b32.xlu0 %v176, 48
      %v528 = vpop.permute.xlu0 %527
      %529 = vrot.lane.b32.xlu0 %v177, 48
      %v530 = vpop.permute.xlu0 %529
      %531 = vrot.lane.b32.xlu0 %v178, 48
      %v532 = vpop.permute.xlu0 %531
      %533 = vrot.lane.b32.xlu0 %v179, 48
      %v534 = vpop.permute.xlu0 %533
      %535 = vrot.lane.b32.xlu0 %v180, 48
      %v536 = vpop.permute.xlu0 %535
      %537 = vrot.lane.b32.xlu0 %v181, 48
      %v538 = vpop.permute.xlu0 %537
      %539 = vrot.lane.b32.xlu0 %v182, 48
      %v540 = vpop.permute.xlu0 %539
      %541 = vrot.lane.b32.xlu0 %v183, 48
      %v542 = vpop.permute.xlu0 %541
      %543 = vrot.lane.b32.xlu0 %v184, 48
      %v544 = vpop.permute.xlu0 %543
      %545 = vrot.lane.b32.xlu0 %v185, 48
      %v546 = vpop.permute.xlu0 %545
      %547 = vrot.lane.b32.xlu0 %v186, 48
      %v548 = vpop.permute.xlu0 %547
      %549 = vrot.lane.b32.xlu0 %v219, 48
      %v550 = vpop.permute.xlu0 %549
      %551 = vrot.lane.b32.xlu0 %v220, 48
      %v552 = vpop.permute.xlu0 %551
      %553 = vrot.lane.b32.xlu0 %v225, 48
      %v554 = vpop.permute.xlu0 %553
      %555 = vrot.lane.b32.xlu0 %v226, 48
      %v556 = vpop.permute.xlu0 %555
      %575 = vrot.lane.b32.xlu0 %v191, 56
      %v576 = vpop.permute.xlu0 %575
      %577 = vrot.lane.b32.xlu0 %v192, 56
      %v578 = vpop.permute.xlu0 %577
      %579 = vrot.lane.b32.xlu0 %v193, 56
      %v580 = vpop.permute.xlu0 %579
      %581 = vrot.lane.b32.xlu0 %v194, 56
      %v582 = vpop.permute.xlu0 %581
      %583 = vrot.lane.b32.xlu0 %v195, 56
      %v584 = vpop.permute.xlu0 %583
      %585 = vrot.lane.b32.xlu0 %v196, 56
      %v586 = vpop.permute.xlu0 %585
      %587 = vrot.lane.b32.xlu0 %v197, 56
      %v588 = vpop.permute.xlu0 %587
      %589 = vrot.lane.b32.xlu0 %v198, 56
      %v590 = vpop.permute.xlu0 %589
      %591 = vrot.lane.b32.xlu0 %v199, 56
      %v592 = vpop.permute.xlu0 %591
      %593 = vrot.lane.b32.xlu0 %v200, 56
      %v594 = vpop.permute.xlu0 %593
      %595 = vrot.lane.b32.xlu0 %v201, 56
      %v596 = vpop.permute.xlu0 %595
      %597 = vrot.lane.b32.xlu0 %v202, 56
      %v598 = vpop.permute.xlu0 %597
      %599 = vrot.lane.b32.xlu0 %v221, 56
      %v600 = vpop.permute.xlu0 %599
      %601 = vrot.lane.b32.xlu0 %v222, 56
      %v602 = vpop.permute.xlu0 %601
      %603 = vrot.lane.b32.xlu0 %v227, 56
      %v604 = vpop.permute.xlu0 %603
      %605 = vrot.lane.b32.xlu0 %v228, 56
      %v606 = vpop.permute.xlu0 %605
      %625 = vrot.lane.b32.xlu0 %v207, 64
      %v626 = vpop.permute.xlu0 %625
      %627 = vrot.lane.b32.xlu0 %v208, 64
      %v628 = vpop.permute.xlu0 %627
      %629 = vrot.lane.b32.xlu0 %v209, 64
      %v630 = vpop.permute.xlu0 %629
      %631 = vrot.lane.b32.xlu0 %v210, 64
      %v632 = vpop.permute.xlu0 %631
      %633 = vrot.lane.b32.xlu0 %v211, 64
      %v634 = vpop.permute.xlu0 %633
      %635 = vrot.lane.b32.xlu0 %v212, 64
      %v636 = vpop.permute.xlu0 %635
      %637 = vrot.lane.b32.xlu0 %v213, 64
      %v638 = vpop.permute.xlu0 %637
      %639 = vrot.lane.b32.xlu0 %v214, 64
      %v640 = vpop.permute.xlu0 %639
      %641 = vrot.lane.b32.xlu0 %v215, 64
      %v642 = vpop.permute.xlu0 %641
      %643 = vrot.lane.b32.xlu0 %v216, 64
      %v644 = vpop.permute.xlu0 %643
      %645 = vrot.lane.b32.xlu0 %v217, 64
      %v646 = vpop.permute.xlu0 %645
      %647 = vrot.lane.b32.xlu0 %v218, 64
      %v648 = vpop.permute.xlu0 %647
      %649 = vrot.lane.b32.xlu0 %v223, 64
      %v650 = vpop.permute.xlu0 %649
      %651 = vrot.lane.b32.xlu0 %v224, 64
      %v652 = vpop.permute.xlu0 %651
      %653 = vrot.lane.b32.xlu0 %v229, 64
      %v654 = vpop.permute.xlu0 %653
      %655 = vrot.lane.b32.xlu0 %v230, 64
      %v656 = vpop.permute.xlu0 %655
      %vm673 = vcmask 64512
      %v674 = vsel %vm673, %v171, %v248
      %v675 = vsel %vm673, %v172, %v250
      %v676 = vsel %vm673, %v173, %v252
      %v677 = vsel %vm673, %v174, %v254
      %v678 = vsel %vm673, %v175, %v256
      %v679 = vsel %vm673, %v176, %v258
      %v680 = vsel %vm673, %v177, %v260
      %v681 = vsel %vm673, %v178, %v262
      %v682 = vsel %vm673, %v179, %v264
      %v683 = vsel %vm673, %v180, %v266
      %v684 = vsel %vm673, %v181, %v268
      %v685 = vsel %vm673, %v182, %v270
      %v686 = vsel %vm673, %v183, %v272
      %v687 = vsel %vm673, %v184, %v274
      %v688 = vsel %vm673, %v185, %v276
      %v689 = vsel %vm673, %v186, %v278
      %vm690 = vcmask 130048
      %v691 = vsel %vm690, %v674, %v312
      %v692 = vsel %vm690, %v675, %v314
      %v693 = vsel %vm690, %v676, %v316
      %v694 = vsel %vm690, %v677, %v318
      %v695 = vsel %vm690, %v678, %v320
      %v696 = vsel %vm690, %v679, %v322
      %v697 = vsel %vm690, %v680, %v324
      %v698 = vsel %vm690, %v681, %v326
      %v699 = vsel %vm690, %v682, %v328
      %v700 = vsel %vm690, %v683, %v330
      %v701 = vsel %vm690, %v684, %v332
      %v702 = vsel %vm690, %v685, %v334
      %v703 = vsel %vm690, %v686, %v336
      %v704 = vsel %vm690, %v687, %v338
      %v705 = vsel %vm690, %v688, %v340
      %v706 = vsel %vm690, %v689, %v342
      %vm707 = vcmask 195584
      %v708 = vsel %vm707, %v691, %v376
      %v709 = vsel %vm707, %v692, %v378
      %v710 = vsel %vm707, %v693, %v380
      %v711 = vsel %vm707, %v694, %v382
      %v712 = vsel %vm707, %v695, %v384
      %v713 = vsel %vm707, %v696, %v386
      %v714 = vsel %vm707, %v697, %v388
      %v715 = vsel %vm707, %v698, %v390
      %v716 = vsel %vm707, %v699, %v392
      %v717 = vsel %vm707, %v700, %v394
      %v718 = vsel %vm707, %v701, %v396
      %v719 = vsel %vm707, %v702, %v398
      %v720 = vsel %vm707, %v703, %v400
      %v721 = vsel %vm707, %v704, %v402
      %v722 = vsel %vm707, %v705, %v404
      %v723 = vsel %vm707, %v706, %v406
      %vm724 = vcmask 261120
      %v725 = vsel %vm724, %v708, %v426
      %v726 = vsel %vm724, %v709, %v428
      %v727 = vsel %vm724, %v710, %v430
      %v728 = vsel %vm724, %v711, %v432
      %v729 = vsel %vm724, %v712, %v434
      %v730 = vsel %vm724, %v713, %v436
      %v731 = vsel %vm724, %v714, %v438
      %v732 = vsel %vm724, %v715, %v440
      %v733 = vsel %vm724, %v716, %v442
      %v734 = vsel %vm724, %v717, %v444
      %v735 = vsel %vm724, %v718, %v446
      %v736 = vsel %vm724, %v719, %v448
      %v737 = vsel %vm724, %v720, %v450
      %v738 = vsel %vm724, %v721, %v452
      %v739 = vsel %vm724, %v722, %v454
      %v740 = vsel %vm724, %v723, %v456
      %vm741 = vcmask 326656
      %v742 = vsel %vm741, %v725, %v476
      %v743 = vsel %vm741, %v726, %v478
      %v744 = vsel %vm741, %v727, %v480
      %v745 = vsel %vm741, %v728, %v482
      %v746 = vsel %vm741, %v729, %v484
      %v747 = vsel %vm741, %v730, %v486
      %v748 = vsel %vm741, %v731, %v488
      %v749 = vsel %vm741, %v732, %v490
      %v750 = vsel %vm741, %v733, %v492
      %v751 = vsel %vm741, %v734, %v494
      %v752 = vsel %vm741, %v735, %v496
      %v753 = vsel %vm741, %v736, %v498
      %v754 = vsel %vm741, %v737, %v500
      %v755 = vsel %vm741, %v738, %v502
      %v756 = vsel %vm741, %v739, %v504
      %v757 = vsel %vm741, %v740, %v506
      %vm758 = vcmask 392192
      %v759 = vsel %vm758, %v742, %v526
      %v760 = vsel %vm758, %v743, %v528
      %v761 = vsel %vm758, %v744, %v530
      %v762 = vsel %vm758, %v745, %v532
      %v763 = vsel %vm758, %v746, %v534
      %v764 = vsel %vm758, %v747, %v536
      %v765 = vsel %vm758, %v748, %v538
      %v766 = vsel %vm758, %v749, %v540
      %v767 = vsel %vm758, %v750, %v542
      %v768 = vsel %vm758, %v751, %v544
      %v769 = vsel %vm758, %v752, %v546
      %v770 = vsel %vm758, %v753, %v548
      %v771 = vsel %vm758, %v754, %v550
      %v772 = vsel %vm758, %v755, %v552
      %v773 = vsel %vm758, %v756, %v554
      %v774 = vsel %vm758, %v757, %v556
      %vm775 = vcmask 457728
      %v776 = vsel %vm775, %v759, %v576
      %v777 = vsel %vm775, %v760, %v578
      %v778 = vsel %vm775, %v761, %v580
      %v779 = vsel %vm775, %v762, %v582
      %v780 = vsel %vm775, %v763, %v584
      %v781 = vsel %vm775, %v764, %v586
      %v782 = vsel %vm775, %v765, %v588
      %v783 = vsel %vm775, %v766, %v590
      %v784 = vsel %vm775, %v767, %v592
      %v785 = vsel %vm775, %v768, %v594
      %v786 = vsel %vm775, %v769, %v596
      %v787 = vsel %vm775, %v770, %v598
      %v788 = vsel %vm775, %v771, %v600
      %v789 = vsel %vm775, %v772, %v602
      %v790 = vsel %vm775, %v773, %v604
      %v791 = vsel %vm775, %v774, %v606
      %vm792 = vcmask 523264
      %v793 = vsel %vm792, %v776, %v626
      %v794 = vsel %vm792, %v777, %v628
      %v795 = vsel %vm792, %v778, %v630
      %v796 = vsel %vm792, %v779, %v632
      %v797 = vsel %vm792, %v780, %v634
      %v798 = vsel %vm792, %v781, %v636
      %v799 = vsel %vm792, %v782, %v638
      %v800 = vsel %vm792, %v783, %v640
      %v801 = vsel %vm792, %v784, %v642
      %v802 = vsel %vm792, %v785, %v644
      %v803 = vsel %vm792, %v786, %v646
      %v804 = vsel %vm792, %v787, %v648
      %v805 = vsel %vm792, %v788, %v650
      %v806 = vsel %vm792, %v789, %v652
      %v807 = vsel %vm792, %v790, %v654
      %v808 = vsel %vm792, %v791, %v656
      %v809 = vld [vmem:[%s1] sm:$0xff]
      %v810 = vld [vmem:[%s1 + $0x8] sm:$0xff]
      %v811 = vld [vmem:[%s1 + $0x10] sm:$0xff]
      %v812 = vld [vmem:[%s1 + $0x18] sm:$0xff]
      %v813 = vld [vmem:[%s1 + $0x20] sm:$0xff]
      %v814 = vld [vmem:[%s1 + $0x28] sm:$0xff]
      %v815 = vld [vmem:[%s1 + $0x30] sm:$0xff]
      %v816 = vld [vmem:[%s1 + $0x38] sm:$0xff]
      %v817 = vld [vmem:[%s1 + $0x40] sm:$0xff]
      %v818 = vld [vmem:[%s2] sm:$0x1]
      %v820 = vlaneseq
      %v821 = vshrl.u32 %v820, 7
      %v822 = vsub.s32 0, %v821
      %v823 = vrot.slane %v818, %v822
      %vm825 = vcmask 588800
      %v827 = vsel %vm825, %v793, 0
      %v830 = vsel %vm825, %v794, 0
      %v833 = vsel %vm825, %v795, 0
      %v836 = vsel %vm825, %v796, 0
      %v839 = vsel %vm825, %v797, 0
      %v842 = vsel %vm825, %v798, 0
      %v845 = vsel %vm825, %v799, 0
      %v848 = vsel %vm825, %v800, 0
      %v851 = vsel %vm825, %v801, 0
      %v854 = vsel %vm825, %v802, 0
      %v857 = vsel %vm825, %v803, 0
      %v860 = vsel %vm825, %v804, 0
      %v863 = vsel %vm825, %v805, 0
      %v866 = vsel %vm825, %v806, 0
      %v869 = vsel %vm825, %v807, 0
      %v872 = vsel %vm825, %v808, 0
      %874 = vmatprep.subr.mxu0 0.0
      %875 = vmatpush1.msra.mxu0 %v809
      %876 = vmatprep.subr.mxu0 0.0
      %877 = vmatpush1.msra.mxu0 %v810
      %878 = vmatprep.subr.mxu0 0.0
      %879 = vmatpush1.msra.mxu0 %v811
      %880 = vmatprep.subr.mxu0 0.0
      %881 = vmatpush1.msra.mxu0 %v812
      %882 = vmatprep.subr.mxu0 0.0
      %883 = vmatpush1.msra.mxu0 %v813
      %884 = vmatprep.subr.mxu0 0.0
      %885 = vmatpush1.msra.mxu0 %v814
      %886 = vmatprep.subr.mxu0 0.0
      %887 = vmatpush1.msra.mxu0 %v815
      %888 = vmatprep.subr.mxu0 0.0
      %889 = vmatpush1.msra.mxu0 %v816
      %890 = vmatprep.subr.mxu0 0.0
      %891 = vmatpush1.msra.mxu0 %v817
      %892 = vmatprep.subr.mxu0 0.0
      %893 = vmatpush1.msra.mxu0 0.0
      %894 = vmatprep.subr.mxu0 0.0
      %895 = vmatpush1.msra.mxu0 0.0
      %896 = vmatprep.subr.mxu0 0.0
      %897 = vmatpush1.msra.mxu0 0.0
      %898 = vmatprep.subr.mxu0 0.0
      %899 = vmatpush1.msra.mxu0 0.0
      %900 = vmatprep.subr.mxu0 0.0
      %901 = vmatpush1.msra.mxu0 0.0
      %902 = vmatprep.subr.mxu0 0.0
      %903 = vmatpush1.msra.mxu0 0.0
      %904 = vmatprep.subr.mxu0 0.0
      %905 = vmatpush1.msra.mxu0 0.0
      %906 = vmatprep.subr.mxu0 0.0
      %907 = vmatpush1.msra.mxu0 0.0
      %908 = vmatprep.subr.mxu0 0.0
      %909 = vmatpush1.msra.mxu0 0.0
      %910 = vmatprep.subr.mxu0 0.0
      %911 = vmatpush1.msra.mxu0 0.0
      %912 = vmatprep.subr.mxu0 0.0
      %913 = vmatpush1.msra.mxu0 0.0
      %914 = vmatprep.subr.mxu0 0.0
      %915 = vmatpush1.msra.mxu0 0.0
      %916 = vmatprep.subr.mxu0 0.0
      %917 = vmatpush1.msra.mxu0 0.0
      %918 = vmatprep.subr.mxu0 0.0
      %919 = vmatpush1.msra.mxu0 0.0
      %920 = vmatprep.subr.mxu0 0.0
      %921 = vmatpush1.msra.mxu0 0.0
      %922 = vmatprep.subr.mxu0 0.0
      %923 = vmatpush1.msra.mxu0 0.0
      %924 = vmatprep.subr.mxu0 0.0
      %925 = vmatpush1.msra.mxu0 0.0
      %926 = vmatprep.subr.mxu0 0.0
      %927 = vmatpush1.msra.mxu0 0.0
      %928 = vmatprep.subr.mxu0 0.0
      %929 = vmatpush1.msra.mxu0 0.0
      %930 = vmatprep.subr.mxu0 0.0
      %931 = vmatpush1.msra.mxu0 0.0
      %932 = vmatprep.subr.mxu0 0.0
      %933 = vmatpush1.msra.mxu0 0.0
      %934 = vmatprep.subr.mxu0 0.0
      %935 = vmatpush1.msra.mxu0 0.0
      %936 = vmatprep.subr.mxu0 0.0
      %937 = vmatpush1.msra.mxu0 0.0
      %938 = vmatprep.mubr.f32.mxu0 0.0
      %939 = vmatmul.mubr.f32.gmra.mrb[0].mxu0 %v827
      %v940 = vpop.f32.mrb[0].mxu0
      %v941 = vadd.f32 %v823, %v940
      %v942 = vpop.f32.mrb[0].mxu0
      %943 = vmatprep.mubr.f32.mxu0 0.0
      %944 = vmatmul.mubr.f32.gmra.mrb[0].mxu0 %v830
      %v945 = vpop.f32.mrb[0].mxu0
      %v946 = vadd.f32 %v823, %v945
      %v947 = vpop.f32.mrb[0].mxu0
      %948 = vmatprep.mubr.f32.mxu0 0.0
      %949 = vmatmul.mubr.f32.gmra.mrb[0].mxu0 %v833
      %v950 = vpop.f32.mrb[0].mxu0
      %v951 = vadd.f32 %v823, %v950
      %v952 = vpop.f32.mrb[0].mxu0
      %953 = vmatprep.mubr.f32.mxu0 0.0
      %954 = vmatmul.mubr.f32.gmra.mrb[0].mxu0 %v836
      %v955 = vpop.f32.mrb[0].mxu0
      %v956 = vadd.f32 %v823, %v955
      %v957 = vpop.f32.mrb[0].mxu0
      %958 = vmatprep.mubr.f32.mxu0 0.0
      %959 = vmatmul.mubr.f32.gmra.mrb[0].mxu0 %v839
      %v960 = vpop.f32.mrb[0].mxu0
      %v961 = vadd.f32 %v823, %v960
      %v962 = vpop.f32.mrb[0].mxu0
      %963 = vmatprep.mubr.f32.mxu0 0.0
      %964 = vmatmul.mubr.f32.gmra.mrb[0].mxu0 %v842
      %v965 = vpop.f32.mrb[0].mxu0
      %v966 = vadd.f32 %v823, %v965
      %v967 = vpop.f32.mrb[0].mxu0
      %968 = vmatprep.mubr.f32.mxu0 0.0
      %969 = vmatmul.mubr.f32.gmra.mrb[0].mxu0 %v845
      %v970 = vpop.f32.mrb[0].mxu0
      %v971 = vadd.f32 %v823, %v970
      %v972 = vpop.f32.mrb[0].mxu0
      %973 = vmatprep.mubr.f32.mxu0 0.0
      %974 = vmatmul.mubr.f32.gmra.mrb[0].mxu0 %v848
      %v975 = vpop.f32.mrb[0].mxu0
      %v976 = vadd.f32 %v823, %v975
      %v977 = vpop.f32.mrb[0].mxu0
      %978 = vmatprep.mubr.f32.mxu0 0.0
      %979 = vmatmul.mubr.f32.gmra.mrb[0].mxu0 %v851
      %v980 = vpop.f32.mrb[0].mxu0
      %v981 = vadd.f32 %v823, %v980
      %v982 = vpop.f32.mrb[0].mxu0
      %983 = vmatprep.mubr.f32.mxu0 0.0
      %984 = vmatmul.mubr.f32.gmra.mrb[0].mxu0 %v854
      %v985 = vpop.f32.mrb[0].mxu0
      %v986 = vadd.f32 %v823, %v985
      %v987 = vpop.f32.mrb[0].mxu0
      %988 = vmatprep.mubr.f32.mxu0 0.0
      %989 = vmatmul.mubr.f32.gmra.mrb[0].mxu0 %v857
      %v990 = vpop.f32.mrb[0].mxu0
      %v991 = vadd.f32 %v823, %v990
      %v992 = vpop.f32.mrb[0].mxu0
      %993 = vmatprep.mubr.f32.mxu0 0.0
      %994 = vmatmul.mubr.f32.gmra.mrb[0].mxu0 %v860
      %v995 = vpop.f32.mrb[0].mxu0
      %v996 = vadd.f32 %v823, %v995
      %v997 = vpop.f32.mrb[0].mxu0
      %998 = vmatprep.mubr.f32.mxu0 0.0
      %999 = vmatmul.mubr.f32.gmra.mrb[0].mxu0 %v863
      %v1000 = vpop.f32.mrb[0].mxu0
      %v1001 = vadd.f32 %v823, %v1000
      %v1002 = vpop.f32.mrb[0].mxu0
      %1003 = vmatprep.mubr.f32.mxu0 0.0
      %1004 = vmatmul.mubr.f32.gmra.mrb[0].mxu0 %v866
      %v1005 = vpop.f32.mrb[0].mxu0
      %v1006 = vadd.f32 %v823, %v1005
      %v1007 = vpop.f32.mrb[0].mxu0
      %1008 = vmatprep.mubr.f32.mxu0 0.0
      %1009 = vmatmul.mubr.f32.gmra.mrb[0].mxu0 %v869
      %v1010 = vpop.f32.mrb[0].mxu0
      %v1011 = vadd.f32 %v823, %v1010
      %v1012 = vpop.f32.mrb[0].mxu0
      %1013 = vmatprep.mubr.f32.mxu0 0.0
      %1014 = vmatmul.mubr.f32.gmra.mrb[0].mxu0 %v872
      %v1015 = vpop.f32.mrb[0].mxu0
      %v1016 = vadd.f32 %v823, %v1015
      %v1017 = vpop.f32.mrb[0].mxu0
      %1018 = vdwg.mxu0
      %vm1019 = vcmp.ge.f32.partialorder %v941, 0.0
      %vm1020 = vcmp.ge.f32.partialorder %v946, 0.0
      %vm1021 = vcmp.ge.f32.partialorder %v951, 0.0
      %vm1022 = vcmp.ge.f32.partialorder %v956, 0.0
      %vm1023 = vcmp.ge.f32.partialorder %v961, 0.0
      %vm1024 = vcmp.ge.f32.partialorder %v966, 0.0
      %vm1025 = vcmp.ge.f32.partialorder %v971, 0.0
      %vm1026 = vcmp.ge.f32.partialorder %v976, 0.0
      %vm1027 = vcmp.ge.f32.partialorder %v981, 0.0
      %vm1028 = vcmp.ge.f32.partialorder %v986, 0.0
      %vm1029 = vcmp.ge.f32.partialorder %v991, 0.0
      %vm1030 = vcmp.ge.f32.partialorder %v996, 0.0
      %vm1031 = vcmp.ge.f32.partialorder %v1001, 0.0
      %vm1032 = vcmp.ge.f32.partialorder %v1006, 0.0
      %vm1033 = vcmp.ge.f32.partialorder %v1011, 0.0
      %vm1034 = vcmp.ge.f32.partialorder %v1016, 0.0
      %v1035 = vmul.f32 %v941, 0.2
      %v1036 = vmul.f32 %v946, 0.2
      %v1037 = vmul.f32 %v951, 0.2
      %v1038 = vmul.f32 %v956, 0.2
      %v1039 = vmul.f32 %v961, 0.2
      %v1040 = vmul.f32 %v966, 0.2
      %v1041 = vmul.f32 %v971, 0.2
      %v1042 = vmul.f32 %v976, 0.2
      %v1043 = vmul.f32 %v981, 0.2
      %v1044 = vmul.f32 %v986, 0.2
      %v1045 = vmul.f32 %v991, 0.2
      %v1046 = vmul.f32 %v996, 0.2
      %v1047 = vmul.f32 %v1001, 0.2
      %v1048 = vmul.f32 %v1006, 0.2
      %v1049 = vmul.f32 %v1011, 0.2
      %v1050 = vmul.f32 %v1016, 0.2
      %v1051 = vsel %vm1019, %v941, %v1035
      %v1052 = vsel %vm1020, %v946, %v1036
      %v1053 = vsel %vm1021, %v951, %v1037
      %v1054 = vsel %vm1022, %v956, %v1038
      %v1055 = vsel %vm1023, %v961, %v1039
      %v1056 = vsel %vm1024, %v966, %v1040
      %v1057 = vsel %vm1025, %v971, %v1041
      %v1058 = vsel %vm1026, %v976, %v1042
      %v1059 = vsel %vm1027, %v981, %v1043
      %v1060 = vsel %vm1028, %v986, %v1044
      %v1061 = vsel %vm1029, %v991, %v1045
      %v1062 = vsel %vm1030, %v996, %v1046
      %v1063 = vsel %vm1031, %v1001, %v1047
      %v1064 = vsel %vm1032, %v1006, %v1048
      %v1065 = vsel %vm1033, %v1011, %v1049
      %v1066 = vsel %vm1034, %v1016, %v1050
      %1067 = vst.msk [vmem:[%s170] sm:$0xff] %vm673, %v1051
      %1068 = vst.msk [vmem:[%s170 + $0x8] sm:$0xff] %vm673, %v1052
      %1069 = vst.msk [vmem:[%s170 + $0x10] sm:$0xff] %vm673, %v1053
      %1070 = vst.msk [vmem:[%s170 + $0x18] sm:$0xff] %vm673, %v1054
      %1071 = vst.msk [vmem:[%s170 + $0x20] sm:$0xff] %vm673, %v1055
      %1072 = vst.msk [vmem:[%s170 + $0x28] sm:$0xff] %vm673, %v1056
      %1073 = vst.msk [vmem:[%s170 + $0x30] sm:$0xff] %vm673, %v1057
      %1074 = vst.msk [vmem:[%s170 + $0x38] sm:$0xff] %vm673, %v1058
      %1075 = vst.msk [vmem:[%s170 + $0x40] sm:$0xff] %vm673, %v1059
      %1076 = vst.msk [vmem:[%s170 + $0x48] sm:$0xff] %vm673, %v1060
      %1077 = vst.msk [vmem:[%s170 + $0x50] sm:$0xff] %vm673, %v1061
      %1078 = vst.msk [vmem:[%s170 + $0x58] sm:$0xff] %vm673, %v1062
      %1079 = vst.msk [vmem:[%s170 + $0x60] sm:$0xff] %vm673, %v1063
      %1080 = vst.msk [vmem:[%s170 + $0x68] sm:$0xff] %vm673, %v1064
      %1081 = vst.msk [vmem:[%s170 + $0x70] sm:$0xff] %vm673, %v1065
      %1082 = vst.msk [vmem:[%s170 + $0x78] sm:$0xff] %vm673, %v1066
      %p1083 = scmp.lt.s32.totalorder %s14, 1
      %s1084 = scalar_select %p1083, %s14, 1
      %s1085 = smul.addr %s1084, 16
      %s1086 = smul.addr %s1085, 8
      %s1087 = scalar_lea.vmem %s3, %s1086
      // Predicated region
      $region33: #{discriminator_forward.7} parent=31 // pred_check
        %p1088 = pneg %p100
      $region34: #{discriminator_forward.7} parent=31 // pred_check_branch
        %1090 = sbr.rel (%p1088) target = $region36
      $region35: #{discriminator_forward.7} parent=31 // pred_region
        _
      $region36: #{discriminator_forward.7} parent=31 // pred_fallthru
        _
    $region32: #{discriminator_forward.7} parent=5 // pred_fallthru
      _
    %p1091 = scmp.le.s32.totalorder 2, %s9
    // Predicated region
    $region37: #{discriminator_forward.7} parent=5 // pred_check
      %p1092 = pneg %p1091
    $region38: #{discriminator_forward.7} parent=5 // pred_check_branch
      %1094 = sbr.rel (%p1092) target = $region40
    $region39: #{discriminator_forward.7} parent=5 // pred_region
      %s1095 = ssub.s32 %s9, 2
      // Predicated region
      $region41: #{discriminator_forward.7} parent=39 // pred_check
        %p1096 = pneg %p106
      $region42: #{discriminator_forward.7} parent=39 // pred_check_branch
        %1098 = sbr.rel (%p1096) target = $region44
      $region43: #{discriminator_forward.7} parent=39 // pred_region
        %p1099 = scmp.lt.s32.totalorder %s15, 1
        %s1100 = scalar_select %p1099, %s15, 1
        %s1101 = smul.addr %s1100, 16
        %s1102 = smul.addr %s1101, 8
        %s1103 = scalar_lea.vmem %s3, %s1102
      $region44: #{discriminator_forward.7} parent=39 // pred_fallthru
        _
    $region40: #{discriminator_forward.7} parent=5 // pred_fallthru
      _
  $region6: #{discriminator_forward.7} parent=0 // loop_footer
    %s13 = sadd.s32 1, %s9
  $region7: #{discriminator_forward.7} parent=0 // loop_footer_branch
    %8 = sbr.rel target = $region3
  $region8: #{discriminator_forward.7} parent=0 // loop_exit
    _

// kernel: discriminator_forward.5
$region0: #{discriminator_forward.5}
  #allocation0 [shape = 'u32[]', space=smem, size = 0x4, offset = 0x4, fixed_abs, tag = 'smem constant byte address 0x4 - core index']
  #allocation1 [shape = 'u32[144,128]{1,0:T(1,128)}', space=vmem, size = 0x12000, scoped, tag = 'internal scratch']
  %s0 = inlined_call_operand.vmem [shape: f32[2,440,4], index: 0, kind: input, shape index: {}]
  %s1 = inlined_call_operand.vmem [shape: f32[36,4], index: 1, kind: input, shape index: {}]
  %s2 = inlined_call_operand.vmem [shape: f32[1,4], index: 2, kind: input, shape index: {}]
  %s3 = inlined_call_operand.vmem [shape: f32[2,384,4], index: 3, kind: output, shape index: {}]
  %s4 = sld [smem:[#allocation0]]
  $region45: #{discriminator_forward.5} parent=0
    _
  %s6 = ssub.s32 1, %s4
  %s7 = scalar_select 0, %s6, %s4
  loop: start=0, step=1, limit=4
  $region2: #{discriminator_forward.5} parent=0 // loop_pre_header
    _
  $region3: #{discriminator_forward.5} parent=0 // loop_header
    %s9 = sphi 0, %s13
    %p10 = scmp.ge.s32.totalorder %s9, 4
    %s19 = sphi 0, %s21
    %s22 = sphi 0, %s19
    %s23 = sphi 0, %s22
    %s39 = sphi 0, %s23
    %s43 = sphi 0, %s43
    %s45 = sphi 0, %s43
    %s46 = sphi 0, %s45
    %s60 = sphi 0, %s46
    %s64 = sphi 0, %s64
    %s66 = sphi 0, %s64
    %s67 = sphi 0, %s66
    %s81 = sphi 0, %s67
    %s87 = sphi 0, %s89
    %s90 = sphi 0, %s87
    %s91 = sphi 0, %s90
    %s107 = sphi 0, %s91
  $region4: #{discriminator_forward.5} parent=0 // loop_header_branch
    %12 = sbr.rel (%p10) target = $region8
  $region5: #{discriminator_forward.5} parent=0 // loop_body
    %s14 = ssub.s32 %s9, 1
    %s15 = ssub.s32 %s9, 2
    %s16 = sadd.s32 %s9, 1
    %s17 = ssub.s32 %s9, %s16
    %p18 = scmp.eq.s32.totalorder %s17, 0
    %s20 = sadd.s32 %s19, 1
    %s21 = scalar_select %p18, %s19, %s20
    %p24 = pneg %p18
    %p25 = scmp.eq.s32.totalorder %s9, 1
    %p26 = por %p24, %p25
    %p27 = scmp.ne.s32.totalorder %s19, %s22
    %p28 = scmp.eq.s32.totalorder %s9, 0
    %p29 = por %p27, %p28
    %p30 = scmp.ne.s32.totalorder %s19, %s22
    %p31 = scmp.eq.s32.totalorder %s14, 1
    %p32 = por %p30, %p31
    %p33 = scmp.ne.s32.totalorder %s22, %s23
    %p34 = scmp.eq.s32.totalorder %s14, 0
    %p35 = por %p33, %p34
    %p36 = scmp.ne.s32.totalorder %s22, %s23
    %p37 = scmp.eq.s32.totalorder %s15, 1
    %p38 = por %p36, %p37
    %p40 = scmp.ne.s32.totalorder %s23, %s39
    %p41 = scmp.eq.s32.totalorder %s15, 0
    %p42 = por %p40, %p41
    %s44 = sadd.s32 %s43, 1
    %p47 = scmp.eq.s32.totalorder %s9, 1
    %p48 = scmp.ne.s32.totalorder %s43, %s45
    %p49 = scmp.eq.s32.totalorder %s9, 0
    %p50 = por %p48, %p49
    %p51 = scmp.ne.s32.totalorder %s43, %s45
    %p52 = scmp.eq.s32.totalorder %s14, 1
    %p53 = por %p51, %p52
    %p54 = scmp.ne.s32.totalorder %s45, %s46
    %p55 = scmp.eq.s32.totalorder %s14, 0
    %p56 = por %p54, %p55
    %p57 = scmp.ne.s32.totalorder %s45, %s46
    %p58 = scmp.eq.s32.totalorder %s15, 1
    %p59 = por %p57, %p58
    %p61 = scmp.ne.s32.totalorder %s46, %s60
    %p62 = scmp.eq.s32.totalorder %s15, 0
    %p63 = por %p61, %p62
    %s65 = sadd.s32 %s64, 1
    %p68 = scmp.eq.s32.totalorder %s9, 1
    %p69 = scmp.ne.s32.totalorder %s64, %s66
    %p70 = scmp.eq.s32.totalorder %s9, 0
    %p71 = por %p69, %p70
    %p72 = scmp.ne.s32.totalorder %s64, %s66
    %p73 = scmp.eq.s32.totalorder %s14, 1
    %p74 = por %p72, %p73
    %p75 = scmp.ne.s32.totalorder %s66, %s67
    %p76 = scmp.eq.s32.totalorder %s14, 0
    %p77 = por %p75, %p76
    %p78 = scmp.ne.s32.totalorder %s66, %s67
    %p79 = scmp.eq.s32.totalorder %s15, 1
    %p80 = por %p78, %p79
    %p82 = scmp.ne.s32.totalorder %s67, %s81
    %p83 = scmp.eq.s32.totalorder %s15, 0
    %p84 = por %p82, %p83
    %s85 = ssub.s32 %s9, %s16
    %p86 = scmp.eq.s32.totalorder %s85, 0
    %s88 = sadd.s32 %s87, 1
    %s89 = scalar_select %p86, %s87, %s88
    %p92 = pneg %p86
    %p93 = scmp.eq.s32.totalorder %s9, 1
    %p94 = por %p92, %p93
    %p95 = scmp.ne.s32.totalorder %s87, %s90
    %p96 = scmp.eq.s32.totalorder %s9, 0
    %p97 = por %p95, %p96
    %p98 = scmp.ne.s32.totalorder %s87, %s90
    %p99 = scmp.eq.s32.totalorder %s14, 1
    %p100 = por %p98, %p99
    %p101 = scmp.ne.s32.totalorder %s90, %s91
    %p102 = scmp.eq.s32.totalorder %s14, 0
    %p103 = por %p101, %p102
    %p104 = scmp.ne.s32.totalorder %s90, %s91
    %p105 = scmp.eq.s32.totalorder %s15, 1
    %p106 = por %p104, %p105
    %p108 = scmp.ne.s32.totalorder %s91, %s107
    %p109 = scmp.eq.s32.totalorder %s15, 0
    %p110 = por %p108, %p109
    %p111 = scmp.le.s32.totalorder 1, %s9
    %p112 = scmp.lt.s32.totalorder %s9, 3
    %p113 = pnand %p111, %p112
    %p114 = pneg %p113
    // Predicated region
    $region9: #{discriminator_forward.5} parent=5 // pred_check
      _
    $region10: #{discriminator_forward.5} parent=5 // pred_check_branch
      %116 = sbr.rel (%p113) target = $region12
    $region11: #{discriminator_forward.5} parent=5 // pred_region
      %s117 = ssub.s32 %s9, 1
      // Predicated region
      $region13: #{discriminator_forward.5} parent=11 // pred_check
        %p118 = pneg %p56
      $region14: #{discriminator_forward.5} parent=11 // pred_check_branch
        %120 = sbr.rel (%p118) target = $region16
      $region15: #{discriminator_forward.5} parent=11 // pred_region
        _
      $region16: #{discriminator_forward.5} parent=11 // pred_fallthru
        _
      // Predicated region
      $region17: #{discriminator_forward.5} parent=11 // pred_check
        %p121 = pneg %p77
      $region18: #{discriminator_forward.5} parent=11 // pred_check_branch
        %123 = sbr.rel (%p121) target = $region20
      $region19: #{discriminator_forward.5} parent=11 // pred_region
        _
      $region20: #{discriminator_forward.5} parent=11 // pred_fallthru
        _
    $region12: #{discriminator_forward.5} parent=5 // pred_fallthru
      _
    %p124 = scmp.lt.s32.totalorder %s9, 2
    // Predicated region
    $region21: #{discriminator_forward.5} parent=5 // pred_check
      %p125 = pneg %p124
    $region22: #{discriminator_forward.5} parent=5 // pred_check_branch
      %127 = sbr.rel (%p125) target = $region24
    $region23: #{discriminator_forward.5} parent=5 // pred_region
      // Predicated region
      $region25: #{discriminator_forward.5} parent=23 // pred_check
        %p128 = pneg %p29
      $region26: #{discriminator_forward.5} parent=23 // pred_check_branch
        %130 = sbr.rel (%p128) target = $region28
      $region27: #{discriminator_forward.5} parent=23 // pred_region
        %p131 = scmp.lt.s32.totalorder %s9, 1
        %s132 = scalar_select %p131, %s9, 1
        %s133 = smul.addr %s132, 55
        %s134 = smul.addr %s133, 8
        %s135 = scalar_lea.vmem %s0, %s134
      $region28: #{discriminator_forward.5} parent=23 // pred_fallthru
        _
    $region24: #{discriminator_forward.5} parent=5 // pred_fallthru
      _
    %p136 = scmp.le.s32.totalorder 1, %s9
    %p137 = scmp.lt.s32.totalorder %s9, 3
    %p138 = pnand %p136, %p137
    %p139 = pneg %p138
    // Predicated region
    $region29: #{discriminator_forward.5} parent=5 // pred_check
      _
    $region30: #{discriminator_forward.5} parent=5 // pred_check_branch
      %141 = sbr.rel (%p138) target = $region32
    $region31: #{discriminator_forward.5} parent=5 // pred_region
      %s142 = ssub.s32 %s9, 1
      %p143 = scmp.lt.s32.totalorder %s14, 1
      %s144 = scalar_select %p143, %s14, 1
      %s145 = smul.addr %s144, 55
      %s146 = smul.addr %s145, 8
      %s147 = scalar_lea.vmem %s0, %s146
      %p148 = pneg %p35
      %p149 = pneg %p32
      %p150 = pneg %p56
      %p151 = pneg %p53
      %p152 = pneg %p77
      %p153 = pneg %p74
      %p154 = pneg %p103
      %p155 = pneg %p100
      %p156 = scmp.lt.s32.totalorder %s14, 1
      %s157 = scalar_select %p156, %s14, 1
      %s158 = smul.addr %s157, 48
      %s159 = smul.addr %s158, 8
      %s160 = scalar_lea.vmem %s3, %s159
      %p161 = scmp.lt.s32.totalorder %s14, 1
      %s162 = scalar_select %p161, %s14, 1
      %s163 = smul.addr %s162, 55
      %s164 = smul.addr %s163, 8
      %s165 = scalar_lea.vmem %s0, %s164
      %p166 = scmp.lt.s32.totalorder %s14, 1
      %s167 = scalar_select %p166, %s14, 1
      %s168 = smul.addr %s167, 48
      %s169 = smul.addr %s168, 8
      %s170 = scalar_lea.vmem %s3, %s169
      %v171 = vld [vmem:[%s165] sm:$0xff]
      %v172 = vld [vmem:[%s165 + $0x8] sm:$0xff]
      %v173 = vld [vmem:[%s165 + $0x10] sm:$0xff]
      %v174 = vld [vmem:[%s165 + $0x18] sm:$0xff]
      %v175 = vld [vmem:[%s165 + $0x20] sm:$0xff]
      %v176 = vld [vmem:[%s165 + $0x28] sm:$0xff]
      %v177 = vld [vmem:[%s165 + $0x30] sm:$0xff]
      %v178 = vld [vmem:[%s165 + $0x38] sm:$0xff]
      %v179 = vld [vmem:[%s165 + $0x40] sm:$0xff]
      %v180 = vld [vmem:[%s165 + $0x48] sm:$0xff]
      %v181 = vld [vmem:[%s165 + $0x50] sm:$0xff]
      %v182 = vld [vmem:[%s165 + $0x58] sm:$0xff]
      %v183 = vld [vmem:[%s165 + $0x60] sm:$0xff]
      %v184 = vld [vmem:[%s165 + $0x68] sm:$0xff]
      %v185 = vld [vmem:[%s165 + $0x70] sm:$0xff]
      %v186 = vld [vmem:[%s165 + $0x78] sm:$0xff]
      %v187 = vld [vmem:[%s165 + $0x80] sm:$0xff]
      %v188 = vld [vmem:[%s165 + $0x88] sm:$0xff]
      %v189 = vld [vmem:[%s165 + $0x90] sm:$0xff]
      %v190 = vld [vmem:[%s165 + $0x98] sm:$0xff]
      %v191 = vld [vmem:[%s165 + $0xa0] sm:$0xff]
      %v192 = vld [vmem:[%s165 + $0xa8] sm:$0xff]
      %v193 = vld [vmem:[%s165 + $0xb0] sm:$0xff]
      %v194 = vld [vmem:[%s165 + $0xb8] sm:$0xff]
      %v195 = vld [vmem:[%s165 + $0xc0] sm:$0xff]
      %v196 = vld [vmem:[%s165 + $0xc8] sm:$0xff]
      %v197 = vld [vmem:[%s165 + $0xd0] sm:$0xff]
      %v198 = vld [vmem:[%s165 + $0xd8] sm:$0xff]
      %v199 = vld [vmem:[%s165 + $0xe0] sm:$0xff]
      %v200 = vld [vmem:[%s165 + $0xe8] sm:$0xff]
      %v201 = vld [vmem:[%s165 + $0xf0] sm:$0xff]
      %v202 = vld [vmem:[%s165 + $0xf8] sm:$0xff]
      %v203 = vld [vmem:[%s165 + $0x100] sm:$0xff]
      %v204 = vld [vmem:[%s165 + $0x108] sm:$0xff]
      %v205 = vld [vmem:[%s165 + $0x110] sm:$0xff]
      %v206 = vld [vmem:[%s165 + $0x118] sm:$0xff]
      %v207 = vld [vmem:[%s165 + $0x120] sm:$0xff]
      %v208 = vld [vmem:[%s165 + $0x128] sm:$0xff]
      %v209 = vld [vmem:[%s165 + $0x130] sm:$0xff]
      %v210 = vld [vmem:[%s165 + $0x138] sm:$0xff]
      %v211 = vld [vmem:[%s165 + $0x140] sm:$0xff]
      %v212 = vld [vmem:[%s165 + $0x148] sm:$0xff]
      %v213 = vld [vmem:[%s165 + $0x150] sm:$0xff]
      %v214 = vld [vmem:[%s165 + $0x158] sm:$0xff]
      %v215 = vld [vmem:[%s165 + $0x160] sm:$0xff]
      %v216 = vld [vmem:[%s165 + $0x168] sm:$0xff]
      %v217 = vld [vmem:[%s165 + $0x170] sm:$0xff]
      %v218 = vld [vmem:[%s165 + $0x178] sm:$0xff]
      %v219 = vld [vmem:[%s165 + $0x1] sm:$0xff]
      %v220 = vld [vmem:[%s165 + $0x9] sm:$0xff]
      %v221 = vld [vmem:[%s165 + $0x11] sm:$0xff]
      %v222 = vld [vmem:[%s165 + $0x19] sm:$0xff]
      %v223 = vld [vmem:[%s165 + $0x21] sm:$0xff]
      %v224 = vld [vmem:[%s165 + $0x29] sm:$0xff]
      %v225 = vld [vmem:[%s165 + $0x31] sm:$0xff]
      %v226 = vld [vmem:[%s165 + $0x39] sm:$0xff]
      %v227 = vld [vmem:[%s165 + $0x41] sm:$0xff]
      %v228 = vld [vmem:[%s165 + $0x49] sm:$0xff]
      %v229 = vld [vmem:[%s165 + $0x51] sm:$0xff]
      %v230 = vld [vmem:[%s165 + $0x59] sm:$0xff]
      %v231 = vld [vmem:[%s165 + $0x61] sm:$0xff]
      %v232 = vld [vmem:[%s165 + $0x69] sm:$0xff]
      %v233 = vld [vmem:[%s165 + $0x71] sm:$0xff]
      %v234 = vld [vmem:[%s165 + $0x79] sm:$0xff]
      %v235 = vld [vmem:[%s165 + $0x81] sm:$0xff]
      %v236 = vld [vmem:[%s165 + $0x89] sm:$0xff]
      %v237 = vld [vmem:[%s165 + $0x91] sm:$0xff]
      %v238 = vld [vmem:[%s165 + $0x99] sm:$0xff]
      %v239 = vld [vmem:[%s165 + $0xa1] sm:$0xff]
      %v240 = vld [vmem:[%s165 + $0xa9] sm:$0xff]
      %v241 = vld [vmem:[%s165 + $0xb1] sm:$0xff]
      %v242 = vld [vmem:[%s165 + $0xb9] sm:$0xff]
      %v243 = vld [vmem:[%s165 + $0xc1] sm:$0xff]
      %v244 = vld [vmem:[%s165 + $0xc9] sm:$0xff]
      %v245 = vld [vmem:[%s165 + $0xd1] sm:$0xff]
      %v246 = vld [vmem:[%s165 + $0xd9] sm:$0xff]
      %v247 = vld [vmem:[%s165 + $0xe1] sm:$0xff]
      %v248 = vld [vmem:[%s165 + $0xe9] sm:$0xff]
      %v249 = vld [vmem:[%s165 + $0xf1] sm:$0xff]
      %v250 = vld [vmem:[%s165 + $0xf9] sm:$0xff]
      %v251 = vld [vmem:[%s165 + $0x101] sm:$0xff]
      %v252 = vld [vmem:[%s165 + $0x109] sm:$0xff]
      %v253 = vld [vmem:[%s165 + $0x111] sm:$0xff]
      %v254 = vld [vmem:[%s165 + $0x119] sm:$0xff]
      %v255 = vld [vmem:[%s165 + $0x121] sm:$0xff]
      %v256 = vld [vmem:[%s165 + $0x129] sm:$0xff]
      %v257 = vld [vmem:[%s165 + $0x131] sm:$0xff]
      %v258 = vld [vmem:[%s165 + $0x139] sm:$0xff]
      %v259 = vld [vmem:[%s165 + $0x141] sm:$0xff]
      %v260 = vld [vmem:[%s165 + $0x149] sm:$0xff]
      %v261 = vld [vmem:[%s165 + $0x151] sm:$0xff]
      %v262 = vld [vmem:[%s165 + $0x159] sm:$0xff]
      %v263 = vld [vmem:[%s165 + $0x161] sm:$0xff]
      %v264 = vld [vmem:[%s165 + $0x169] sm:$0xff]
      %v265 = vld [vmem:[%s165 + $0x171] sm:$0xff]
      %v266 = vld [vmem:[%s165 + $0x179] sm:$0xff]
      %v267 = vld [vmem:[%s165 + $0x2] sm:$0xff]
      %v268 = vld [vmem:[%s165 + $0xa] sm:$0xff]
      %v269 = vld [vmem:[%s165 + $0x12] sm:$0xff]
      %v270 = vld [vmem:[%s165 + $0x1a] sm:$0xff]
      %v271 = vld [vmem:[%s165 + $0x22] sm:$0xff]
      %v272 = vld [vmem:[%s165 + $0x2a] sm:$0xff]
      %v273 = vld [vmem:[%s165 + $0x32] sm:$0xff]
      %v274 = vld [vmem:[%s165 + $0x3a] sm:$0xff]
      %v275 = vld [vmem:[%s165 + $0x42] sm:$0xff]
      %v276 = vld [vmem:[%s165 + $0x4a] sm:$0xff]
      %v277 = vld [vmem:[%s165 + $0x52] sm:$0xff]
      %v278 = vld [vmem:[%s165 + $0x5a] sm:$0xff]
      %v279 = vld [vmem:[%s165 + $0x62] sm:$0xff]
      %v280 = vld [vmem:[%s165 + $0x6a] sm:$0xff]
      %v281 = vld [vmem:[%s165 + $0x72] sm:$0xff]
      %v282 = vld [vmem:[%s165 + $0x7a] sm:$0xff]
      %v283 = vld [vmem:[%s165 + $0x82] sm:$0xff]
      %v284 = vld [vmem:[%s165 + $0x8a] sm:$0xff]
      %v285 = vld [vmem:[%s165 + $0x92] sm:$0xff]
      %v286 = vld [vmem:[%s165 + $0x9a] sm:$0xff]
      %v287 = vld [vmem:[%s165 + $0xa2] sm:$0xff]
      %v288 = vld [vmem:[%s165 + $0xaa] sm:$0xff]
      %v289 = vld [vmem:[%s165 + $0xb2] sm:$0xff]
      %v290 = vld [vmem:[%s165 + $0xba] sm:$0xff]
      %v291 = vld [vmem:[%s165 + $0xc2] sm:$0xff]
      %v292 = vld [vmem:[%s165 + $0xca] sm:$0xff]
      %v293 = vld [vmem:[%s165 + $0xd2] sm:$0xff]
      %v294 = vld [vmem:[%s165 + $0xda] sm:$0xff]
      %v295 = vld [vmem:[%s165 + $0xe2] sm:$0xff]
      %v296 = vld [vmem:[%s165 + $0xea] sm:$0xff]
      %v297 = vld [vmem:[%s165 + $0xf2] sm:$0xff]
      %v298 = vld [vmem:[%s165 + $0xfa] sm:$0xff]
      %v299 = vld [vmem:[%s165 + $0x102] sm:$0xff]
      %v300 = vld [vmem:[%s165 + $0x10a] sm:$0xff]
      %v301 = vld [vmem:[%s165 + $0x112] sm:$0xff]
      %v302 = vld [vmem:[%s165 + $0x11a] sm:$0xff]
      %v303 = vld [vmem:[%s165 + $0x122] sm:$0xff]
      %v304 = vld [vmem:[%s165 + $0x12a] sm:$0xff]
      %v305 = vld [vmem:[%s165 + $0x132] sm:$0xff]
      %v306 = vld [vmem:[%s165 + $0x13a] sm:$0xff]
      %v307 = vld [vmem:[%s165 + $0x142] sm:$0xff]
      %v308 = vld [vmem:[%s165 + $0x14a] sm:$0xff]
      %v309 = vld [vmem:[%s165 + $0x152] sm:$0xff]
      %v310 = vld [vmem:[%s165 + $0x15a] sm:$0xff]
      %v311 = vld [vmem:[%s165 + $0x162] sm:$0xff]
      %v312 = vld [vmem:[%s165 + $0x16a] sm:$0xff]
      %v313 = vld [vmem:[%s165 + $0x172] sm:$0xff]
      %v314 = vld [vmem:[%s165 + $0x17a] sm:$0xff]
      %v315 = vld [vmem:[%s165 + $0x180] sm:$0xff]
      %v316 = vld [vmem:[%s165 + $0x188] sm:$0xff]
      %v317 = vld [vmem:[%s165 + $0x190] sm:$0xff]
      %v318 = vld [vmem:[%s165 + $0x181] sm:$0xff]
      %v319 = vld [vmem:[%s165 + $0x189] sm:$0xff]
      %v320 = vld [vmem:[%s165 + $0x191] sm:$0xff]
      %v321 = vld [vmem:[%s165 + $0x182] sm:$0xff]
      %v322 = vld [vmem:[%s165 + $0x18a] sm:$0xff]
      %v323 = vld [vmem:[%s165 + $0x192] sm:$0xff]
      %v324 = vld [vmem:[%s165 + $0x198] sm:$0xff]
      %v325 = vld [vmem:[%s165 + $0x1a0] sm:$0xff]
      %v326 = vld [vmem:[%s165 + $0x1a8] sm:$0xff]
      %v327 = vld [vmem:[%s165 + $0x199] sm:$0xff]
      %v328 = vld [vmem:[%s165 + $0x1a1] sm:$0xff]
      %v329 = vld [vmem:[%s165 + $0x1a9] sm:$0xff]
      %v330 = vld [vmem:[%s165 + $0x19a] sm:$0xff]
      %v331 = vld [vmem:[%s165 + $0x1a2] sm:$0xff]
      %v332 = vld [vmem:[%s165 + $0x1aa] sm:$0xff]
      %381 = vrot.lane.b32.xlu0 %v219, 4
      %v382 = vpop.permute.xlu0 %381
      %383 = vrot.lane.b32.xlu0 %v220, 4
      %v384 = vpop.permute.xlu0 %383
      %385 = vrot.lane.b32.xlu0 %v221, 4
      %v386 = vpop.permute.xlu0 %385
      %387 = vrot.lane.b32.xlu0 %v222, 4
      %v388 = vpop.permute.xlu0 %387
      %389 = vrot.lane.b32.xlu0 %v223, 4
      %v390 = vpop.permute.xlu0 %389
      %391 = vrot.lane.b32.xlu0 %v224, 4
      %v392 = vpop.permute.xlu0 %391
      %393 = vrot.lane.b32.xlu0 %v225, 4
      %v394 = vpop.permute.xlu0 %393
      %395 = vrot.lane.b32.xlu0 %v226, 4
      %v396 = vpop.permute.xlu0 %395
      %397 = vrot.lane.b32.xlu0 %v227, 4
      %v398 = vpop.permute.xlu0 %397
      %399 = vrot.lane.b32.xlu0 %v228, 4
      %v400 = vpop.permute.xlu0 %399
      %401 = vrot.lane.b32.xlu0 %v229, 4
      %v402 = vpop.permute.xlu0 %401
      %403 = vrot.lane.b32.xlu0 %v230, 4
      %v404 = vpop.permute.xlu0 %403
      %405 = vrot.lane.b32.xlu0 %v231, 4
      %v406 = vpop.permute.xlu0 %405
      %407 = vrot.lane.b32.xlu0 %v232, 4
      %v408 = vpop.permute.xlu0 %407
      %409 = vrot.lane.b32.xlu0 %v233, 4
      %v410 = vpop.permute.xlu0 %409
      %411 = vrot.lane.b32.xlu0 %v234, 4
      %v412 = vpop.permute.xlu0 %411
      %413 = vrot.lane.b32.xlu0 %v235, 4
      %v414 = vpop.permute.xlu0 %413
      %415 = vrot.lane.b32.xlu0 %v236, 4
      %v416 = vpop.permute.xlu0 %415
      %417 = vrot.lane.b32.xlu0 %v237, 4
      %v418 = vpop.permute.xlu0 %417
      %419 = vrot.lane.b32.xlu0 %v238, 4
      %v420 = vpop.permute.xlu0 %419
      %421 = vrot.lane.b32.xlu0 %v239, 4
      %v422 = vpop.permute.xlu0 %421
      %423 = vrot.lane.b32.xlu0 %v240, 4
      %v424 = vpop.permute.xlu0 %423
      %425 = vrot.lane.b32.xlu0 %v241, 4
      %v426 = vpop.permute.xlu0 %425
      %427 = vrot.lane.b32.xlu0 %v242, 4
      %v428 = vpop.permute.xlu0 %427
      %429 = vrot.lane.b32.xlu0 %v243, 4
      %v430 = vpop.permute.xlu0 %429
      %431 = vrot.lane.b32.xlu0 %v244, 4
      %v432 = vpop.permute.xlu0 %431
      %433 = vrot.lane.b32.xlu0 %v245, 4
      %v434 = vpop.permute.xlu0 %433
      %435 = vrot.lane.b32.xlu0 %v246, 4
      %v436 = vpop.permute.xlu0 %435
      %437 = vrot.lane.b32.xlu0 %v247, 4
      %v438 = vpop.permute.xlu0 %437
      %439 = vrot.lane.b32.xlu0 %v248, 4
      %v440 = vpop.permute.xlu0 %439
      %441 = vrot.lane.b32.xlu0 %v249, 4
      %v442 = vpop.permute.xlu0 %441
      %443 = vrot.lane.b32.xlu0 %v250, 4
      %v444 = vpop.permute.xlu0 %443
      %445 = vrot.lane.b32.xlu0 %v251, 4
      %v446 = vpop.permute.xlu0 %445
      %447 = vrot.lane.b32.xlu0 %v252, 4
      %v448 = vpop.permute.xlu0 %447
      %449 = vrot.lane.b32.xlu0 %v253, 4
      %v450 = vpop.permute.xlu0 %449
      %451 = vrot.lane.b32.xlu0 %v254, 4
      %v452 = vpop.permute.xlu0 %451
      %453 = vrot.lane.b32.xlu0 %v255, 4
      %v454 = vpop.permute.xlu0 %453
      %455 = vrot.lane.b32.xlu0 %v256, 4
      %v456 = vpop.permute.xlu0 %455
      %457 = vrot.lane.b32.xlu0 %v257, 4
      %v458 = vpop.permute.xlu0 %457
      %459 = vrot.lane.b32.xlu0 %v258, 4
      %v460 = vpop.permute.xlu0 %459
      %461 = vrot.lane.b32.xlu0 %v259, 4
      %v462 = vpop.permute.xlu0 %461
      %463 = vrot.lane.b32.xlu0 %v260, 4
      %v464 = vpop.permute.xlu0 %463
      %465 = vrot.lane.b32.xlu0 %v261, 4
      %v466 = vpop.permute.xlu0 %465
      %467 = vrot.lane.b32.xlu0 %v262, 4
      %v468 = vpop.permute.xlu0 %467
      %469 = vrot.lane.b32.xlu0 %v263, 4
      %v470 = vpop.permute.xlu0 %469
      %471 = vrot.lane.b32.xlu0 %v264, 4
      %v472 = vpop.permute.xlu0 %471
      %473 = vrot.lane.b32.xlu0 %v265, 4
      %v474 = vpop.permute.xlu0 %473
      %475 = vrot.lane.b32.xlu0 %v266, 4
      %v476 = vpop.permute.xlu0 %475
      %573 = vrot.lane.b32.xlu0 %v267, 8
      %v574 = vpop.permute.xlu0 %573
      %575 = vrot.lane.b32.xlu0 %v268, 8
      %v576 = vpop.permute.xlu0 %575
      %577 = vrot.lane.b32.xlu0 %v269, 8
      %v578 = vpop.permute.xlu0 %577
      %579 = vrot.lane.b32.xlu0 %v270, 8
      %v580 = vpop.permute.xlu0 %579
      %581 = vrot.lane.b32.xlu0 %v271, 8
      %v582 = vpop.permute.xlu0 %581
      %583 = vrot.lane.b32.xlu0 %v272, 8
      %v584 = vpop.permute.xlu0 %583
      %585 = vrot.lane.b32.xlu0 %v273, 8
      %v586 = vpop.permute.xlu0 %585
      %587 = vrot.lane.b32.xlu0 %v274, 8
      %v588 = vpop.permute.xlu0 %587
      %589 = vrot.lane.b32.xlu0 %v275, 8
      %v590 = vpop.permute.xlu0 %589
      %591 = vrot.lane.b32.xlu0 %v276, 8
      %v592 = vpop.permute.xlu0 %591
      %593 = vrot.lane.b32.xlu0 %v277, 8
      %v594 = vpop.permute.xlu0 %593
      %595 = vrot.lane.b32.xlu0 %v278, 8
      %v596 = vpop.permute.xlu0 %595
      %597 = vrot.lane.b32.xlu0 %v279, 8
      %v598 = vpop.permute.xlu0 %597
      %599 = vrot.lane.b32.xlu0 %v280, 8
      %v600 = vpop.permute.xlu0 %599
      %601 = vrot.lane.b32.xlu0 %v281, 8
      %v602 = vpop.permute.xlu0 %601
      %603 = vrot.lane.b32.xlu0 %v282, 8
      %v604 = vpop.permute.xlu0 %603
      %605 = vrot.lane.b32.xlu0 %v283, 8
      %v606 = vpop.permute.xlu0 %605
      %607 = vrot.lane.b32.xlu0 %v284, 8
      %v608 = vpop.permute.xlu0 %607
      %609 = vrot.lane.b32.xlu0 %v285, 8
      %v610 = vpop.permute.xlu0 %609
      %611 = vrot.lane.b32.xlu0 %v286, 8
      %v612 = vpop.permute.xlu0 %611
      %613 = vrot.lane.b32.xlu0 %v287, 8
      %v614 = vpop.permute.xlu0 %613
      %615 = vrot.lane.b32.xlu0 %v288, 8
      %v616 = vpop.permute.xlu0 %615
      %617 = vrot.lane.b32.xlu0 %v289, 8
      %v618 = vpop.permute.xlu0 %617
      %619 = vrot.lane.b32.xlu0 %v290, 8
      %v620 = vpop.permute.xlu0 %619
      %621 = vrot.lane.b32.xlu0 %v291, 8
      %v622 = vpop.permute.xlu0 %621
      %623 = vrot.lane.b32.xlu0 %v292, 8
      %v624 = vpop.permute.xlu0 %623
      %625 = vrot.lane.b32.xlu0 %v293, 8
      %v626 = vpop.permute.xlu0 %625
      %627 = vrot.lane.b32.xlu0 %v294, 8
      %v628 = vpop.permute.xlu0 %627
      %629 = vrot.lane.b32.xlu0 %v295, 8
      %v630 = vpop.permute.xlu0 %629
      %631 = vrot.lane.b32.xlu0 %v296, 8
      %v632 = vpop.permute.xlu0 %631
      %633 = vrot.lane.b32.xlu0 %v297, 8
      %v634 = vpop.permute.xlu0 %633
      %635 = vrot.lane.b32.xlu0 %v298, 8
      %v636 = vpop.permute.xlu0 %635
      %637 = vrot.lane.b32.xlu0 %v299, 8
      %v638 = vpop.permute.xlu0 %637
      %639 = vrot.lane.b32.xlu0 %v300, 8
      %v640 = vpop.permute.xlu0 %639
      %641 = vrot.lane.b32.xlu0 %v301, 8
      %v642 = vpop.permute.xlu0 %641
      %643 = vrot.lane.b32.xlu0 %v302, 8
      %v644 = vpop.permute.xlu0 %643
      %645 = vrot.lane.b32.xlu0 %v303, 8
      %v646 = vpop.permute.xlu0 %645
      %647 = vrot.lane.b32.xlu0 %v304, 8
      %v648 = vpop.permute.xlu0 %647
      %649 = vrot.lane.b32.xlu0 %v305, 8
      %v650 = vpop.permute.xlu0 %649
      %651 = vrot.lane.b32.xlu0 %v306, 8
      %v652 = vpop.permute.xlu0 %651
      %653 = vrot.lane.b32.xlu0 %v307, 8
      %v654 = vpop.permute.xlu0 %653
      %655 = vrot.lane.b32.xlu0 %v308, 8
      %v656 = vpop.permute.xlu0 %655
      %657 = vrot.lane.b32.xlu0 %v309, 8
      %v658 = vpop.permute.xlu0 %657
      %659 = vrot.lane.b32.xlu0 %v310, 8
      %v660 = vpop.permute.xlu0 %659
      %661 = vrot.lane.b32.xlu0 %v311, 8
      %v662 = vpop.permute.xlu0 %661
      %663 = vrot.lane.b32.xlu0 %v312, 8
      %v664 = vpop.permute.xlu0 %663
      %665 = vrot.lane.b32.xlu0 %v313, 8
      %v666 = vpop.permute.xlu0 %665
      %667 = vrot.lane.b32.xlu0 %v314, 8
      %v668 = vpop.permute.xlu0 %667
      %765 = vrot.lane.b32.xlu0 %v174, 12
      %v766 = vpop.permute.xlu0 %765
      %767 = vrot.lane.b32.xlu0 %v175, 12
      %v768 = vpop.permute.xlu0 %767
      %769 = vrot.lane.b32.xlu0 %v176, 12
      %v770 = vpop.permute.xlu0 %769
      %771 = vrot.lane.b32.xlu0 %v177, 12
      %v772 = vpop.permute.xlu0 %771
      %773 = vrot.lane.b32.xlu0 %v178, 12
      %v774 = vpop.permute.xlu0 %773
      %775 = vrot.lane.b32.xlu0 %v179, 12
      %v776 = vpop.permute.xlu0 %775
      %777 = vrot.lane.b32.xlu0 %v180, 12
      %v778 = vpop.permute.xlu0 %777
      %779 = vrot.lane.b32.xlu0 %v181, 12
      %v780 = vpop.permute.xlu0 %779
      %781 = vrot.lane.b32.xlu0 %v182, 12
      %v782 = vpop.permute.xlu0 %781
      %783 = vrot.lane.b32.xlu0 %v183, 12
      %v784 = vpop.permute.xlu0 %783
      %785 = vrot.lane.b32.xlu0 %v184, 12
      %v786 = vpop.permute.xlu0 %785
      %787 = vrot.lane.b32.xlu0 %v185, 12
      %v788 = vpop.permute.xlu0 %787
      %789 = vrot.lane.b32.xlu0 %v186, 12
      %v790 = vpop.permute.xlu0 %789
      %791 = vrot.lane.b32.xlu0 %v187, 12
      %v792 = vpop.permute.xlu0 %791
      %793 = vrot.lane.b32.xlu0 %v188, 12
      %v794 = vpop.permute.xlu0 %793
      %795 = vrot.lane.b32.xlu0 %v189, 12
      %v796 = vpop.permute.xlu0 %795
      %797 = vrot.lane.b32.xlu0 %v190, 12
      %v798 = vpop.permute.xlu0 %797
      %799 = vrot.lane.b32.xlu0 %v191, 12
      %v800 = vpop.permute.xlu0 %799
      %801 = vrot.lane.b32.xlu0 %v192, 12
      %v802 = vpop.permute.xlu0 %801
      %803 = vrot.lane.b32.xlu0 %v193, 12
      %v804 = vpop.permute.xlu0 %803
      %805 = vrot.lane.b32.xlu0 %v194, 12
      %v806 = vpop.permute.xlu0 %805
      %807 = vrot.lane.b32.xlu0 %v195, 12
      %v808 = vpop.permute.xlu0 %807
      %809 = vrot.lane.b32.xlu0 %v196, 12
      %v810 = vpop.permute.xlu0 %809
      %811 = vrot.lane.b32.xlu0 %v197, 12
      %v812 = vpop.permute.xlu0 %811
      %813 = vrot.lane.b32.xlu0 %v198, 12
      %v814 = vpop.permute.xlu0 %813
      %815 = vrot.lane.b32.xlu0 %v199, 12
      %v816 = vpop.permute.xlu0 %815
      %817 = vrot.lane.b32.xlu0 %v200, 12
      %v818 = vpop.permute.xlu0 %817
      %819 = vrot.lane.b32.xlu0 %v201, 12
      %v820 = vpop.permute.xlu0 %819
      %821 = vrot.lane.b32.xlu0 %v202, 12
      %v822 = vpop.permute.xlu0 %821
      %823 = vrot.lane.b32.xlu0 %v203, 12
      %v824 = vpop.permute.xlu0 %823
      %825 = vrot.lane.b32.xlu0 %v204, 12
      %v826 = vpop.permute.xlu0 %825
      %827 = vrot.lane.b32.xlu0 %v205, 12
      %v828 = vpop.permute.xlu0 %827
      %829 = vrot.lane.b32.xlu0 %v206, 12
      %v830 = vpop.permute.xlu0 %829
      %831 = vrot.lane.b32.xlu0 %v207, 12
      %v832 = vpop.permute.xlu0 %831
      %833 = vrot.lane.b32.xlu0 %v208, 12
      %v834 = vpop.permute.xlu0 %833
      %835 = vrot.lane.b32.xlu0 %v209, 12
      %v836 = vpop.permute.xlu0 %835
      %837 = vrot.lane.b32.xlu0 %v210, 12
      %v838 = vpop.permute.xlu0 %837
      %839 = vrot.lane.b32.xlu0 %v211, 12
      %v840 = vpop.permute.xlu0 %839
      %841 = vrot.lane.b32.xlu0 %v212, 12
      %v842 = vpop.permute.xlu0 %841
      %843 = vrot.lane.b32.xlu0 %v213, 12
      %v844 = vpop.permute.xlu0 %843
      %845 = vrot.lane.b32.xlu0 %v214, 12
      %v846 = vpop.permute.xlu0 %845
      %847 = vrot.lane.b32.xlu0 %v215, 12
      %v848 = vpop.permute.xlu0 %847
      %849 = vrot.lane.b32.xlu0 %v216, 12
      %v850 = vpop.permute.xlu0 %849
      %851 = vrot.lane.b32.xlu0 %v217, 12
      %v852 = vpop.permute.xlu0 %851
      %853 = vrot.lane.b32.xlu0 %v218, 12
      %v854 = vpop.permute.xlu0 %853
      %855 = vrot.lane.b32.xlu0 %v315, 12
      %v856 = vpop.permute.xlu0 %855
      %857 = vrot.lane.b32.xlu0 %v316, 12
      %v858 = vpop.permute.xlu0 %857
      %859 = vrot.lane.b32.xlu0 %v317, 12
      %v860 = vpop.permute.xlu0 %859
      %912 = vrot.lane.b32.xlu0 %v222, 16
      %v913 = vpop.permute.xlu0 %912
      %914 = vrot.lane.b32.xlu0 %v223, 16
      %v915 = vpop.permute.xlu0 %914
      %916 = vrot.lane.b32.xlu0 %v224, 16
      %v917 = vpop.permute.xlu0 %916
      %918 = vrot.lane.b32.xlu0 %v225, 16
      %v919 = vpop.permute.xlu0 %918
      %920 = vrot.lane.b32.xlu0 %v226, 16
      %v921 = vpop.permute.xlu0 %920
      %922 = vrot.lane.b32.xlu0 %v227, 16
      %v923 = vpop.permute.xlu0 %922
      %924 = vrot.lane.b32.xlu0 %v228, 16
      %v925 = vpop.permute.xlu0 %924
      %926 = vrot.lane.b32.xlu0 %v229, 16
      %v927 = vpop.permute.xlu0 %926
      %928 = vrot.lane.b32.xlu0 %v230, 16
      %v929 = vpop.permute.xlu0 %928
      %930 = vrot.lane.b32.xlu0 %v231, 16
      %v931 = vpop.permute.xlu0 %930
      %932 = vrot.lane.b32.xlu0 %v232, 16
      %v933 = vpop.permute.xlu0 %932
      %934 = vrot.lane.b32.xlu0 %v233, 16
      %v935 = vpop.permute.xlu0 %934
      %936 = vrot.lane.b32.xlu0 %v234, 16
      %v937 = vpop.permute.xlu0 %936
      %938 = vrot.lane.b32.xlu0 %v235, 16
      %v939 = vpop.permute.xlu0 %938
      %940 = vrot.lane.b32.xlu0 %v236, 16
      %v941 = vpop.permute.xlu0 %940
      %942 = vrot.lane.b32.xlu0 %v237, 16
      %v943 = vpop.permute.xlu0 %942
      %944 = vrot.lane.b32.xlu0 %v238, 16
      %v945 = vpop.permute.xlu0 %944
      %946 = vrot.lane.b32.xlu0 %v239, 16
      %v947 = vpop.permute.xlu0 %946
      %948 = vrot.lane.b32.xlu0 %v240, 16
      %v949 = vpop.permute.xlu0 %948
      %950 = vrot.lane.b32.xlu0 %v241, 16
      %v951 = vpop.permute.xlu0 %950
      %952 = vrot.lane.b32.xlu0 %v242, 16
      %v953 = vpop.permute.xlu0 %952
      %954 = vrot.lane.b32.xlu0 %v243, 16
      %v955 = vpop.permute.xlu0 %954
      %956 = vrot.lane.b32.xlu0 %v244, 16
      %v957 = vpop.permute.xlu0 %956
      %958 = vrot.lane.b32.xlu0 %v245, 16
      %v959 = vpop.permute.xlu0 %958
      %960 = vrot.lane.b32.xlu0 %v246, 16
      %v961 = vpop.permute.xlu0 %960
      %962 = vrot.lane.b32.xlu0 %v247, 16
      %v963 = vpop.permute.xlu0 %962
      %964 = vrot.lane.b32.xlu0 %v248, 16
      %v965 = vpop.permute.xlu0 %964
      %966 = vrot.lane.b32.xlu0 %v249, 16
      %v967 = vpop.permute.xlu0 %966
      %968 = vrot.lane.b32.xlu0 %v250, 16
      %v969 = vpop.permute.xlu0 %968
      %970 = vrot.lane.b32.xlu0 %v251, 16
      %v971 = vpop.permute.xlu0 %970
      %972 = vrot.lane.b32.xlu0 %v252, 16
      %v973 = vpop.permute.xlu0 %972
      %974 = vrot.lane.b32.xlu0 %v253, 16
      %v975 = vpop.permute.xlu0 %974
      %976 = vrot.lane.b32.xlu0 %v254, 16
      %v977 = vpop.permute.xlu0 %976
      %978 = vrot.lane.b32.xlu0 %v255, 16
      %v979 = vpop.permute.xlu0 %978
      %980 = vrot.lane.b32.xlu0 %v256, 16
      %v981 = vpop.permute.xlu0 %980
      %982 = vrot.lane.b32.xlu0 %v257, 16
      %v983 = vpop.permute.xlu0 %982
      %984 = vrot.lane.b32.xlu0 %v258, 16
      %v985 = vpop.permute.xlu0 %984
      %986 = vrot.lane.b32.xlu0 %v259, 16
      %v987 = vpop.permute.xlu0 %986
      %988 = vrot.lane.b32.xlu0 %v260, 16
      %v989 = vpop.permute.xlu0 %988
      %990 = vrot.lane.b32.xlu0 %v261, 16
      %v991 = vpop.permute.xlu0 %990
      %992 = vrot.lane.b32.xlu0 %v262, 16
      %v993 = vpop.permute.xlu0 %992
      %994 = vrot.lane.b32.xlu0 %v263, 16
      %v995 = vpop.permute.xlu0 %994
      %996 = vrot.lane.b32.xlu0 %v264, 16
      %v997 = vpop.permute.xlu0 %996
      %998 = vrot.lane.b32.xlu0 %v265, 16
      %v999 = vpop.permute.xlu0 %998
      %1000 = vrot.lane.b32.xlu0 %v266, 16
      %v1001 = vpop.permute.xlu0 %1000
      %1002 = vrot.lane.b32.xlu0 %v318, 16
      %v1003 = vpop.permute.xlu0 %1002
      %1004 = vrot.lane.b32.xlu0 %v319, 16
      %v1005 = vpop.permute.xlu0 %1004
      %1006 = vrot.lane.b32.xlu0 %v320, 16
      %v1007 = vpop.permute.xlu0 %1006
      %1059 = vrot.lane.b32.xlu0 %v270, 20
      %v1060 = vpop.permute.xlu0 %1059
      %1061 = vrot.lane.b32.xlu0 %v271, 20
      %v1062 = vpop.permute.xlu0 %1061
      %1063 = vrot.lane.b32.xlu0 %v272, 20
      %v1064 = vpop.permute.xlu0 %1063
      %1065 = vrot.lane.b32.xlu0 %v273, 20
      %v1066 = vpop.permute.xlu0 %1065
      %1067 = vrot.lane.b32.xlu0 %v274, 20
      %v1068 = vpop.permute.xlu0 %1067
      %1069 = vrot.lane.b32.xlu0 %v275, 20
      %v1070 = vpop.permute.xlu0 %1069
      %1071 = vrot.lane.b32.xlu0 %v276, 20
      %v1072 = vpop.permute.xlu0 %1071
      %1073 = vrot.lane.b32.xlu0 %v277, 20
      %v1074 = vpop.permute.xlu0 %1073
      %1075 = vrot.lane.b32.xlu0 %v278, 20
      %v1076 = vpop.permute.xlu0 %1075
      %1077 = vrot.lane.b32.xlu0 %v279, 20
      %v1078 = vpop.permute.xlu0 %1077
      %1079 = vrot.lane.b32.xlu0 %v280, 20
      %v1080 = vpop.permute.xlu0 %1079
      %1081 = vrot.lane.b32.xlu0 %v281, 20
      %v1082 = vpop.permute.xlu0 %1081
      %1083 = vrot.lane.b32.xlu0 %v282, 20
      %v1084 = vpop.permute.xlu0 %1083
      %1085 = vrot.lane.b32.xlu0 %v283, 20
      %v1086 = vpop.permute.xlu0 %1085
      %1087 = vrot.lane.b32.xlu0 %v284, 20
      %v1088 = vpop.permute.xlu0 %1087
      %1089 = vrot.lane.b32.xlu0 %v285, 20
      %v1090 = vpop.permute.xlu0 %1089
      %1091 = vrot.lane.b32.xlu0 %v286, 20
      %v1092 = vpop.permute.xlu0 %1091
      %1093 = vrot.lane.b32.xlu0 %v287, 20
      %v1094 = vpop.permute.xlu0 %1093
      %1095 = vrot.lane.b32.xlu0 %v288, 20
      %v1096 = vpop.permute.xlu0 %1095
      %1097 = vrot.lane.b32.xlu0 %v289, 20
      %v1098 = vpop.permute.xlu0 %1097
      %1099 = vrot.lane.b32.xlu0 %v290, 20
      %v1100 = vpop.permute.xlu0 %1099
      %1101 = vrot.lane.b32.xlu0 %v291, 20
      %v1102 = vpop.permute.xlu0 %1101
      %1103 = vrot.lane.b32.xlu0 %v292, 20
      %v1104 = vpop.permute.xlu0 %1103
      %1105 = vrot.lane.b32.xlu0 %v293, 20
      %v1106 = vpop.permute.xlu0 %1105
      %1107 = vrot.lane.b32.xlu0 %v294, 20
      %v1108 = vpop.permute.xlu0 %1107
      %1109 = vrot.lane.b32.xlu0 %v295, 20
      %v1110 = vpop.permute.xlu0 %1109
      %1111 = vrot.lane.b32.xlu0 %v296, 20
      %v1112 = vpop.permute.xlu0 %1111
      %1113 = vrot.lane.b32.xlu0 %v297, 20
      %v1114 = vpop.permute.xlu0 %1113
      %1115 = vrot.lane.b32.xlu0 %v298, 20
      %v1116 = vpop.permute.xlu0 %1115
      %1117 = vrot.lane.b32.xlu0 %v299, 20
      %v1118 = vpop.permute.xlu0 %1117
      %1119 = vrot.lane.b32.xlu0 %v300, 20
      %v1120 = vpop.permute.xlu0 %1119
      %1121 = vrot.lane.b32.xlu0 %v301, 20
      %v1122 = vpop.permute.xlu0 %1121
      %1123 = vrot.lane.b32.xlu0 %v302, 20
      %v1124 = vpop.permute.xlu0 %1123
      %1125 = vrot.lane.b32.xlu0 %v303, 20
      %v1126 = vpop.permute.xlu0 %1125
      %1127 = vrot.lane.b32.xlu0 %v304, 20
      %v1128 = vpop.permute.xlu0 %1127
      %1129 = vrot.lane.b32.xlu0 %v305, 20
      %v1130 = vpop.permute.xlu0 %1129
      %1131 = vrot.lane.b32.xlu0 %v306, 20
      %v1132 = vpop.permute.xlu0 %1131
      %1133 = vrot.lane.b32.xlu0 %v307, 20
      %v1134 = vpop.permute.xlu0 %1133
      %1135 = vrot.lane.b32.xlu0 %v308, 20
      %v1136 = vpop.permute.xlu0 %1135
      %1137 = vrot.lane.b32.xlu0 %v309, 20
      %v1138 = vpop.permute.xlu0 %1137
      %1139 = vrot.lane.b32.xlu0 %v310, 20
      %v1140 = vpop.permute.xlu0 %1139
      %1141 = vrot.lane.b32.xlu0 %v311, 20
      %v1142 = vpop.permute.xlu0 %1141
      %1143 = vrot.lane.b32.xlu0 %v312, 20
      %v1144 = vpop.permute.xlu0 %1143
      %1145 = vrot.lane.b32.xlu0 %v313, 20
      %v1146 = vpop.permute.xlu0 %1145
      %1147 = vrot.lane.b32.xlu0 %v314, 20
      %v1148 = vpop.permute.xlu0 %1147
      %1149 = vrot.lane.b32.xlu0 %v321, 20
      %v1150 = vpop.permute.xlu0 %1149
      %1151 = vrot.lane.b32.xlu0 %v322, 20
      %v1152 = vpop.permute.xlu0 %1151
      %1153 = vrot.lane.b32.xlu0 %v323, 20
      %v1154 = vpop.permute.xlu0 %1153
      %1206 = vrot.lane.b32.xlu0 %v177, 24
      %v1207 = vpop.permute.xlu0 %1206
      %1208 = vrot.lane.b32.xlu0 %v178, 24
      %v1209 = vpop.permute.xlu0 %1208
      %1210 = vrot.lane.b32.xlu0 %v179, 24
      %v1211 = vpop.permute.xlu0 %1210
      %1212 = vrot.lane.b32.xlu0 %v180, 24
      %v1213 = vpop.permute.xlu0 %1212
      %1214 = vrot.lane.b32.xlu0 %v181, 24
      %v1215 = vpop.permute.xlu0 %1214
      %1216 = vrot.lane.b32.xlu0 %v182, 24
      %v1217 = vpop.permute.xlu0 %1216
      %1218 = vrot.lane.b32.xlu0 %v183, 24
      %v1219 = vpop.permute.xlu0 %1218
      %1220 = vrot.lane.b32.xlu0 %v184, 24
      %v1221 = vpop.permute.xlu0 %1220
      %1222 = vrot.lane.b32.xlu0 %v185, 24
      %v1223 = vpop.permute.xlu0 %1222
      %1224 = vrot.lane.b32.xlu0 %v186, 24
      %v1225 = vpop.permute.xlu0 %1224
      %1226 = vrot.lane.b32.xlu0 %v187, 24
      %v1227 = vpop.permute.xlu0 %1226
      %1228 = vrot.lane.b32.xlu0 %v188, 24
      %v1229 = vpop.permute.xlu0 %1228
      %1230 = vrot.lane.b32.xlu0 %v189, 24
      %v1231 = vpop.permute.xlu0 %1230
      %1232 = vrot.lane.b32.xlu0 %v190, 24
      %v1233 = vpop.permute.xlu0 %1232
      %1234 = vrot.lane.b32.xlu0 %v191, 24
      %v1235 = vpop.permute.xlu0 %1234
      %1236 = vrot.lane.b32.xlu0 %v192, 24
      %v1237 = vpop.permute.xlu0 %1236
      %1238 = vrot.lane.b32.xlu0 %v193, 24
      %v1239 = vpop.permute.xlu0 %1238
      %1240 = vrot.lane.b32.xlu0 %v194, 24
      %v1241 = vpop.permute.xlu0 %1240
      %1242 = vrot.lane.b32.xlu0 %v195, 24
      %v1243 = vpop.permute.xlu0 %1242
      %1244 = vrot.lane.b32.xlu0 %v196, 24
      %v1245 = vpop.permute.xlu0 %1244
      %1246 = vrot.lane.b32.xlu0 %v197, 24
      %v1247 = vpop.permute.xlu0 %1246
      %1248 = vrot.lane.b32.xlu0 %v198, 24
      %v1249 = vpop.permute.xlu0 %1248
      %1250 = vrot.lane.b32.xlu0 %v199, 24
      %v1251 = vpop.permute.xlu0 %1250
      %1252 = vrot.lane.b32.xlu0 %v200, 24
      %v1253 = vpop.permute.xlu0 %1252
      %1254 = vrot.lane.b32.xlu0 %v201, 24
      %v1255 = vpop.permute.xlu0 %1254
      %1256 = vrot.lane.b32.xlu0 %v202, 24
      %v1257 = vpop.permute.xlu0 %1256
      %1258 = vrot.lane.b32.xlu0 %v203, 24
      %v1259 = vpop.permute.xlu0 %1258
      %1260 = vrot.lane.b32.xlu0 %v204, 24
      %v1261 = vpop.permute.xlu0 %1260
      %1262 = vrot.lane.b32.xlu0 %v205, 24
      %v1263 = vpop.permute.xlu0 %1262
      %1264 = vrot.lane.b32.xlu0 %v206, 24
      %v1265 = vpop.permute.xlu0 %1264
      %1266 = vrot.lane.b32.xlu0 %v207, 24
      %v1267 = vpop.permute.xlu0 %1266
      %1268 = vrot.lane.b32.xlu0 %v208, 24
      %v1269 = vpop.permute.xlu0 %1268
      %1270 = vrot.lane.b32.xlu0 %v209, 24
      %v1271 = vpop.permute.xlu0 %1270
      %1272 = vrot.lane.b32.xlu0 %v210, 24
      %v1273 = vpop.permute.xlu0 %1272
      %1274 = vrot.lane.b32.xlu0 %v211, 24
      %v1275 = vpop.permute.xlu0 %1274
      %1276 = vrot.lane.b32.xlu0 %v212, 24
      %v1277 = vpop.permute.xlu0 %1276
      %1278 = vrot.lane.b32.xlu0 %v213, 24
      %v1279 = vpop.permute.xlu0 %1278
      %1280 = vrot.lane.b32.xlu0 %v214, 24
      %v1281 = vpop.permute.xlu0 %1280
      %1282 = vrot.lane.b32.xlu0 %v215, 24
      %v1283 = vpop.permute.xlu0 %1282
      %1284 = vrot.lane.b32.xlu0 %v216, 24
      %v1285 = vpop.permute.xlu0 %1284
      %1286 = vrot.lane.b32.xlu0 %v217, 24
      %v1287 = vpop.permute.xlu0 %1286
      %1288 = vrot.lane.b32.xlu0 %v218, 24
      %v1289 = vpop.permute.xlu0 %1288
      %1290 = vrot.lane.b32.xlu0 %v315, 24
      %v1291 = vpop.permute.xlu0 %1290
      %1292 = vrot.lane.b32.xlu0 %v316, 24
      %v1293 = vpop.permute.xlu0 %1292
      %1294 = vrot.lane.b32.xlu0 %v317, 24
      %v1295 = vpop.permute.xlu0 %1294
      %1296 = vrot.lane.b32.xlu0 %v324, 24
      %v1297 = vpop.permute.xlu0 %1296
      %1298 = vrot.lane.b32.xlu0 %v325, 24
      %v1299 = vpop.permute.xlu0 %1298
      %1300 = vrot.lane.b32.xlu0 %v326, 24
      %v1301 = vpop.permute.xlu0 %1300
      %1353 = vrot.lane.b32.xlu0 %v225, 28
      %v1354 = vpop.permute.xlu0 %1353
      %1355 = vrot.lane.b32.xlu0 %v226, 28
      %v1356 = vpop.permute.xlu0 %1355
      %1357 = vrot.lane.b32.xlu0 %v227, 28
      %v1358 = vpop.permute.xlu0 %1357
      %1359 = vrot.lane.b32.xlu0 %v228, 28
      %v1360 = vpop.permute.xlu0 %1359
      %1361 = vrot.lane.b32.xlu0 %v229, 28
      %v1362 = vpop.permute.xlu0 %1361
      %1363 = vrot.lane.b32.xlu0 %v230, 28
      %v1364 = vpop.permute.xlu0 %1363
      %1365 = vrot.lane.b32.xlu0 %v231, 28
      %v1366 = vpop.permute.xlu0 %1365
      %1367 = vrot.lane.b32.xlu0 %v232, 28
      %v1368 = vpop.permute.xlu0 %1367
      %1369 = vrot.lane.b32.xlu0 %v233, 28
      %v1370 = vpop.permute.xlu0 %1369
      %1371 = vrot.lane.b32.xlu0 %v234, 28
      %v1372 = vpop.permute.xlu0 %1371
      %1373 = vrot.lane.b32.xlu0 %v235, 28
      %v1374 = vpop.permute.xlu0 %1373
      %1375 = vrot.lane.b32.xlu0 %v236, 28
      %v1376 = vpop.permute.xlu0 %1375
      %1377 = vrot.lane.b32.xlu0 %v237, 28
      %v1378 = vpop.permute.xlu0 %1377
      %1379 = vrot.lane.b32.xlu0 %v238, 28
      %v1380 = vpop.permute.xlu0 %1379
      %1381 = vrot.lane.b32.xlu0 %v239, 28
      %v1382 = vpop.permute.xlu0 %1381
      %1383 = vrot.lane.b32.xlu0 %v240, 28
      %v1384 = vpop.permute.xlu0 %1383
      %1385 = vrot.lane.b32.xlu0 %v241, 28
      %v1386 = vpop.permute.xlu0 %1385
      %1387 = vrot.lane.b32.xlu0 %v242, 28
      %v1388 = vpop.permute.xlu0 %1387
      %1389 = vrot.lane.b32.xlu0 %v243, 28
      %v1390 = vpop.permute.xlu0 %1389
      %1391 = vrot.lane.b32.xlu0 %v244, 28
      %v1392 = vpop.permute.xlu0 %1391
      %1393 = vrot.lane.b32.xlu0 %v245, 28
      %v1394 = vpop.permute.xlu0 %1393
      %1395 = vrot.lane.b32.xlu0 %v246, 28
      %v1396 = vpop.permute.xlu0 %1395
      %1397 = vrot.lane.b32.xlu0 %v247, 28
      %v1398 = vpop.permute.xlu0 %1397
      %1399 = vrot.lane.b32.xlu0 %v248, 28
      %v1400 = vpop.permute.xlu0 %1399
      %1401 = vrot.lane.b32.xlu0 %v249, 28
      %v1402 = vpop.permute.xlu0 %1401
      %1403 = vrot.lane.b32.xlu0 %v250, 28
      %v1404 = vpop.permute.xlu0 %1403
      %1405 = vrot.lane.b32.xlu0 %v251, 28
      %v1406 = vpop.permute.xlu0 %1405
      %1407 = vrot.lane.b32.xlu0 %v252, 28
      %v1408 = vpop.permute.xlu0 %1407
      %1409 = vrot.lane.b32.xlu0 %v253, 28
      %v1410 = vpop.permute.xlu0 %1409
      %1411 = vrot.lane.b32.xlu0 %v254, 28
      %v1412 = vpop.permute.xlu0 %1411
      %1413 = vrot.lane.b32.xlu0 %v255, 28
      %v1414 = vpop.permute.xlu0 %1413
      %1415 = vrot.lane.b32.xlu0 %v256, 28
      %v1416 = vpop.permute.xlu0 %1415
      %1417 = vrot.lane.b32.xlu0 %v257, 28
      %v1418 = vpop.permute.xlu0 %1417
      %1419 = vrot.lane.b32.xlu0 %v258, 28
      %v1420 = vpop.permute.xlu0 %1419
      %1421 = vrot.lane.b32.xlu0 %v259, 28
      %v1422 = vpop.permute.xlu0 %1421
      %1423 = vrot.lane.b32.xlu0 %v260, 28
      %v1424 = vpop.permute.xlu0 %1423
      %1425 = vrot.lane.b32.xlu0 %v261, 28
      %v1426 = vpop.permute.xlu0 %1425
      %1427 = vrot.lane.b32.xlu0 %v262, 28
      %v1428 = vpop.permute.xlu0 %1427
      %1429 = vrot.lane.b32.xlu0 %v263, 28
      %v1430 = vpop.permute.xlu0 %1429
      %1431 = vrot.lane.b32.xlu0 %v264, 28
      %v1432 = vpop.permute.xlu0 %1431
      %1433 = vrot.lane.b32.xlu0 %v265, 28
      %v1434 = vpop.permute.xlu0 %1433
      %1435 = vrot.lane.b32.xlu0 %v266, 28
      %v1436 = vpop.permute.xlu0 %1435
      %1437 = vrot.lane.b32.xlu0 %v318, 28
      %v1438 = vpop.permute.xlu0 %1437
      %1439 = vrot.lane.b32.xlu0 %v319, 28
      %v1440 = vpop.permute.xlu0 %1439
      %1441 = vrot.lane.b32.xlu0 %v320, 28
      %v1442 = vpop.permute.xlu0 %1441
      %1443 = vrot.lane.b32.xlu0 %v327, 28
      %v1444 = vpop.permute.xlu0 %1443
      %1445 = vrot.lane.b32.xlu0 %v328, 28
      %v1446 = vpop.permute.xlu0 %1445
      %1447 = vrot.lane.b32.xlu0 %v329, 28
      %v1448 = vpop.permute.xlu0 %1447
      %1500 = vrot.lane.b32.xlu0 %v273, 32
      %v1501 = vpop.permute.xlu0 %1500
      %1502 = vrot.lane.b32.xlu0 %v274, 32
      %v1503 = vpop.permute.xlu0 %1502
      %1504 = vrot.lane.b32.xlu0 %v275, 32
      %v1505 = vpop.permute.xlu0 %1504
      %1506 = vrot.lane.b32.xlu0 %v276, 32
      %v1507 = vpop.permute.xlu0 %1506
      %1508 = vrot.lane.b32.xlu0 %v277, 32
      %v1509 = vpop.permute.xlu0 %1508
      %1510 = vrot.lane.b32.xlu0 %v278, 32
      %v1511 = vpop.permute.xlu0 %1510
      %1512 = vrot.lane.b32.xlu0 %v279, 32
      %v1513 = vpop.permute.xlu0 %1512
      %1514 = vrot.lane.b32.xlu0 %v280, 32
      %v1515 = vpop.permute.xlu0 %1514
      %1516 = vrot.lane.b32.xlu0 %v281, 32
      %v1517 = vpop.permute.xlu0 %1516
      %1518 = vrot.lane.b32.xlu0 %v282, 32
      %v1519 = vpop.permute.xlu0 %1518
      %1520 = vrot.lane.b32.xlu0 %v283, 32
      %v1521 = vpop.permute.xlu0 %1520
      %1522 = vrot.lane.b32.xlu0 %v284, 32
      %v1523 = vpop.permute.xlu0 %1522
      %1524 = vrot.lane.b32.xlu0 %v285, 32
      %v1525 = vpop.permute.xlu0 %1524
      %1526 = vrot.lane.b32.xlu0 %v286, 32
      %v1527 = vpop.permute.xlu0 %1526
      %1528 = vrot.lane.b32.xlu0 %v287, 32
      %v1529 = vpop.permute.xlu0 %1528
      %1530 = vrot.lane.b32.xlu0 %v288, 32
      %v1531 = vpop.permute.xlu0 %1530
      %1532 = vrot.lane.b32.xlu0 %v289, 32
      %v1533 = vpop.permute.xlu0 %1532
      %1534 = vrot.lane.b32.xlu0 %v290, 32
      %v1535 = vpop.permute.xlu0 %1534
      %1536 = vrot.lane.b32.xlu0 %v291, 32
      %v1537 = vpop.permute.xlu0 %1536
      %1538 = vrot.lane.b32.xlu0 %v292, 32
      %v1539 = vpop.permute.xlu0 %1538
      %1540 = vrot.lane.b32.xlu0 %v293, 32
      %v1541 = vpop.permute.xlu0 %1540
      %1542 = vrot.lane.b32.xlu0 %v294, 32
      %v1543 = vpop.permute.xlu0 %1542
      %1544 = vrot.lane.b32.xlu0 %v295, 32
      %v1545 = vpop.permute.xlu0 %1544
      %1546 = vrot.lane.b32.xlu0 %v296, 32
      %v1547 = vpop.permute.xlu0 %1546
      %1548 = vrot.lane.b32.xlu0 %v297, 32
      %v1549 = vpop.permute.xlu0 %1548
      %1550 = vrot.lane.b32.xlu0 %v298, 32
      %v1551 = vpop.permute.xlu0 %1550
      %1552 = vrot.lane.b32.xlu0 %v299, 32
      %v1553 = vpop.permute.xlu0 %1552
      %1554 = vrot.lane.b32.xlu0 %v300, 32
      %v1555 = vpop.permute.xlu0 %1554
      %1556 = vrot.lane.b32.xlu0 %v301, 32
      %v1557 = vpop.permute.xlu0 %1556
      %1558 = vrot.lane.b32.xlu0 %v302, 32
      %v1559 = vpop.permute.xlu0 %1558
      %1560 = vrot.lane.b32.xlu0 %v303, 32
      %v1561 = vpop.permute.xlu0 %1560
      %1562 = vrot.lane.b32.xlu0 %v304, 32
      %v1563 = vpop.permute.xlu0 %1562
      %1564 = vrot.lane.b32.xlu0 %v305, 32
      %v1565 = vpop.permute.xlu0 %1564
      %1566 = vrot.lane.b32.xlu0 %v306, 32
      %v1567 = vpop.permute.xlu0 %1566
      %1568 = vrot.lane.b32.xlu0 %v307, 32
      %v1569 = vpop.permute.xlu0 %1568
      %1570 = vrot.lane.b32.xlu0 %v308, 32
      %v1571 = vpop.permute.xlu0 %1570
      %1572 = vrot.lane.b32.xlu0 %v309, 32
      %v1573 = vpop.permute.xlu0 %1572
      %1574 = vrot.lane.b32.xlu0 %v310, 32
      %v1575 = vpop.permute.xlu0 %1574
      %1576 = vrot.lane.b32.xlu0 %v311, 32
      %v1577 = vpop.permute.xlu0 %1576
      %1578 = vrot.lane.b32.xlu0 %v312, 32
      %v1579 = vpop.permute.xlu0 %1578
      %1580 = vrot.lane.b32.xlu0 %v313, 32
      %v1581 = vpop.permute.xlu0 %1580
      %1582 = vrot.lane.b32.xlu0 %v314, 32
      %v1583 = vpop.permute.xlu0 %1582
      %1584 = vrot.lane.b32.xlu0 %v321, 32
      %v1585 = vpop.permute.xlu0 %1584
      %1586 = vrot.lane.b32.xlu0 %v322, 32
      %v1587 = vpop.permute.xlu0 %1586
      %1588 = vrot.lane.b32.xlu0 %v323, 32
      %v1589 = vpop.permute.xlu0 %1588
      %1590 = vrot.lane.b32.xlu0 %v330, 32
      %v1591 = vpop.permute.xlu0 %1590
      %1592 = vrot.lane.b32.xlu0 %v331, 32
      %v1593 = vpop.permute.xlu0 %1592
      %1594 = vrot.lane.b32.xlu0 %v332, 32
      %v1595 = vpop.permute.xlu0 %1594
      %vm1644 = vcmask 31744
      %v1645 = vsel %vm1644, %v171, %v382
      %v1646 = vsel %vm1644, %v172, %v384
      %v1647 = vsel %vm1644, %v173, %v386
      %v1648 = vsel %vm1644, %v174, %v388
      %v1649 = vsel %vm1644, %v175, %v390
      %v1650 = vsel %vm1644, %v176, %v392
      %v1651 = vsel %vm1644, %v177, %v394
      %v1652 = vsel %vm1644, %v178, %v396
      %v1653 = vsel %vm1644, %v179, %v398
      %v1654 = vsel %vm1644, %v180, %v400
      %v1655 = vsel %vm1644, %v181, %v402
      %v1656 = vsel %vm1644, %v182, %v404
      %v1657 = vsel %vm1644, %v183, %v406
      %v1658 = vsel %vm1644, %v184, %v408
      %v1659 = vsel %vm1644, %v185, %v410
      %v1660 = vsel %vm1644, %v186, %v412
      %v1661 = vsel %vm1644, %v187, %v414
      %v1662 = vsel %vm1644, %v188, %v416
      %v1663 = vsel %vm1644, %v189, %v418
      %v1664 = vsel %vm1644, %v190, %v420
      %v1665 = vsel %vm1644, %v191, %v422
      %v1666 = vsel %vm1644, %v192, %v424
      %v1667 = vsel %vm1644, %v193, %v426
      %v1668 = vsel %vm1644, %v194, %v428
      %v1669 = vsel %vm1644, %v195, %v430
      %v1670 = vsel %vm1644, %v196, %v432
      %v1671 = vsel %vm1644, %v197, %v434
      %v1672 = vsel %vm1644, %v198, %v436
      %v1673 = vsel %vm1644, %v199, %v438
      %v1674 = vsel %vm1644, %v200, %v440
      %v1675 = vsel %vm1644, %v201, %v442
      %v1676 = vsel %vm1644, %v202, %v444
      %v1677 = vsel %vm1644, %v203, %v446
      %v1678 = vsel %vm1644, %v204, %v448
      %v1679 = vsel %vm1644, %v205, %v450
      %v1680 = vsel %vm1644, %v206, %v452
      %v1681 = vsel %vm1644, %v207, %v454
      %v1682 = vsel %vm1644, %v208, %v456
      %v1683 = vsel %vm1644, %v209, %v458
      %v1684 = vsel %vm1644, %v210, %v460
      %v1685 = vsel %vm1644, %v211, %v462
      %v1686 = vsel %vm1644, %v212, %v464
      %v1687 = vsel %vm1644, %v213, %v466
      %v1688 = vsel %vm1644, %v214, %v468
      %v1689 = vsel %vm1644, %v215, %v470
      %v1690 = vsel %vm1644, %v216, %v472
      %v1691 = vsel %vm1644, %v217, %v474
      %v1692 = vsel %vm1644, %v218, %v476
      %vm1693 = vcmask 64512
      %v1694 = vsel %vm1693, %v1645, %v574
      %v1695 = vsel %vm1693, %v1646, %v576
      %v1696 = vsel %vm1693, %v1647, %v578
      %v1697 = vsel %vm1693, %v1648, %v580
      %v1698 = vsel %vm1693, %v1649, %v582
      %v1699 = vsel %vm1693, %v1650, %v584
      %v1700 = vsel %vm1693, %v1651, %v586
      %v1701 = vsel %vm1693, %v1652, %v588
      %v1702 = vsel %vm1693, %v1653, %v590
      %v1703 = vsel %vm1693, %v1654, %v592
      %v1704 = vsel %vm1693, %v1655, %v594
      %v1705 = vsel %vm1693, %v1656, %v596
      %v1706 = vsel %vm1693, %v1657, %v598
      %v1707 = vsel %vm1693, %v1658, %v600
      %v1708 = vsel %vm1693, %v1659, %v602
      %v1709 = vsel %vm1693, %v1660, %v604
      %v1710 = vsel %vm1693, %v1661, %v606
      %v1711 = vsel %vm1693, %v1662, %v608
      %v1712 = vsel %vm1693, %v1663, %v610
      %v1713 = vsel %vm1693, %v1664, %v612
      %v1714 = vsel %vm1693, %v1665, %v614
      %v1715 = vsel %vm1693, %v1666, %v616
      %v1716 = vsel %vm1693, %v1667, %v618
      %v1717 = vsel %vm1693, %v1668, %v620
      %v1718 = vsel %vm1693, %v1669, %v622
      %v1719 = vsel %vm1693, %v1670, %v624
      %v1720 = vsel %vm1693, %v1671, %v626
      %v1721 = vsel %vm1693, %v1672, %v628
      %v1722 = vsel %vm1693, %v1673, %v630
      %v1723 = vsel %vm1693, %v1674, %v632
      %v1724 = vsel %vm1693, %v1675, %v634
      %v1725 = vsel %vm1693, %v1676, %v636
      %v1726 = vsel %vm1693, %v1677, %v638
      %v1727 = vsel %vm1693, %v1678, %v640
      %v1728 = vsel %vm1693, %v1679, %v642
      %v1729 = vsel %vm1693, %v1680, %v644
      %v1730 = vsel %vm1693, %v1681, %v646
      %v1731 = vsel %vm1693, %v1682, %v648
      %v1732 = vsel %vm1693, %v1683, %v650
      %v1733 = vsel %vm1693, %v1684, %v652
      %v1734 = vsel %vm1693, %v1685, %v654
      %v1735 = vsel %vm1693, %v1686, %v656
      %v1736 = vsel %vm1693, %v1687, %v658
      %v1737 = vsel %vm1693, %v1688, %v660
      %v1738 = vsel %vm1693, %v1689, %v662
      %v1739 = vsel %vm1693, %v1690, %v664
      %v1740 = vsel %vm1693, %v1691, %v666
      %v1741 = vsel %vm1693, %v1692, %v668
      %vm1742 = vcmask 97280
      %v1743 = vsel %vm1742, %v1694, %v766
      %v1744 = vsel %vm1742, %v1695, %v768
      %v1745 = vsel %vm1742, %v1696, %v770
      %v1746 = vsel %vm1742, %v1697, %v772
      %v1747 = vsel %vm1742, %v1698, %v774
      %v1748 = vsel %vm1742, %v1699, %v776
      %v1749 = vsel %vm1742, %v1700, %v778
      %v1750 = vsel %vm1742, %v1701, %v780
      %v1751 = vsel %vm1742, %v1702, %v782
      %v1752 = vsel %vm1742, %v1703, %v784
      %v1753 = vsel %vm1742, %v1704, %v786
      %v1754 = vsel %vm1742, %v1705, %v788
      %v1755 = vsel %vm1742, %v1706, %v790
      %v1756 = vsel %vm1742, %v1707, %v792
      %v1757 = vsel %vm1742, %v1708, %v794
      %v1758 = vsel %vm1742, %v1709, %v796
      %v1759 = vsel %vm1742, %v1710, %v798
      %v1760 = vsel %vm1742, %v1711, %v800
      %v1761 = vsel %vm1742, %v1712, %v802
      %v1762 = vsel %vm1742, %v1713, %v804
      %v1763 = vsel %vm1742, %v1714, %v806
      %v1764 = vsel %vm1742, %v1715, %v808
      %v1765 = vsel %vm1742, %v1716, %v810
      %v1766 = vsel %vm1742, %v1717, %v812
      %v1767 = vsel %vm1742, %v1718, %v814
      %v1768 = vsel %vm1742, %v1719, %v816
      %v1769 = vsel %vm1742, %v1720, %v818
      %v1770 = vsel %vm1742, %v1721, %v820
      %v1771 = vsel %vm1742, %v1722, %v822
      %v1772 = vsel %vm1742, %v1723, %v824
      %v1773 = vsel %vm1742, %v1724, %v826
      %v1774 = vsel %vm1742, %v1725, %v828
      %v1775 = vsel %vm1742, %v1726, %v830
      %v1776 = vsel %vm1742, %v1727, %v832
      %v1777 = vsel %vm1742, %v1728, %v834
      %v1778 = vsel %vm1742, %v1729, %v836
      %v1779 = vsel %vm1742, %v1730, %v838
      %v1780 = vsel %vm1742, %v1731, %v840
      %v1781 = vsel %vm1742, %v1732, %v842
      %v1782 = vsel %vm1742, %v1733, %v844
      %v1783 = vsel %vm1742, %v1734, %v846
      %v1784 = vsel %vm1742, %v1735, %v848
      %v1785 = vsel %vm1742, %v1736, %v850
      %v1786 = vsel %vm1742, %v1737, %v852
      %v1787 = vsel %vm1742, %v1738, %v854
      %v1788 = vsel %vm1742, %v1739, %v856
      %v1789 = vsel %vm1742, %v1740, %v858
      %v1790 = vsel %vm1742, %v1741, %v860
      %vm1791 = vcmask 130048
      %v1792 = vsel %vm1791, %v1743, %v913
      %v1793 = vsel %vm1791, %v1744, %v915
      %v1794 = vsel %vm1791, %v1745, %v917
      %v1795 = vsel %vm1791, %v1746, %v919
      %v1796 = vsel %vm1791, %v1747, %v921
      %v1797 = vsel %vm1791, %v1748, %v923
      %v1798 = vsel %vm1791, %v1749, %v925
      %v1799 = vsel %vm1791, %v1750, %v927
      %v1800 = vsel %vm1791, %v1751, %v929
      %v1801 = vsel %vm1791, %v1752, %v931
      %v1802 = vsel %vm1791, %v1753, %v933
      %v1803 = vsel %vm1791, %v1754, %v935
      %v1804 = vsel %vm1791, %v1755, %v937
      %v1805 = vsel %vm1791, %v1756, %v939
      %v1806 = vsel %vm1791, %v1757, %v941
      %v1807 = vsel %vm1791, %v1758, %v943
      %v1808 = vsel %vm1791, %v1759, %v945
      %v1809 = vsel %vm1791, %v1760, %v947
      %v1810 = vsel %vm1791, %v1761, %v949
      %v1811 = vsel %vm1791, %v1762, %v951
      %v1812 = vsel %vm1791, %v1763, %v953
      %v1813 = vsel %vm1791, %v1764, %v955
      %v1814 = vsel %vm1791, %v1765, %v957
      %v1815 = vsel %vm1791, %v1766, %v959
      %v1816 = vsel %vm1791, %v1767, %v961
      %v1817 = vsel %vm1791, %v1768, %v963
      %v1818 = vsel %vm1791, %v1769, %v965
      %v1819 = vsel %vm1791, %v1770, %v967
      %v1820 = vsel %vm1791, %v1771, %v969
      %v1821 = vsel %vm1791, %v1772, %v971
      %v1822 = vsel %vm1791, %v1773, %v973
      %v1823 = vsel %vm1791, %v1774, %v975
      %v1824 = vsel %vm1791, %v1775, %v977
      %v1825 = vsel %vm1791, %v1776, %v979
      %v1826 = vsel %vm1791, %v1777, %v981
      %v1827 = vsel %vm1791, %v1778, %v983
      %v1828 = vsel %vm1791, %v1779, %v985
      %v1829 = vsel %vm1791, %v1780, %v987
      %v1830 = vsel %vm1791, %v1781, %v989
      %v1831 = vsel %vm1791, %v1782, %v991
      %v1832 = vsel %vm1791, %v1783, %v993
      %v1833 = vsel %vm1791, %v1784, %v995
      %v1834 = vsel %vm1791, %v1785, %v997
      %v1835 = vsel %vm1791, %v1786, %v999
      %v1836 = vsel %vm1791, %v1787, %v1001
      %v1837 = vsel %vm1791, %v1788, %v1003
      %v1838 = vsel %vm1791, %v1789, %v1005
      %v1839 = vsel %vm1791, %v1790, %v1007
      %vm1840 = vcmask 162816
      %v1841 = vsel %vm1840, %v1792, %v1060
      %v1842 = vsel %vm1840, %v1793, %v1062
      %v1843 = vsel %vm1840, %v1794, %v1064
      %v1844 = vsel %vm1840, %v1795, %v1066
      %v1845 = vsel %vm1840, %v1796, %v1068
      %v1846 = vsel %vm1840, %v1797, %v1070
      %v1847 = vsel %vm1840, %v1798, %v1072
      %v1848 = vsel %vm1840, %v1799, %v1074
      %v1849 = vsel %vm1840, %v1800, %v1076
      %v1850 = vsel %vm1840, %v1801, %v1078
      %v1851 = vsel %vm1840, %v1802, %v1080
      %v1852 = vsel %vm1840, %v1803, %v1082
      %v1853 = vsel %vm1840, %v1804, %v1084
      %v1854 = vsel %vm1840, %v1805, %v1086
      %v1855 = vsel %vm1840, %v1806, %v1088
      %v1856 = vsel %vm1840, %v1807, %v1090
      %v1857 = vsel %vm1840, %v1808, %v1092
      %v1858 = vsel %vm1840, %v1809, %v1094
      %v1859 = vsel %vm1840, %v1810, %v1096
      %v1860 = vsel %vm1840, %v1811, %v1098
      %v1861 = vsel %vm1840, %v1812, %v1100
      %v1862 = vsel %vm1840, %v1813, %v1102
      %v1863 = vsel %vm1840, %v1814, %v1104
      %v1864 = vsel %vm1840, %v1815, %v1106
      %v1865 = vsel %vm1840, %v1816, %v1108
      %v1866 = vsel %vm1840, %v1817, %v1110
      %v1867 = vsel %vm1840, %v1818, %v1112
      %v1868 = vsel %vm1840, %v1819, %v1114
      %v1869 = vsel %vm1840, %v1820, %v1116
      %v1870 = vsel %vm1840, %v1821, %v1118
      %v1871 = vsel %vm1840, %v1822, %v1120
      %v1872 = vsel %vm1840, %v1823, %v1122
      %v1873 = vsel %vm1840, %v1824, %v1124
      %v1874 = vsel %vm1840, %v1825, %v1126
      %v1875 = vsel %vm1840, %v1826, %v1128
      %v1876 = vsel %vm1840, %v1827, %v1130
      %v1877 = vsel %vm1840, %v1828, %v1132
      %v1878 = vsel %vm1840, %v1829, %v1134
      %v1879 = vsel %vm1840, %v1830, %v1136
      %v1880 = vsel %vm1840, %v1831, %v1138
      %v1881 = vsel %vm1840, %v1832, %v1140
      %v1882 = vsel %vm1840, %v1833, %v1142
      %v1883 = vsel %vm1840, %v1834, %v1144
      %v1884 = vsel %vm1840, %v1835, %v1146
      %v1885 = vsel %vm1840, %v1836, %v1148
      %v1886 = vsel %vm1840, %v1837, %v1150
      %v1887 = vsel %vm1840, %v1838, %v1152
      %v1888 = vsel %vm1840, %v1839, %v1154
      %vm1889 = vcmask 195584
      %v1890 = vsel %vm1889, %v1841, %v1207
      %v1891 = vsel %vm1889, %v1842, %v1209
      %v1892 = vsel %vm1889, %v1843, %v1211
      %v1893 = vsel %vm1889, %v1844, %v1213
      %v1894 = vsel %vm1889, %v1845, %v1215
      %v1895 = vsel %vm1889, %v1846, %v1217
      %v1896 = vsel %vm1889, %v1847, %v1219
      %v1897 = vsel %vm1889, %v1848, %v1221
      %v1898 = vsel %vm1889, %v1849, %v1223
      %v1899 = vsel %vm1889, %v1850, %v1225
      %v1900 = vsel %vm1889, %v1851, %v1227
      %v1901 = vsel %vm1889, %v1852, %v1229
      %v1902 = vsel %vm1889, %v1853, %v1231
      %v1903 = vsel %vm1889, %v1854, %v1233
      %v1904 = vsel %vm1889, %v1855, %v1235
      %v1905 = vsel %vm1889, %v1856, %v1237
      %v1906 = vsel %vm1889, %v1857, %v1239
      %v1907 = vsel %vm1889, %v1858, %v1241
      %v1908 = vsel %vm1889, %v1859, %v1243
      %v1909 = vsel %vm1889, %v1860, %v1245
      %v1910 = vsel %vm1889, %v1861, %v1247
      %v1911 = vsel %vm1889, %v1862, %v1249
      %v1912 = vsel %vm1889, %v1863, %v1251
      %v1913 = vsel %vm1889, %v1864, %v1253
      %v1914 = vsel %vm1889, %v1865, %v1255
      %v1915 = vsel %vm1889, %v1866, %v1257
      %v1916 = vsel %vm1889, %v1867, %v1259
      %v1917 = vsel %vm1889, %v1868, %v1261
      %v1918 = vsel %vm1889, %v1869, %v1263
      %v1919 = vsel %vm1889, %v1870, %v1265
      %v1920 = vsel %vm1889, %v1871, %v1267
      %v1921 = vsel %vm1889, %v1872, %v1269
      %v1922 = vsel %vm1889, %v1873, %v1271
      %v1923 = vsel %vm1889, %v1874, %v1273
      %v1924 = vsel %vm1889, %v1875, %v1275
      %v1925 = vsel %vm1889, %v1876, %v1277
      %v1926 = vsel %vm1889, %v1877, %v1279
      %v1927 = vsel %vm1889, %v1878, %v1281
      %v1928 = vsel %vm1889, %v1879, %v1283
      %v1929 = vsel %vm1889, %v1880, %v1285
      %v1930 = vsel %vm1889, %v1881, %v1287
      %v1931 = vsel %vm1889, %v1882, %v1289
      %v1932 = vsel %vm1889, %v1883, %v1291
      %v1933 = vsel %vm1889, %v1884, %v1293
      %v1934 = vsel %vm1889, %v1885, %v1295
      %v1935 = vsel %vm1889, %v1886, %v1297
      %v1936 = vsel %vm1889, %v1887, %v1299
      %v1937 = vsel %vm1889, %v1888, %v1301
      %vm1938 = vcmask 228352
      %v1939 = vsel %vm1938, %v1890, %v1354
      %v1940 = vsel %vm1938, %v1891, %v1356
      %v1941 = vsel %vm1938, %v1892, %v1358
      %v1942 = vsel %vm1938, %v1893, %v1360
      %v1943 = vsel %vm1938, %v1894, %v1362
      %v1944 = vsel %vm1938, %v1895, %v1364
      %v1945 = vsel %vm1938, %v1896, %v1366
      %v1946 = vsel %vm1938, %v1897, %v1368
      %v1947 = vsel %vm1938, %v1898, %v1370
      %v1948 = vsel %vm1938, %v1899, %v1372
      %v1949 = vsel %vm1938, %v1900, %v1374
      %v1950 = vsel %vm1938, %v1901, %v1376
      %v1951 = vsel %vm1938, %v1902, %v1378
      %v1952 = vsel %vm1938, %v1903, %v1380
      %v1953 = vsel %vm1938, %v1904, %v1382
      %v1954 = vsel %vm1938, %v1905, %v1384
      %v1955 = vsel %vm1938, %v1906, %v1386
      %v1956 = vsel %vm1938, %v1907, %v1388
      %v1957 = vsel %vm1938, %v1908, %v1390
      %v1958 = vsel %vm1938, %v1909, %v1392
      %v1959 = vsel %vm1938, %v1910, %v1394
      %v1960 = vsel %vm1938, %v1911, %v1396
      %v1961 = vsel %vm1938, %v1912, %v1398
      %v1962 = vsel %vm1938, %v1913, %v1400
      %v1963 = vsel %vm1938, %v1914, %v1402
      %v1964 = vsel %vm1938, %v1915, %v1404
      %v1965 = vsel %vm1938, %v1916, %v1406
      %v1966 = vsel %vm1938, %v1917, %v1408
      %v1967 = vsel %vm1938, %v1918, %v1410
      %v1968 = vsel %vm1938, %v1919, %v1412
      %v1969 = vsel %vm1938, %v1920, %v1414
      %v1970 = vsel %vm1938, %v1921, %v1416
      %v1971 = vsel %vm1938, %v1922, %v1418
      %v1972 = vsel %vm1938, %v1923, %v1420
      %v1973 = vsel %vm1938, %v1924, %v1422
      %v1974 = vsel %vm1938, %v1925, %v1424
      %v1975 = vsel %vm1938, %v1926, %v1426
      %v1976 = vsel %vm1938, %v1927, %v1428
      %v1977 = vsel %vm1938, %v1928, %v1430
      %v1978 = vsel %vm1938, %v1929, %v1432
      %v1979 = vsel %vm1938, %v1930, %v1434
      %v1980 = vsel %vm1938, %v1931, %v1436
      %v1981 = vsel %vm1938, %v1932, %v1438
      %v1982 = vsel %vm1938, %v1933, %v1440
      %v1983 = vsel %vm1938, %v1934, %v1442
      %v1984 = vsel %vm1938, %v1935, %v1444
      %v1985 = vsel %vm1938, %v1936, %v1446
      %v1986 = vsel %vm1938, %v1937, %v1448
      %vm1987 = vcmask 261120
      %v1988 = vsel %vm1987, %v1939, %v1501
      %v1989 = vsel %vm1987, %v1940, %v1503
      %v1990 = vsel %vm1987, %v1941, %v1505
      %v1991 = vsel %vm1987, %v1942, %v1507
      %v1992 = vsel %vm1987, %v1943, %v1509
      %v1993 = vsel %vm1987, %v1944, %v1511
      %v1994 = vsel %vm1987, %v1945, %v1513
      %v1995 = vsel %vm1987, %v1946, %v1515
      %v1996 = vsel %vm1987, %v1947, %v1517
      %v1997 = vsel %vm1987, %v1948, %v1519
      %v1998 = vsel %vm1987, %v1949, %v1521
      %v1999 = vsel %vm1987, %v1950, %v1523
      %v2000 = vsel %vm1987, %v1951, %v1525
      %v2001 = vsel %vm1987, %v1952, %v1527
      %v2002 = vsel %vm1987, %v1953, %v1529
      %v2003 = vsel %vm1987, %v1954, %v1531
      %v2004 = vsel %vm1987, %v1955, %v1533
      %v2005 = vsel %vm1987, %v1956, %v1535
      %v2006 = vsel %vm1987, %v1957, %v1537
      %v2007 = vsel %vm1987, %v1958, %v1539
      %v2008 = vsel %vm1987, %v1959, %v1541
      %v2009 = vsel %vm1987, %v1960, %v1543
      %v2010 = vsel %vm1987, %v1961, %v1545
      %v2011 = vsel %vm1987, %v1962, %v1547
      %v2012 = vsel %vm1987, %v1963, %v1549
      %v2013 = vsel %vm1987, %v1964, %v1551
      %v2014 = vsel %vm1987, %v1965, %v1553
      %v2015 = vsel %vm1987, %v1966, %v1555
      %v2016 = vsel %vm1987, %v1967, %v1557
      %v2017 = vsel %vm1987, %v1968, %v1559
      %v2018 = vsel %vm1987, %v1969, %v1561
      %v2019 = vsel %vm1987, %v1970, %v1563
      %v2020 = vsel %vm1987, %v1971, %v1565
      %v2021 = vsel %vm1987, %v1972, %v1567
      %v2022 = vsel %vm1987, %v1973, %v1569
      %v2023 = vsel %vm1987, %v1974, %v1571
      %v2024 = vsel %vm1987, %v1975, %v1573
      %v2025 = vsel %vm1987, %v1976, %v1575
      %v2026 = vsel %vm1987, %v1977, %v1577
      %v2027 = vsel %vm1987, %v1978, %v1579
      %v2028 = vsel %vm1987, %v1979, %v1581
      %v2029 = vsel %vm1987, %v1980, %v1583
      %v2030 = vsel %vm1987, %v1981, %v1585
      %v2031 = vsel %vm1987, %v1982, %v1587
      %v2032 = vsel %vm1987, %v1983, %v1589
      %v2033 = vsel %vm1987, %v1984, %v1591
      %v2034 = vsel %vm1987, %v1985, %v1593
      %v2035 = vsel %vm1987, %v1986, %v1595
      %v2036 = vld [vmem:[%s1] sm:$0xff]
      %v2037 = vld [vmem:[%s1 + $0x8] sm:$0xff]
      %v2038 = vld [vmem:[%s1 + $0x10] sm:$0xff]
      %v2039 = vld [vmem:[%s1 + $0x18] sm:$0xff]
      %v2040 = vld [vmem:[%s1 + $0x20] sm:$0xf]
      %v2041 = vld [vmem:[%s2] sm:$0x1]
      %v2043 = vlaneseq
      %v2044 = vshrl.u32 %v2043, 7
      %v2045 = vsub.s32 0, %v2044
      %v2046 = vrot.slane %v2041, %v2045
      %vm2048 = vcmask 293888
      %v2050 = vsel %vm2048, %v1988, 0
      %v2053 = vsel %vm2048, %v1989, 0
      %v2056 = vsel %vm2048, %v1990, 0
      %v2059 = vsel %vm2048, %v1991, 0
      %v2062 = vsel %vm2048, %v1992, 0
      %v2065 = vsel %vm2048, %v1993, 0
      %v2068 = vsel %vm2048, %v1994, 0
      %v2071 = vsel %vm2048, %v1995, 0
      %v2074 = vsel %vm2048, %v1996, 0
      %v2077 = vsel %vm2048, %v1997, 0
      %v2080 = vsel %vm2048, %v1998, 0
      %v2083 = vsel %vm2048, %v1999, 0
      %v2086 = vsel %vm2048, %v2000, 0
      %v2089 = vsel %vm2048, %v2001, 0
      %v2092 = vsel %vm2048, %v2002, 0
      %v2095 = vsel %vm2048, %v2003, 0
      %v2098 = vsel %vm2048, %v2004, 0
      %v2101 = vsel %vm2048, %v2005, 0
      %v2104 = vsel %vm2048, %v2006, 0
      %v2107 = vsel %vm2048, %v2007, 0
      %v2110 = vsel %vm2048, %v2008, 0
      %v2113 = vsel %vm2048, %v2009, 0
      %v2116 = vsel %vm2048, %v2010, 0
      %v2119 = vsel %vm2048, %v2011, 0
      %v2122 = vsel %vm2048, %v2012, 0
      %v2125 = vsel %vm2048, %v2013, 0
      %v2128 = vsel %vm2048, %v2014, 0
      %v2131 = vsel %vm2048, %v2015, 0
      %v2134 = vsel %vm2048, %v2016, 0
      %v2137 = vsel %vm2048, %v2017, 0
      %v2140 = vsel %vm2048, %v2018, 0
      %v2143 = vsel %vm2048, %v2019, 0
      %v2146 = vsel %vm2048, %v2020, 0
      %v2149 = vsel %vm2048, %v2021, 0
      %v2152 = vsel %vm2048, %v2022, 0
      %v2155 = vsel %vm2048, %v2023, 0
      %v2158 = vsel %vm2048, %v2024, 0
      %v2161 = vsel %vm2048, %v2025, 0
      %v2164 = vsel %vm2048, %v2026, 0
      %v2167 = vsel %vm2048, %v2027, 0
      %v2170 = vsel %vm2048, %v2028, 0
      %v2173 = vsel %vm2048, %v2029, 0
      %v2176 = vsel %vm2048, %v2030, 0
      %v2179 = vsel %vm2048, %v2031, 0
      %v2182 = vsel %vm2048, %v2032, 0
      %v2185 = vsel %vm2048, %v2033, 0
      %v2188 = vsel %vm2048, %v2034, 0
      %v2191 = vsel %vm2048, %v2035, 0
      %vm2193 = vcmask 1043456
      %v2195 = vsel %vm2193, %v2040, 0
      %2197 = vmatprep.subr.mxu0 0.0
      %2198 = vmatpush1.msra.mxu0 %v2036
      %2199 = vmatprep.subr.mxu0 0.0
      %2200 = vmatpush1.msra.mxu0 %v2037
      %2201 = vmatprep.subr.mxu0 0.0
      %2202 = vmatpush1.msra.mxu0 %v2038
      %2203 = vmatprep.subr.mxu0 0.0
      %2204 = vmatpush1.msra.mxu0 %v2039
      %2205 = vmatprep.subr.mxu0 0.0
      %2206 = vmatpush1.msra.mxu0 %v2195
      %2207 = vmatprep.subr.mxu0 0.0
      %2208 = vmatpush1.msra.mxu0 0.0
      %2209 = vmatprep.subr.mxu0 0.0
      %2210 = vmatpush1.msra.mxu0 0.0
      %2211 = vmatprep.subr.mxu0 0.0
      %2212 = vmatpush1.msra.mxu0 0.0
      %2213 = vmatprep.subr.mxu0 0.0
      %2214 = vmatpush1.msra.mxu0 0.0
      %2215 = vmatprep.subr.mxu0 0.0
      %2216 = vmatpush1.msra.mxu0 0.0
      %2217 = vmatprep.subr.mxu0 0.0
      %2218 = vmatpush1.msra.mxu0 0.0
      %2219 = vmatprep.subr.mxu0 0.0
      %2220 = vmatpush1.msra.mxu0 0.0
      %2221 = vmatprep.subr.mxu0 0.0
      %2222 = vmatpush1.msra.mxu0 0.0
      %2223 = vmatprep.subr.mxu0 0.0
      %2224 = vmatpush1.msra.mxu0 0.0
      %2225 = vmatprep.subr.mxu0 0.0
      %2226 = vmatpush1.msra.mxu0 0.0
      %2227 = vmatprep.subr.mxu0 0.0
      %2228 = vmatpush1.msra.mxu0 0.0
      %2229 = vmatprep.subr.mxu0 0.0
      %2230 = vmatpush1.msra.mxu0 0.0
      %2231 = vmatprep.subr.mxu0 0.0
      %2232 = vmatpush1.msra.mxu0 0.0
      %2233 = vmatprep.subr.mxu0 0.0
      %2234 = vmatpush1.msra.mxu0 0.0
      %2235 = vmatprep.subr.mxu0 0.0
      %2236 = vmatpush1.msra.mxu0 0.0
      %2237 = vmatprep.subr.mxu0 0.0
      %2238 = vmatpush1.msra.mxu0 0.0
      %2239 = vmatprep.subr.mxu0 0.0
      %2240 = vmatpush1.msra.mxu0 0.0
      %2241 = vmatprep.subr.mxu0 0.0
      %2242 = vmatpush1.msra.mxu0 0.0
      %2243 = vmatprep.subr.mxu0 0.0
      %2244 = vmatpush1.msra.mxu0 0.0
      %2245 = vmatprep.subr.mxu0 0.0
      %2246 = vmatpush1.msra.mxu0 0.0
      %2247 = vmatprep.subr.mxu0 0.0
      %2248 = vmatpush1.msra.mxu0 0.0
      %2249 = vmatprep.subr.mxu0 0.0
      %2250 = vmatpush1.msra.mxu0 0.0
      %2251 = vmatprep.subr.mxu0 0.0
      %2252 = vmatpush1.msra.mxu0 0.0
      %2253 = vmatprep.subr.mxu0 0.0
      %2254 = vmatpush1.msra.mxu0 0.0
      %2255 = vmatprep.subr.mxu0 0.0
      %2256 = vmatpush1.msra.mxu0 0.0
      %2257 = vmatprep.subr.mxu0 0.0
      %2258 = vmatpush1.msra.mxu0 0.0
      %2259 = vmatprep.subr.mxu0 0.0
      %2260 = vmatpush1.msra.mxu0 0.0
      %2261 = vmatprep.mubr.f32.mxu0 0.0
      %2262 = vmatmul.mubr.f32.gmra.mrb[0].mxu0 %v2050
      %v2263 = vpop.f32.mrb[0].mxu0
      %v2264 = vadd.f32 %v2046, %v2263
      %v2265 = vpop.f32.mrb[0].mxu0
      %2266 = vmatprep.mubr.f32.mxu0 0.0
      %2267 = vmatmul.mubr.f32.gmra.mrb[0].mxu0 %v2053
      %v2268 = vpop.f32.mrb[0].mxu0
      %v2269 = vadd.f32 %v2046, %v2268
      %v2270 = vpop.f32.mrb[0].mxu0
      %2271 = vmatprep.mubr.f32.mxu0 0.0
      %2272 = vmatmul.mubr.f32.gmra.mrb[0].mxu0 %v2056
      %v2273 = vpop.f32.mrb[0].mxu0
      %v2274 = vadd.f32 %v2046, %v2273
      %v2275 = vpop.f32.mrb[0].mxu0
      %2276 = vmatprep.mubr.f32.mxu0 0.0
      %2277 = vmatmul.mubr.f32.gmra.mrb[0].mxu0 %v2059
      %v2278 = vpop.f32.mrb[0].mxu0
      %v2279 = vadd.f32 %v2046, %v2278
      %v2280 = vpop.f32.mrb[0].mxu0
      %2281 = vmatprep.mubr.f32.mxu0 0.0
      %2282 = vmatmul.mubr.f32.gmra.mrb[0].mxu0 %v2062
      %v2283 = vpop.f32.mrb[0].mxu0
      %v2284 = vadd.f32 %v2046, %v2283
      %v2285 = vpop.f32.mrb[0].mxu0
      %2286 = vmatprep.mubr.f32.mxu0 0.0
      %2287 = vmatmul.mubr.f32.gmra.mrb[0].mxu0 %v2065
      %v2288 = vpop.f32.mrb[0].mxu0
      %v2289 = vadd.f32 %v2046, %v2288
      %v2290 = vpop.f32.mrb[0].mxu0
      %2291 = vmatprep.mubr.f32.mxu0 0.0
      %2292 = vmatmul.mubr.f32.gmra.mrb[0].mxu0 %v2068
      %v2293 = vpop.f32.mrb[0].mxu0
      %v2294 = vadd.f32 %v2046, %v2293
      %v2295 = vpop.f32.mrb[0].mxu0
      %2296 = vmatprep.mubr.f32.mxu0 0.0
      %2297 = vmatmul.mubr.f32.gmra.mrb[0].mxu0 %v2071
      %v2298 = vpop.f32.mrb[0].mxu0
      %v2299 = vadd.f32 %v2046, %v2298
      %v2300 = vpop.f32.mrb[0].mxu0
      %2301 = vmatprep.mubr.f32.mxu0 0.0
      %2302 = vmatmul.mubr.f32.gmra.mrb[0].mxu0 %v2074
      %v2303 = vpop.f32.mrb[0].mxu0
      %v2304 = vadd.f32 %v2046, %v2303
      %v2305 = vpop.f32.mrb[0].mxu0
      %2306 = vmatprep.mubr.f32.mxu0 0.0
      %2307 = vmatmul.mubr.f32.gmra.mrb[0].mxu0 %v2077
      %v2308 = vpop.f32.mrb[0].mxu0
      %v2309 = vadd.f32 %v2046, %v2308
      %v2310 = vpop.f32.mrb[0].mxu0
      %2311 = vmatprep.mubr.f32.mxu0 0.0
      %2312 = vmatmul.mubr.f32.gmra.mrb[0].mxu0 %v2080
      %v2313 = vpop.f32.mrb[0].mxu0
      %v2314 = vadd.f32 %v2046, %v2313
      %v2315 = vpop.f32.mrb[0].mxu0
      %2316 = vmatprep.mubr.f32.mxu0 0.0
      %2317 = vmatmul.mubr.f32.gmra.mrb[0].mxu0 %v2083
      %v2318 = vpop.f32.mrb[0].mxu0
      %v2319 = vadd.f32 %v2046, %v2318
      %v2320 = vpop.f32.mrb[0].mxu0
      %2321 = vmatprep.mubr.f32.mxu0 0.0
      %2322 = vmatmul.mubr.f32.gmra.mrb[0].mxu0 %v2086
      %v2323 = vpop.f32.mrb[0].mxu0
      %v2324 = vadd.f32 %v2046, %v2323
      %v2325 = vpop.f32.mrb[0].mxu0
      %2326 = vmatprep.mubr.f32.mxu0 0.0
      %2327 = vmatmul.mubr.f32.gmra.mrb[0].mxu0 %v2089
      %v2328 = vpop.f32.mrb[0].mxu0
      %v2329 = vadd.f32 %v2046, %v2328
      %v2330 = vpop.f32.mrb[0].mxu0
      %2331 = vmatprep.mubr.f32.mxu0 0.0
      %2332 = vmatmul.mubr.f32.gmra.mrb[0].mxu0 %v2092
      %v2333 = vpop.f32.mrb[0].mxu0
      %v2334 = vadd.f32 %v2046, %v2333
      %v2335 = vpop.f32.mrb[0].mxu0
      %2336 = vmatprep.mubr.f32.mxu0 0.0
      %2337 = vmatmul.mubr.f32.gmra.mrb[0].mxu0 %v2095
      %v2338 = vpop.f32.mrb[0].mxu0
      %v2339 = vadd.f32 %v2046, %v2338
      %v2340 = vpop.f32.mrb[0].mxu0
      %2341 = vmatprep.mubr.f32.mxu0 0.0
      %2342 = vmatmul.mubr.f32.gmra.mrb[0].mxu0 %v2098
      %v2343 = vpop.f32.mrb[0].mxu0
      %v2344 = vadd.f32 %v2046, %v2343
      %v2345 = vpop.f32.mrb[0].mxu0
      %2346 = vmatprep.mubr.f32.mxu0 0.0
      %2347 = vmatmul.mubr.f32.gmra.mrb[0].mxu0 %v2101
      %v2348 = vpop.f32.mrb[0].mxu0
      %v2349 = vadd.f32 %v2046, %v2348
      %v2350 = vpop.f32.mrb[0].mxu0
      %2351 = vmatprep.mubr.f32.mxu0 0.0
      %2352 = vmatmul.mubr.f32.gmra.mrb[0].mxu0 %v2104
      %v2353 = vpop.f32.mrb[0].mxu0
      %v2354 = vadd.f32 %v2046, %v2353
      %v2355 = vpop.f32.mrb[0].mxu0
      %2356 = vmatprep.mubr.f32.mxu0 0.0
      %2357 = vmatmul.mubr.f32.gmra.mrb[0].mxu0 %v2107
      %v2358 = vpop.f32.mrb[0].mxu0
      %v2359 = vadd.f32 %v2046, %v2358
      %v2360 = vpop.f32.mrb[0].mxu0
      %2361 = vmatprep.mubr.f32.mxu0 0.0
      %2362 = vmatmul.mubr.f32.gmra.mrb[0].mxu0 %v2110
      %v2363 = vpop.f32.mrb[0].mxu0
      %v2364 = vadd.f32 %v2046, %v2363
      %v2365 = vpop.f32.mrb[0].mxu0
      %2366 = vmatprep.mubr.f32.mxu0 0.0
      %2367 = vmatmul.mubr.f32.gmra.mrb[0].mxu0 %v2113
      %v2368 = vpop.f32.mrb[0].mxu0
      %v2369 = vadd.f32 %v2046, %v2368
      %v2370 = vpop.f32.mrb[0].mxu0
      %2371 = vmatprep.mubr.f32.mxu0 0.0
      %2372 = vmatmul.mubr.f32.gmra.mrb[0].mxu0 %v2116
      %v2373 = vpop.f32.mrb[0].mxu0
      %v2374 = vadd.f32 %v2046, %v2373
      %v2375 = vpop.f32.mrb[0].mxu0
      %2376 = vmatprep.mubr.f32.mxu0 0.0
      %2377 = vmatmul.mubr.f32.gmra.mrb[0].mxu0 %v2119
      %v2378 = vpop.f32.mrb[0].mxu0
      %v2379 = vadd.f32 %v2046, %v2378
      %v2380 = vpop.f32.mrb[0].mxu0
      %2381 = vmatprep.mubr.f32.mxu0 0.0
      %2382 = vmatmul.mubr.f32.gmra.mrb[0].mxu0 %v2122
      %v2383 = vpop.f32.mrb[0].mxu0
      %v2384 = vadd.f32 %v2046, %v2383
      %v2385 = vpop.f32.mrb[0].mxu0
      %2386 = vmatprep.mubr.f32.mxu0 0.0
      %2387 = vmatmul.mubr.f32.gmra.mrb[0].mxu0 %v2125
      %v2388 = vpop.f32.mrb[0].mxu0
      %v2389 = vadd.f32 %v2046, %v2388
      %v2390 = vpop.f32.mrb[0].mxu0
      %2391 = vmatprep.mubr.f32.mxu0 0.0
      %2392 = vmatmul.mubr.f32.gmra.mrb[0].mxu0 %v2128
      %v2393 = vpop.f32.mrb[0].mxu0
      %v2394 = vadd.f32 %v2046, %v2393
      %v2395 = vpop.f32.mrb[0].mxu0
      %2396 = vmatprep.mubr.f32.mxu0 0.0
      %2397 = vmatmul.mubr.f32.gmra.mrb[0].mxu0 %v2131
      %v2398 = vpop.f32.mrb[0].mxu0
      %v2399 = vadd.f32 %v2046, %v2398
      %v2400 = vpop.f32.mrb[0].mxu0
      %2401 = vmatprep.mubr.f32.mxu0 0.0
      %2402 = vmatmul.mubr.f32.gmra.mrb[0].mxu0 %v2134
      %v2403 = vpop.f32.mrb[0].mxu0
      %v2404 = vadd.f32 %v2046, %v2403
      %v2405 = vpop.f32.mrb[0].mxu0
      %2406 = vmatprep.mubr.f32.mxu0 0.0
      %2407 = vmatmul.mubr.f32.gmra.mrb[0].mxu0 %v2137
      %v2408 = vpop.f32.mrb[0].mxu0
      %v2409 = vadd.f32 %v2046, %v2408
      %v2410 = vpop.f32.mrb[0].mxu0
      %2411 = vmatprep.mubr.f32.mxu0 0.0
      %2412 = vmatmul.mubr.f32.gmra.mrb[0].mxu0 %v2140
      %v2413 = vpop.f32.mrb[0].mxu0
      %v2414 = vadd.f32 %v2046, %v2413
      %v2415 = vpop.f32.mrb[0].mxu0
      %2416 = vmatprep.mubr.f32.mxu0 0.0
      %2417 = vmatmul.mubr.f32.gmra.mrb[0].mxu0 %v2143
      %v2418 = vpop.f32.mrb[0].mxu0
      %v2419 = vadd.f32 %v2046, %v2418
      %v2420 = vpop.f32.mrb[0].mxu0
      %2421 = vmatprep.mubr.f32.mxu0 0.0
      %2422 = vmatmul.mubr.f32.gmra.mrb[0].mxu0 %v2146
      %v2423 = vpop.f32.mrb[0].mxu0
      %v2424 = vadd.f32 %v2046, %v2423
      %v2425 = vpop.f32.mrb[0].mxu0
      %2426 = vmatprep.mubr.f32.mxu0 0.0
      %2427 = vmatmul.mubr.f32.gmra.mrb[0].mxu0 %v2149
      %v2428 = vpop.f32.mrb[0].mxu0
      %v2429 = vadd.f32 %v2046, %v2428
      %v2430 = vpop.f32.mrb[0].mxu0
      %2431 = vmatprep.mubr.f32.mxu0 0.0
      %2432 = vmatmul.mubr.f32.gmra.mrb[0].mxu0 %v2152
      %v2433 = vpop.f32.mrb[0].mxu0
      %v2434 = vadd.f32 %v2046, %v2433
      %v2435 = vpop.f32.mrb[0].mxu0
      %2436 = vmatprep.mubr.f32.mxu0 0.0
      %2437 = vmatmul.mubr.f32.gmra.mrb[0].mxu0 %v2155
      %v2438 = vpop.f32.mrb[0].mxu0
      %v2439 = vadd.f32 %v2046, %v2438
      %v2440 = vpop.f32.mrb[0].mxu0
      %2441 = vmatprep.mubr.f32.mxu0 0.0
      %2442 = vmatmul.mubr.f32.gmra.mrb[0].mxu0 %v2158
      %v2443 = vpop.f32.mrb[0].mxu0
      %v2444 = vadd.f32 %v2046, %v2443
      %v2445 = vpop.f32.mrb[0].mxu0
      %2446 = vmatprep.mubr.f32.mxu0 0.0
      %2447 = vmatmul.mubr.f32.gmra.mrb[0].mxu0 %v2161
      %v2448 = vpop.f32.mrb[0].mxu0
      %v2449 = vadd.f32 %v2046, %v2448
      %v2450 = vpop.f32.mrb[0].mxu0
      %2451 = vmatprep.mubr.f32.mxu0 0.0
      %2452 = vmatmul.mubr.f32.gmra.mrb[0].mxu0 %v2164
      %v2453 = vpop.f32.mrb[0].mxu0
      %v2454 = vadd.f32 %v2046, %v2453
      %v2455 = vpop.f32.mrb[0].mxu0
      %2456 = vmatprep.mubr.f32.mxu0 0.0
      %2457 = vmatmul.mubr.f32.gmra.mrb[0].mxu0 %v2167
      %v2458 = vpop.f32.mrb[0].mxu0
      %v2459 = vadd.f32 %v2046, %v2458
      %v2460 = vpop.f32.mrb[0].mxu0
      %2461 = vmatprep.mubr.f32.mxu0 0.0
      %2462 = vmatmul.mubr.f32.gmra.mrb[0].mxu0 %v2170
      %v2463 = vpop.f32.mrb[0].mxu0
      %v2464 = vadd.f32 %v2046, %v2463
      %v2465 = vpop.f32.mrb[0].mxu0
      %2466 = vmatprep.mubr.f32.mxu0 0.0
      %2467 = vmatmul.mubr.f32.gmra.mrb[0].mxu0 %v2173
      %v2468 = vpop.f32.mrb[0].mxu0
      %v2469 = vadd.f32 %v2046, %v2468
      %v2470 = vpop.f32.mrb[0].mxu0
      %2471 = vmatprep.mubr.f32.mxu0 0.0
      %2472 = vmatmul.mubr.f32.gmra.mrb[0].mxu0 %v2176
      %v2473 = vpop.f32.mrb[0].mxu0
      %v2474 = vadd.f32 %v2046, %v2473
      %v2475 = vpop.f32.mrb[0].mxu0
      %2476 = vmatprep.mubr.f32.mxu0 0.0
      %2477 = vmatmul.mubr.f32.gmra.mrb[0].mxu0 %v2179
      %v2478 = vpop.f32.mrb[0].mxu0
      %v2479 = vadd.f32 %v2046, %v2478
      %v2480 = vpop.f32.mrb[0].mxu0
      %2481 = vmatprep.mubr.f32.mxu0 0.0
      %2482 = vmatmul.mubr.f32.gmra.mrb[0].mxu0 %v2182
      %v2483 = vpop.f32.mrb[0].mxu0
      %v2484 = vadd.f32 %v2046, %v2483
      %v2485 = vpop.f32.mrb[0].mxu0
      %2486 = vmatprep.mubr.f32.mxu0 0.0
      %2487 = vmatmul.mubr.f32.gmra.mrb[0].mxu0 %v2185
      %v2488 = vpop.f32.mrb[0].mxu0
      %v2489 = vadd.f32 %v2046, %v2488
      %v2490 = vpop.f32.mrb[0].mxu0
      %2491 = vmatprep.mubr.f32.mxu0 0.0
      %2492 = vmatmul.mubr.f32.gmra.mrb[0].mxu0 %v2188
      %v2493 = vpop.f32.mrb[0].mxu0
      %v2494 = vadd.f32 %v2046, %v2493
      %v2495 = vpop.f32.mrb[0].mxu0
      %2496 = vmatprep.mubr.f32.mxu0 0.0
      %2497 = vmatmul.mubr.f32.gmra.mrb[0].mxu0 %v2191
      %v2498 = vpop.f32.mrb[0].mxu0
      %v2499 = vadd.f32 %v2046, %v2498
      %v2500 = vpop.f32.mrb[0].mxu0
      %2501 = vdwg.mxu0
      %vm2502 = vcmp.ge.f32.partialorder %v2264, 0.0
      %vm2503 = vcmp.ge.f32.partialorder %v2269, 0.0
      %vm2504 = vcmp.ge.f32.partialorder %v2274, 0.0
      %vm2505 = vcmp.ge.f32.partialorder %v2279, 0.0
      %vm2506 = vcmp.ge.f32.partialorder %v2284, 0.0
      %vm2507 = vcmp.ge.f32.partialorder %v2289, 0.0
      %vm2508 = vcmp.ge.f32.partialorder %v2294, 0.0
      %vm2509 = vcmp.ge.f32.partialorder %v2299, 0.0
      %vm2510 = vcmp.ge.f32.partialorder %v2304, 0.0
      %vm2511 = vcmp.ge.f32.partialorder %v2309, 0.0
      %vm2512 = vcmp.ge.f32.partialorder %v2314, 0.0
      %vm2513 = vcmp.ge.f32.partialorder %v2319, 0.0
      %vm2514 = vcmp.ge.f32.partialorder %v2324, 0.0
      %vm2515 = vcmp.ge.f32.partialorder %v2329, 0.0
      %vm2516 = vcmp.ge.f32.partialorder %v2334, 0.0
      %vm2517 = vcmp.ge.f32.partialorder %v2339, 0.0
      %vm2518 = vcmp.ge.f32.partialorder %v2344, 0.0
      %vm2519 = vcmp.ge.f32.partialorder %v2349, 0.0
      %vm2520 = vcmp.ge.f32.partialorder %v2354, 0.0
      %vm2521 = vcmp.ge.f32.partialorder %v2359, 0.0
      %vm2522 = vcmp.ge.f32.partialorder %v2364, 0.0
      %vm2523 = vcmp.ge.f32.partialorder %v2369, 0.0
      %vm2524 = vcmp.ge.f32.partialorder %v2374, 0.0
      %vm2525 = vcmp.ge.f32.partialorder %v2379, 0.0
      %vm2526 = vcmp.ge.f32.partialorder %v2384, 0.0
      %vm2527 = vcmp.ge.f32.partialorder %v2389, 0.0
      %vm2528 = vcmp.ge.f32.partialorder %v2394, 0.0
      %vm2529 = vcmp.ge.f32.partialorder %v2399, 0.0
      %vm2530 = vcmp.ge.f32.partialorder %v2404, 0.0
      %vm2531 = vcmp.ge.f32.partialorder %v2409, 0.0
      %vm2532 = vcmp.ge.f32.partialorder %v2414, 0.0
      %vm2533 = vcmp.ge.f32.partialorder %v2419, 0.0
      %vm2534 = vcmp.ge.f32.partialorder %v2424, 0.0
      %vm2535 = vcmp.ge.f32.partialorder %v2429, 0.0
      %vm2536 = vcmp.ge.f32.partialorder %v2434, 0.0
      %vm2537 = vcmp.ge.f32.partialorder %v2439, 0.0
      %vm2538 = vcmp.ge.f32.partialorder %v2444, 0.0
      %vm2539 = vcmp.ge.f32.partialorder %v2449, 0.0
      %vm2540 = vcmp.ge.f32.partialorder %v2454, 0.0
      %vm2541 = vcmp.ge.f32.partialorder %v2459, 0.0
      %vm2542 = vcmp.ge.f32.partialorder %v2464, 0.0
      %vm2543 = vcmp.ge.f32.partialorder %v2469, 0.0
      %vm2544 = vcmp.ge.f32.partialorder %v2474, 0.0
      %vm2545 = vcmp.ge.f32.partialorder %v2479, 0.0
      %vm2546 = vcmp.ge.f32.partialorder %v2484, 0.0
      %vm2547 = vcmp.ge.f32.partialorder %v2489, 0.0
      %vm2548 = vcmp.ge.f32.partialorder %v2494, 0.0
      %vm2549 = vcmp.ge.f32.partialorder %v2499, 0.0
      %v2550 = vmul.f32 %v2264, 0.2
      %v2551 = vmul.f32 %v2269, 0.2
      %v2552 = vmul.f32 %v2274, 0.2
      %v2553 = vmul.f32 %v2279, 0.2
      %v2554 = vmul.f32 %v2284, 0.2
      %v2555 = vmul.f32 %v2289, 0.2
      %v2556 = vmul.f32 %v2294, 0.2
      %v2557 = vmul.f32 %v2299, 0.2
      %v2558 = vmul.f32 %v2304, 0.2
      %v2559 = vmul.f32 %v2309, 0.2
      %v2560 = vmul.f32 %v2314, 0.2
      %v2561 = vmul.f32 %v2319, 0.2
      %v2562 = vmul.f32 %v2324, 0.2
      %v2563 = vmul.f32 %v2329, 0.2
      %v2564 = vmul.f32 %v2334, 0.2
      %v2565 = vmul.f32 %v2339, 0.2
      %v2566 = vmul.f32 %v2344, 0.2
      %v2567 = vmul.f32 %v2349, 0.2
      %v2568 = vmul.f32 %v2354, 0.2
      %v2569 = vmul.f32 %v2359, 0.2
      %v2570 = vmul.f32 %v2364, 0.2
      %v2571 = vmul.f32 %v2369, 0.2
      %v2572 = vmul.f32 %v2374, 0.2
      %v2573 = vmul.f32 %v2379, 0.2
      %v2574 = vmul.f32 %v2384, 0.2
      %v2575 = vmul.f32 %v2389, 0.2
      %v2576 = vmul.f32 %v2394, 0.2
      %v2577 = vmul.f32 %v2399, 0.2
      %v2578 = vmul.f32 %v2404, 0.2
      %v2579 = vmul.f32 %v2409, 0.2
      %v2580 = vmul.f32 %v2414, 0.2
      %v2581 = vmul.f32 %v2419, 0.2
      %v2582 = vmul.f32 %v2424, 0.2
      %v2583 = vmul.f32 %v2429, 0.2
      %v2584 = vmul.f32 %v2434, 0.2
      %v2585 = vmul.f32 %v2439, 0.2
      %v2586 = vmul.f32 %v2444, 0.2
      %v2587 = vmul.f32 %v2449, 0.2
      %v2588 = vmul.f32 %v2454, 0.2
      %v2589 = vmul.f32 %v2459, 0.2
      %v2590 = vmul.f32 %v2464, 0.2
      %v2591 = vmul.f32 %v2469, 0.2
      %v2592 = vmul.f32 %v2474, 0.2
      %v2593 = vmul.f32 %v2479, 0.2
      %v2594 = vmul.f32 %v2484, 0.2
      %v2595 = vmul.f32 %v2489, 0.2
      %v2596 = vmul.f32 %v2494, 0.2
      %v2597 = vmul.f32 %v2499, 0.2
      %v2598 = vsel %vm2502, %v2264, %v2550
      %v2599 = vsel %vm2503, %v2269, %v2551
      %v2600 = vsel %vm2504, %v2274, %v2552
      %v2601 = vsel %vm2505, %v2279, %v2553
      %v2602 = vsel %vm2506, %v2284, %v2554
      %v2603 = vsel %vm2507, %v2289, %v2555
      %v2604 = vsel %vm2508, %v2294, %v2556
      %v2605 = vsel %vm2509, %v2299, %v2557
      %v2606 = vsel %vm2510, %v2304, %v2558
      %v2607 = vsel %vm2511, %v2309, %v2559
      %v2608 = vsel %vm2512, %v2314, %v2560
      %v2609 = vsel %vm2513, %v2319, %v2561
      %v2610 = vsel %vm2514, %v2324, %v2562
      %v2611 = vsel %vm2515, %v2329, %v2563
      %v2612 = vsel %vm2516, %v2334, %v2564
      %v2613 = vsel %vm2517, %v2339, %v2565
      %v2614 = vsel %vm2518, %v2344, %v2566
      %v2615 = vsel %vm2519, %v2349, %v2567
      %v2616 = vsel %vm2520, %v2354, %v2568
      %v2617 = vsel %vm2521, %v2359, %v2569
      %v2618 = vsel %vm2522, %v2364, %v2570
      %v2619 = vsel %vm2523, %v2369, %v2571
      %v2620 = vsel %vm2524, %v2374, %v2572
      %v2621 = vsel %vm2525, %v2379, %v2573
      %v2622 = vsel %vm2526, %v2384, %v2574
      %v2623 = vsel %vm2527, %v2389, %v2575
      %v2624 = vsel %vm2528, %v2394, %v2576
      %v2625 = vsel %vm2529, %v2399, %v2577
      %v2626 = vsel %vm2530, %v2404, %v2578
      %v2627 = vsel %vm2531, %v2409, %v2579
      %v2628 = vsel %vm2532, %v2414, %v2580
      %v2629 = vsel %vm2533, %v2419, %v2581
      %v2630 = vsel %vm2534, %v2424, %v2582
      %v2631 = vsel %vm2535, %v2429, %v2583
      %v2632 = vsel %vm2536, %v2434, %v2584
      %v2633 = vsel %vm2537, %v2439, %v2585
      %v2634 = vsel %vm2538, %v2444, %v2586
      %v2635 = vsel %vm2539, %v2449, %v2587
      %v2636 = vsel %vm2540, %v2454, %v2588
      %v2637 = vsel %vm2541, %v2459, %v2589
      %v2638 = vsel %vm2542, %v2464, %v2590
      %v2639 = vsel %vm2543, %v2469, %v2591
      %v2640 = vsel %vm2544, %v2474, %v2592
      %v2641 = vsel %vm2545, %v2479, %v2593
      %v2642 = vsel %vm2546, %v2484, %v2594
      %v2643 = vsel %vm2547, %v2489, %v2595
      %v2644 = vsel %vm2548, %v2494, %v2596
      %v2645 = vsel %vm2549, %v2499, %v2597
      %2646 = vst.msk [vmem:[%s170] sm:$0xff] %vm1644, %v2598
      %2647 = vst.msk [vmem:[%s170 + $0x8] sm:$0xff] %vm1644, %v2599
      %2648 = vst.msk [vmem:[%s170 + $0x10] sm:$0xff] %vm1644, %v2600
      %2649 = vst.msk [vmem:[%s170 + $0x18] sm:$0xff] %vm1644, %v2601
      %2650 = vst.msk [vmem:[%s170 + $0x20] sm:$0xff] %vm1644, %v2602
      %2651 = vst.msk [vmem:[%s170 + $0x28] sm:$0xff] %vm1644, %v2603
      %2652 = vst.msk [vmem:[%s170 + $0x30] sm:$0xff] %vm1644, %v2604
      %2653 = vst.msk [vmem:[%s170 + $0x38] sm:$0xff] %vm1644, %v2605
      %2654 = vst.msk [vmem:[%s170 + $0x40] sm:$0xff] %vm1644, %v2606
      %2655 = vst.msk [vmem:[%s170 + $0x48] sm:$0xff] %vm1644, %v2607
      %2656 = vst.msk [vmem:[%s170 + $0x50] sm:$0xff] %vm1644, %v2608
      %2657 = vst.msk [vmem:[%s170 + $0x58] sm:$0xff] %vm1644, %v2609
      %2658 = vst.msk [vmem:[%s170 + $0x60] sm:$0xff] %vm1644, %v2610
      %2659 = vst.msk [vmem:[%s170 + $0x68] sm:$0xff] %vm1644, %v2611
      %2660 = vst.msk [vmem:[%s170 + $0x70] sm:$0xff] %vm1644, %v2612
      %2661 = vst.msk [vmem:[%s170 + $0x78] sm:$0xff] %vm1644, %v2613
      %2662 = vst.msk [vmem:[%s170 + $0x80] sm:$0xff] %vm1644, %v2614
      %2663 = vst.msk [vmem:[%s170 + $0x88] sm:$0xff] %vm1644, %v2615
      %2664 = vst.msk [vmem:[%s170 + $0x90] sm:$0xff] %vm1644, %v2616
      %2665 = vst.msk [vmem:[%s170 + $0x98] sm:$0xff] %vm1644, %v2617
      %2666 = vst.msk [vmem:[%s170 + $0xa0] sm:$0xff] %vm1644, %v2618
      %2667 = vst.msk [vmem:[%s170 + $0xa8] sm:$0xff] %vm1644, %v2619
      %2668 = vst.msk [vmem:[%s170 + $0xb0] sm:$0xff] %vm1644, %v2620
      %2669 = vst.msk [vmem:[%s170 + $0xb8] sm:$0xff] %vm1644, %v2621
      %2670 = vst.msk [vmem:[%s170 + $0xc0] sm:$0xff] %vm1644, %v2622
      %2671 = vst.msk [vmem:[%s170 + $0xc8] sm:$0xff] %vm1644, %v2623
      %2672 = vst.msk [vmem:[%s170 + $0xd0] sm:$0xff] %vm1644, %v2624
      %2673 = vst.msk [vmem:[%s170 + $0xd8] sm:$0xff] %vm1644, %v2625
      %2674 = vst.msk [vmem:[%s170 + $0xe0] sm:$0xff] %vm1644, %v2626
      %2675 = vst.msk [vmem:[%s170 + $0xe8] sm:$0xff] %vm1644, %v2627
      %2676 = vst.msk [vmem:[%s170 + $0xf0] sm:$0xff] %vm1644, %v2628
      %2677 = vst.msk [vmem:[%s170 + $0xf8] sm:$0xff] %vm1644, %v2629
      %2678 = vst.msk [vmem:[%s170 + $0x100] sm:$0xff] %vm1644, %v2630
      %2679 = vst.msk [vmem:[%s170 + $0x108] sm:$0xff] %vm1644, %v2631
      %2680 = vst.msk [vmem:[%s170 + $0x110] sm:$0xff] %vm1644, %v2632
      %2681 = vst.msk [vmem:[%s170 + $0x118] sm:$0xff] %vm1644, %v2633
      %2682 = vst.msk [vmem:[%s170 + $0x120] sm:$0xff] %vm1644, %v2634
      %2683 = vst.msk [vmem:[%s170 + $0x128] sm:$0xff] %vm1644, %v2635
      %2684 = vst.msk [vmem:[%s170 + $0x130] sm:$0xff] %vm1644, %v2636
      %2685 = vst.msk [vmem:[%s170 + $0x138] sm:$0xff] %vm1644, %v2637
      %2686 = vst.msk [vmem:[%s170 + $0x140] sm:$0xff] %vm1644, %v2638
      %2687 = vst.msk [vmem:[%s170 + $0x148] sm:$0xff] %vm1644, %v2639
      %2688 = vst.msk [vmem:[%s170 + $0x150] sm:$0xff] %vm1644, %v2640
      %2689 = vst.msk [vmem:[%s170 + $0x158] sm:$0xff] %vm1644, %v2641
      %2690 = vst.msk [vmem:[%s170 + $0x160] sm:$0xff] %vm1644, %v2642
      %2691 = vst.msk [vmem:[%s170 + $0x168] sm:$0xff] %vm1644, %v2643
      %2692 = vst.msk [vmem:[%s170 + $0x170] sm:$0xff] %vm1644, %v2644
      %2693 = vst.msk [vmem:[%s170 + $0x178] sm:$0xff] %vm1644, %v2645
      %p2694 = scmp.lt.s32.totalorder %s14, 1
      %s2695 = scalar_select %p2694, %s14, 1
      %s2696 = smul.addr %s2695, 48
      %s2697 = smul.addr %s2696, 8
      %s2698 = scalar_lea.vmem %s3, %s2697
      // Predicated region
      $region33: #{discriminator_forward.5} parent=31 // pred_check
        %p2699 = pneg %p100
      $region34: #{discriminator_forward.5} parent=31 // pred_check_branch
        %2701 = sbr.rel (%p2699) target = $region36
      $region35: #{discriminator_forward.5} parent=31 // pred_region
        _
      $region36: #{discriminator_forward.5} parent=31 // pred_fallthru
        _
    $region32: #{discriminator_forward.5} parent=5 // pred_fallthru
      _
    %p2702 = scmp.le.s32.totalorder 2, %s9
    // Predicated region
    $region37: #{discriminator_forward.5} parent=5 // pred_check
      %p2703 = pneg %p2702
    $region38: #{discriminator_forward.5} parent=5 // pred_check_branch
      %2705 = sbr.rel (%p2703) target = $region40
    $region39: #{discriminator_forward.5} parent=5 // pred_region
      %s2706 = ssub.s32 %s9, 2
      // Predicated region
      $region41: #{discriminator_forward.5} parent=39 // pred_check
        %p2707 = pneg %p106
      $region42: #{discriminator_forward.5} parent=39 // pred_check_branch
        %2709 = sbr.rel (%p2707) target = $region44
      $region43: #{discriminator_forward.5} parent=39 // pred_region
        %p2710 = scmp.lt.s32.totalorder %s15, 1
        %s2711 = scalar_select %p2710, %s15, 1
        %s2712 = smul.addr %s2711, 48
        %s2713 = smul.addr %s2712, 8
        %s2714 = scalar_lea.vmem %s3, %s2713
      $region44: #{discriminator_forward.5} parent=39 // pred_fallthru
        _
    $region40: #{discriminator_forward.5} parent=5 // pred_fallthru
      _
  $region6: #{discriminator_forward.5} parent=0 // loop_footer
    %s13 = sadd.s32 1, %s9
  $region7: #{discriminator_forward.5} parent=0 // loop_footer_branch
    %8 = sbr.rel target = $region3
  $region8: #{discriminator_forward.5} parent=0 // loop_exit
    _

// kernel: discriminator_forward.8
$region0: #{discriminator_forward.8}
  #allocation0 [shape = 'u32[]', space=smem, size = 0x4, offset = 0x4, fixed_abs, tag = 'smem constant byte address 0x4 - core index']
  #allocation1 [shape = 'u32[144,128]{1,0:T(1,128)}', space=vmem, size = 0x12000, scoped, tag = 'internal scratch']
  %s0 = inlined_call_operand.vmem [shape: f32[2,168,8], index: 0, kind: input, shape index: {}]
  %s1 = inlined_call_operand.vmem [shape: f32[72,8], index: 1, kind: input, shape index: {}]
  %s2 = inlined_call_operand.vmem [shape: f32[1,8], index: 2, kind: input, shape index: {}]
  %s3 = inlined_call_operand.vmem [shape: f32[2,16,8], index: 3, kind: input, shape index: {}]
  %s4 = inlined_call_operand.vmem [shape: f32[8,8], index: 4, kind: input, shape index: {}]
  %s5 = inlined_call_operand.vmem [shape: f32[1,8], index: 5, kind: input, shape index: {}]
  %s6 = inlined_call_operand.vmem [shape: f32[2,16,8], index: 6, kind: output, shape index: {}]
  %s7 = sld [smem:[#allocation0]]
  $region57: #{discriminator_forward.8} parent=0
    _
  %s9 = ssub.s32 1, %s7
  %s10 = scalar_select 0, %s9, %s7
  loop: start=0, step=1, limit=4
  $region2: #{discriminator_forward.8} parent=0 // loop_pre_header
    _
  $region3: #{discriminator_forward.8} parent=0 // loop_header
    %s12 = sphi 0, %s16
    %p13 = scmp.ge.s32.totalorder %s12, 4
    %s22 = sphi 0, %s24
    %s25 = sphi 0, %s22
    %s26 = sphi 0, %s25
    %s42 = sphi 0, %s26
    %s46 = sphi 0, %s46
    %s48 = sphi 0, %s46
    %s49 = sphi 0, %s48
    %s63 = sphi 0, %s49
    %s67 = sphi 0, %s67
    %s69 = sphi 0, %s67
    %s70 = sphi 0, %s69
    %s84 = sphi 0, %s70
    %s90 = sphi 0, %s92
    %s93 = sphi 0, %s90
    %s94 = sphi 0, %s93
    %s110 = sphi 0, %s94
    %s114 = sphi 0, %s114
    %s116 = sphi 0, %s114
    %s117 = sphi 0, %s116
    %s131 = sphi 0, %s117
    %s135 = sphi 0, %s135
    %s137 = sphi 0, %s135
    %s138 = sphi 0, %s137
    %s152 = sphi 0, %s138
    %s158 = sphi 0, %s160
    %s161 = sphi 0, %s158
    %s162 = sphi 0, %s161
    %s178 = sphi 0, %s162
  $region4: #{discriminator_forward.8} parent=0 // loop_header_branch
    %15 = sbr.rel (%p13) target = $region8
  $region5: #{discriminator_forward.8} parent=0 // loop_body
    %s17 = ssub.s32 %s12, 1
    %s18 = ssub.s32 %s12, 2
    %s19 = sadd.s32 %s12, 1
    %s20 = ssub.s32 %s12, %s19
    %p21 = scmp.eq.s32.totalorder %s20, 0
    %s23 = sadd.s32 %s22, 1
    %s24 = scalar_select %p21, %s22, %s23
    %p27 = pneg %p21
    %p28 = scmp.eq.s32.totalorder %s12, 1
    %p29 = por %p27, %p28
    %p30 = scmp.ne.s32.totalorder %s22, %s25
    %p31 = scmp.eq.s32.totalorder %s12, 0
    %p32 = por %p30, %p31
    %p33 = scmp.ne.s32.totalorder %s22, %s25
    %p34 = scmp.eq.s32.totalorder %s17, 1
    %p35 = por %p33, %p34
    %p36 = scmp.ne.s32.totalorder %s25, %s26
    %p37 = scmp.eq.s32.totalorder %s17, 0
    %p38 = por %p36, %p37
    %p39 = scmp.ne.s32.totalorder %s25, %s26
    %p40 = scmp.eq.s32.totalorder %s18, 1
    %p41 = por %p39, %p40
    %p43 = scmp.ne.s32.totalorder %s26, %s42
    %p44 = scmp.eq.s32.totalorder %s18, 0
    %p45 = por %p43, %p44
    %s47 = sadd.s32 %s46, 1
    %p50 = scmp.eq.s32.totalorder %s12, 1
    %p51 = scmp.ne.s32.totalorder %s46, %s48
    %p52 = scmp.eq.s32.totalorder %s12, 0
    %p53 = por %p51, %p52
    %p54 = scmp.ne.s32.totalorder %s46, %s48
    %p55 = scmp.eq.s32.totalorder %s17, 1
    %p56 = por %p54, %p55
    %p57 = scmp.ne.s32.totalorder %s48, %s49
    %p58 = scmp.eq.s32.totalorder %s17, 0
    %p59 = por %p57, %p58
    %p60 = scmp.ne.s32.totalorder %s48, %s49
    %p61 = scmp.eq.s32.totalorder %s18, 1
    %p62 = por %p60, %p61
    %p64 = scmp.ne.s32.totalorder %s49, %s63
    %p65 = scmp.eq.s32.totalorder %s18, 0
    %p66 = por %p64, %p65
    %s68 = sadd.s32 %s67, 1
    %p71 = scmp.eq.s32.totalorder %s12, 1
    %p72 = scmp.ne.s32.totalorder %s67, %s69
    %p73 = scmp.eq.s32.totalorder %s12, 0
    %p74 = por %p72, %p73
    %p75 = scmp.ne.s32.totalorder %s67, %s69
    %p76 = scmp.eq.s32.totalorder %s17, 1
    %p77 = por %p75, %p76
    %p78 = scmp.ne.s32.totalorder %s69, %s70
    %p79 = scmp.eq.s32.totalorder %s17, 0
    %p80 = por %p78, %p79
    %p81 = scmp.ne.s32.totalorder %s69, %s70
    %p82 = scmp.eq.s32.totalorder %s18, 1
    %p83 = por %p81, %p82
    %p85 = scmp.ne.s32.totalorder %s70, %s84
    %p86 = scmp.eq.s32.totalorder %s18, 0
    %p87 = por %p85, %p86
    %s88 = ssub.s32 %s12, %s19
    %p89 = scmp.eq.s32.totalorder %s88, 0
    %s91 = sadd.s32 %s90, 1
    %s92 = scalar_select %p89, %s90, %s91
    %p95 = pneg %p89
    %p96 = scmp.eq.s32.totalorder %s12, 1
    %p97 = por %p95, %p96
    %p98 = scmp.ne.s32.totalorder %s90, %s93
    %p99 = scmp.eq.s32.totalorder %s12, 0
    %p100 = por %p98, %p99
    %p101 = scmp.ne.s32.totalorder %s90, %s93
    %p102 = scmp.eq.s32.totalorder %s17, 1
    %p103 = por %p101, %p102
    %p104 = scmp.ne.s32.totalorder %s93, %s94
    %p105 = scmp.eq.s32.totalorder %s17, 0
    %p106 = por %p104, %p105
    %p107 = scmp.ne.s32.totalorder %s93, %s94
    %p108 = scmp.eq.s32.totalorder %s18, 1
    %p109 = por %p107, %p108
    %p111 = scmp.ne.s32.totalorder %s94, %s110
    %p112 = scmp.eq.s32.totalorder %s18, 0
    %p113 = por %p111, %p112
    %s115 = sadd.s32 %s114, 1
    %p118 = scmp.eq.s32.totalorder %s12, 1
    %p119 = scmp.ne.s32.totalorder %s114, %s116
    %p120 = scmp.eq.s32.totalorder %s12, 0
    %p121 = por %p119, %p120
    %p122 = scmp.ne.s32.totalorder %s114, %s116
    %p123 = scmp.eq.s32.totalorder %s17, 1
    %p124 = por %p122, %p123
    %p125 = scmp.ne.s32.totalorder %s116, %s117
    %p126 = scmp.eq.s32.totalorder %s17, 0
    %p127 = por %p125, %p126
    %p128 = scmp.ne.s32.totalorder %s116, %s117
    %p129 = scmp.eq.s32.totalorder %s18, 1
    %p130 = por %p128, %p129
    %p132 = scmp.ne.s32.totalorder %s117, %s131
    %p133 = scmp.eq.s32.totalorder %s18, 0
    %p134 = por %p132, %p133
    %s136 = sadd.s32 %s135, 1
    %p139 = scmp.eq.s32.totalorder %s12, 1
    %p140 = scmp.ne.s32.totalorder %s135, %s137
    %p141 = scmp.eq.s32.totalorder %s12, 0
    %p142 = por %p140, %p141
    %p143 = scmp.ne.s32.totalorder %s135, %s137
    %p144 = scmp.eq.s32.totalorder %s17, 1
    %p145 = por %p143, %p144
    %p146 = scmp.ne.s32.totalorder %s137, %s138
    %p147 = scmp.eq.s32.totalorder %s17, 0
    %p148 = por %p146, %p147
    %p149 = scmp.ne.s32.totalorder %s137, %s138
    %p150 = scmp.eq.s32.totalorder %s18, 1
    %p151 = por %p149, %p150
    %p153 = scmp.ne.s32.totalorder %s138, %s152
    %p154 = scmp.eq.s32.totalorder %s18, 0
    %p155 = por %p153, %p154
    %s156 = ssub.s32 %s12, %s19
    %p157 = scmp.eq.s32.totalorder %s156, 0
    %s159 = sadd.s32 %s158, 1
    %s160 = scalar_select %p157, %s158, %s159
    %p163 = pneg %p157
    %p164 = scmp.eq.s32.totalorder %s12, 1
    %p165 = por %p163, %p164
    %p166 = scmp.ne.s32.totalorder %s158, %s161
    %p167 = scmp.eq.s32.totalorder %s12, 0
    %p168 = por %p166, %p167
    %p169 = scmp.ne.s32.totalorder %s158, %s161
    %p170 = scmp.eq.s32.totalorder %s17, 1
    %p171 = por %p169, %p170
    %p172 = scmp.ne.s32.totalorder %s161, %s162
    %p173 = scmp.eq.s32.totalorder %s17, 0
    %p174 = por %p172, %p173
    %p175 = scmp.ne.s32.totalorder %s161, %s162
    %p176 = scmp.eq.s32.totalorder %s18, 1
    %p177 = por %p175, %p176
    %p179 = scmp.ne.s32.totalorder %s162, %s178
    %p180 = scmp.eq.s32.totalorder %s18, 0
    %p181 = por %p179, %p180
    %p182 = scmp.le.s32.totalorder 1, %s12
    %p183 = scmp.lt.s32.totalorder %s12, 3
    %p184 = pnand %p182, %p183
    %p185 = pneg %p184
    // Predicated region
    $region9: #{discriminator_forward.8} parent=5 // pred_check
      _
    $region10: #{discriminator_forward.8} parent=5 // pred_check_branch
      %187 = sbr.rel (%p184) target = $region12
    $region11: #{discriminator_forward.8} parent=5 // pred_region
      %s188 = ssub.s32 %s12, 1
      // Predicated region
      $region13: #{discriminator_forward.8} parent=11 // pred_check
        %p189 = pneg %p59
      $region14: #{discriminator_forward.8} parent=11 // pred_check_branch
        %191 = sbr.rel (%p189) target = $region16
      $region15: #{discriminator_forward.8} parent=11 // pred_region
        _
      $region16: #{discriminator_forward.8} parent=11 // pred_fallthru
        _
      // Predicated region
      $region17: #{discriminator_forward.8} parent=11 // pred_check
        %p192 = pneg %p80
      $region18: #{discriminator_forward.8} parent=11 // pred_check_branch
        %194 = sbr.rel (%p192) target = $region20
      $region19: #{discriminator_forward.8} parent=11 // pred_region
        _
      $region20: #{discriminator_forward.8} parent=11 // pred_fallthru
        _
      // Predicated region
      $region21: #{discriminator_forward.8} parent=11 // pred_check
        %p195 = pneg %p127
      $region22: #{discriminator_forward.8} parent=11 // pred_check_branch
        %197 = sbr.rel (%p195) target = $region24
      $region23: #{discriminator_forward.8} parent=11 // pred_region
        _
      $region24: #{discriminator_forward.8} parent=11 // pred_fallthru
        _
      // Predicated region
      $region25: #{discriminator_forward.8} parent=11 // pred_check
        %p198 = pneg %p148
      $region26: #{discriminator_forward.8} parent=11 // pred_check_branch
        %200 = sbr.rel (%p198) target = $region28
      $region27: #{discriminator_forward.8} parent=11 // pred_region
        _
      $region28: #{discriminator_forward.8} parent=11 // pred_fallthru
        _
    $region12: #{discriminator_forward.8} parent=5 // pred_fallthru
      _
    %p201 = scmp.lt.s32.totalorder %s12, 2
    // Predicated region
    $region29: #{discriminator_forward.8} parent=5 // pred_check
      %p202 = pneg %p201
    $region30: #{discriminator_forward.8} parent=5 // pred_check_branch
      %204 = sbr.rel (%p202) target = $region32
    $region31: #{discriminator_forward.8} parent=5 // pred_region
      // Predicated region
      $region33: #{discriminator_forward.8} parent=31 // pred_check
        %p205 = pneg %p32
      $region34: #{discriminator_forward.8} parent=31 // pred_check_branch
        %207 = sbr.rel (%p205) target = $region36
      $region35: #{discriminator_forward.8} parent=31 // pred_region
        %p208 = scmp.lt.s32.totalorder %s12, 1
        %s209 = scalar_select %p208, %s12, 1
        %s210 = smul.addr %s209, 21
        %s211 = smul.addr %s210, 8
        %s212 = scalar_lea.vmem %s0, %s211
      $region36: #{discriminator_forward.8} parent=31 // pred_fallthru
        _
      // Predicated region
      $region37: #{discriminator_forward.8} parent=31 // pred_check
        %p213 = pneg %p100
      $region38: #{discriminator_forward.8} parent=31 // pred_check_branch
        %215 = sbr.rel (%p213) target = $region40
      $region39: #{discriminator_forward.8} parent=31 // pred_region
        %p216 = scmp.lt.s32.totalorder %s12, 1
        %s217 = scalar_select %p216, %s12, 1
        %s218 = smul.addr %s217, 2
        %s219 = smul.addr %s218, 8
        %s220 = scalar_lea.vmem %s3, %s219
      $region40: #{discriminator_forward.8} parent=31 // pred_fallthru
        _
    $region32: #{discriminator_forward.8} parent=5 // pred_fallthru
      _
    %p221 = scmp.le.s32.totalorder 1, %s12
    %p222 = scmp.lt.s32.totalorder %s12, 3
    %p223 = pnand %p221, %p222
    %p224 = pneg %p223
    // Predicated region
    $region41: #{discriminator_forward.8} parent=5 // pred_check
      _
    $region42: #{discriminator_forward.8} parent=5 // pred_check_branch
      %226 = sbr.rel (%p223) target = $region44
    $region43: #{discriminator_forward.8} parent=5 // pred_region
      %s227 = ssub.s32 %s12, 1
      %p228 = scmp.lt.s32.totalorder %s17, 1
      %s229 = scalar_select %p228, %s17, 1
      %s230 = smul.addr %s229, 21
      %s231 = smul.addr %s230, 8
      %s232 = scalar_lea.vmem %s0, %s231
      %p233 = pneg %p38
      %p234 = pneg %p35
      %p235 = pneg %p59
      %p236 = pneg %p56
      %p237 = pneg %p80
      %p238 = pneg %p77
      %p239 = scmp.lt.s32.totalorder %s17, 1
      %s240 = scalar_select %p239, %s17, 1
      %s241 = smul.addr %s240, 2
      %s242 = smul.addr %s241, 8
      %s243 = scalar_lea.vmem %s3, %s242
      %p244 = pneg %p106
      %p245 = pneg %p103
      %p246 = pneg %p127
      %p247 = pneg %p124
      %p248 = pneg %p148
      %p249 = pneg %p145
      %p250 = pneg %p174
      %p251 = pneg %p171
      %p252 = scmp.lt.s32.totalorder %s17, 1
      %s253 = scalar_select %p252, %s17, 1
      %s254 = smul.addr %s253, 2
      %s255 = smul.addr %s254, 8
      %s256 = scalar_lea.vmem %s6, %s255
      %p257 = scmp.lt.s32.totalorder %s17, 1
      %s258 = scalar_select %p257, %s17, 1
      %s259 = smul.addr %s258, 21
      %s260 = smul.addr %s259, 8
      %s261 = scalar_lea.vmem %s0, %s260
      %p262 = scmp.lt.s32.totalorder %s17, 1
      %s263 = scalar_select %p262, %s17, 1
      %s264 = smul.addr %s263, 2
      %s265 = smul.addr %s264, 8
      %s266 = scalar_lea.vmem %s3, %s265
      %p267 = scmp.lt.s32.totalorder %s17, 1
      %s268 = scalar_select %p267, %s17, 1
      %s269 = smul.addr %s268, 2
      %s270 = smul.addr %s269, 8
      %s271 = scalar_lea.vmem %s6, %s270
      %v272 = vld [vmem:[%s261] sm:$0xff]
      %v273 = vld [vmem:[%s261 + $0x8] sm:$0xff]
      %v274 = vld [vmem:[%s261 + $0x10] sm:$0xff]
      %v275 = vld [vmem:[%s261 + $0x18] sm:$0xff]
      %v276 = vld [vmem:[%s261 + $0x20] sm:$0xff]
      %v277 = vld [vmem:[%s261 + $0x28] sm:$0xff]
      %v278 = vld [vmem:[%s261 + $0x30] sm:$0xff]
      %v279 = vld [vmem:[%s261 + $0x38] sm:$0xff]
      %v280 = vld [vmem:[%s261 + $0x40] sm:$0xff]
      %v281 = vld [vmem:[%s261 + $0x48] sm:$0xff]
      %v282 = vld [vmem:[%s261 + $0x50] sm:$0xff]
      %v283 = vld [vmem:[%s261 + $0x58] sm:$0xff]
      %v284 = vld [vmem:[%s261 + $0x60] sm:$0xff]
      %v285 = vld [vmem:[%s261 + $0x68] sm:$0xff]
      %v286 = vld [vmem:[%s261 + $0x70] sm:$0xff]
      %v287 = vld [vmem:[%s261 + $0x78] sm:$0xff]
      %v288 = vld [vmem:[%s261 + $0x1] sm:$0xff]
      %v289 = vld [vmem:[%s261 + $0x9] sm:$0xff]
      %v290 = vld [vmem:[%s261 + $0x11] sm:$0xff]
      %v291 = vld [vmem:[%s261 + $0x19] sm:$0xff]
      %v292 = vld [vmem:[%s261 + $0x21] sm:$0xff]
      %v293 = vld [vmem:[%s261 + $0x29] sm:$0xff]
      %v294 = vld [vmem:[%s261 + $0x31] sm:$0xff]
      %v295 = vld [vmem:[%s261 + $0x39] sm:$0xff]
      %v296 = vld [vmem:[%s261 + $0x41] sm:$0xff]
      %v297 = vld [vmem:[%s261 + $0x49] sm:$0xff]
      %v298 = vld [vmem:[%s261 + $0x51] sm:$0xff]
      %v299 = vld [vmem:[%s261 + $0x59] sm:$0xff]
      %v300 = vld [vmem:[%s261 + $0x61] sm:$0xff]
      %v301 = vld [vmem:[%s261 + $0x69] sm:$0xff]
      %v302 = vld [vmem:[%s261 + $0x71] sm:$0xff]
      %v303 = vld [vmem:[%s261 + $0x79] sm:$0xff]
      %v304 = vld [vmem:[%s261 + $0x2] sm:$0xff]
      %v305 = vld [vmem:[%s261 + $0xa] sm:$0xff]
      %v306 = vld [vmem:[%s261 + $0x12] sm:$0xff]
      %v307 = vld [vmem:[%s261 + $0x1a] sm:$0xff]
      %v308 = vld [vmem:[%s261 + $0x22] sm:$0xff]
      %v309 = vld [vmem:[%s261 + $0x2a] sm:$0xff]
      %v310 = vld [vmem:[%s261 + $0x32] sm:$0xff]
      %v311 = vld [vmem:[%s261 + $0x3a] sm:$0xff]
      %v312 = vld [vmem:[%s261 + $0x42] sm:$0xff]
      %v313 = vld [vmem:[%s261 + $0x4a] sm:$0xff]
      %v314 = vld [vmem:[%s261 + $0x52] sm:$0xff]
      %v315 = vld [vmem:[%s261 + $0x5a] sm:$0xff]
      %v316 = vld [vmem:[%s261 + $0x62] sm:$0xff]
      %v317 = vld [vmem:[%s261 + $0x6a] sm:$0xff]
      %v318 = vld [vmem:[%s261 + $0x72] sm:$0xff]
      %v319 = vld [vmem:[%s261 + $0x7a] sm:$0xff]
      %v320 = vld [vmem:[%s261 + $0x80] sm:$0xff]
      %v321 = vld [vmem:[%s261 + $0x88] sm:$0xff]
      %v322 = vld [vmem:[%s261 + $0x81] sm:$0xff]
      %v323 = vld [vmem:[%s261 + $0x89] sm:$0xff]
      %v324 = vld [vmem:[%s261 + $0x82] sm:$0xff]
      %v325 = vld [vmem:[%s261 + $0x8a] sm:$0xff]
      %v326 = vld [vmem:[%s261 + $0x90] sm:$0xff]
      %v327 = vld [vmem:[%s261 + $0x98] sm:$0xff]
      %v328 = vld [vmem:[%s261 + $0x91] sm:$0xff]
      %v329 = vld [vmem:[%s261 + $0x99] sm:$0xff]
      %v330 = vld [vmem:[%s261 + $0x92] sm:$0xff]
      %v331 = vld [vmem:[%s261 + $0x9a] sm:$0xff]
      %348 = vrot.lane.b32.xlu0 %v288, 8
      %v349 = vpop.permute.xlu0 %348
      %350 = vrot.lane.b32.xlu0 %v289, 8
      %v351 = vpop.permute.xlu0 %350
      %352 = vrot.lane.b32.xlu0 %v290, 8
      %v353 = vpop.permute.xlu0 %352
      %354 = vrot.lane.b32.xlu0 %v291, 8
      %v355 = vpop.permute.xlu0 %354
      %356 = vrot.lane.b32.xlu0 %v292, 8
      %v357 = vpop.permute.xlu0 %356
      %358 = vrot.lane.b32.xlu0 %v293, 8
      %v359 = vpop.permute.xlu0 %358
      %360 = vrot.lane.b32.xlu0 %v294, 8
      %v361 = vpop.permute.xlu0 %360
      %362 = vrot.lane.b32.xlu0 %v295, 8
      %v363 = vpop.permute.xlu0 %362
      %364 = vrot.lane.b32.xlu0 %v296, 8
      %v365 = vpop.permute.xlu0 %364
      %366 = vrot.lane.b32.xlu0 %v297, 8
      %v367 = vpop.permute.xlu0 %366
      %368 = vrot.lane.b32.xlu0 %v298, 8
      %v369 = vpop.permute.xlu0 %368
      %370 = vrot.lane.b32.xlu0 %v299, 8
      %v371 = vpop.permute.xlu0 %370
      %372 = vrot.lane.b32.xlu0 %v300, 8
      %v373 = vpop.permute.xlu0 %372
      %374 = vrot.lane.b32.xlu0 %v301, 8
      %v375 = vpop.permute.xlu0 %374
      %376 = vrot.lane.b32.xlu0 %v302, 8
      %v377 = vpop.permute.xlu0 %376
      %378 = vrot.lane.b32.xlu0 %v303, 8
      %v379 = vpop.permute.xlu0 %378
      %412 = vrot.lane.b32.xlu0 %v304, 16
      %v413 = vpop.permute.xlu0 %412
      %414 = vrot.lane.b32.xlu0 %v305, 16
      %v415 = vpop.permute.xlu0 %414
      %416 = vrot.lane.b32.xlu0 %v306, 16
      %v417 = vpop.permute.xlu0 %416
      %418 = vrot.lane.b32.xlu0 %v307, 16
      %v419 = vpop.permute.xlu0 %418
      %420 = vrot.lane.b32.xlu0 %v308, 16
      %v421 = vpop.permute.xlu0 %420
      %422 = vrot.lane.b32.xlu0 %v309, 16
      %v423 = vpop.permute.xlu0 %422
      %424 = vrot.lane.b32.xlu0 %v310, 16
      %v425 = vpop.permute.xlu0 %424
      %426 = vrot.lane.b32.xlu0 %v311, 16
      %v427 = vpop.permute.xlu0 %426
      %428 = vrot.lane.b32.xlu0 %v312, 16
      %v429 = vpop.permute.xlu0 %428
      %430 = vrot.lane.b32.xlu0 %v313, 16
      %v431 = vpop.permute.xlu0 %430
      %432 = vrot.lane.b32.xlu0 %v314, 16
      %v433 = vpop.permute.xlu0 %432
      %434 = vrot.lane.b32.xlu0 %v315, 16
      %v435 = vpop.permute.xlu0 %434
      %436 = vrot.lane.b32.xlu0 %v316, 16
      %v437 = vpop.permute.xlu0 %436
      %438 = vrot.lane.b32.xlu0 %v317, 16
      %v439 = vpop.permute.xlu0 %438
      %440 = vrot.lane.b32.xlu0 %v318, 16
      %v441 = vpop.permute.xlu0 %440
      %442 = vrot.lane.b32.xlu0 %v319, 16
      %v443 = vpop.permute.xlu0 %442
      %476 = vrot.lane.b32.xlu0 %v274, 24
      %v477 = vpop.permute.xlu0 %476
      %478 = vrot.lane.b32.xlu0 %v275, 24
      %v479 = vpop.permute.xlu0 %478
      %480 = vrot.lane.b32.xlu0 %v276, 24
      %v481 = vpop.permute.xlu0 %480
      %482 = vrot.lane.b32.xlu0 %v277, 24
      %v483 = vpop.permute.xlu0 %482
      %484 = vrot.lane.b32.xlu0 %v278, 24
      %v485 = vpop.permute.xlu0 %484
      %486 = vrot.lane.b32.xlu0 %v279, 24
      %v487 = vpop.permute.xlu0 %486
      %488 = vrot.lane.b32.xlu0 %v280, 24
      %v489 = vpop.permute.xlu0 %488
      %490 = vrot.lane.b32.xlu0 %v281, 24
      %v491 = vpop.permute.xlu0 %490
      %492 = vrot.lane.b32.xlu0 %v282, 24
      %v493 = vpop.permute.xlu0 %492
      %494 = vrot.lane.b32.xlu0 %v283, 24
      %v495 = vpop.permute.xlu0 %494
      %496 = vrot.lane.b32.xlu0 %v284, 24
      %v497 = vpop.permute.xlu0 %496
      %498 = vrot.lane.b32.xlu0 %v285, 24
      %v499 = vpop.permute.xlu0 %498
      %500 = vrot.lane.b32.xlu0 %v286, 24
      %v501 = vpop.permute.xlu0 %500
      %502 = vrot.lane.b32.xlu0 %v287, 24
      %v503 = vpop.permute.xlu0 %502
      %504 = vrot.lane.b32.xlu0 %v320, 24
      %v505 = vpop.permute.xlu0 %504
      %506 = vrot.lane.b32.xlu0 %v321, 24
      %v507 = vpop.permute.xlu0 %506
      %526 = vrot.lane.b32.xlu0 %v290, 32
      %v527 = vpop.permute.xlu0 %526
      %528 = vrot.lane.b32.xlu0 %v291, 32
      %v529 = vpop.permute.xlu0 %528
      %530 = vrot.lane.b32.xlu0 %v292, 32
      %v531 = vpop.permute.xlu0 %530
      %532 = vrot.lane.b32.xlu0 %v293, 32
      %v533 = vpop.permute.xlu0 %532
      %534 = vrot.lane.b32.xlu0 %v294, 32
      %v535 = vpop.permute.xlu0 %534
      %536 = vrot.lane.b32.xlu0 %v295, 32
      %v537 = vpop.permute.xlu0 %536
      %538 = vrot.lane.b32.xlu0 %v296, 32
      %v539 = vpop.permute.xlu0 %538
      %540 = vrot.lane.b32.xlu0 %v297, 32
      %v541 = vpop.permute.xlu0 %540
      %542 = vrot.lane.b32.xlu0 %v298, 32
      %v543 = vpop.permute.xlu0 %542
      %544 = vrot.lane.b32.xlu0 %v299, 32
      %v545 = vpop.permute.xlu0 %544
      %546 = vrot.lane.b32.xlu0 %v300, 32
      %v547 = vpop.permute.xlu0 %546
      %548 = vrot.lane.b32.xlu0 %v301, 32
      %v549 = vpop.permute.xlu0 %548
      %550 = vrot.lane.b32.xlu0 %v302, 32
      %v551 = vpop.permute.xlu0 %550
      %552 = vrot.lane.b32.xlu0 %v303, 32
      %v553 = vpop.permute.xlu0 %552
      %554 = vrot.lane.b32.xlu0 %v322, 32
      %v555 = vpop.permute.xlu0 %554
      %556 = vrot.lane.b32.xlu0 %v323, 32
      %v557 = vpop.permute.xlu0 %556
      %576 = vrot.lane.b32.xlu0 %v306, 40
      %v577 = vpop.permute.xlu0 %576
      %578 = vrot.lane.b32.xlu0 %v307, 40
      %v579 = vpop.permute.xlu0 %578
      %580 = vrot.lane.b32.xlu0 %v308, 40
      %v581 = vpop.permute.xlu0 %580
      %582 = vrot.lane.b32.xlu0 %v309, 40
      %v583 = vpop.permute.xlu0 %582
      %584 = vrot.lane.b32.xlu0 %v310, 40
      %v585 = vpop.permute.xlu0 %584
      %586 = vrot.lane.b32.xlu0 %v311, 40
      %v587 = vpop.permute.xlu0 %586
      %588 = vrot.lane.b32.xlu0 %v312, 40
      %v589 = vpop.permute.xlu0 %588
      %590 = vrot.lane.b32.xlu0 %v313, 40
      %v591 = vpop.permute.xlu0 %590
      %592 = vrot.lane.b32.xlu0 %v314, 40
      %v593 = vpop.permute.xlu0 %592
      %594 = vrot.lane.b32.xlu0 %v315, 40
      %v595 = vpop.permute.xlu0 %594
      %596 = vrot.lane.b32.xlu0 %v316, 40
      %v597 = vpop.permute.xlu0 %596
      %598 = vrot.lane.b32.xlu0 %v317, 40
      %v599 = vpop.permute.xlu0 %598
      %600 = vrot.lane.b32.xlu0 %v318, 40
      %v601 = vpop.permute.xlu0 %600
      %602 = vrot.lane.b32.xlu0 %v319, 40
      %v603 = vpop.permute.xlu0 %602
      %604 = vrot.lane.b32.xlu0 %v324, 40
      %v605 = vpop.permute.xlu0 %604
      %606 = vrot.lane.b32.xlu0 %v325, 40
      %v607 = vpop.permute.xlu0 %606
      %626 = vrot.lane.b32.xlu0 %v276, 48
      %v627 = vpop.permute.xlu0 %626
      %628 = vrot.lane.b32.xlu0 %v277, 48
      %v629 = vpop.permute.xlu0 %628
      %630 = vrot.lane.b32.xlu0 %v278, 48
      %v631 = vpop.permute.xlu0 %630
      %632 = vrot.lane.b32.xlu0 %v279, 48
      %v633 = vpop.permute.xlu0 %632
      %634 = vrot.lane.b32.xlu0 %v280, 48
      %v635 = vpop.permute.xlu0 %634
      %636 = vrot.lane.b32.xlu0 %v281, 48
      %v637 = vpop.permute.xlu0 %636
      %638 = vrot.lane.b32.xlu0 %v282, 48
      %v639 = vpop.permute.xlu0 %638
      %640 = vrot.lane.b32.xlu0 %v283, 48
      %v641 = vpop.permute.xlu0 %640
      %642 = vrot.lane.b32.xlu0 %v284, 48
      %v643 = vpop.permute.xlu0 %642
      %644 = vrot.lane.b32.xlu0 %v285, 48
      %v645 = vpop.permute.xlu0 %644
      %646 = vrot.lane.b32.xlu0 %v286, 48
      %v647 = vpop.permute.xlu0 %646
      %648 = vrot.lane.b32.xlu0 %v287, 48
      %v649 = vpop.permute.xlu0 %648
      %650 = vrot.lane.b32.xlu0 %v320, 48
      %v651 = vpop.permute.xlu0 %650
      %652 = vrot.lane.b32.xlu0 %v321, 48
      %v653 = vpop.permute.xlu0 %652
      %654 = vrot.lane.b32.xlu0 %v326, 48
      %v655 = vpop.permute.xlu0 %654
      %656 = vrot.lane.b32.xlu0 %v327, 48
      %v657 = vpop.permute.xlu0 %656
      %676 = vrot.lane.b32.xlu0 %v292, 56
      %v677 = vpop.permute.xlu0 %676
      %678 = vrot.lane.b32.xlu0 %v293, 56
      %v679 = vpop.permute.xlu0 %678
      %680 = vrot.lane.b32.xlu0 %v294, 56
      %v681 = vpop.permute.xlu0 %680
      %682 = vrot.lane.b32.xlu0 %v295, 56
      %v683 = vpop.permute.xlu0 %682
      %684 = vrot.lane.b32.xlu0 %v296, 56
      %v685 = vpop.permute.xlu0 %684
      %686 = vrot.lane.b32.xlu0 %v297, 56
      %v687 = vpop.permute.xlu0 %686
      %688 = vrot.lane.b32.xlu0 %v298, 56
      %v689 = vpop.permute.xlu0 %688
      %690 = vrot.lane.b32.xlu0 %v299, 56
      %v691 = vpop.permute.xlu0 %690
      %692 = vrot.lane.b32.xlu0 %v300, 56
      %v693 = vpop.permute.xlu0 %692
      %694 = vrot.lane.b32.xlu0 %v301, 56
      %v695 = vpop.permute.xlu0 %694
      %696 = vrot.lane.b32.xlu0 %v302, 56
      %v697 = vpop.permute.xlu0 %696
      %698 = vrot.lane.b32.xlu0 %v303, 56
      %v699 = vpop.permute.xlu0 %698
      %700 = vrot.lane.b32.xlu0 %v322, 56
      %v701 = vpop.permute.xlu0 %700
      %702 = vrot.lane.b32.xlu0 %v323, 56
      %v703 = vpop.permute.xlu0 %702
      %704 = vrot.lane.b32.xlu0 %v328, 56
      %v705 = vpop.permute.xlu0 %704
      %706 = vrot.lane.b32.xlu0 %v329, 56
      %v707 = vpop.permute.xlu0 %706
      %726 = vrot.lane.b32.xlu0 %v308, 64
      %v727 = vpop.permute.xlu0 %726
      %728 = vrot.lane.b32.xlu0 %v309, 64
      %v729 = vpop.permute.xlu0 %728
      %730 = vrot.lane.b32.xlu0 %v310, 64
      %v731 = vpop.permute.xlu0 %730
      %732 = vrot.lane.b32.xlu0 %v311, 64
      %v733 = vpop.permute.xlu0 %732
      %734 = vrot.lane.b32.xlu0 %v312, 64
      %v735 = vpop.permute.xlu0 %734
      %736 = vrot.lane.b32.xlu0 %v313, 64
      %v737 = vpop.permute.xlu0 %736
      %738 = vrot.lane.b32.xlu0 %v314, 64
      %v739 = vpop.permute.xlu0 %738
      %740 = vrot.lane.b32.xlu0 %v315, 64
      %v741 = vpop.permute.xlu0 %740
      %742 = vrot.lane.b32.xlu0 %v316, 64
      %v743 = vpop.permute.xlu0 %742
      %744 = vrot.lane.b32.xlu0 %v317, 64
      %v745 = vpop.permute.xlu0 %744
      %746 = vrot.lane.b32.xlu0 %v318, 64
      %v747 = vpop.permute.xlu0 %746
      %748 = vrot.lane.b32.xlu0 %v319, 64
      %v749 = vpop.permute.xlu0 %748
      %750 = vrot.lane.b32.xlu0 %v324, 64
      %v751 = vpop.permute.xlu0 %750
      %752 = vrot.lane.b32.xlu0 %v325, 64
      %v753 = vpop.permute.xlu0 %752
      %754 = vrot.lane.b32.xlu0 %v330, 64
      %v755 = vpop.permute.xlu0 %754
      %756 = vrot.lane.b32.xlu0 %v331, 64
      %v757 = vpop.permute.xlu0 %756
      %vm774 = vcmask 64512
      %v775 = vsel %vm774, %v272, %v349
      %v776 = vsel %vm774, %v273, %v351
      %v777 = vsel %vm774, %v274, %v353
      %v778 = vsel %vm774, %v275, %v355
      %v779 = vsel %vm774, %v276, %v357
      %v780 = vsel %vm774, %v277, %v359
      %v781 = vsel %vm774, %v278, %v361
      %v782 = vsel %vm774, %v279, %v363
      %v783 = vsel %vm774, %v280, %v365
      %v784 = vsel %vm774, %v281, %v367
      %v785 = vsel %vm774, %v282, %v369
      %v786 = vsel %vm774, %v283, %v371
      %v787 = vsel %vm774, %v284, %v373
      %v788 = vsel %vm774, %v285, %v375
      %v789 = vsel %vm774, %v286, %v377
      %v790 = vsel %vm774, %v287, %v379
      %vm791 = vcmask 130048
      %v792 = vsel %vm791, %v775, %v413
      %v793 = vsel %vm791, %v776, %v415
      %v794 = vsel %vm791, %v777, %v417
      %v795 = vsel %vm791, %v778, %v419
      %v796 = vsel %vm791, %v779, %v421
      %v797 = vsel %vm791, %v780, %v423
      %v798 = vsel %vm791, %v781, %v425
      %v799 = vsel %vm791, %v782, %v427
      %v800 = vsel %vm791, %v783, %v429
      %v801 = vsel %vm791, %v784, %v431
      %v802 = vsel %vm791, %v785, %v433
      %v803 = vsel %vm791, %v786, %v435
      %v804 = vsel %vm791, %v787, %v437
      %v805 = vsel %vm791, %v788, %v439
      %v806 = vsel %vm791, %v789, %v441
      %v807 = vsel %vm791, %v790, %v443
      %vm808 = vcmask 195584
      %v809 = vsel %vm808, %v792, %v477
      %v810 = vsel %vm808, %v793, %v479
      %v811 = vsel %vm808, %v794, %v481
      %v812 = vsel %vm808, %v795, %v483
      %v813 = vsel %vm808, %v796, %v485
      %v814 = vsel %vm808, %v797, %v487
      %v815 = vsel %vm808, %v798, %v489
      %v816 = vsel %vm808, %v799, %v491
      %v817 = vsel %vm808, %v800, %v493
      %v818 = vsel %vm808, %v801, %v495
      %v819 = vsel %vm808, %v802, %v497
      %v820 = vsel %vm808, %v803, %v499
      %v821 = vsel %vm808, %v804, %v501
      %v822 = vsel %vm808, %v805, %v503
      %v823 = vsel %vm808, %v806, %v505
      %v824 = vsel %vm808, %v807, %v507
      %vm825 = vcmask 261120
      %v826 = vsel %vm825, %v809, %v527
      %v827 = vsel %vm825, %v810, %v529
      %v828 = vsel %vm825, %v811, %v531
      %v829 = vsel %vm825, %v812, %v533
      %v830 = vsel %vm825, %v813, %v535
      %v831 = vsel %vm825, %v814, %v537
      %v832 = vsel %vm825, %v815, %v539
      %v833 = vsel %vm825, %v816, %v541
      %v834 = vsel %vm825, %v817, %v543
      %v835 = vsel %vm825, %v818, %v545
      %v836 = vsel %vm825, %v819, %v547
      %v837 = vsel %vm825, %v820, %v549
      %v838 = vsel %vm825, %v821, %v551
      %v839 = vsel %vm825, %v822, %v553
      %v840 = vsel %vm825, %v823, %v555
      %v841 = vsel %vm825, %v824, %v557
      %vm842 = vcmask 326656
      %v843 = vsel %vm842, %v826, %v577
      %v844 = vsel %vm842, %v827, %v579
      %v845 = vsel %vm842, %v828, %v581
      %v846 = vsel %vm842, %v829, %v583
      %v847 = vsel %vm842, %v830, %v585
      %v848 = vsel %vm842, %v831, %v587
      %v849 = vsel %vm842, %v832, %v589
      %v850 = vsel %vm842, %v833, %v591
      %v851 = vsel %vm842, %v834, %v593
      %v852 = vsel %vm842, %v835, %v595
      %v853 = vsel %vm842, %v836, %v597
      %v854 = vsel %vm842, %v837, %v599
      %v855 = vsel %vm842, %v838, %v601
      %v856 = vsel %vm842, %v839, %v603
      %v857 = vsel %vm842, %v840, %v605
      %v858 = vsel %vm842, %v841, %v607
      %vm859 = vcmask 392192
      %v860 = vsel %vm859, %v843, %v627
      %v861 = vsel %vm859, %v844, %v629
      %v862 = vsel %vm859, %v845, %v631
      %v863 = vsel %vm859, %v846, %v633
      %v864 = vsel %vm859, %v847, %v635
      %v865 = vsel %vm859, %v848, %v637
      %v866 = vsel %vm859, %v849, %v639
      %v867 = vsel %vm859, %v850, %v641
      %v868 = vsel %vm859, %v851, %v643
      %v869 = vsel %vm859, %v852, %v645
      %v870 = vsel %vm859, %v853, %v647
      %v871 = vsel %vm859, %v854, %v649
      %v872 = vsel %vm859, %v855, %v651
      %v873 = vsel %vm859, %v856, %v653
      %v874 = vsel %vm859, %v857, %v655
      %v875 = vsel %vm859, %v858, %v657
      %vm876 = vcmask 457728
      %v877 = vsel %vm876, %v860, %v677
      %v878 = vsel %vm876, %v861, %v679
      %v879 = vsel %vm876, %v862, %v681
      %v880 = vsel %vm876, %v863, %v683
      %v881 = vsel %vm876, %v864, %v685
      %v882 = vsel %vm876, %v865, %v687
      %v883 = vsel %vm876, %v866, %v689
      %v884 = vsel %vm876, %v867, %v691
      %v885 = vsel %vm876, %v868, %v693
      %v886 = vsel %vm876, %v869, %v695
      %v887 = vsel %vm876, %v870, %v697
      %v888 = vsel %vm876, %v871, %v699
      %v889 = vsel %vm876, %v872, %v701
      %v890 = vsel %vm876, %v873, %v703
      %v891 = vsel %vm876, %v874, %v705
      %v892 = vsel %vm876, %v875, %v707
      %vm893 = vcmask 523264
      %v894 = vsel %vm893, %v877, %v727
      %v895 = vsel %vm893, %v878, %v729
      %v896 = vsel %vm893, %v879, %v731
      %v897 = vsel %vm893, %v880, %v733
      %v898 = vsel %vm893, %v881, %v735
      %v899 = vsel %vm893, %v882, %v737
      %v900 = vsel %vm893, %v883, %v739
      %v901 = vsel %vm893, %v884, %v741
      %v902 = vsel %vm893, %v885, %v743
      %v903 = vsel %vm893, %v886, %v745
      %v904 = vsel %vm893, %v887, %v747
      %v905 = vsel %vm893, %v888, %v749
      %v906 = vsel %vm893, %v889, %v751
      %v907 = vsel %vm893, %v890, %v753
      %v908 = vsel %vm893, %v891, %v755
      %v909 = vsel %vm893, %v892, %v757
      %v910 = vld [vmem:[%s1] sm:$0xff]
      %v911 = vld [vmem:[%s1 + $0x8] sm:$0xff]
      %v912 = vld [vmem:[%s1 + $0x10] sm:$0xff]
      %v913 = vld [vmem:[%s1 + $0x18] sm:$0xff]
      %v914 = vld [vmem:[%s1 + $0x20] sm:$0xff]
      %v915 = vld [vmem:[%s1 + $0x28] sm:$0xff]
      %v916 = vld [vmem:[%s1 + $0x30] sm:$0xff]
      %v917 = vld [vmem:[%s1 + $0x38] sm:$0xff]
      %v918 = vld [vmem:[%s1 + $0x40] sm:$0xff]
      %v919 = vld [vmem:[%s2] sm:$0x1]
      %v921 = vlaneseq
      %v922 = vshrl.u32 %v921, 7
      %v923 = vsub.s32 0, %v922
      %v924 = vrot.slane %v919, %v923
      %vm926 = vcmask 588800
      %v928 = vsel %vm926, %v894, 0
      %v931 = vsel %vm926, %v895, 0
      %v934 = vsel %vm926, %v896, 0
      %v937 = vsel %vm926, %v897, 0
      %v940 = vsel %vm926, %v898, 0
      %v943 = vsel %vm926, %v899, 0
      %v946 = vsel %vm926, %v900, 0
      %v949 = vsel %vm926, %v901, 0
      %v952 = vsel %vm926, %v902, 0
      %v955 = vsel %vm926, %v903, 0
      %v958 = vsel %vm926, %v904, 0
      %v961 = vsel %vm926, %v905, 0
      %v964 = vsel %vm926, %v906, 0
      %v967 = vsel %vm926, %v907, 0
      %v970 = vsel %vm926, %v908, 0
      %v973 = vsel %vm926, %v909, 0
      %975 = vmatprep.subr.mxu0 0.0
      %976 = vmatpush1.msra.mxu0 %v910
      %977 = vmatprep.subr.mxu0 0.0
      %978 = vmatpush1.msra.mxu0 %v911
      %979 = vmatprep.subr.mxu0 0.0
      %980 = vmatpush1.msra.mxu0 %v912
      %981 = vmatprep.subr.mxu0 0.0
      %982 = vmatpush1.msra.mxu0 %v913
      %983 = vmatprep.subr.mxu0 0.0
      %984 = vmatpush1.msra.mxu0 %v914
      %985 = vmatprep.subr.mxu0 0.0
      %986 = vmatpush1.msra.mxu0 %v915
      %987 = vmatprep.subr.mxu0 0.0
      %988 = vmatpush1.msra.mxu0 %v916
      %989 = vmatprep.subr.mxu0 0.0
      %990 = vmatpush1.msra.mxu0 %v917
      %991 = vmatprep.subr.mxu0 0.0
      %992 = vmatpush1.msra.mxu0 %v918
      %993 = vmatprep.subr.mxu0 0.0
      %994 = vmatpush1.msra.mxu0 0.0
      %995 = vmatprep.subr.mxu0 0.0
      %996 = vmatpush1.msra.mxu0 0.0
      %997 = vmatprep.subr.mxu0 0.0
      %998 = vmatpush1.msra.mxu0 0.0
      %999 = vmatprep.subr.mxu0 0.0
      %1000 = vmatpush1.msra.mxu0 0.0
      %1001 = vmatprep.subr.mxu0 0.0
      %1002 = vmatpush1.msra.mxu0 0.0
      %1003 = vmatprep.subr.mxu0 0.0
      %1004 = vmatpush1.msra.mxu0 0.0
      %1005 = vmatprep.subr.mxu0 0.0
      %1006 = vmatpush1.msra.mxu0 0.0
      %1007 = vmatprep.subr.mxu0 0.0
      %1008 = vmatpush1.msra.mxu0 0.0
      %1009 = vmatprep.subr.mxu0 0.0
      %1010 = vmatpush1.msra.mxu0 0.0
      %1011 = vmatprep.subr.mxu0 0.0
      %1012 = vmatpush1.msra.mxu0 0.0
      %1013 = vmatprep.subr.mxu0 0.0
      %1014 = vmatpush1.msra.mxu0 0.0
      %1015 = vmatprep.subr.mxu0 0.0
      %1016 = vmatpush1.msra.mxu0 0.0
      %1017 = vmatprep.subr.mxu0 0.0
      %1018 = vmatpush1.msra.mxu0 0.0
      %1019 = vmatprep.subr.mxu0 0.0
      %1020 = vmatpush1.msra.mxu0 0.0
      %1021 = vmatprep.subr.mxu0 0.0
      %1022 = vmatpush1.msra.mxu0 0.0
      %1023 = vmatprep.subr.mxu0 0.0
      %1024 = vmatpush1.msra.mxu0 0.0
      %1025 = vmatprep.subr.mxu0 0.0
      %1026 = vmatpush1.msra.mxu0 0.0
      %1027 = vmatprep.subr.mxu0 0.0
      %1028 = vmatpush1.msra.mxu0 0.0
      %1029 = vmatprep.subr.mxu0 0.0
      %1030 = vmatpush1.msra.mxu0 0.0
      %1031 = vmatprep.subr.mxu0 0.0
      %1032 = vmatpush1.msra.mxu0 0.0
      %1033 = vmatprep.subr.mxu0 0.0
      %1034 = vmatpush1.msra.mxu0 0.0
      %1035 = vmatprep.subr.mxu0 0.0
      %1036 = vmatpush1.msra.mxu0 0.0
      %1037 = vmatprep.subr.mxu0 0.0
      %1038 = vmatpush1.msra.mxu0 0.0
      %1039 = vmatprep.mubr.f32.mxu0 0.0
      %1040 = vmatmul.mubr.f32.gmra.mrb[0].mxu0 %v928
      %v1041 = vpop.f32.mrb[0].mxu0
      %v1042 = vadd.f32 %v924, %v1041
      %v1043 = vpop.f32.mrb[0].mxu0
      %1044 = vmatprep.mubr.f32.mxu0 0.0
      %1045 = vmatmul.mubr.f32.gmra.mrb[0].mxu0 %v931
      %v1046 = vpop.f32.mrb[0].mxu0
      %v1047 = vpop.f32.mrb[0].mxu0
      %1048 = vmatprep.mubr.f32.mxu0 0.0
      %1049 = vmatmul.mubr.f32.gmra.mrb[0].mxu0 %v934
      %v1050 = vpop.f32.mrb[0].mxu0
      %v1051 = vadd.f32 %v924, %v1050
      %v1052 = vpop.f32.mrb[0].mxu0
      %1053 = vmatprep.mubr.f32.mxu0 0.0
      %1054 = vmatmul.mubr.f32.gmra.mrb[0].mxu0 %v937
      %v1055 = vpop.f32.mrb[0].mxu0
      %v1056 = vpop.f32.mrb[0].mxu0
      %1057 = vmatprep.mubr.f32.mxu0 0.0
      %1058 = vmatmul.mubr.f32.gmra.mrb[0].mxu0 %v940
      %v1059 = vpop.f32.mrb[0].mxu0
      %v1060 = vadd.f32 %v924, %v1059
      %v1061 = vpop.f32.mrb[0].mxu0
      %1062 = vmatprep.mubr.f32.mxu0 0.0
      %1063 = vmatmul.mubr.f32.gmra.mrb[0].mxu0 %v943
      %v1064 = vpop.f32.mrb[0].mxu0
      %v1065 = vpop.f32.mrb[0].mxu0
      %1066 = vmatprep.mubr.f32.mxu0 0.0
      %1067 = vmatmul.mubr.f32.gmra.mrb[0].mxu0 %v946
      %v1068 = vpop.f32.mrb[0].mxu0
      %v1069 = vadd.f32 %v924, %v1068
      %v1070 = vpop.f32.mrb[0].mxu0
      %1071 = vmatprep.mubr.f32.mxu0 0.0
      %1072 = vmatmul.mubr.f32.gmra.mrb[0].mxu0 %v949
      %v1073 = vpop.f32.mrb[0].mxu0
      %v1074 = vpop.f32.mrb[0].mxu0
      %1075 = vmatprep.mubr.f32.mxu0 0.0
      %1076 = vmatmul.mubr.f32.gmra.mrb[0].mxu0 %v952
      %v1077 = vpop.f32.mrb[0].mxu0
      %v1078 = vadd.f32 %v924, %v1077
      %v1079 = vpop.f32.mrb[0].mxu0
      %1080 = vmatprep.mubr.f32.mxu0 0.0
      %1081 = vmatmul.mubr.f32.gmra.mrb[0].mxu0 %v955
      %v1082 = vpop.f32.mrb[0].mxu0
      %v1083 = vpop.f32.mrb[0].mxu0
      %1084 = vmatprep.mubr.f32.mxu0 0.0
      %1085 = vmatmul.mubr.f32.gmra.mrb[0].mxu0 %v958
      %v1086 = vpop.f32.mrb[0].mxu0
      %v1087 = vadd.f32 %v924, %v1086
      %v1088 = vpop.f32.mrb[0].mxu0
      %1089 = vmatprep.mubr.f32.mxu0 0.0
      %1090 = vmatmul.mubr.f32.gmra.mrb[0].mxu0 %v961
      %v1091 = vpop.f32.mrb[0].mxu0
      %v1092 = vpop.f32.mrb[0].mxu0
      %1093 = vmatprep.mubr.f32.mxu0 0.0
      %1094 = vmatmul.mubr.f32.gmra.mrb[0].mxu0 %v964
      %v1095 = vpop.f32.mrb[0].mxu0
      %v1096 = vadd.f32 %v924, %v1095
      %v1097 = vpop.f32.mrb[0].mxu0
      %1098 = vmatprep.mubr.f32.mxu0 0.0
      %1099 = vmatmul.mubr.f32.gmra.mrb[0].mxu0 %v967
      %v1100 = vpop.f32.mrb[0].mxu0
      %v1101 = vpop.f32.mrb[0].mxu0
      %1102 = vmatprep.mubr.f32.mxu0 0.0
      %1103 = vmatmul.mubr.f32.gmra.mrb[0].mxu0 %v970
      %v1104 = vpop.f32.mrb[0].mxu0
      %v1105 = vadd.f32 %v924, %v1104
      %v1106 = vpop.f32.mrb[0].mxu0
      %1107 = vmatprep.mubr.f32.mxu0 0.0
      %1108 = vmatmul.mubr.f32.gmra.mrb[0].mxu0 %v973
      %v1109 = vpop.f32.mrb[0].mxu0
      %v1110 = vpop.f32.mrb[0].mxu0
      %1111 = vdwg.mxu0
      %vm1112 = vcmp.ge.f32.partialorder %v1042, 0.0
      %vm1113 = vcmp.ge.f32.partialorder %v1051, 0.0
      %vm1114 = vcmp.ge.f32.partialorder %v1060, 0.0
      %vm1115 = vcmp.ge.f32.partialorder %v1069, 0.0
      %vm1116 = vcmp.ge.f32.partialorder %v1078, 0.0
      %vm1117 = vcmp.ge.f32.partialorder %v1087, 0.0
      %vm1118 = vcmp.ge.f32.partialorder %v1096, 0.0
      %vm1119 = vcmp.ge.f32.partialorder %v1105, 0.0
      %v1120 = vmul.f32 %v1042, 0.2
      %v1121 = vmul.f32 %v1051, 0.2
      %v1122 = vmul.f32 %v1060, 0.2
      %v1123 = vmul.f32 %v1069, 0.2
      %v1124 = vmul.f32 %v1078, 0.2
      %v1125 = vmul.f32 %v1087, 0.2
      %v1126 = vmul.f32 %v1096, 0.2
      %v1127 = vmul.f32 %v1105, 0.2
      %v1128 = vsel %vm1112, %v1042, %v1120
      %v1129 = vsel %vm1113, %v1051, %v1121
      %v1130 = vsel %vm1114, %v1060, %v1122
      %v1131 = vsel %vm1115, %v1069, %v1123
      %v1132 = vsel %vm1116, %v1078, %v1124
      %v1133 = vsel %vm1117, %v1087, %v1125
      %v1134 = vsel %vm1118, %v1096, %v1126
      %v1135 = vsel %vm1119, %v1105, %v1127
      %v1144 = vcombine.high %v1128, %v1128
      %v1146 = vunpack.c.l.s4 1983009808
      %v1147 = vunpack.c.0.s8 %v1146
      %v1148 = vlaneseq
      %v1149 = vshrl.u32 %v1148, 7
      %v1150 = vsub.s32 %v1147, %v1149
      %v1151 = vrot.slane %v1128, %v1150
      %v1153 = vunpack.c.l.s4 1983009808
      %v1154 = vunpack.c.0.s8 %v1153
      %v1155 = vlaneseq
      %v1156 = vshrl.u32 %v1155, 7
      %v1157 = vsub.s32 %v1154, %v1156
      %v1158 = vrot.slane %v1144, %v1157
      %v1159 = vcombine.high %v1151, %v1151
      %v1160 = vcombine.high %v1158, %v1158
      %v1161 = vcombine.high %v1129, %v1129
      %v1163 = vunpack.c.l.s4 1983009808
      %v1164 = vunpack.c.0.s8 %v1163
      %v1165 = vlaneseq
      %v1166 = vshrl.u32 %v1165, 7
      %v1167 = vsub.s32 %v1164, %v1166
      %v1168 = vrot.slane %v1129, %v1167
      %v1170 = vunpack.c.l.s4 1983009808
      %v1171 = vunpack.c.0.s8 %v1170
      %v1172 = vlaneseq
      %v1173 = vshrl.u32 %v1172, 7
      %v1174 = vsub.s32 %v1171, %v1173
      %v1175 = vrot.slane %v1161, %v1174
      %v1176 = vcombine.high %v1168, %v1168
      %v1177 = vcombine.high %v1175, %v1175
      %v1178 = vcombine.high %v1130, %v1130
      %v1180 = vunpack.c.l.s4 1983009808
      %v1181 = vunpack.c.0.s8 %v1180
      %v1182 = vlaneseq
      %v1183 = vshrl.u32 %v1182, 7
      %v1184 = vsub.s32 %v1181, %v1183
      %v1185 = vrot.slane %v1130, %v1184
      %v1187 = vunpack.c.l.s4 1983009808
      %v1188 = vunpack.c.0.s8 %v1187
      %v1189 = vlaneseq
      %v1190 = vshrl.u32 %v1189, 7
      %v1191 = vsub.s32 %v1188, %v1190
      %v1192 = vrot.slane %v1178, %v1191
      %v1193 = vcombine.high %v1185, %v1185
      %v1194 = vcombine.high %v1192, %v1192
      %v1195 = vcombine.high %v1131, %v1131
      %v1197 = vunpack.c.l.s4 1983009808
      %v1198 = vunpack.c.0.s8 %v1197
      %v1199 = vlaneseq
      %v1200 = vshrl.u32 %v1199, 7
      %v1201 = vsub.s32 %v1198, %v1200
      %v1202 = vrot.slane %v1131, %v1201
      %v1204 = vunpack.c.l.s4 1983009808
      %v1205 = vunpack.c.0.s8 %v1204
      %v1206 = vlaneseq
      %v1207 = vshrl.u32 %v1206, 7
      %v1208 = vsub.s32 %v1205, %v1207
      %v1209 = vrot.slane %v1195, %v1208
      %v1210 = vcombine.high %v1202, %v1202
      %v1211 = vcombine.high %v1209, %v1209
      %v1212 = vcombine.high %v1132, %v1132
      %v1214 = vunpack.c.l.s4 1983009808
      %v1215 = vunpack.c.0.s8 %v1214
      %v1216 = vlaneseq
      %v1217 = vshrl.u32 %v1216, 7
      %v1218 = vsub.s32 %v1215, %v1217
      %v1219 = vrot.slane %v1132, %v1218
      %v1221 = vunpack.c.l.s4 1983009808
      %v1222 = vunpack.c.0.s8 %v1221
      %v1223 = vlaneseq
      %v1224 = vshrl.u32 %v1223, 7
      %v1225 = vsub.s32 %v1222, %v1224
      %v1226 = vrot.slane %v1212, %v1225
      %v1227 = vcombine.high %v1219, %v1219
      %v1228 = vcombine.high %v1226, %v1226
      %v1229 = vcombine.high %v1133, %v1133
      %v1231 = vunpack.c.l.s4 1983009808
      %v1232 = vunpack.c.0.s8 %v1231
      %v1233 = vlaneseq
      %v1234 = vshrl.u32 %v1233, 7
      %v1235 = vsub.s32 %v1232, %v1234
      %v1236 = vrot.slane %v1133, %v1235
      %v1238 = vunpack.c.l.s4 1983009808
      %v1239 = vunpack.c.0.s8 %v1238
      %v1240 = vlaneseq
      %v1241 = vshrl.u32 %v1240, 7
      %v1242 = vsub.s32 %v1239, %v1241
      %v1243 = vrot.slane %v1229, %v1242
      %v1244 = vcombine.high %v1236, %v1236
      %v1245 = vcombine.high %v1243, %v1243
      %v1246 = vcombine.high %v1134, %v1134
      %v1248 = vunpack.c.l.s4 1983009808
      %v1249 = vunpack.c.0.s8 %v1248
      %v1250 = vlaneseq
      %v1251 = vshrl.u32 %v1250, 7
      %v1252 = vsub.s32 %v1249, %v1251
      %v1253 = vrot.slane %v1134, %v1252
      %v1255 = vunpack.c.l.s4 1983009808
      %v1256 = vunpack.c.0.s8 %v1255
      %v1257 = vlaneseq
      %v1258 = vshrl.u32 %v1257, 7
      %v1259 = vsub.s32 %v1256, %v1258
      %v1260 = vrot.slane %v1246, %v1259
      %v1261 = vcombine.high %v1253, %v1253
      %v1262 = vcombine.high %v1260, %v1260
      %v1263 = vcombine.high %v1135, %v1135
      %v1265 = vunpack.c.l.s4 1983009808
      %v1266 = vunpack.c.0.s8 %v1265
      %v1267 = vlaneseq
      %v1268 = vshrl.u32 %v1267, 7
      %v1269 = vsub.s32 %v1266, %v1268
      %v1270 = vrot.slane %v1135, %v1269
      %v1272 = vunpack.c.l.s4 1983009808
      %v1273 = vunpack.c.0.s8 %v1272
      %v1274 = vlaneseq
      %v1275 = vshrl.u32 %v1274, 7
      %v1276 = vsub.s32 %v1273, %v1275
      %v1277 = vrot.slane %v1263, %v1276
      %v1278 = vcombine.high %v1270, %v1270
      %v1279 = vcombine.high %v1277, %v1277
      %v1312 = vrot.slane %v1151, 7
      %v1313 = vrot.slane %v1312, 2
      %v1314 = vrot.slane %v1159, 7
      %v1315 = vrot.slane %v1314, 2
      %v1316 = vrot.slane %v1158, 7
      %v1317 = vrot.slane %v1316, 2
      %v1318 = vrot.slane %v1160, 7
      %v1319 = vrot.slane %v1318, 2
      %v1320 = vrot.slane %v1168, 7
      %v1321 = vrot.slane %v1320, 2
      %v1322 = vrot.slane %v1176, 7
      %v1323 = vrot.slane %v1322, 2
      %v1324 = vrot.slane %v1175, 7
      %v1325 = vrot.slane %v1324, 2
      %v1326 = vrot.slane %v1177, 7
      %v1327 = vrot.slane %v1326, 2
      %v1328 = vrot.slane %v1185, 7
      %v1329 = vrot.slane %v1328, 2
      %v1330 = vrot.slane %v1193, 7
      %v1331 = vrot.slane %v1330, 2
      %v1332 = vrot.slane %v1192, 7
      %v1333 = vrot.slane %v1332, 2
      %v1334 = vrot.slane %v1194, 7
      %v1335 = vrot.slane %v1334, 2
      %v1336 = vrot.slane %v1202, 7
      %v1337 = vrot.slane %v1336, 2
      %v1338 = vrot.slane %v1210, 7
      %v1339 = vrot.slane %v1338, 2
      %v1340 = vrot.slane %v1209, 7
      %v1341 = vrot.slane %v1340, 2
      %v1342 = vrot.slane %v1211, 7
      %v1343 = vrot.slane %v1342, 2
      %v1344 = vrot.slane %v1219, 7
      %v1345 = vrot.slane %v1344, 2
      %v1346 = vrot.slane %v1227, 7
      %v1347 = vrot.slane %v1346, 2
      %v1348 = vrot.slane %v1226, 7
      %v1349 = vrot.slane %v1348, 2
      %v1350 = vrot.slane %v1228, 7
      %v1351 = vrot.slane %v1350, 2
      %v1352 = vrot.slane %v1236, 7
      %v1353 = vrot.slane %v1352, 2
      %v1354 = vrot.slane %v1244, 7
      %v1355 = vrot.slane %v1354, 2
      %v1356 = vrot.slane %v1243, 7
      %v1357 = vrot.slane %v1356, 2
      %v1358 = vrot.slane %v1245, 7
      %v1359 = vrot.slane %v1358, 2
      %v1360 = vrot.slane %v1253, 7
      %v1361 = vrot.slane %v1360, 2
      %v1362 = vrot.slane %v1261, 7
      %v1363 = vrot.slane %v1362, 2
      %v1364 = vrot.slane %v1260, 7
      %v1365 = vrot.slane %v1364, 2
      %v1366 = vrot.slane %v1262, 7
      %v1367 = vrot.slane %v1366, 2
      %v1368 = vrot.slane %v1270, 7
      %v1369 = vrot.slane %v1368, 2
      %v1370 = vrot.slane %v1278, 7
      %v1371 = vrot.slane %v1370, 2
      %v1372 = vrot.slane %v1277, 7
      %v1373 = vrot.slane %v1372, 2
      %v1374 = vrot.slane %v1279, 7
      %v1375 = vrot.slane %v1374, 2
      %v1408 = vadd.f32 %v1151, %v1313
      %v1409 = vadd.f32 %v1159, %v1315
      %v1410 = vadd.f32 %v1158, %v1317
      %v1411 = vadd.f32 %v1160, %v1319
      %v1412 = vadd.f32 %v1168, %v1321
      %v1413 = vadd.f32 %v1176, %v1323
      %v1414 = vadd.f32 %v1175, %v1325
      %v1415 = vadd.f32 %v1177, %v1327
      %v1416 = vadd.f32 %v1185, %v1329
      %v1417 = vadd.f32 %v1193, %v1331
      %v1418 = vadd.f32 %v1192, %v1333
      %v1419 = vadd.f32 %v1194, %v1335
      %v1420 = vadd.f32 %v1202, %v1337
      %v1421 = vadd.f32 %v1210, %v1339
      %v1422 = vadd.f32 %v1209, %v1341
      %v1423 = vadd.f32 %v1211, %v1343
      %v1424 = vadd.f32 %v1219, %v1345
      %v1425 = vadd.f32 %v1227, %v1347
      %v1426 = vadd.f32 %v1226, %v1349
      %v1427 = vadd.f32 %v1228, %v1351
      %v1428 = vadd.f32 %v1236, %v1353
      %v1429 = vadd.f32 %v1244, %v1355
      %v1430 = vadd.f32 %v1243, %v1357
      %v1431 = vadd.f32 %v1245, %v1359
      %v1432 = vadd.f32 %v1253, %v1361
      %v1433 = vadd.f32 %v1261, %v1363
      %v1434 = vadd.f32 %v1260, %v1365
      %v1435 = vadd.f32 %v1262, %v1367
      %v1436 = vadd.f32 %v1270, %v1369
      %v1437 = vadd.f32 %v1278, %v1371
      %v1438 = vadd.f32 %v1277, %v1373
      %v1439 = vadd.f32 %v1279, %v1375
      %v1440 = vadd.f32 %v1408, %v1412
      %v1441 = vadd.f32 %v1409, %v1413
      %v1442 = vadd.f32 %v1410, %v1414
      %v1443 = vadd.f32 %v1411, %v1415
      %v1444 = vadd.f32 %v1416, %v1420
      %v1445 = vadd.f32 %v1417, %v1421
      %v1446 = vadd.f32 %v1418, %v1422
      %v1447 = vadd.f32 %v1419, %v1423
      %v1448 = vadd.f32 %v1424, %v1428
      %v1449 = vadd.f32 %v1425, %v1429
      %v1450 = vadd.f32 %v1426, %v1430
      %v1451 = vadd.f32 %v1427, %v1431
      %v1452 = vadd.f32 %v1432, %v1436
      %v1453 = vadd.f32 %v1433, %v1437
      %v1454 = vadd.f32 %v1434, %v1438
      %v1455 = vadd.f32 %v1435, %v1439
      %v1456 = vmul.f32 %v1440, 0.25
      %v1457 = vmul.f32 %v1441, 0.25
      %v1458 = vmul.f32 %v1442, 0.25
      %v1459 = vmul.f32 %v1443, 0.25
      %v1460 = vmul.f32 %v1444, 0.25
      %v1461 = vmul.f32 %v1445, 0.25
      %v1462 = vmul.f32 %v1446, 0.25
      %v1463 = vmul.f32 %v1447, 0.25
      %v1464 = vmul.f32 %v1448, 0.25
      %v1465 = vmul.f32 %v1449, 0.25
      %v1466 = vmul.f32 %v1450, 0.25
      %v1467 = vmul.f32 %v1451, 0.25
      %v1468 = vmul.f32 %v1452, 0.25
      %v1469 = vmul.f32 %v1453, 0.25
      %v1470 = vmul.f32 %v1454, 0.25
      %v1471 = vmul.f32 %v1455, 0.25
      %v1472 = vld [vmem:[%s266] sm:$0xff]
      %v1473 = vld [vmem:[%s266 + $0x8] sm:$0xff]
      %v1474 = vld [vmem:[%s4] sm:$0xff]
      %v1475 = vld [vmem:[%s5] sm:$0x1]
      %v1477 = vlaneseq
      %v1478 = vshrl.u32 %v1477, 7
      %v1479 = vsub.s32 0, %v1478
      %v1480 = vrot.slane %v1475, %v1479
      %v1483 = vsel %vm774, %v1472, 0
      %v1486 = vsel %vm774, %v1473, 0
      %1488 = vmatprep.subr.mxu0 0.0
      %1489 = vmatpush1.msra.mxu0 %v1474
      %1490 = vmatprep.subr.mxu0 0.0
      %1491 = vmatpush1.msra.mxu0 0.0
      %1492 = vmatprep.subr.mxu0 0.0
      %1493 = vmatpush1.msra.mxu0 0.0
      %1494 = vmatprep.subr.mxu0 0.0
      %1495 = vmatpush1.msra.mxu0 0.0
      %1496 = vmatprep.subr.mxu0 0.0
      %1497 = vmatpush1.msra.mxu0 0.0
      %1498 = vmatprep.subr.mxu0 0.0
      %1499 = vmatpush1.msra.mxu0 0.0
      %1500 = vmatprep.subr.mxu0 0.0
      %1501 = vmatpush1.msra.mxu0 0.0
      %1502 = vmatprep.subr.mxu0 0.0
      %1503 = vmatpush1.msra.mxu0 0.0
      %1504 = vmatprep.subr.mxu0 0.0
      %1505 = vmatpush1.msra.mxu0 0.0
      %1506 = vmatprep.subr.mxu0 0.0
      %1507 = vmatpush1.msra.mxu0 0.0
      %1508 = vmatprep.subr.mxu0 0.0
      %1509 = vmatpush1.msra.mxu0 0.0
      %1510 = vmatprep.subr.mxu0 0.0
      %1511 = vmatpush1.msra.mxu0 0.0
      %1512 = vmatprep.subr.mxu0 0.0
      %1513 = vmatpush1.msra.mxu0 0.0
      %1514 = vmatprep.subr.mxu0 0.0
      %1515 = vmatpush1.msra.mxu0 0.0
      %1516 = vmatprep.subr.mxu0 0.0
      %1517 = vmatpush1.msra.mxu0 0.0
      %1518 = vmatprep.subr.mxu0 0.0
      %1519 = vmatpush1.msra.mxu0 0.0
      %1520 = vmatprep.subr.mxu0 0.0
      %1521 = vmatpush1.msra.mxu0 0.0
      %1522 = vmatprep.subr.mxu0 0.0
      %1523 = vmatpush1.msra.mxu0 0.0
      %1524 = vmatprep.subr.mxu0 0.0
      %1525 = vmatpush1.msra.mxu0 0.0
      %1526 = vmatprep.subr.mxu0 0.0
      %1527 = vmatpush1.msra.mxu0 0.0
      %1528 = vmatprep.subr.mxu0 0.0
      %1529 = vmatpush1.msra.mxu0 0.0
      %1530 = vmatprep.subr.mxu0 0.0
      %1531 = vmatpush1.msra.mxu0 0.0
      %1532 = vmatprep.subr.mxu0 0.0
      %1533 = vmatpush1.msra.mxu0 0.0
      %1534 = vmatprep.subr.mxu0 0.0
      %1535 = vmatpush1.msra.mxu0 0.0
      %1536 = vmatprep.subr.mxu0 0.0
      %1537 = vmatpush1.msra.mxu0 0.0
      %1538 = vmatprep.subr.mxu0 0.0
      %1539 = vmatpush1.msra.mxu0 0.0
      %1540 = vmatprep.subr.mxu0 0.0
      %1541 = vmatpush1.msra.mxu0 0.0
      %1542 = vmatprep.subr.mxu0 0.0
      %1543 = vmatpush1.msra.mxu0 0.0
      %1544 = vmatprep.subr.mxu0 0.0
      %1545 = vmatpush1.msra.mxu0 0.0
      %1546 = vmatprep.subr.mxu0 0.0
      %1547 = vmatpush1.msra.mxu0 0.0
      %1548 = vmatprep.subr.mxu0 0.0
      %1549 = vmatpush1.msra.mxu0 0.0
      %1550 = vmatprep.subr.mxu0 0.0
      %1551 = vmatpush1.msra.mxu0 0.0
      %1552 = vmatprep.mubr.f32.mxu0 0.0
      %1553 = vmatmul.mubr.f32.gmra.mrb[0].mxu0 %v1483
      %v1554 = vpop.f32.mrb[0].mxu0
      %v1555 = vadd.f32 %v1480, %v1554
      %v1556 = vpop.f32.mrb[0].mxu0
      %1557 = vmatprep.mubr.f32.mxu0 0.0
      %1558 = vmatmul.mubr.f32.gmra.mrb[0].mxu0 %v1486
      %v1559 = vpop.f32.mrb[0].mxu0
      %v1560 = vadd.f32 %v1480, %v1559
      %v1561 = vpop.f32.mrb[0].mxu0
      %1562 = vdwg.mxu0
      %v1565 = vcombine.high %v1555, %v1555
      %v1567 = vunpack.c.l.s4 1983009808
      %v1568 = vunpack.c.0.s8 %v1567
      %v1569 = vlaneseq
      %v1570 = vshrl.u32 %v1569, 7
      %v1571 = vsub.s32 %v1568, %v1570
      %v1572 = vrot.slane %v1555, %v1571
      %v1574 = vunpack.c.l.s4 1983009808
      %v1575 = vunpack.c.0.s8 %v1574
      %v1576 = vlaneseq
      %v1577 = vshrl.u32 %v1576, 7
      %v1578 = vsub.s32 %v1575, %v1577
      %v1579 = vrot.slane %v1565, %v1578
      %v1580 = vcombine.high %v1572, %v1572
      %v1581 = vcombine.high %v1579, %v1579
      %v1582 = vcombine.high %v1560, %v1560
      %v1584 = vunpack.c.l.s4 1983009808
      %v1585 = vunpack.c.0.s8 %v1584
      %v1586 = vlaneseq
      %v1587 = vshrl.u32 %v1586, 7
      %v1588 = vsub.s32 %v1585, %v1587
      %v1589 = vrot.slane %v1560, %v1588
      %v1591 = vunpack.c.l.s4 1983009808
      %v1592 = vunpack.c.0.s8 %v1591
      %v1593 = vlaneseq
      %v1594 = vshrl.u32 %v1593, 7
      %v1595 = vsub.s32 %v1592, %v1594
      %v1596 = vrot.slane %v1582, %v1595
      %v1597 = vcombine.high %v1589, %v1589
      %v1598 = vcombine.high %v1596, %v1596
      %v1599 = vrot.slane %v1572, 1
      %v1600 = vrot.slane %v1580, 1
      %v1601 = vrot.slane %v1579, 1
      %v1602 = vrot.slane %v1581, 1
      %v1603 = vrot.slane %v1589, 1
      %v1604 = vrot.slane %v1597, 1
      %v1605 = vrot.slane %v1596, 1
      %v1606 = vrot.slane %v1598, 1
      %v1623 = vadd.f32 %v1456, %v1572
      %v1624 = vadd.f32 %v1457, %v1599
      %v1625 = vadd.f32 %v1458, %v1580
      %v1626 = vadd.f32 %v1459, %v1600
      %v1627 = vadd.f32 %v1460, %v1579
      %v1628 = vadd.f32 %v1461, %v1601
      %v1629 = vadd.f32 %v1462, %v1581
      %v1630 = vadd.f32 %v1463, %v1602
      %v1631 = vadd.f32 %v1464, %v1589
      %v1632 = vadd.f32 %v1465, %v1603
      %v1633 = vadd.f32 %v1466, %v1597
      %v1634 = vadd.f32 %v1467, %v1604
      %v1635 = vadd.f32 %v1468, %v1596
      %v1636 = vadd.f32 %v1469, %v1605
      %v1637 = vadd.f32 %v1470, %v1598
      %v1638 = vadd.f32 %v1471, %v1606
      %v1639 = vmul.f32 %v1623, 0.70710677
      %v1640 = vmul.f32 %v1624, 0.70710677
      %v1641 = vmul.f32 %v1625, 0.70710677
      %v1642 = vmul.f32 %v1626, 0.70710677
      %v1643 = vmul.f32 %v1627, 0.70710677
      %v1644 = vmul.f32 %v1628, 0.70710677
      %v1645 = vmul.f32 %v1629, 0.70710677
      %v1646 = vmul.f32 %v1630, 0.70710677
      %v1647 = vmul.f32 %v1631, 0.70710677
      %v1648 = vmul.f32 %v1632, 0.70710677
      %v1649 = vmul.f32 %v1633, 0.70710677
      %v1650 = vmul.f32 %v1634, 0.70710677
      %v1651 = vmul.f32 %v1635, 0.70710677
      %v1652 = vmul.f32 %v1636, 0.70710677
      %v1653 = vmul.f32 %v1637, 0.70710677
      %v1654 = vmul.f32 %v1638, 0.70710677
      %v1671 = vlaneseq
      %v1672 = vshrl.u32 %v1671, 7
      %v1673 = vsub.s32 0, %v1672
      %v1674 = vrot.slane %v1639, %v1673
      %v1675 = vlaneseq
      %v1676 = vshrl.u32 %v1675, 7
      %v1677 = vsub.s32 0, %v1676
      %v1678 = vrot.slane %v1640, %v1677
      %v1679 = vlaneseq
      %v1680 = vshrl.u32 %v1679, 7
      %v1681 = vsub.s32 0, %v1680
      %v1682 = vrot.slane %v1641, %v1681
      %v1683 = vlaneseq
      %v1684 = vshrl.u32 %v1683, 7
      %v1685 = vsub.s32 0, %v1684
      %v1686 = vrot.slane %v1642, %v1685
      %v1687 = vlaneseq
      %v1688 = vshrl.u32 %v1687, 7
      %v1689 = vsub.s32 0, %v1688
      %v1690 = vrot.slane %v1643, %v1689
      %v1691 = vlaneseq
      %v1692 = vshrl.u32 %v1691, 7
      %v1693 = vsub.s32 0, %v1692
      %v1694 = vrot.slane %v1644, %v1693
      %v1695 = vlaneseq
      %v1696 = vshrl.u32 %v1695, 7
      %v1697 = vsub.s32 0, %v1696
      %v1698 = vrot.slane %v1645, %v1697
      %v1699 = vlaneseq
      %v1700 = vshrl.u32 %v1699, 7
      %v1701 = vsub.s32 0, %v1700
      %v1702 = vrot.slane %v1646, %v1701
      %v1703 = vlaneseq
      %v1704 = vshrl.u32 %v1703, 7
      %v1705 = vsub.s32 0, %v1704
      %v1706 = vrot.slane %v1647, %v1705
      %v1707 = vlaneseq
      %v1708 = vshrl.u32 %v1707, 7
      %v1709 = vsub.s32 0, %v1708
      %v1710 = vrot.slane %v1648, %v1709
      %v1711 = vlaneseq
      %v1712 = vshrl.u32 %v1711, 7
      %v1713 = vsub.s32 0, %v1712
      %v1714 = vrot.slane %v1649, %v1713
      %v1715 = vlaneseq
      %v1716 = vshrl.u32 %v1715, 7
      %v1717 = vsub.s32 0, %v1716
      %v1718 = vrot.slane %v1650, %v1717
      %v1719 = vlaneseq
      %v1720 = vshrl.u32 %v1719, 7
      %v1721 = vsub.s32 0, %v1720
      %v1722 = vrot.slane %v1651, %v1721
      %v1723 = vlaneseq
      %v1724 = vshrl.u32 %v1723, 7
      %v1725 = vsub.s32 0, %v1724
      %v1726 = vrot.slane %v1652, %v1725
      %v1727 = vlaneseq
      %v1728 = vshrl.u32 %v1727, 7
      %v1729 = vsub.s32 0, %v1728
      %v1730 = vrot.slane %v1653, %v1729
      %v1731 = vlaneseq
      %v1732 = vshrl.u32 %v1731, 7
      %v1733 = vsub.s32 0, %v1732
      %v1734 = vrot.slane %v1654, %v1733
      %vm1735 = vcmask 1041409
      %v1736 = vsel %vm1735, %v1678, %v1674
      %vm1737 = vcmask 1042434
      %v1738 = vsel %vm1737, %v1682, %v1736
      %vm1739 = vcmask 1043459
      %v1740 = vsel %vm1739, %v1686, %v1738
      %vm1741 = vcmask 1044484
      %v1742 = vsel %vm1741, %v1690, %v1740
      %vm1743 = vcmask 1045509
      %v1744 = vsel %vm1743, %v1694, %v1742
      %vm1745 = vcmask 1046534
      %v1746 = vsel %vm1745, %v1698, %v1744
      %vm1747 = vcmask 1047559
      %v1748 = vsel %vm1747, %v1702, %v1746
      %v1749 = vsel %vm1735, %v1710, %v1706
      %v1750 = vsel %vm1737, %v1714, %v1749
      %v1751 = vsel %vm1739, %v1718, %v1750
      %v1752 = vsel %vm1741, %v1722, %v1751
      %v1753 = vsel %vm1743, %v1726, %v1752
      %v1754 = vsel %vm1745, %v1730, %v1753
      %v1755 = vsel %vm1747, %v1734, %v1754
      %1758 = vst.msk [vmem:[%s271] sm:$0xff] %vm774, %v1748
      %1759 = vst.msk [vmem:[%s271 + $0x8] sm:$0xff] %vm774, %v1755
      %p1760 = scmp.lt.s32.totalorder %s17, 1
      %s1761 = scalar_select %p1760, %s17, 1
      %s1762 = smul.addr %s1761, 2
      %s1763 = smul.addr %s1762, 8
      %s1764 = scalar_lea.vmem %s6, %s1763
      // Predicated region
      $region45: #{discriminator_forward.8} parent=43 // pred_check
        %p1765 = pneg %p171
      $region46: #{discriminator_forward.8} parent=43 // pred_check_branch
        %1767 = sbr.rel (%p1765) target = $region48
      $region47: #{discriminator_forward.8} parent=43 // pred_region
        _
      $region48: #{discriminator_forward.8} parent=43 // pred_fallthru
        _
    $region44: #{discriminator_forward.8} parent=5 // pred_fallthru
      _
    %p1768 = scmp.le.s32.totalorder 2, %s12
    // Predicated region
    $region49: #{discriminator_forward.8} parent=5 // pred_check
      %p1769 = pneg %p1768
    $region50: #{discriminator_forward.8} parent=5 // pred_check_branch
      %1771 = sbr.rel (%p1769) target = $region52
    $region51: #{discriminator_forward.8} parent=5 // pred_region
      %s1772 = ssub.s32 %s12, 2
      // Predicated region
      $region53: #{discriminator_forward.8} parent=51 // pred_check
        %p1773 = pneg %p177
      $region54: #{discriminator_forward.8} parent=51 // pred_check_branch
        %1775 = sbr.rel (%p1773) target = $region56
      $region55: #{discriminator_forward.8} parent=51 // pred_region
        %p1776 = scmp.lt.s32.totalorder %s18, 1
        %s1777 = scalar_select %p1776, %s18, 1
        %s1778 = smul.addr %s1777, 2
        %s1779 = smul.addr %s1778, 8
        %s1780 = scalar_lea.vmem %s6, %s1779
      $region56: #{discriminator_forward.8} parent=51 // pred_fallthru
        _
    $region52: #{discriminator_forward.8} parent=5 // pred_fallthru
      _
  $region6: #{discriminator_forward.8} parent=0 // loop_footer
    %s16 = sadd.s32 1, %s12
  $region7: #{discriminator_forward.8} parent=0 // loop_footer_branch
    %11 = sbr.rel target = $region3
  $region8: #{discriminator_forward.8} parent=0 // loop_exit
    _

// kernel: discriminator_forward.6
$region0: #{discriminator_forward.6}
  #allocation0 [shape = 'u32[]', space=smem, size = 0x4, offset = 0x4, fixed_abs, tag = 'smem constant byte address 0x4 - core index']
  #allocation1 [shape = 'u32[144,128]{1,0:T(1,128)}', space=vmem, size = 0x12000, scoped, tag = 'internal scratch']
  %s0 = inlined_call_operand.vmem [shape: f32[2,440,4], index: 0, kind: input, shape index: {}]
  %s1 = inlined_call_operand.vmem [shape: f32[36,8], index: 1, kind: input, shape index: {}]
  %s2 = inlined_call_operand.vmem [shape: f32[1,8], index: 2, kind: input, shape index: {}]
  %s3 = inlined_call_operand.vmem [shape: f32[2,64,4], index: 3, kind: input, shape index: {}]
  %s4 = inlined_call_operand.vmem [shape: f32[4,8], index: 4, kind: input, shape index: {}]
  %s5 = inlined_call_operand.vmem [shape: f32[1,8], index: 5, kind: input, shape index: {}]
  %s6 = inlined_call_operand.vmem [shape: f32[2,64,8], index: 6, kind: output, shape index: {}]
  %s7 = sld [smem:[#allocation0]]
  $region57: #{discriminator_forward.6} parent=0
    _
  %s9 = ssub.s32 1, %s7
  %s10 = scalar_select 0, %s9, %s7
  loop: start=0, step=1, limit=4
  $region2: #{discriminator_forward.6} parent=0 // loop_pre_header
    _
  $region3: #{discriminator_forward.6} parent=0 // loop_header
    %s12 = sphi 0, %s16
    %p13 = scmp.ge.s32.totalorder %s12, 4
    %s22 = sphi 0, %s24
    %s25 = sphi 0, %s22
    %s26 = sphi 0, %s25
    %s42 = sphi 0, %s26
    %s46 = sphi 0, %s46
    %s48 = sphi 0, %s46
    %s49 = sphi 0, %s48
    %s63 = sphi 0, %s49
    %s67 = sphi 0, %s67
    %s69 = sphi 0, %s67
    %s70 = sphi 0, %s69
    %s84 = sphi 0, %s70
    %s90 = sphi 0, %s92
    %s93 = sphi 0, %s90
    %s94 = sphi 0, %s93
    %s110 = sphi 0, %s94
    %s114 = sphi 0, %s114
    %s116 = sphi 0, %s114
    %s117 = sphi 0, %s116
    %s131 = sphi 0, %s117
    %s135 = sphi 0, %s135
    %s137 = sphi 0, %s135
    %s138 = sphi 0, %s137
    %s152 = sphi 0, %s138
    %s158 = sphi 0, %s160
    %s161 = sphi 0, %s158
    %s162 = sphi 0, %s161
    %s178 = sphi 0, %s162
  $region4: #{discriminator_forward.6} parent=0 // loop_header_branch
    %15 = sbr.rel (%p13) target = $region8
  $region5: #{discriminator_forward.6} parent=0 // loop_body
    %s17 = ssub.s32 %s12, 1
    %s18 = ssub.s32 %s12, 2
    %s19 = sadd.s32 %s12, 1
    %s20 = ssub.s32 %s12, %s19
    %p21 = scmp.eq.s32.totalorder %s20, 0
    %s23 = sadd.s32 %s22, 1
    %s24 = scalar_select %p21, %s22, %s23
    %p27 = pneg %p21
    %p28 = scmp.eq.s32.totalorder %s12, 1
    %p29 = por %p27, %p28
    %p30 = scmp.ne.s32.totalorder %s22, %s25
    %p31 = scmp.eq.s32.totalorder %s12, 0
    %p32 = por %p30, %p31
    %p33 = scmp.ne.s32.totalorder %s22, %s25
    %p34 = scmp.eq.s32.totalorder %s17, 1
    %p35 = por %p33, %p34
    %p36 = scmp.ne.s32.totalorder %s25, %s26
    %p37 = scmp.eq.s32.totalorder %s17, 0
    %p38 = por %p36, %p37
    %p39 = scmp.ne.s32.totalorder %s25, %s26
    %p40 = scmp.eq.s32.totalorder %s18, 1
    %p41 = por %p39, %p40
    %p43 = scmp.ne.s32.totalorder %s26, %s42
    %p44 = scmp.eq.s32.totalorder %s18, 0
    %p45 = por %p43, %p44
    %s47 = sadd.s32 %s46, 1
    %p50 = scmp.eq.s32.totalorder %s12, 1
    %p51 = scmp.ne.s32.totalorder %s46, %s48
    %p52 = scmp.eq.s32.totalorder %s12, 0
    %p53 = por %p51, %p52
    %p54 = scmp.ne.s32.totalorder %s46, %s48
    %p55 = scmp.eq.s32.totalorder %s17, 1
    %p56 = por %p54, %p55
    %p57 = scmp.ne.s32.totalorder %s48, %s49
    %p58 = scmp.eq.s32.totalorder %s17, 0
    %p59 = por %p57, %p58
    %p60 = scmp.ne.s32.totalorder %s48, %s49
    %p61 = scmp.eq.s32.totalorder %s18, 1
    %p62 = por %p60, %p61
    %p64 = scmp.ne.s32.totalorder %s49, %s63
    %p65 = scmp.eq.s32.totalorder %s18, 0
    %p66 = por %p64, %p65
    %s68 = sadd.s32 %s67, 1
    %p71 = scmp.eq.s32.totalorder %s12, 1
    %p72 = scmp.ne.s32.totalorder %s67, %s69
    %p73 = scmp.eq.s32.totalorder %s12, 0
    %p74 = por %p72, %p73
    %p75 = scmp.ne.s32.totalorder %s67, %s69
    %p76 = scmp.eq.s32.totalorder %s17, 1
    %p77 = por %p75, %p76
    %p78 = scmp.ne.s32.totalorder %s69, %s70
    %p79 = scmp.eq.s32.totalorder %s17, 0
    %p80 = por %p78, %p79
    %p81 = scmp.ne.s32.totalorder %s69, %s70
    %p82 = scmp.eq.s32.totalorder %s18, 1
    %p83 = por %p81, %p82
    %p85 = scmp.ne.s32.totalorder %s70, %s84
    %p86 = scmp.eq.s32.totalorder %s18, 0
    %p87 = por %p85, %p86
    %s88 = ssub.s32 %s12, %s19
    %p89 = scmp.eq.s32.totalorder %s88, 0
    %s91 = sadd.s32 %s90, 1
    %s92 = scalar_select %p89, %s90, %s91
    %p95 = pneg %p89
    %p96 = scmp.eq.s32.totalorder %s12, 1
    %p97 = por %p95, %p96
    %p98 = scmp.ne.s32.totalorder %s90, %s93
    %p99 = scmp.eq.s32.totalorder %s12, 0
    %p100 = por %p98, %p99
    %p101 = scmp.ne.s32.totalorder %s90, %s93
    %p102 = scmp.eq.s32.totalorder %s17, 1
    %p103 = por %p101, %p102
    %p104 = scmp.ne.s32.totalorder %s93, %s94
    %p105 = scmp.eq.s32.totalorder %s17, 0
    %p106 = por %p104, %p105
    %p107 = scmp.ne.s32.totalorder %s93, %s94
    %p108 = scmp.eq.s32.totalorder %s18, 1
    %p109 = por %p107, %p108
    %p111 = scmp.ne.s32.totalorder %s94, %s110
    %p112 = scmp.eq.s32.totalorder %s18, 0
    %p113 = por %p111, %p112
    %s115 = sadd.s32 %s114, 1
    %p118 = scmp.eq.s32.totalorder %s12, 1
    %p119 = scmp.ne.s32.totalorder %s114, %s116
    %p120 = scmp.eq.s32.totalorder %s12, 0
    %p121 = por %p119, %p120
    %p122 = scmp.ne.s32.totalorder %s114, %s116
    %p123 = scmp.eq.s32.totalorder %s17, 1
    %p124 = por %p122, %p123
    %p125 = scmp.ne.s32.totalorder %s116, %s117
    %p126 = scmp.eq.s32.totalorder %s17, 0
    %p127 = por %p125, %p126
    %p128 = scmp.ne.s32.totalorder %s116, %s117
    %p129 = scmp.eq.s32.totalorder %s18, 1
    %p130 = por %p128, %p129
    %p132 = scmp.ne.s32.totalorder %s117, %s131
    %p133 = scmp.eq.s32.totalorder %s18, 0
    %p134 = por %p132, %p133
    %s136 = sadd.s32 %s135, 1
    %p139 = scmp.eq.s32.totalorder %s12, 1
    %p140 = scmp.ne.s32.totalorder %s135, %s137
    %p141 = scmp.eq.s32.totalorder %s12, 0
    %p142 = por %p140, %p141
    %p143 = scmp.ne.s32.totalorder %s135, %s137
    %p144 = scmp.eq.s32.totalorder %s17, 1
    %p145 = por %p143, %p144
    %p146 = scmp.ne.s32.totalorder %s137, %s138
    %p147 = scmp.eq.s32.totalorder %s17, 0
    %p148 = por %p146, %p147
    %p149 = scmp.ne.s32.totalorder %s137, %s138
    %p150 = scmp.eq.s32.totalorder %s18, 1
    %p151 = por %p149, %p150
    %p153 = scmp.ne.s32.totalorder %s138, %s152
    %p154 = scmp.eq.s32.totalorder %s18, 0
    %p155 = por %p153, %p154
    %s156 = ssub.s32 %s12, %s19
    %p157 = scmp.eq.s32.totalorder %s156, 0
    %s159 = sadd.s32 %s158, 1
    %s160 = scalar_select %p157, %s158, %s159
    %p163 = pneg %p157
    %p164 = scmp.eq.s32.totalorder %s12, 1
    %p165 = por %p163, %p164
    %p166 = scmp.ne.s32.totalorder %s158, %s161
    %p167 = scmp.eq.s32.totalorder %s12, 0
    %p168 = por %p166, %p167
    %p169 = scmp.ne.s32.totalorder %s158, %s161
    %p170 = scmp.eq.s32.totalorder %s17, 1
    %p171 = por %p169, %p170
    %p172 = scmp.ne.s32.totalorder %s161, %s162
    %p173 = scmp.eq.s32.totalorder %s17, 0
    %p174 = por %p172, %p173
    %p175 = scmp.ne.s32.totalorder %s161, %s162
    %p176 = scmp.eq.s32.totalorder %s18, 1
    %p177 = por %p175, %p176
    %p179 = scmp.ne.s32.totalorder %s162, %s178
    %p180 = scmp.eq.s32.totalorder %s18, 0
    %p181 = por %p179, %p180
    %p182 = scmp.le.s32.totalorder 1, %s12
    %p183 = scmp.lt.s32.totalorder %s12, 3
    %p184 = pnand %p182, %p183
    %p185 = pneg %p184
    // Predicated region
    $region9: #{discriminator_forward.6} parent=5 // pred_check
      _
    $region10: #{discriminator_forward.6} parent=5 // pred_check_branch
      %187 = sbr.rel (%p184) target = $region12
    $region11: #{discriminator_forward.6} parent=5 // pred_region
      %s188 = ssub.s32 %s12, 1
      // Predicated region
      $region13: #{discriminator_forward.6} parent=11 // pred_check
        %p189 = pneg %p59
      $region14: #{discriminator_forward.6} parent=11 // pred_check_branch
        %191 = sbr.rel (%p189) target = $region16
      $region15: #{discriminator_forward.6} parent=11 // pred_region
        _
      $region16: #{discriminator_forward.6} parent=11 // pred_fallthru
        _
      // Predicated region
      $region17: #{discriminator_forward.6} parent=11 // pred_check
        %p192 = pneg %p80
      $region18: #{discriminator_forward.6} parent=11 // pred_check_branch
        %194 = sbr.rel (%p192) target = $region20
      $region19: #{discriminator_forward.6} parent=11 // pred_region
        _
      $region20: #{discriminator_forward.6} parent=11 // pred_fallthru
        _
      // Predicated region
      $region21: #{discriminator_forward.6} parent=11 // pred_check
        %p195 = pneg %p127
      $region22: #{discriminator_forward.6} parent=11 // pred_check_branch
        %197 = sbr.rel (%p195) target = $region24
      $region23: #{discriminator_forward.6} parent=11 // pred_region
        _
      $region24: #{discriminator_forward.6} parent=11 // pred_fallthru
        _
      // Predicated region
      $region25: #{discriminator_forward.6} parent=11 // pred_check
        %p198 = pneg %p148
      $region26: #{discriminator_forward.6} parent=11 // pred_check_branch
        %200 = sbr.rel (%p198) target = $region28
      $region27: #{discriminator_forward.6} parent=11 // pred_region
        _
      $region28: #{discriminator_forward.6} parent=11 // pred_fallthru
        _
    $region12: #{discriminator_forward.6} parent=5 // pred_fallthru
      _
    %p201 = scmp.lt.s32.totalorder %s12, 2
    // Predicated region
    $region29: #{discriminator_forward.6} parent=5 // pred_check
      %p202 = pneg %p201
    $region30: #{discriminator_forward.6} parent=5 // pred_check_branch
      %204 = sbr.rel (%p202) target = $region32
    $region31: #{discriminator_forward.6} parent=5 // pred_region
      // Predicated region
      $region33: #{discriminator_forward.6} parent=31 // pred_check
        %p205 = pneg %p32
      $region34: #{discriminator_forward.6} parent=31 // pred_check_branch
        %207 = sbr.rel (%p205) target = $region36
      $region35: #{discriminator_forward.6} parent=31 // pred_region
        %p208 = scmp.lt.s32.totalorder %s12, 1
        %s209 = scalar_select %p208, %s12, 1
        %s210 = smul.addr %s209, 55
        %s211 = smul.addr %s210, 8
        %s212 = scalar_lea.vmem %s0, %s211
      $region36: #{discriminator_forward.6} parent=31 // pred_fallthru
        _
      // Predicated region
      $region37: #{discriminator_forward.6} parent=31 // pred_check
        %p213 = pneg %p100
      $region38: #{discriminator_forward.6} parent=31 // pred_check_branch
        %215 = sbr.rel (%p213) target = $region40
      $region39: #{discriminator_forward.6} parent=31 // pred_region
        %p216 = scmp.lt.s32.totalorder %s12, 1
        %s217 = scalar_select %p216, %s12, 1
        %s218 = smul.addr %s217, 8
        %s219 = smul.addr %s218, 8
        %s220 = scalar_lea.vmem %s3, %s219
      $region40: #{discriminator_forward.6} parent=31 // pred_fallthru
        _
    $region32: #{discriminator_forward.6} parent=5 // pred_fallthru
      _
    %p221 = scmp.le.s32.totalorder 1, %s12
    %p222 = scmp.lt.s32.totalorder %s12, 3
    %p223 = pnand %p221, %p222
    %p224 = pneg %p223
    // Predicated region
    $region41: #{discriminator_forward.6} parent=5 // pred_check
      _
    $region42: #{discriminator_forward.6} parent=5 // pred_check_branch
      %226 = sbr.rel (%p223) target = $region44
    $region43: #{discriminator_forward.6} parent=5 // pred_region
      %s227 = ssub.s32 %s12, 1
      %p228 = scmp.lt.s32.totalorder %s17, 1
      %s229 = scalar_select %p228, %s17, 1
      %s230 = smul.addr %s229, 55
      %s231 = smul.addr %s230, 8
      %s232 = scalar_lea.vmem %s0, %s231
      %p233 = pneg %p38
      %p234 = pneg %p35
      %p235 = pneg %p59
      %p236 = pneg %p56
      %p237 = pneg %p80
      %p238 = pneg %p77
      %p239 = scmp.lt.s32.totalorder %s17, 1
      %s240 = scalar_select %p239, %s17, 1
      %s241 = smul.addr %s240, 8
      %s242 = smul.addr %s241, 8
      %s243 = scalar_lea.vmem %s3, %s242
      %p244 = pneg %p106
      %p245 = pneg %p103
      %p246 = pneg %p127
      %p247 = pneg %p124
      %p248 = pneg %p148
      %p249 = pneg %p145
      %p250 = pneg %p174
      %p251 = pneg %p171
      %p252 = scmp.lt.s32.totalorder %s17, 1
      %s253 = scalar_select %p252, %s17, 1
      %s254 = smul.addr %s253, 8
      %s255 = smul.addr %s254, 8
      %s256 = scalar_lea.vmem %s6, %s255
      %p257 = scmp.lt.s32.totalorder %s17, 1
      %s258 = scalar_select %p257, %s17, 1
      %s259 = smul.addr %s258, 55
      %s260 = smul.addr %s259, 8
      %s261 = scalar_lea.vmem %s0, %s260
      %p262 = scmp.lt.s32.totalorder %s17, 1
      %s263 = scalar_select %p262, %s17, 1
      %s264 = smul.addr %s263, 8
      %s265 = smul.addr %s264, 8
      %s266 = scalar_lea.vmem %s3, %s265
      %p267 = scmp.lt.s32.totalorder %s17, 1
      %s268 = scalar_select %p267, %s17, 1
      %s269 = smul.addr %s268, 8
      %s270 = smul.addr %s269, 8
      %s271 = scalar_lea.vmem %s6, %s270
      %v272 = vld [vmem:[%s261] sm:$0xff]
      %v273 = vld [vmem:[%s261 + $0x8] sm:$0xff]
      %v274 = vld [vmem:[%s261 + $0x10] sm:$0xff]
      %v275 = vld [vmem:[%s261 + $0x18] sm:$0xff]
      %v276 = vld [vmem:[%s261 + $0x20] sm:$0xff]
      %v277 = vld [vmem:[%s261 + $0x28] sm:$0xff]
      %v278 = vld [vmem:[%s261 + $0x30] sm:$0xff]
      %v279 = vld [vmem:[%s261 + $0x38] sm:$0xff]
      %v280 = vld [vmem:[%s261 + $0x40] sm:$0xff]
      %v281 = vld [vmem:[%s261 + $0x48] sm:$0xff]
      %v282 = vld [vmem:[%s261 + $0x50] sm:$0xff]
      %v283 = vld [vmem:[%s261 + $0x58] sm:$0xff]
      %v284 = vld [vmem:[%s261 + $0x60] sm:$0xff]
      %v285 = vld [vmem:[%s261 + $0x68] sm:$0xff]
      %v286 = vld [vmem:[%s261 + $0x70] sm:$0xff]
      %v287 = vld [vmem:[%s261 + $0x78] sm:$0xff]
      %v288 = vld [vmem:[%s261 + $0x80] sm:$0xff]
      %v289 = vld [vmem:[%s261 + $0x88] sm:$0xff]
      %v290 = vld [vmem:[%s261 + $0x90] sm:$0xff]
      %v291 = vld [vmem:[%s261 + $0x98] sm:$0xff]
      %v292 = vld [vmem:[%s261 + $0xa0] sm:$0xff]
      %v293 = vld [vmem:[%s261 + $0xa8] sm:$0xff]
      %v294 = vld [vmem:[%s261 + $0xb0] sm:$0xff]
      %v295 = vld [vmem:[%s261 + $0xb8] sm:$0xff]
      %v296 = vld [vmem:[%s261 + $0xc0] sm:$0xff]
      %v297 = vld [vmem:[%s261 + $0xc8] sm:$0xff]
      %v298 = vld [vmem:[%s261 + $0xd0] sm:$0xff]
      %v299 = vld [vmem:[%s261 + $0xd8] sm:$0xff]
      %v300 = vld [vmem:[%s261 + $0xe0] sm:$0xff]
      %v301 = vld [vmem:[%s261 + $0xe8] sm:$0xff]
      %v302 = vld [vmem:[%s261 + $0xf0] sm:$0xff]
      %v303 = vld [vmem:[%s261 + $0xf8] sm:$0xff]
      %v304 = vld [vmem:[%s261 + $0x100] sm:$0xff]
      %v305 = vld [vmem:[%s261 + $0x108] sm:$0xff]
      %v306 = vld [vmem:[%s261 + $0x110] sm:$0xff]
      %v307 = vld [vmem:[%s261 + $0x118] sm:$0xff]
      %v308 = vld [vmem:[%s261 + $0x120] sm:$0xff]
      %v309 = vld [vmem:[%s261 + $0x128] sm:$0xff]
      %v310 = vld [vmem:[%s261 + $0x130] sm:$0xff]
      %v311 = vld [vmem:[%s261 + $0x138] sm:$0xff]
      %v312 = vld [vmem:[%s261 + $0x140] sm:$0xff]
      %v313 = vld [vmem:[%s261 + $0x148] sm:$0xff]
      %v314 = vld [vmem:[%s261 + $0x150] sm:$0xff]
      %v315 = vld [vmem:[%s261 + $0x158] sm:$0xff]
      %v316 = vld [vmem:[%s261 + $0x160] sm:$0xff]
      %v317 = vld [vmem:[%s261 + $0x168] sm:$0xff]
      %v318 = vld [vmem:[%s261 + $0x170] sm:$0xff]
      %v319 = vld [vmem:[%s261 + $0x178] sm:$0xff]
      %v320 = vld [vmem:[%s261 + $0x1] sm:$0xff]
      %v321 = vld [vmem:[%s261 + $0x9] sm:$0xff]
      %v322 = vld [vmem:[%s261 + $0x11] sm:$0xff]
      %v323 = vld [vmem:[%s261 + $0x19] sm:$0xff]
      %v324 = vld [vmem:[%s261 + $0x21] sm:$0xff]
      %v325 = vld [vmem:[%s261 + $0x29] sm:$0xff]
      %v326 = vld [vmem:[%s261 + $0x31] sm:$0xff]
      %v327 = vld [vmem:[%s261 + $0x39] sm:$0xff]
      %v328 = vld [vmem:[%s261 + $0x41] sm:$0xff]
      %v329 = vld [vmem:[%s261 + $0x49] sm:$0xff]
      %v330 = vld [vmem:[%s261 + $0x51] sm:$0xff]
      %v331 = vld [vmem:[%s261 + $0x59] sm:$0xff]
      %v332 = vld [vmem:[%s261 + $0x61] sm:$0xff]
      %v333 = vld [vmem:[%s261 + $0x69] sm:$0xff]
      %v334 = vld [vmem:[%s261 + $0x71] sm:$0xff]
      %v335 = vld [vmem:[%s261 + $0x79] sm:$0xff]
      %v336 = vld [vmem:[%s261 + $0x81] sm:$0xff]
      %v337 = vld [vmem:[%s261 + $0x89] sm:$0xff]
      %v338 = vld [vmem:[%s261 + $0x91] sm:$0xff]
      %v339 = vld [vmem:[%s261 + $0x99] sm:$0xff]
      %v340 = vld [vmem:[%s261 + $0xa1] sm:$0xff]
      %v341 = vld [vmem:[%s261 + $0xa9] sm:$0xff]
      %v342 = vld [vmem:[%s261 + $0xb1] sm:$0xff]
      %v343 = vld [vmem:[%s261 + $0xb9] sm:$0xff]
      %v344 = vld [vmem:[%s261 + $0xc1] sm:$0xff]
      %v345 = vld [vmem:[%s261 + $0xc9] sm:$0xff]
      %v346 = vld [vmem:[%s261 + $0xd1] sm:$0xff]
      %v347 = vld [vmem:[%s261 + $0xd9] sm:$0xff]
      %v348 = vld [vmem:[%s261 + $0xe1] sm:$0xff]
      %v349 = vld [vmem:[%s261 + $0xe9] sm:$0xff]
      %v350 = vld [vmem:[%s261 + $0xf1] sm:$0xff]
      %v351 = vld [vmem:[%s261 + $0xf9] sm:$0xff]
      %v352 = vld [vmem:[%s261 + $0x101] sm:$0xff]
      %v353 = vld [vmem:[%s261 + $0x109] sm:$0xff]
      %v354 = vld [vmem:[%s261 + $0x111] sm:$0xff]
      %v355 = vld [vmem:[%s261 + $0x119] sm:$0xff]
      %v356 = vld [vmem:[%s261 + $0x121] sm:$0xff]
      %v357 = vld [vmem:[%s261 + $0x129] sm:$0xff]
      %v358 = vld [vmem:[%s261 + $0x131] sm:$0xff]
      %v359 = vld [vmem:[%s261 + $0x139] sm:$0xff]
      %v360 = vld [vmem:[%s261 + $0x141] sm:$0xff]
      %v361 = vld [vmem:[%s261 + $0x149] sm:$0xff]
      %v362 = vld [vmem:[%s261 + $0x151] sm:$0xff]
      %v363 = vld [vmem:[%s261 + $0x159] sm:$0xff]
      %v364 = vld [vmem:[%s261 + $0x161] sm:$0xff]
      %v365 = vld [vmem:[%s261 + $0x169] sm:$0xff]
      %v366 = vld [vmem:[%s261 + $0x171] sm:$0xff]
      %v367 = vld [vmem:[%s261 + $0x179] sm:$0xff]
      %v368 = vld [vmem:[%s261 + $0x2] sm:$0xff]
      %v369 = vld [vmem:[%s261 + $0xa] sm:$0xff]
      %v370 = vld [vmem:[%s261 + $0x12] sm:$0xff]
      %v371 = vld [vmem:[%s261 + $0x1a] sm:$0xff]
      %v372 = vld [vmem:[%s261 + $0x22] sm:$0xff]
      %v373 = vld [vmem:[%s261 + $0x2a] sm:$0xff]
      %v374 = vld [vmem:[%s261 + $0x32] sm:$0xff]
      %v375 = vld [vmem:[%s261 + $0x3a] sm:$0xff]
      %v376 = vld [vmem:[%s261 + $0x42] sm:$0xff]
      %v377 = vld [vmem:[%s261 + $0x4a] sm:$0xff]
      %v378 = vld [vmem:[%s261 + $0x52] sm:$0xff]
      %v379 = vld [vmem:[%s261 + $0x5a] sm:$0xff]
      %v380 = vld [vmem:[%s261 + $0x62] sm:$0xff]
      %v381 = vld [vmem:[%s261 + $0x6a] sm:$0xff]
      %v382 = vld [vmem:[%s261 + $0x72] sm:$0xff]
      %v383 = vld [vmem:[%s261 + $0x7a] sm:$0xff]
      %v384 = vld [vmem:[%s261 + $0x82] sm:$0xff]
      %v385 = vld [vmem:[%s261 + $0x8a] sm:$0xff]
      %v386 = vld [vmem:[%s261 + $0x92] sm:$0xff]
      %v387 = vld [vmem:[%s261 + $0x9a] sm:$0xff]
      %v388 = vld [vmem:[%s261 + $0xa2] sm:$0xff]
      %v389 = vld [vmem:[%s261 + $0xaa] sm:$0xff]
      %v390 = vld [vmem:[%s261 + $0xb2] sm:$0xff]
      %v391 = vld [vmem:[%s261 + $0xba] sm:$0xff]
      %v392 = vld [vmem:[%s261 + $0xc2] sm:$0xff]
      %v393 = vld [vmem:[%s261 + $0xca] sm:$0xff]
      %v394 = vld [vmem:[%s261 + $0xd2] sm:$0xff]
      %v395 = vld [vmem:[%s261 + $0xda] sm:$0xff]
      %v396 = vld [vmem:[%s261 + $0xe2] sm:$0xff]
      %v397 = vld [vmem:[%s261 + $0xea] sm:$0xff]
      %v398 = vld [vmem:[%s261 + $0xf2] sm:$0xff]
      %v399 = vld [vmem:[%s261 + $0xfa] sm:$0xff]
      %v400 = vld [vmem:[%s261 + $0x102] sm:$0xff]
      %v401 = vld [vmem:[%s261 + $0x10a] sm:$0xff]
      %v402 = vld [vmem:[%s261 + $0x112] sm:$0xff]
      %v403 = vld [vmem:[%s261 + $0x11a] sm:$0xff]
      %v404 = vld [vmem:[%s261 + $0x122] sm:$0xff]
      %v405 = vld [vmem:[%s261 + $0x12a] sm:$0xff]
      %v406 = vld [vmem:[%s261 + $0x132] sm:$0xff]
      %v407 = vld [vmem:[%s261 + $0x13a] sm:$0xff]
      %v408 = vld [vmem:[%s261 + $0x142] sm:$0xff]
      %v409 = vld [vmem:[%s261 + $0x14a] sm:$0xff]
      %v410 = vld [vmem:[%s261 + $0x152] sm:$0xff]
      %v411 = vld [vmem:[%s261 + $0x15a] sm:$0xff]
      %v412 = vld [vmem:[%s261 + $0x162] sm:$0xff]
      %v413 = vld [vmem:[%s261 + $0x16a] sm:$0xff]
      %v414 = vld [vmem:[%s261 + $0x172] sm:$0xff]
      %v415 = vld [vmem:[%s261 + $0x17a] sm:$0xff]
      %v416 = vld [vmem:[%s261 + $0x180] sm:$0xff]
      %v417 = vld [vmem:[%s261 + $0x188] sm:$0xff]
      %v418 = vld [vmem:[%s261 + $0x190] sm:$0xff]
      %v419 = vld [vmem:[%s261 + $0x181] sm:$0xff]
      %v420 = vld [vmem:[%s261 + $0x189] sm:$0xff]
      %v421 = vld [vmem:[%s261 + $0x191] sm:$0xff]
      %v422 = vld [vmem:[%s261 + $0x182] sm:$0xff]
      %v423 = vld [vmem:[%s261 + $0x18a] sm:$0xff]
      %v424 = vld [vmem:[%s261 + $0x192] sm:$0xff]
      %v425 = vld [vmem:[%s261 + $0x198] sm:$0xff]
      %v426 = vld [vmem:[%s261 + $0x1a0] sm:$0xff]
      %v427 = vld [vmem:[%s261 + $0x1a8] sm:$0xff]
      %v428 = vld [vmem:[%s261 + $0x199] sm:$0xff]
      %v429 = vld [vmem:[%s261 + $0x1a1] sm:$0xff]
      %v430 = vld [vmem:[%s261 + $0x1a9] sm:$0xff]
      %v431 = vld [vmem:[%s261 + $0x19a] sm:$0xff]
      %v432 = vld [vmem:[%s261 + $0x1a2] sm:$0xff]
      %v433 = vld [vmem:[%s261 + $0x1aa] sm:$0xff]
      %482 = vrot.lane.b32.xlu0 %v320, 4
      %v483 = vpop.permute.xlu0 %482
      %484 = vrot.lane.b32.xlu0 %v321, 4
      %v485 = vpop.permute.xlu0 %484
      %486 = vrot.lane.b32.xlu0 %v322, 4
      %v487 = vpop.permute.xlu0 %486
      %488 = vrot.lane.b32.xlu0 %v323, 4
      %v489 = vpop.permute.xlu0 %488
      %490 = vrot.lane.b32.xlu0 %v324, 4
      %v491 = vpop.permute.xlu0 %490
      %492 = vrot.lane.b32.xlu0 %v325, 4
      %v493 = vpop.permute.xlu0 %492
      %494 = vrot.lane.b32.xlu0 %v326, 4
      %v495 = vpop.permute.xlu0 %494
      %496 = vrot.lane.b32.xlu0 %v327, 4
      %v497 = vpop.permute.xlu0 %496
      %498 = vrot.lane.b32.xlu0 %v328, 4
      %v499 = vpop.permute.xlu0 %498
      %500 = vrot.lane.b32.xlu0 %v329, 4
      %v501 = vpop.permute.xlu0 %500
      %502 = vrot.lane.b32.xlu0 %v330, 4
      %v503 = vpop.permute.xlu0 %502
      %504 = vrot.lane.b32.xlu0 %v331, 4
      %v505 = vpop.permute.xlu0 %504
      %506 = vrot.lane.b32.xlu0 %v332, 4
      %v507 = vpop.permute.xlu0 %506
      %508 = vrot.lane.b32.xlu0 %v333, 4
      %v509 = vpop.permute.xlu0 %508
      %510 = vrot.lane.b32.xlu0 %v334, 4
      %v511 = vpop.permute.xlu0 %510
      %512 = vrot.lane.b32.xlu0 %v335, 4
      %v513 = vpop.permute.xlu0 %512
      %514 = vrot.lane.b32.xlu0 %v336, 4
      %v515 = vpop.permute.xlu0 %514
      %516 = vrot.lane.b32.xlu0 %v337, 4
      %v517 = vpop.permute.xlu0 %516
      %518 = vrot.lane.b32.xlu0 %v338, 4
      %v519 = vpop.permute.xlu0 %518
      %520 = vrot.lane.b32.xlu0 %v339, 4
      %v521 = vpop.permute.xlu0 %520
      %522 = vrot.lane.b32.xlu0 %v340, 4
      %v523 = vpop.permute.xlu0 %522
      %524 = vrot.lane.b32.xlu0 %v341, 4
      %v525 = vpop.permute.xlu0 %524
      %526 = vrot.lane.b32.xlu0 %v342, 4
      %v527 = vpop.permute.xlu0 %526
      %528 = vrot.lane.b32.xlu0 %v343, 4
      %v529 = vpop.permute.xlu0 %528
      %530 = vrot.lane.b32.xlu0 %v344, 4
      %v531 = vpop.permute.xlu0 %530
      %532 = vrot.lane.b32.xlu0 %v345, 4
      %v533 = vpop.permute.xlu0 %532
      %534 = vrot.lane.b32.xlu0 %v346, 4
      %v535 = vpop.permute.xlu0 %534
      %536 = vrot.lane.b32.xlu0 %v347, 4
      %v537 = vpop.permute.xlu0 %536
      %538 = vrot.lane.b32.xlu0 %v348, 4
      %v539 = vpop.permute.xlu0 %538
      %540 = vrot.lane.b32.xlu0 %v349, 4
      %v541 = vpop.permute.xlu0 %540
      %542 = vrot.lane.b32.xlu0 %v350, 4
      %v543 = vpop.permute.xlu0 %542
      %544 = vrot.lane.b32.xlu0 %v351, 4
      %v545 = vpop.permute.xlu0 %544
      %546 = vrot.lane.b32.xlu0 %v352, 4
      %v547 = vpop.permute.xlu0 %546
      %548 = vrot.lane.b32.xlu0 %v353, 4
      %v549 = vpop.permute.xlu0 %548
      %550 = vrot.lane.b32.xlu0 %v354, 4
      %v551 = vpop.permute.xlu0 %550
      %552 = vrot.lane.b32.xlu0 %v355, 4
      %v553 = vpop.permute.xlu0 %552
      %554 = vrot.lane.b32.xlu0 %v356, 4
      %v555 = vpop.permute.xlu0 %554
      %556 = vrot.lane.b32.xlu0 %v357, 4
      %v557 = vpop.permute.xlu0 %556
      %558 = vrot.lane.b32.xlu0 %v358, 4
      %v559 = vpop.permute.xlu0 %558
      %560 = vrot.lane.b32.xlu0 %v359, 4
      %v561 = vpop.permute.xlu0 %560
      %562 = vrot.lane.b32.xlu0 %v360, 4
      %v563 = vpop.permute.xlu0 %562
      %564 = vrot.lane.b32.xlu0 %v361, 4
      %v565 = vpop.permute.xlu0 %564
      %566 = vrot.lane.b32.xlu0 %v362, 4
      %v567 = vpop.permute.xlu0 %566
      %568 = vrot.lane.b32.xlu0 %v363, 4
      %v569 = vpop.permute.xlu0 %568
      %570 = vrot.lane.b32.xlu0 %v364, 4
      %v571 = vpop.permute.xlu0 %570
      %572 = vrot.lane.b32.xlu0 %v365, 4
      %v573 = vpop.permute.xlu0 %572
      %574 = vrot.lane.b32.xlu0 %v366, 4
      %v575 = vpop.permute.xlu0 %574
      %576 = vrot.lane.b32.xlu0 %v367, 4
      %v577 = vpop.permute.xlu0 %576
      %674 = vrot.lane.b32.xlu0 %v368, 8
      %v675 = vpop.permute.xlu0 %674
      %676 = vrot.lane.b32.xlu0 %v369, 8
      %v677 = vpop.permute.xlu0 %676
      %678 = vrot.lane.b32.xlu0 %v370, 8
      %v679 = vpop.permute.xlu0 %678
      %680 = vrot.lane.b32.xlu0 %v371, 8
      %v681 = vpop.permute.xlu0 %680
      %682 = vrot.lane.b32.xlu0 %v372, 8
      %v683 = vpop.permute.xlu0 %682
      %684 = vrot.lane.b32.xlu0 %v373, 8
      %v685 = vpop.permute.xlu0 %684
      %686 = vrot.lane.b32.xlu0 %v374, 8
      %v687 = vpop.permute.xlu0 %686
      %688 = vrot.lane.b32.xlu0 %v375, 8
      %v689 = vpop.permute.xlu0 %688
      %690 = vrot.lane.b32.xlu0 %v376, 8
      %v691 = vpop.permute.xlu0 %690
      %692 = vrot.lane.b32.xlu0 %v377, 8
      %v693 = vpop.permute.xlu0 %692
      %694 = vrot.lane.b32.xlu0 %v378, 8
      %v695 = vpop.permute.xlu0 %694
      %696 = vrot.lane.b32.xlu0 %v379, 8
      %v697 = vpop.permute.xlu0 %696
      %698 = vrot.lane.b32.xlu0 %v380, 8
      %v699 = vpop.permute.xlu0 %698
      %700 = vrot.lane.b32.xlu0 %v381, 8
      %v701 = vpop.permute.xlu0 %700
      %702 = vrot.lane.b32.xlu0 %v382, 8
      %v703 = vpop.permute.xlu0 %702
      %704 = vrot.lane.b32.xlu0 %v383, 8
      %v705 = vpop.permute.xlu0 %704
      %706 = vrot.lane.b32.xlu0 %v384, 8
      %v707 = vpop.permute.xlu0 %706
      %708 = vrot.lane.b32.xlu0 %v385, 8
      %v709 = vpop.permute.xlu0 %708
      %710 = vrot.lane.b32.xlu0 %v386, 8
      %v711 = vpop.permute.xlu0 %710
      %712 = vrot.lane.b32.xlu0 %v387, 8
      %v713 = vpop.permute.xlu0 %712
      %714 = vrot.lane.b32.xlu0 %v388, 8
      %v715 = vpop.permute.xlu0 %714
      %716 = vrot.lane.b32.xlu0 %v389, 8
      %v717 = vpop.permute.xlu0 %716
      %718 = vrot.lane.b32.xlu0 %v390, 8
      %v719 = vpop.permute.xlu0 %718
      %720 = vrot.lane.b32.xlu0 %v391, 8
      %v721 = vpop.permute.xlu0 %720
      %722 = vrot.lane.b32.xlu0 %v392, 8
      %v723 = vpop.permute.xlu0 %722
      %724 = vrot.lane.b32.xlu0 %v393, 8
      %v725 = vpop.permute.xlu0 %724
      %726 = vrot.lane.b32.xlu0 %v394, 8
      %v727 = vpop.permute.xlu0 %726
      %728 = vrot.lane.b32.xlu0 %v395, 8
      %v729 = vpop.permute.xlu0 %728
      %730 = vrot.lane.b32.xlu0 %v396, 8
      %v731 = vpop.permute.xlu0 %730
      %732 = vrot.lane.b32.xlu0 %v397, 8
      %v733 = vpop.permute.xlu0 %732
      %734 = vrot.lane.b32.xlu0 %v398, 8
      %v735 = vpop.permute.xlu0 %734
      %736 = vrot.lane.b32.xlu0 %v399, 8
      %v737 = vpop.permute.xlu0 %736
      %738 = vrot.lane.b32.xlu0 %v400, 8
      %v739 = vpop.permute.xlu0 %738
      %740 = vrot.lane.b32.xlu0 %v401, 8
      %v741 = vpop.permute.xlu0 %740
      %742 = vrot.lane.b32.xlu0 %v402, 8
      %v743 = vpop.permute.xlu0 %742
      %744 = vrot.lane.b32.xlu0 %v403, 8
      %v745 = vpop.permute.xlu0 %744
      %746 = vrot.lane.b32.xlu0 %v404, 8
      %v747 = vpop.permute.xlu0 %746
      %748 = vrot.lane.b32.xlu0 %v405, 8
      %v749 = vpop.permute.xlu0 %748
      %750 = vrot.lane.b32.xlu0 %v406, 8
      %v751 = vpop.permute.xlu0 %750
      %752 = vrot.lane.b32.xlu0 %v407, 8
      %v753 = vpop.permute.xlu0 %752
      %754 = vrot.lane.b32.xlu0 %v408, 8
      %v755 = vpop.permute.xlu0 %754
      %756 = vrot.lane.b32.xlu0 %v409, 8
      %v757 = vpop.permute.xlu0 %756
      %758 = vrot.lane.b32.xlu0 %v410, 8
      %v759 = vpop.permute.xlu0 %758
      %760 = vrot.lane.b32.xlu0 %v411, 8
      %v761 = vpop.permute.xlu0 %760
      %762 = vrot.lane.b32.xlu0 %v412, 8
      %v763 = vpop.permute.xlu0 %762
      %764 = vrot.lane.b32.xlu0 %v413, 8
      %v765 = vpop.permute.xlu0 %764
      %766 = vrot.lane.b32.xlu0 %v414, 8
      %v767 = vpop.permute.xlu0 %766
      %768 = vrot.lane.b32.xlu0 %v415, 8
      %v769 = vpop.permute.xlu0 %768
      %866 = vrot.lane.b32.xlu0 %v275, 12
      %v867 = vpop.permute.xlu0 %866
      %868 = vrot.lane.b32.xlu0 %v276, 12
      %v869 = vpop.permute.xlu0 %868
      %870 = vrot.lane.b32.xlu0 %v277, 12
      %v871 = vpop.permute.xlu0 %870
      %872 = vrot.lane.b32.xlu0 %v278, 12
      %v873 = vpop.permute.xlu0 %872
      %874 = vrot.lane.b32.xlu0 %v279, 12
      %v875 = vpop.permute.xlu0 %874
      %876 = vrot.lane.b32.xlu0 %v280, 12
      %v877 = vpop.permute.xlu0 %876
      %878 = vrot.lane.b32.xlu0 %v281, 12
      %v879 = vpop.permute.xlu0 %878
      %880 = vrot.lane.b32.xlu0 %v282, 12
      %v881 = vpop.permute.xlu0 %880
      %882 = vrot.lane.b32.xlu0 %v283, 12
      %v883 = vpop.permute.xlu0 %882
      %884 = vrot.lane.b32.xlu0 %v284, 12
      %v885 = vpop.permute.xlu0 %884
      %886 = vrot.lane.b32.xlu0 %v285, 12
      %v887 = vpop.permute.xlu0 %886
      %888 = vrot.lane.b32.xlu0 %v286, 12
      %v889 = vpop.permute.xlu0 %888
      %890 = vrot.lane.b32.xlu0 %v287, 12
      %v891 = vpop.permute.xlu0 %890
      %892 = vrot.lane.b32.xlu0 %v288, 12
      %v893 = vpop.permute.xlu0 %892
      %894 = vrot.lane.b32.xlu0 %v289, 12
      %v895 = vpop.permute.xlu0 %894
      %896 = vrot.lane.b32.xlu0 %v290, 12
      %v897 = vpop.permute.xlu0 %896
      %898 = vrot.lane.b32.xlu0 %v291, 12
      %v899 = vpop.permute.xlu0 %898
      %900 = vrot.lane.b32.xlu0 %v292, 12
      %v901 = vpop.permute.xlu0 %900
      %902 = vrot.lane.b32.xlu0 %v293, 12
      %v903 = vpop.permute.xlu0 %902
      %904 = vrot.lane.b32.xlu0 %v294, 12
      %v905 = vpop.permute.xlu0 %904
      %906 = vrot.lane.b32.xlu0 %v295, 12
      %v907 = vpop.permute.xlu0 %906
      %908 = vrot.lane.b32.xlu0 %v296, 12
      %v909 = vpop.permute.xlu0 %908
      %910 = vrot.lane.b32.xlu0 %v297, 12
      %v911 = vpop.permute.xlu0 %910
      %912 = vrot.lane.b32.xlu0 %v298, 12
      %v913 = vpop.permute.xlu0 %912
      %914 = vrot.lane.b32.xlu0 %v299, 12
      %v915 = vpop.permute.xlu0 %914
      %916 = vrot.lane.b32.xlu0 %v300, 12
      %v917 = vpop.permute.xlu0 %916
      %918 = vrot.lane.b32.xlu0 %v301, 12
      %v919 = vpop.permute.xlu0 %918
      %920 = vrot.lane.b32.xlu0 %v302, 12
      %v921 = vpop.permute.xlu0 %920
      %922 = vrot.lane.b32.xlu0 %v303, 12
      %v923 = vpop.permute.xlu0 %922
      %924 = vrot.lane.b32.xlu0 %v304, 12
      %v925 = vpop.permute.xlu0 %924
      %926 = vrot.lane.b32.xlu0 %v305, 12
      %v927 = vpop.permute.xlu0 %926
      %928 = vrot.lane.b32.xlu0 %v306, 12
      %v929 = vpop.permute.xlu0 %928
      %930 = vrot.lane.b32.xlu0 %v307, 12
      %v931 = vpop.permute.xlu0 %930
      %932 = vrot.lane.b32.xlu0 %v308, 12
      %v933 = vpop.permute.xlu0 %932
      %934 = vrot.lane.b32.xlu0 %v309, 12
      %v935 = vpop.permute.xlu0 %934
      %936 = vrot.lane.b32.xlu0 %v310, 12
      %v937 = vpop.permute.xlu0 %936
      %938 = vrot.lane.b32.xlu0 %v311, 12
      %v939 = vpop.permute.xlu0 %938
      %940 = vrot.lane.b32.xlu0 %v312, 12
      %v941 = vpop.permute.xlu0 %940
      %942 = vrot.lane.b32.xlu0 %v313, 12
      %v943 = vpop.permute.xlu0 %942
      %944 = vrot.lane.b32.xlu0 %v314, 12
      %v945 = vpop.permute.xlu0 %944
      %946 = vrot.lane.b32.xlu0 %v315, 12
      %v947 = vpop.permute.xlu0 %946
      %948 = vrot.lane.b32.xlu0 %v316, 12
      %v949 = vpop.permute.xlu0 %948
      %950 = vrot.lane.b32.xlu0 %v317, 12
      %v951 = vpop.permute.xlu0 %950
      %952 = vrot.lane.b32.xlu0 %v318, 12
      %v953 = vpop.permute.xlu0 %952
      %954 = vrot.lane.b32.xlu0 %v319, 12
      %v955 = vpop.permute.xlu0 %954
      %956 = vrot.lane.b32.xlu0 %v416, 12
      %v957 = vpop.permute.xlu0 %956
      %958 = vrot.lane.b32.xlu0 %v417, 12
      %v959 = vpop.permute.xlu0 %958
      %960 = vrot.lane.b32.xlu0 %v418, 12
      %v961 = vpop.permute.xlu0 %960
      %1013 = vrot.lane.b32.xlu0 %v323, 16
      %v1014 = vpop.permute.xlu0 %1013
      %1015 = vrot.lane.b32.xlu0 %v324, 16
      %v1016 = vpop.permute.xlu0 %1015
      %1017 = vrot.lane.b32.xlu0 %v325, 16
      %v1018 = vpop.permute.xlu0 %1017
      %1019 = vrot.lane.b32.xlu0 %v326, 16
      %v1020 = vpop.permute.xlu0 %1019
      %1021 = vrot.lane.b32.xlu0 %v327, 16
      %v1022 = vpop.permute.xlu0 %1021
      %1023 = vrot.lane.b32.xlu0 %v328, 16
      %v1024 = vpop.permute.xlu0 %1023
      %1025 = vrot.lane.b32.xlu0 %v329, 16
      %v1026 = vpop.permute.xlu0 %1025
      %1027 = vrot.lane.b32.xlu0 %v330, 16
      %v1028 = vpop.permute.xlu0 %1027
      %1029 = vrot.lane.b32.xlu0 %v331, 16
      %v1030 = vpop.permute.xlu0 %1029
      %1031 = vrot.lane.b32.xlu0 %v332, 16
      %v1032 = vpop.permute.xlu0 %1031
      %1033 = vrot.lane.b32.xlu0 %v333, 16
      %v1034 = vpop.permute.xlu0 %1033
      %1035 = vrot.lane.b32.xlu0 %v334, 16
      %v1036 = vpop.permute.xlu0 %1035
      %1037 = vrot.lane.b32.xlu0 %v335, 16
      %v1038 = vpop.permute.xlu0 %1037
      %1039 = vrot.lane.b32.xlu0 %v336, 16
      %v1040 = vpop.permute.xlu0 %1039
      %1041 = vrot.lane.b32.xlu0 %v337, 16
      %v1042 = vpop.permute.xlu0 %1041
      %1043 = vrot.lane.b32.xlu0 %v338, 16
      %v1044 = vpop.permute.xlu0 %1043
      %1045 = vrot.lane.b32.xlu0 %v339, 16
      %v1046 = vpop.permute.xlu0 %1045
      %1047 = vrot.lane.b32.xlu0 %v340, 16
      %v1048 = vpop.permute.xlu0 %1047
      %1049 = vrot.lane.b32.xlu0 %v341, 16
      %v1050 = vpop.permute.xlu0 %1049
      %1051 = vrot.lane.b32.xlu0 %v342, 16
      %v1052 = vpop.permute.xlu0 %1051
      %1053 = vrot.lane.b32.xlu0 %v343, 16
      %v1054 = vpop.permute.xlu0 %1053
      %1055 = vrot.lane.b32.xlu0 %v344, 16
      %v1056 = vpop.permute.xlu0 %1055
      %1057 = vrot.lane.b32.xlu0 %v345, 16
      %v1058 = vpop.permute.xlu0 %1057
      %1059 = vrot.lane.b32.xlu0 %v346, 16
      %v1060 = vpop.permute.xlu0 %1059
      %1061 = vrot.lane.b32.xlu0 %v347, 16
      %v1062 = vpop.permute.xlu0 %1061
      %1063 = vrot.lane.b32.xlu0 %v348, 16
      %v1064 = vpop.permute.xlu0 %1063
      %1065 = vrot.lane.b32.xlu0 %v349, 16
      %v1066 = vpop.permute.xlu0 %1065
      %1067 = vrot.lane.b32.xlu0 %v350, 16
      %v1068 = vpop.permute.xlu0 %1067
      %1069 = vrot.lane.b32.xlu0 %v351, 16
      %v1070 = vpop.permute.xlu0 %1069
      %1071 = vrot.lane.b32.xlu0 %v352, 16
      %v1072 = vpop.permute.xlu0 %1071
      %1073 = vrot.lane.b32.xlu0 %v353, 16
      %v1074 = vpop.permute.xlu0 %1073
      %1075 = vrot.lane.b32.xlu0 %v354, 16
      %v1076 = vpop.permute.xlu0 %1075
      %1077 = vrot.lane.b32.xlu0 %v355, 16
      %v1078 = vpop.permute.xlu0 %1077
      %1079 = vrot.lane.b32.xlu0 %v356, 16
      %v1080 = vpop.permute.xlu0 %1079
      %1081 = vrot.lane.b32.xlu0 %v357, 16
      %v1082 = vpop.permute.xlu0 %1081
      %1083 = vrot.lane.b32.xlu0 %v358, 16
      %v1084 = vpop.permute.xlu0 %1083
      %1085 = vrot.lane.b32.xlu0 %v359, 16
      %v1086 = vpop.permute.xlu0 %1085
      %1087 = vrot.lane.b32.xlu0 %v360, 16
      %v1088 = vpop.permute.xlu0 %1087
      %1089 = vrot.lane.b32.xlu0 %v361, 16
      %v1090 = vpop.permute.xlu0 %1089
      %1091 = vrot.lane.b32.xlu0 %v362, 16
      %v1092 = vpop.permute.xlu0 %1091
      %1093 = vrot.lane.b32.xlu0 %v363, 16
      %v1094 = vpop.permute.xlu0 %1093
      %1095 = vrot.lane.b32.xlu0 %v364, 16
      %v1096 = vpop.permute.xlu0 %1095
      %1097 = vrot.lane.b32.xlu0 %v365, 16
      %v1098 = vpop.permute.xlu0 %1097
      %1099 = vrot.lane.b32.xlu0 %v366, 16
      %v1100 = vpop.permute.xlu0 %1099
      %1101 = vrot.lane.b32.xlu0 %v367, 16
      %v1102 = vpop.permute.xlu0 %1101
      %1103 = vrot.lane.b32.xlu0 %v419, 16
      %v1104 = vpop.permute.xlu0 %1103
      %1105 = vrot.lane.b32.xlu0 %v420, 16
      %v1106 = vpop.permute.xlu0 %1105
      %1107 = vrot.lane.b32.xlu0 %v421, 16
      %v1108 = vpop.permute.xlu0 %1107
      %1160 = vrot.lane.b32.xlu0 %v371, 20
      %v1161 = vpop.permute.xlu0 %1160
      %1162 = vrot.lane.b32.xlu0 %v372, 20
      %v1163 = vpop.permute.xlu0 %1162
      %1164 = vrot.lane.b32.xlu0 %v373, 20
      %v1165 = vpop.permute.xlu0 %1164
      %1166 = vrot.lane.b32.xlu0 %v374, 20
      %v1167 = vpop.permute.xlu0 %1166
      %1168 = vrot.lane.b32.xlu0 %v375, 20
      %v1169 = vpop.permute.xlu0 %1168
      %1170 = vrot.lane.b32.xlu0 %v376, 20
      %v1171 = vpop.permute.xlu0 %1170
      %1172 = vrot.lane.b32.xlu0 %v377, 20
      %v1173 = vpop.permute.xlu0 %1172
      %1174 = vrot.lane.b32.xlu0 %v378, 20
      %v1175 = vpop.permute.xlu0 %1174
      %1176 = vrot.lane.b32.xlu0 %v379, 20
      %v1177 = vpop.permute.xlu0 %1176
      %1178 = vrot.lane.b32.xlu0 %v380, 20
      %v1179 = vpop.permute.xlu0 %1178
      %1180 = vrot.lane.b32.xlu0 %v381, 20
      %v1181 = vpop.permute.xlu0 %1180
      %1182 = vrot.lane.b32.xlu0 %v382, 20
      %v1183 = vpop.permute.xlu0 %1182
      %1184 = vrot.lane.b32.xlu0 %v383, 20
      %v1185 = vpop.permute.xlu0 %1184
      %1186 = vrot.lane.b32.xlu0 %v384, 20
      %v1187 = vpop.permute.xlu0 %1186
      %1188 = vrot.lane.b32.xlu0 %v385, 20
      %v1189 = vpop.permute.xlu0 %1188
      %1190 = vrot.lane.b32.xlu0 %v386, 20
      %v1191 = vpop.permute.xlu0 %1190
      %1192 = vrot.lane.b32.xlu0 %v387, 20
      %v1193 = vpop.permute.xlu0 %1192
      %1194 = vrot.lane.b32.xlu0 %v388, 20
      %v1195 = vpop.permute.xlu0 %1194
      %1196 = vrot.lane.b32.xlu0 %v389, 20
      %v1197 = vpop.permute.xlu0 %1196
      %1198 = vrot.lane.b32.xlu0 %v390, 20
      %v1199 = vpop.permute.xlu0 %1198
      %1200 = vrot.lane.b32.xlu0 %v391, 20
      %v1201 = vpop.permute.xlu0 %1200
      %1202 = vrot.lane.b32.xlu0 %v392, 20
      %v1203 = vpop.permute.xlu0 %1202
      %1204 = vrot.lane.b32.xlu0 %v393, 20
      %v1205 = vpop.permute.xlu0 %1204
      %1206 = vrot.lane.b32.xlu0 %v394, 20
      %v1207 = vpop.permute.xlu0 %1206
      %1208 = vrot.lane.b32.xlu0 %v395, 20
      %v1209 = vpop.permute.xlu0 %1208
      %1210 = vrot.lane.b32.xlu0 %v396, 20
      %v1211 = vpop.permute.xlu0 %1210
      %1212 = vrot.lane.b32.xlu0 %v397, 20
      %v1213 = vpop.permute.xlu0 %1212
      %1214 = vrot.lane.b32.xlu0 %v398, 20
      %v1215 = vpop.permute.xlu0 %1214
      %1216 = vrot.lane.b32.xlu0 %v399, 20
      %v1217 = vpop.permute.xlu0 %1216
      %1218 = vrot.lane.b32.xlu0 %v400, 20
      %v1219 = vpop.permute.xlu0 %1218
      %1220 = vrot.lane.b32.xlu0 %v401, 20
      %v1221 = vpop.permute.xlu0 %1220
      %1222 = vrot.lane.b32.xlu0 %v402, 20
      %v1223 = vpop.permute.xlu0 %1222
      %1224 = vrot.lane.b32.xlu0 %v403, 20
      %v1225 = vpop.permute.xlu0 %1224
      %1226 = vrot.lane.b32.xlu0 %v404, 20
      %v1227 = vpop.permute.xlu0 %1226
      %1228 = vrot.lane.b32.xlu0 %v405, 20
      %v1229 = vpop.permute.xlu0 %1228
      %1230 = vrot.lane.b32.xlu0 %v406, 20
      %v1231 = vpop.permute.xlu0 %1230
      %1232 = vrot.lane.b32.xlu0 %v407, 20
      %v1233 = vpop.permute.xlu0 %1232
      %1234 = vrot.lane.b32.xlu0 %v408, 20
      %v1235 = vpop.permute.xlu0 %1234
      %1236 = vrot.lane.b32.xlu0 %v409, 20
      %v1237 = vpop.permute.xlu0 %1236
      %1238 = vrot.lane.b32.xlu0 %v410, 20
      %v1239 = vpop.permute.xlu0 %1238
      %1240 = vrot.lane.b32.xlu0 %v411, 20
      %v1241 = vpop.permute.xlu0 %1240
      %1242 = vrot.lane.b32.xlu0 %v412, 20
      %v1243 = vpop.permute.xlu0 %1242
      %1244 = vrot.lane.b32.xlu0 %v413, 20
      %v1245 = vpop.permute.xlu0 %1244
      %1246 = vrot.lane.b32.xlu0 %v414, 20
      %v1247 = vpop.permute.xlu0 %1246
      %1248 = vrot.lane.b32.xlu0 %v415, 20
      %v1249 = vpop.permute.xlu0 %1248
      %1250 = vrot.lane.b32.xlu0 %v422, 20
      %v1251 = vpop.permute.xlu0 %1250
      %1252 = vrot.lane.b32.xlu0 %v423, 20
      %v1253 = vpop.permute.xlu0 %1252
      %1254 = vrot.lane.b32.xlu0 %v424, 20
      %v1255 = vpop.permute.xlu0 %1254
      %1307 = vrot.lane.b32.xlu0 %v278, 24
      %v1308 = vpop.permute.xlu0 %1307
      %1309 = vrot.lane.b32.xlu0 %v279, 24
      %v1310 = vpop.permute.xlu0 %1309
      %1311 = vrot.lane.b32.xlu0 %v280, 24
      %v1312 = vpop.permute.xlu0 %1311
      %1313 = vrot.lane.b32.xlu0 %v281, 24
      %v1314 = vpop.permute.xlu0 %1313
      %1315 = vrot.lane.b32.xlu0 %v282, 24
      %v1316 = vpop.permute.xlu0 %1315
      %1317 = vrot.lane.b32.xlu0 %v283, 24
      %v1318 = vpop.permute.xlu0 %1317
      %1319 = vrot.lane.b32.xlu0 %v284, 24
      %v1320 = vpop.permute.xlu0 %1319
      %1321 = vrot.lane.b32.xlu0 %v285, 24
      %v1322 = vpop.permute.xlu0 %1321
      %1323 = vrot.lane.b32.xlu0 %v286, 24
      %v1324 = vpop.permute.xlu0 %1323
      %1325 = vrot.lane.b32.xlu0 %v287, 24
      %v1326 = vpop.permute.xlu0 %1325
      %1327 = vrot.lane.b32.xlu0 %v288, 24
      %v1328 = vpop.permute.xlu0 %1327
      %1329 = vrot.lane.b32.xlu0 %v289, 24
      %v1330 = vpop.permute.xlu0 %1329
      %1331 = vrot.lane.b32.xlu0 %v290, 24
      %v1332 = vpop.permute.xlu0 %1331
      %1333 = vrot.lane.b32.xlu0 %v291, 24
      %v1334 = vpop.permute.xlu0 %1333
      %1335 = vrot.lane.b32.xlu0 %v292, 24
      %v1336 = vpop.permute.xlu0 %1335
      %1337 = vrot.lane.b32.xlu0 %v293, 24
      %v1338 = vpop.permute.xlu0 %1337
      %1339 = vrot.lane.b32.xlu0 %v294, 24
      %v1340 = vpop.permute.xlu0 %1339
      %1341 = vrot.lane.b32.xlu0 %v295, 24
      %v1342 = vpop.permute.xlu0 %1341
      %1343 = vrot.lane.b32.xlu0 %v296, 24
      %v1344 = vpop.permute.xlu0 %1343
      %1345 = vrot.lane.b32.xlu0 %v297, 24
      %v1346 = vpop.permute.xlu0 %1345
      %1347 = vrot.lane.b32.xlu0 %v298, 24
      %v1348 = vpop.permute.xlu0 %1347
      %1349 = vrot.lane.b32.xlu0 %v299, 24
      %v1350 = vpop.permute.xlu0 %1349
      %1351 = vrot.lane.b32.xlu0 %v300, 24
      %v1352 = vpop.permute.xlu0 %1351
      %1353 = vrot.lane.b32.xlu0 %v301, 24
      %v1354 = vpop.permute.xlu0 %1353
      %1355 = vrot.lane.b32.xlu0 %v302, 24
      %v1356 = vpop.permute.xlu0 %1355
      %1357 = vrot.lane.b32.xlu0 %v303, 24
      %v1358 = vpop.permute.xlu0 %1357
      %1359 = vrot.lane.b32.xlu0 %v304, 24
      %v1360 = vpop.permute.xlu0 %1359
      %1361 = vrot.lane.b32.xlu0 %v305, 24
      %v1362 = vpop.permute.xlu0 %1361
      %1363 = vrot.lane.b32.xlu0 %v306, 24
      %v1364 = vpop.permute.xlu0 %1363
      %1365 = vrot.lane.b32.xlu0 %v307, 24
      %v1366 = vpop.permute.xlu0 %1365
      %1367 = vrot.lane.b32.xlu0 %v308, 24
      %v1368 = vpop.permute.xlu0 %1367
      %1369 = vrot.lane.b32.xlu0 %v309, 24
      %v1370 = vpop.permute.xlu0 %1369
      %1371 = vrot.lane.b32.xlu0 %v310, 24
      %v1372 = vpop.permute.xlu0 %1371
      %1373 = vrot.lane.b32.xlu0 %v311, 24
      %v1374 = vpop.permute.xlu0 %1373
      %1375 = vrot.lane.b32.xlu0 %v312, 24
      %v1376 = vpop.permute.xlu0 %1375
      %1377 = vrot.lane.b32.xlu0 %v313, 24
      %v1378 = vpop.permute.xlu0 %1377
      %1379 = vrot.lane.b32.xlu0 %v314, 24
      %v1380 = vpop.permute.xlu0 %1379
      %1381 = vrot.lane.b32.xlu0 %v315, 24
      %v1382 = vpop.permute.xlu0 %1381
      %1383 = vrot.lane.b32.xlu0 %v316, 24
      %v1384 = vpop.permute.xlu0 %1383
      %1385 = vrot.lane.b32.xlu0 %v317, 24
      %v1386 = vpop.permute.xlu0 %1385
      %1387 = vrot.lane.b32.xlu0 %v318, 24
      %v1388 = vpop.permute.xlu0 %1387
      %1389 = vrot.lane.b32.xlu0 %v319, 24
      %v1390 = vpop.permute.xlu0 %1389
      %1391 = vrot.lane.b32.xlu0 %v416, 24
      %v1392 = vpop.permute.xlu0 %1391
      %1393 = vrot.lane.b32.xlu0 %v417, 24
      %v1394 = vpop.permute.xlu0 %1393
      %1395 = vrot.lane.b32.xlu0 %v418, 24
      %v1396 = vpop.permute.xlu0 %1395
      %1397 = vrot.lane.b32.xlu0 %v425, 24
      %v1398 = vpop.permute.xlu0 %1397
      %1399 = vrot.lane.b32.xlu0 %v426, 24
      %v1400 = vpop.permute.xlu0 %1399
      %1401 = vrot.lane.b32.xlu0 %v427, 24
      %v1402 = vpop.permute.xlu0 %1401
      %1454 = vrot.lane.b32.xlu0 %v326, 28
      %v1455 = vpop.permute.xlu0 %1454
      %1456 = vrot.lane.b32.xlu0 %v327, 28
      %v1457 = vpop.permute.xlu0 %1456
      %1458 = vrot.lane.b32.xlu0 %v328, 28
      %v1459 = vpop.permute.xlu0 %1458
      %1460 = vrot.lane.b32.xlu0 %v329, 28
      %v1461 = vpop.permute.xlu0 %1460
      %1462 = vrot.lane.b32.xlu0 %v330, 28
      %v1463 = vpop.permute.xlu0 %1462
      %1464 = vrot.lane.b32.xlu0 %v331, 28
      %v1465 = vpop.permute.xlu0 %1464
      %1466 = vrot.lane.b32.xlu0 %v332, 28
      %v1467 = vpop.permute.xlu0 %1466
      %1468 = vrot.lane.b32.xlu0 %v333, 28
      %v1469 = vpop.permute.xlu0 %1468
      %1470 = vrot.lane.b32.xlu0 %v334, 28
      %v1471 = vpop.permute.xlu0 %1470
      %1472 = vrot.lane.b32.xlu0 %v335, 28
      %v1473 = vpop.permute.xlu0 %1472
      %1474 = vrot.lane.b32.xlu0 %v336, 28
      %v1475 = vpop.permute.xlu0 %1474
      %1476 = vrot.lane.b32.xlu0 %v337, 28
      %v1477 = vpop.permute.xlu0 %1476
      %1478 = vrot.lane.b32.xlu0 %v338, 28
      %v1479 = vpop.permute.xlu0 %1478
      %1480 = vrot.lane.b32.xlu0 %v339, 28
      %v1481 = vpop.permute.xlu0 %1480
      %1482 = vrot.lane.b32.xlu0 %v340, 28
      %v1483 = vpop.permute.xlu0 %1482
      %1484 = vrot.lane.b32.xlu0 %v341, 28
      %v1485 = vpop.permute.xlu0 %1484
      %1486 = vrot.lane.b32.xlu0 %v342, 28
      %v1487 = vpop.permute.xlu0 %1486
      %1488 = vrot.lane.b32.xlu0 %v343, 28
      %v1489 = vpop.permute.xlu0 %1488
      %1490 = vrot.lane.b32.xlu0 %v344, 28
      %v1491 = vpop.permute.xlu0 %1490
      %1492 = vrot.lane.b32.xlu0 %v345, 28
      %v1493 = vpop.permute.xlu0 %1492
      %1494 = vrot.lane.b32.xlu0 %v346, 28
      %v1495 = vpop.permute.xlu0 %1494
      %1496 = vrot.lane.b32.xlu0 %v347, 28
      %v1497 = vpop.permute.xlu0 %1496
      %1498 = vrot.lane.b32.xlu0 %v348, 28
      %v1499 = vpop.permute.xlu0 %1498
      %1500 = vrot.lane.b32.xlu0 %v349, 28
      %v1501 = vpop.permute.xlu0 %1500
      %1502 = vrot.lane.b32.xlu0 %v350, 28
      %v1503 = vpop.permute.xlu0 %1502
      %1504 = vrot.lane.b32.xlu0 %v351, 28
      %v1505 = vpop.permute.xlu0 %1504
      %1506 = vrot.lane.b32.xlu0 %v352, 28
      %v1507 = vpop.permute.xlu0 %1506
      %1508 = vrot.lane.b32.xlu0 %v353, 28
      %v1509 = vpop.permute.xlu0 %1508
      %1510 = vrot.lane.b32.xlu0 %v354, 28
      %v1511 = vpop.permute.xlu0 %1510
      %1512 = vrot.lane.b32.xlu0 %v355, 28
      %v1513 = vpop.permute.xlu0 %1512
      %1514 = vrot.lane.b32.xlu0 %v356, 28
      %v1515 = vpop.permute.xlu0 %1514
      %1516 = vrot.lane.b32.xlu0 %v357, 28
      %v1517 = vpop.permute.xlu0 %1516
      %1518 = vrot.lane.b32.xlu0 %v358, 28
      %v1519 = vpop.permute.xlu0 %1518
      %1520 = vrot.lane.b32.xlu0 %v359, 28
      %v1521 = vpop.permute.xlu0 %1520
      %1522 = vrot.lane.b32.xlu0 %v360, 28
      %v1523 = vpop.permute.xlu0 %1522
      %1524 = vrot.lane.b32.xlu0 %v361, 28
      %v1525 = vpop.permute.xlu0 %1524
      %1526 = vrot.lane.b32.xlu0 %v362, 28
      %v1527 = vpop.permute.xlu0 %1526
      %1528 = vrot.lane.b32.xlu0 %v363, 28
      %v1529 = vpop.permute.xlu0 %1528
      %1530 = vrot.lane.b32.xlu0 %v364, 28
      %v1531 = vpop.permute.xlu0 %1530
      %1532 = vrot.lane.b32.xlu0 %v365, 28
      %v1533 = vpop.permute.xlu0 %1532
      %1534 = vrot.lane.b32.xlu0 %v366, 28
      %v1535 = vpop.permute.xlu0 %1534
      %1536 = vrot.lane.b32.xlu0 %v367, 28
      %v1537 = vpop.permute.xlu0 %1536
      %1538 = vrot.lane.b32.xlu0 %v419, 28
      %v1539 = vpop.permute.xlu0 %1538
      %1540 = vrot.lane.b32.xlu0 %v420, 28
      %v1541 = vpop.permute.xlu0 %1540
      %1542 = vrot.lane.b32.xlu0 %v421, 28
      %v1543 = vpop.permute.xlu0 %1542
      %1544 = vrot.lane.b32.xlu0 %v428, 28
      %v1545 = vpop.permute.xlu0 %1544
      %1546 = vrot.lane.b32.xlu0 %v429, 28
      %v1547 = vpop.permute.xlu0 %1546
      %1548 = vrot.lane.b32.xlu0 %v430, 28
      %v1549 = vpop.permute.xlu0 %1548
      %1601 = vrot.lane.b32.xlu0 %v374, 32
      %v1602 = vpop.permute.xlu0 %1601
      %1603 = vrot.lane.b32.xlu0 %v375, 32
      %v1604 = vpop.permute.xlu0 %1603
      %1605 = vrot.lane.b32.xlu0 %v376, 32
      %v1606 = vpop.permute.xlu0 %1605
      %1607 = vrot.lane.b32.xlu0 %v377, 32
      %v1608 = vpop.permute.xlu0 %1607
      %1609 = vrot.lane.b32.xlu0 %v378, 32
      %v1610 = vpop.permute.xlu0 %1609
      %1611 = vrot.lane.b32.xlu0 %v379, 32
      %v1612 = vpop.permute.xlu0 %1611
      %1613 = vrot.lane.b32.xlu0 %v380, 32
      %v1614 = vpop.permute.xlu0 %1613
      %1615 = vrot.lane.b32.xlu0 %v381, 32
      %v1616 = vpop.permute.xlu0 %1615
      %1617 = vrot.lane.b32.xlu0 %v382, 32
      %v1618 = vpop.permute.xlu0 %1617
      %1619 = vrot.lane.b32.xlu0 %v383, 32
      %v1620 = vpop.permute.xlu0 %1619
      %1621 = vrot.lane.b32.xlu0 %v384, 32
      %v1622 = vpop.permute.xlu0 %1621
      %1623 = vrot.lane.b32.xlu0 %v385, 32
      %v1624 = vpop.permute.xlu0 %1623
      %1625 = vrot.lane.b32.xlu0 %v386, 32
      %v1626 = vpop.permute.xlu0 %1625
      %1627 = vrot.lane.b32.xlu0 %v387, 32
      %v1628 = vpop.permute.xlu0 %1627
      %1629 = vrot.lane.b32.xlu0 %v388, 32
      %v1630 = vpop.permute.xlu0 %1629
      %1631 = vrot.lane.b32.xlu0 %v389, 32
      %v1632 = vpop.permute.xlu0 %1631
      %1633 = vrot.lane.b32.xlu0 %v390, 32
      %v1634 = vpop.permute.xlu0 %1633
      %1635 = vrot.lane.b32.xlu0 %v391, 32
      %v1636 = vpop.permute.xlu0 %1635
      %1637 = vrot.lane.b32.xlu0 %v392, 32
      %v1638 = vpop.permute.xlu0 %1637
      %1639 = vrot.lane.b32.xlu0 %v393, 32
      %v1640 = vpop.permute.xlu0 %1639
      %1641 = vrot.lane.b32.xlu0 %v394, 32
      %v1642 = vpop.permute.xlu0 %1641
      %1643 = vrot.lane.b32.xlu0 %v395, 32
      %v1644 = vpop.permute.xlu0 %1643
      %1645 = vrot.lane.b32.xlu0 %v396, 32
      %v1646 = vpop.permute.xlu0 %1645
      %1647 = vrot.lane.b32.xlu0 %v397, 32
      %v1648 = vpop.permute.xlu0 %1647
      %1649 = vrot.lane.b32.xlu0 %v398, 32
      %v1650 = vpop.permute.xlu0 %1649
      %1651 = vrot.lane.b32.xlu0 %v399, 32
      %v1652 = vpop.permute.xlu0 %1651
      %1653 = vrot.lane.b32.xlu0 %v400, 32
      %v1654 = vpop.permute.xlu0 %1653
      %1655 = vrot.lane.b32.xlu0 %v401, 32
      %v1656 = vpop.permute.xlu0 %1655
      %1657 = vrot.lane.b32.xlu0 %v402, 32
      %v1658 = vpop.permute.xlu0 %1657
      %1659 = vrot.lane.b32.xlu0 %v403, 32
      %v1660 = vpop.permute.xlu0 %1659
      %1661 = vrot.lane.b32.xlu0 %v404, 32
      %v1662 = vpop.permute.xlu0 %1661
      %1663 = vrot.lane.b32.xlu0 %v405, 32
      %v1664 = vpop.permute.xlu0 %1663
      %1665 = vrot.lane.b32.xlu0 %v406, 32
      %v1666 = vpop.permute.xlu0 %1665
      %1667 = vrot.lane.b32.xlu0 %v407, 32
      %v1668 = vpop.permute.xlu0 %1667
      %1669 = vrot.lane.b32.xlu0 %v408, 32
      %v1670 = vpop.permute.xlu0 %1669
      %1671 = vrot.lane.b32.xlu0 %v409, 32
      %v1672 = vpop.permute.xlu0 %1671
      %1673 = vrot.lane.b32.xlu0 %v410, 32
      %v1674 = vpop.permute.xlu0 %1673
      %1675 = vrot.lane.b32.xlu0 %v411, 32
      %v1676 = vpop.permute.xlu0 %1675
      %1677 = vrot.lane.b32.xlu0 %v412, 32
      %v1678 = vpop.permute.xlu0 %1677
      %1679 = vrot.lane.b32.xlu0 %v413, 32
      %v1680 = vpop.permute.xlu0 %1679
      %1681 = vrot.lane.b32.xlu0 %v414, 32
      %v1682 = vpop.permute.xlu0 %1681
      %1683 = vrot.lane.b32.xlu0 %v415, 32
      %v1684 = vpop.permute.xlu0 %1683
      %1685 = vrot.lane.b32.xlu0 %v422, 32
      %v1686 = vpop.permute.xlu0 %1685
      %1687 = vrot.lane.b32.xlu0 %v423, 32
      %v1688 = vpop.permute.xlu0 %1687
      %1689 = vrot.lane.b32.xlu0 %v424, 32
      %v1690 = vpop.permute.xlu0 %1689
      %1691 = vrot.lane.b32.xlu0 %v431, 32
      %v1692 = vpop.permute.xlu0 %1691
      %1693 = vrot.lane.b32.xlu0 %v432, 32
      %v1694 = vpop.permute.xlu0 %1693
      %1695 = vrot.lane.b32.xlu0 %v433, 32
      %v1696 = vpop.permute.xlu0 %1695
      %vm1745 = vcmask 31744
      %v1746 = vsel %vm1745, %v272, %v483
      %v1747 = vsel %vm1745, %v273, %v485
      %v1748 = vsel %vm1745, %v274, %v487
      %v1749 = vsel %vm1745, %v275, %v489
      %v1750 = vsel %vm1745, %v276, %v491
      %v1751 = vsel %vm1745, %v277, %v493
      %v1752 = vsel %vm1745, %v278, %v495
      %v1753 = vsel %vm1745, %v279, %v497
      %v1754 = vsel %vm1745, %v280, %v499
      %v1755 = vsel %vm1745, %v281, %v501
      %v1756 = vsel %vm1745, %v282, %v503
      %v1757 = vsel %vm1745, %v283, %v505
      %v1758 = vsel %vm1745, %v284, %v507
      %v1759 = vsel %vm1745, %v285, %v509
      %v1760 = vsel %vm1745, %v286, %v511
      %v1761 = vsel %vm1745, %v287, %v513
      %v1762 = vsel %vm1745, %v288, %v515
      %v1763 = vsel %vm1745, %v289, %v517
      %v1764 = vsel %vm1745, %v290, %v519
      %v1765 = vsel %vm1745, %v291, %v521
      %v1766 = vsel %vm1745, %v292, %v523
      %v1767 = vsel %vm1745, %v293, %v525
      %v1768 = vsel %vm1745, %v294, %v527
      %v1769 = vsel %vm1745, %v295, %v529
      %v1770 = vsel %vm1745, %v296, %v531
      %v1771 = vsel %vm1745, %v297, %v533
      %v1772 = vsel %vm1745, %v298, %v535
      %v1773 = vsel %vm1745, %v299, %v537
      %v1774 = vsel %vm1745, %v300, %v539
      %v1775 = vsel %vm1745, %v301, %v541
      %v1776 = vsel %vm1745, %v302, %v543
      %v1777 = vsel %vm1745, %v303, %v545
      %v1778 = vsel %vm1745, %v304, %v547
      %v1779 = vsel %vm1745, %v305, %v549
      %v1780 = vsel %vm1745, %v306, %v551
      %v1781 = vsel %vm1745, %v307, %v553
      %v1782 = vsel %vm1745, %v308, %v555
      %v1783 = vsel %vm1745, %v309, %v557
      %v1784 = vsel %vm1745, %v310, %v559
      %v1785 = vsel %vm1745, %v311, %v561
      %v1786 = vsel %vm1745, %v312, %v563
      %v1787 = vsel %vm1745, %v313, %v565
      %v1788 = vsel %vm1745, %v314, %v567
      %v1789 = vsel %vm1745, %v315, %v569
      %v1790 = vsel %vm1745, %v316, %v571
      %v1791 = vsel %vm1745, %v317, %v573
      %v1792 = vsel %vm1745, %v318, %v575
      %v1793 = vsel %vm1745, %v319, %v577
      %vm1794 = vcmask 64512
      %v1795 = vsel %vm1794, %v1746, %v675
      %v1796 = vsel %vm1794, %v1747, %v677
      %v1797 = vsel %vm1794, %v1748, %v679
      %v1798 = vsel %vm1794, %v1749, %v681
      %v1799 = vsel %vm1794, %v1750, %v683
      %v1800 = vsel %vm1794, %v1751, %v685
      %v1801 = vsel %vm1794, %v1752, %v687
      %v1802 = vsel %vm1794, %v1753, %v689
      %v1803 = vsel %vm1794, %v1754, %v691
      %v1804 = vsel %vm1794, %v1755, %v693
      %v1805 = vsel %vm1794, %v1756, %v695
      %v1806 = vsel %vm1794, %v1757, %v697
      %v1807 = vsel %vm1794, %v1758, %v699
      %v1808 = vsel %vm1794, %v1759, %v701
      %v1809 = vsel %vm1794, %v1760, %v703
      %v1810 = vsel %vm1794, %v1761, %v705
      %v1811 = vsel %vm1794, %v1762, %v707
      %v1812 = vsel %vm1794, %v1763, %v709
      %v1813 = vsel %vm1794, %v1764, %v711
      %v1814 = vsel %vm1794, %v1765, %v713
      %v1815 = vsel %vm1794, %v1766, %v715
      %v1816 = vsel %vm1794, %v1767, %v717
      %v1817 = vsel %vm1794, %v1768, %v719
      %v1818 = vsel %vm1794, %v1769, %v721
      %v1819 = vsel %vm1794, %v1770, %v723
      %v1820 = vsel %vm1794, %v1771, %v725
      %v1821 = vsel %vm1794, %v1772, %v727
      %v1822 = vsel %vm1794, %v1773, %v729
      %v1823 = vsel %vm1794, %v1774, %v731
      %v1824 = vsel %vm1794, %v1775, %v733
      %v1825 = vsel %vm1794, %v1776, %v735
      %v1826 = vsel %vm1794, %v1777, %v737
      %v1827 = vsel %vm1794, %v1778, %v739
      %v1828 = vsel %vm1794, %v1779, %v741
      %v1829 = vsel %vm1794, %v1780, %v743
      %v1830 = vsel %vm1794, %v1781, %v745
      %v1831 = vsel %vm1794, %v1782, %v747
      %v1832 = vsel %vm1794, %v1783, %v749
      %v1833 = vsel %vm1794, %v1784, %v751
      %v1834 = vsel %vm1794, %v1785, %v753
      %v1835 = vsel %vm1794, %v1786, %v755
      %v1836 = vsel %vm1794, %v1787, %v757
      %v1837 = vsel %vm1794, %v1788, %v759
      %v1838 = vsel %vm1794, %v1789, %v761
      %v1839 = vsel %vm1794, %v1790, %v763
      %v1840 = vsel %vm1794, %v1791, %v765
      %v1841 = vsel %vm1794, %v1792, %v767
      %v1842 = vsel %vm1794, %v1793, %v769
      %vm1843 = vcmask 97280
      %v1844 = vsel %vm1843, %v1795, %v867
      %v1845 = vsel %vm1843, %v1796, %v869
      %v1846 = vsel %vm1843, %v1797, %v871
      %v1847 = vsel %vm1843, %v1798, %v873
      %v1848 = vsel %vm1843, %v1799, %v875
      %v1849 = vsel %vm1843, %v1800, %v877
      %v1850 = vsel %vm1843, %v1801, %v879
      %v1851 = vsel %vm1843, %v1802, %v881
      %v1852 = vsel %vm1843, %v1803, %v883
      %v1853 = vsel %vm1843, %v1804, %v885
      %v1854 = vsel %vm1843, %v1805, %v887
      %v1855 = vsel %vm1843, %v1806, %v889
      %v1856 = vsel %vm1843, %v1807, %v891
      %v1857 = vsel %vm1843, %v1808, %v893
      %v1858 = vsel %vm1843, %v1809, %v895
      %v1859 = vsel %vm1843, %v1810, %v897
      %v1860 = vsel %vm1843, %v1811, %v899
      %v1861 = vsel %vm1843, %v1812, %v901
      %v1862 = vsel %vm1843, %v1813, %v903
      %v1863 = vsel %vm1843, %v1814, %v905
      %v1864 = vsel %vm1843, %v1815, %v907
      %v1865 = vsel %vm1843, %v1816, %v909
      %v1866 = vsel %vm1843, %v1817, %v911
      %v1867 = vsel %vm1843, %v1818, %v913
      %v1868 = vsel %vm1843, %v1819, %v915
      %v1869 = vsel %vm1843, %v1820, %v917
      %v1870 = vsel %vm1843, %v1821, %v919
      %v1871 = vsel %vm1843, %v1822, %v921
      %v1872 = vsel %vm1843, %v1823, %v923
      %v1873 = vsel %vm1843, %v1824, %v925
      %v1874 = vsel %vm1843, %v1825, %v927
      %v1875 = vsel %vm1843, %v1826, %v929
      %v1876 = vsel %vm1843, %v1827, %v931
      %v1877 = vsel %vm1843, %v1828, %v933
      %v1878 = vsel %vm1843, %v1829, %v935
      %v1879 = vsel %vm1843, %v1830, %v937
      %v1880 = vsel %vm1843, %v1831, %v939
      %v1881 = vsel %vm1843, %v1832, %v941
      %v1882 = vsel %vm1843, %v1833, %v943
      %v1883 = vsel %vm1843, %v1834, %v945
      %v1884 = vsel %vm1843, %v1835, %v947
      %v1885 = vsel %vm1843, %v1836, %v949
      %v1886 = vsel %vm1843, %v1837, %v951
      %v1887 = vsel %vm1843, %v1838, %v953
      %v1888 = vsel %vm1843, %v1839, %v955
      %v1889 = vsel %vm1843, %v1840, %v957
      %v1890 = vsel %vm1843, %v1841, %v959
      %v1891 = vsel %vm1843, %v1842, %v961
      %vm1892 = vcmask 130048
      %v1893 = vsel %vm1892, %v1844, %v1014
      %v1894 = vsel %vm1892, %v1845, %v1016
      %v1895 = vsel %vm1892, %v1846, %v1018
      %v1896 = vsel %vm1892, %v1847, %v1020
      %v1897 = vsel %vm1892, %v1848, %v1022
      %v1898 = vsel %vm1892, %v1849, %v1024
      %v1899 = vsel %vm1892, %v1850, %v1026
      %v1900 = vsel %vm1892, %v1851, %v1028
      %v1901 = vsel %vm1892, %v1852, %v1030
      %v1902 = vsel %vm1892, %v1853, %v1032
      %v1903 = vsel %vm1892, %v1854, %v1034
      %v1904 = vsel %vm1892, %v1855, %v1036
      %v1905 = vsel %vm1892, %v1856, %v1038
      %v1906 = vsel %vm1892, %v1857, %v1040
      %v1907 = vsel %vm1892, %v1858, %v1042
      %v1908 = vsel %vm1892, %v1859, %v1044
      %v1909 = vsel %vm1892, %v1860, %v1046
      %v1910 = vsel %vm1892, %v1861, %v1048
      %v1911 = vsel %vm1892, %v1862, %v1050
      %v1912 = vsel %vm1892, %v1863, %v1052
      %v1913 = vsel %vm1892, %v1864, %v1054
      %v1914 = vsel %vm1892, %v1865, %v1056
      %v1915 = vsel %vm1892, %v1866, %v1058
      %v1916 = vsel %vm1892, %v1867, %v1060
      %v1917 = vsel %vm1892, %v1868, %v1062
      %v1918 = vsel %vm1892, %v1869, %v1064
      %v1919 = vsel %vm1892, %v1870, %v1066
      %v1920 = vsel %vm1892, %v1871, %v1068
      %v1921 = vsel %vm1892, %v1872, %v1070
      %v1922 = vsel %vm1892, %v1873, %v1072
      %v1923 = vsel %vm1892, %v1874, %v1074
      %v1924 = vsel %vm1892, %v1875, %v1076
      %v1925 = vsel %vm1892, %v1876, %v1078
      %v1926 = vsel %vm1892, %v1877, %v1080
      %v1927 = vsel %vm1892, %v1878, %v1082
      %v1928 = vsel %vm1892, %v1879, %v1084
      %v1929 = vsel %vm1892, %v1880, %v1086
      %v1930 = vsel %vm1892, %v1881, %v1088
      %v1931 = vsel %vm1892, %v1882, %v1090
      %v1932 = vsel %vm1892, %v1883, %v1092
      %v1933 = vsel %vm1892, %v1884, %v1094
      %v1934 = vsel %vm1892, %v1885, %v1096
      %v1935 = vsel %vm1892, %v1886, %v1098
      %v1936 = vsel %vm1892, %v1887, %v1100
      %v1937 = vsel %vm1892, %v1888, %v1102
      %v1938 = vsel %vm1892, %v1889, %v1104
      %v1939 = vsel %vm1892, %v1890, %v1106
      %v1940 = vsel %vm1892, %v1891, %v1108
      %vm1941 = vcmask 162816
      %v1942 = vsel %vm1941, %v1893, %v1161
      %v1943 = vsel %vm1941, %v1894, %v1163
      %v1944 = vsel %vm1941, %v1895, %v1165
      %v1945 = vsel %vm1941, %v1896, %v1167
      %v1946 = vsel %vm1941, %v1897, %v1169
      %v1947 = vsel %vm1941, %v1898, %v1171
      %v1948 = vsel %vm1941, %v1899, %v1173
      %v1949 = vsel %vm1941, %v1900, %v1175
      %v1950 = vsel %vm1941, %v1901, %v1177
      %v1951 = vsel %vm1941, %v1902, %v1179
      %v1952 = vsel %vm1941, %v1903, %v1181
      %v1953 = vsel %vm1941, %v1904, %v1183
      %v1954 = vsel %vm1941, %v1905, %v1185
      %v1955 = vsel %vm1941, %v1906, %v1187
      %v1956 = vsel %vm1941, %v1907, %v1189
      %v1957 = vsel %vm1941, %v1908, %v1191
      %v1958 = vsel %vm1941, %v1909, %v1193
      %v1959 = vsel %vm1941, %v1910, %v1195
      %v1960 = vsel %vm1941, %v1911, %v1197
      %v1961 = vsel %vm1941, %v1912, %v1199
      %v1962 = vsel %vm1941, %v1913, %v1201
      %v1963 = vsel %vm1941, %v1914, %v1203
      %v1964 = vsel %vm1941, %v1915, %v1205
      %v1965 = vsel %vm1941, %v1916, %v1207
      %v1966 = vsel %vm1941, %v1917, %v1209
      %v1967 = vsel %vm1941, %v1918, %v1211
      %v1968 = vsel %vm1941, %v1919, %v1213
      %v1969 = vsel %vm1941, %v1920, %v1215
      %v1970 = vsel %vm1941, %v1921, %v1217
      %v1971 = vsel %vm1941, %v1922, %v1219
      %v1972 = vsel %vm1941, %v1923, %v1221
      %v1973 = vsel %vm1941, %v1924, %v1223
      %v1974 = vsel %vm1941, %v1925, %v1225
      %v1975 = vsel %vm1941, %v1926, %v1227
      %v1976 = vsel %vm1941, %v1927, %v1229
      %v1977 = vsel %vm1941, %v1928, %v1231
      %v1978 = vsel %vm1941, %v1929, %v1233
      %v1979 = vsel %vm1941, %v1930, %v1235
      %v1980 = vsel %vm1941, %v1931, %v1237
      %v1981 = vsel %vm1941, %v1932, %v1239
      %v1982 = vsel %vm1941, %v1933, %v1241
      %v1983 = vsel %vm1941, %v1934, %v1243
      %v1984 = vsel %vm1941, %v1935, %v1245
      %v1985 = vsel %vm1941, %v1936, %v1247
      %v1986 = vsel %vm1941, %v1937, %v1249
      %v1987 = vsel %vm1941, %v1938, %v1251
      %v1988 = vsel %vm1941, %v1939, %v1253
      %v1989 = vsel %vm1941, %v1940, %v1255
      %vm1990 = vcmask 195584
      %v1991 = vsel %vm1990, %v1942, %v1308
      %v1992 = vsel %vm1990, %v1943, %v1310
      %v1993 = vsel %vm1990, %v1944, %v1312
      %v1994 = vsel %vm1990, %v1945, %v1314
      %v1995 = vsel %vm1990, %v1946, %v1316
      %v1996 = vsel %vm1990, %v1947, %v1318
      %v1997 = vsel %vm1990, %v1948, %v1320
      %v1998 = vsel %vm1990, %v1949, %v1322
      %v1999 = vsel %vm1990, %v1950, %v1324
      %v2000 = vsel %vm1990, %v1951, %v1326
      %v2001 = vsel %vm1990, %v1952, %v1328
      %v2002 = vsel %vm1990, %v1953, %v1330
      %v2003 = vsel %vm1990, %v1954, %v1332
      %v2004 = vsel %vm1990, %v1955, %v1334
      %v2005 = vsel %vm1990, %v1956, %v1336
      %v2006 = vsel %vm1990, %v1957, %v1338
      %v2007 = vsel %vm1990, %v1958, %v1340
      %v2008 = vsel %vm1990, %v1959, %v1342
      %v2009 = vsel %vm1990, %v1960, %v1344
      %v2010 = vsel %vm1990, %v1961, %v1346
      %v2011 = vsel %vm1990, %v1962, %v1348
      %v2012 = vsel %vm1990, %v1963, %v1350
      %v2013 = vsel %vm1990, %v1964, %v1352
      %v2014 = vsel %vm1990, %v1965, %v1354
      %v2015 = vsel %vm1990, %v1966, %v1356
      %v2016 = vsel %vm1990, %v1967, %v1358
      %v2017 = vsel %vm1990, %v1968, %v1360
      %v2018 = vsel %vm1990, %v1969, %v1362
      %v2019 = vsel %vm1990, %v1970, %v1364
      %v2020 = vsel %vm1990, %v1971, %v1366
      %v2021 = vsel %vm1990, %v1972, %v1368
      %v2022 = vsel %vm1990, %v1973, %v1370
      %v2023 = vsel %vm1990, %v1974, %v1372
      %v2024 = vsel %vm1990, %v1975, %v1374
      %v2025 = vsel %vm1990, %v1976, %v1376
      %v2026 = vsel %vm1990, %v1977, %v1378
      %v2027 = vsel %vm1990, %v1978, %v1380
      %v2028 = vsel %vm1990, %v1979, %v1382
      %v2029 = vsel %vm1990, %v1980, %v1384
      %v2030 = vsel %vm1990, %v1981, %v1386
      %v2031 = vsel %vm1990, %v1982, %v1388
      %v2032 = vsel %vm1990, %v1983, %v1390
      %v2033 = vsel %vm1990, %v1984, %v1392
      %v2034 = vsel %vm1990, %v1985, %v1394
      %v2035 = vsel %vm1990, %v1986, %v1396
      %v2036 = vsel %vm1990, %v1987, %v1398
      %v2037 = vsel %vm1990, %v1988, %v1400
      %v2038 = vsel %vm1990, %v1989, %v1402
      %vm2039 = vcmask 228352
      %v2040 = vsel %vm2039, %v1991, %v1455
      %v2041 = vsel %vm2039, %v1992, %v1457
      %v2042 = vsel %vm2039, %v1993, %v1459
      %v2043 = vsel %vm2039, %v1994, %v1461
      %v2044 = vsel %vm2039, %v1995, %v1463
      %v2045 = vsel %vm2039, %v1996, %v1465
      %v2046 = vsel %vm2039, %v1997, %v1467
      %v2047 = vsel %vm2039, %v1998, %v1469
      %v2048 = vsel %vm2039, %v1999, %v1471
      %v2049 = vsel %vm2039, %v2000, %v1473
      %v2050 = vsel %vm2039, %v2001, %v1475
      %v2051 = vsel %vm2039, %v2002, %v1477
      %v2052 = vsel %vm2039, %v2003, %v1479
      %v2053 = vsel %vm2039, %v2004, %v1481
      %v2054 = vsel %vm2039, %v2005, %v1483
      %v2055 = vsel %vm2039, %v2006, %v1485
      %v2056 = vsel %vm2039, %v2007, %v1487
      %v2057 = vsel %vm2039, %v2008, %v1489
      %v2058 = vsel %vm2039, %v2009, %v1491
      %v2059 = vsel %vm2039, %v2010, %v1493
      %v2060 = vsel %vm2039, %v2011, %v1495
      %v2061 = vsel %vm2039, %v2012, %v1497
      %v2062 = vsel %vm2039, %v2013, %v1499
      %v2063 = vsel %vm2039, %v2014, %v1501
      %v2064 = vsel %vm2039, %v2015, %v1503
      %v2065 = vsel %vm2039, %v2016, %v1505
      %v2066 = vsel %vm2039, %v2017, %v1507
      %v2067 = vsel %vm2039, %v2018, %v1509
      %v2068 = vsel %vm2039, %v2019, %v1511
      %v2069 = vsel %vm2039, %v2020, %v1513
      %v2070 = vsel %vm2039, %v2021, %v1515
      %v2071 = vsel %vm2039, %v2022, %v1517
      %v2072 = vsel %vm2039, %v2023, %v1519
      %v2073 = vsel %vm2039, %v2024, %v1521
      %v2074 = vsel %vm2039, %v2025, %v1523
      %v2075 = vsel %vm2039, %v2026, %v1525
      %v2076 = vsel %vm2039, %v2027, %v1527
      %v2077 = vsel %vm2039, %v2028, %v1529
      %v2078 = vsel %vm2039, %v2029, %v1531
      %v2079 = vsel %vm2039, %v2030, %v1533
      %v2080 = vsel %vm2039, %v2031, %v1535
      %v2081 = vsel %vm2039, %v2032, %v1537
      %v2082 = vsel %vm2039, %v2033, %v1539
      %v2083 = vsel %vm2039, %v2034, %v1541
      %v2084 = vsel %vm2039, %v2035, %v1543
      %v2085 = vsel %vm2039, %v2036, %v1545
      %v2086 = vsel %vm2039, %v2037, %v1547
      %v2087 = vsel %vm2039, %v2038, %v1549
      %vm2088 = vcmask 261120
      %v2089 = vsel %vm2088, %v2040, %v1602
      %v2090 = vsel %vm2088, %v2041, %v1604
      %v2091 = vsel %vm2088, %v2042, %v1606
      %v2092 = vsel %vm2088, %v2043, %v1608
      %v2093 = vsel %vm2088, %v2044, %v1610
      %v2094 = vsel %vm2088, %v2045, %v1612
      %v2095 = vsel %vm2088, %v2046, %v1614
      %v2096 = vsel %vm2088, %v2047, %v1616
      %v2097 = vsel %vm2088, %v2048, %v1618
      %v2098 = vsel %vm2088, %v2049, %v1620
      %v2099 = vsel %vm2088, %v2050, %v1622
      %v2100 = vsel %vm2088, %v2051, %v1624
      %v2101 = vsel %vm2088, %v2052, %v1626
      %v2102 = vsel %vm2088, %v2053, %v1628
      %v2103 = vsel %vm2088, %v2054, %v1630
      %v2104 = vsel %vm2088, %v2055, %v1632
      %v2105 = vsel %vm2088, %v2056, %v1634
      %v2106 = vsel %vm2088, %v2057, %v1636
      %v2107 = vsel %vm2088, %v2058, %v1638
      %v2108 = vsel %vm2088, %v2059, %v1640
      %v2109 = vsel %vm2088, %v2060, %v1642
      %v2110 = vsel %vm2088, %v2061, %v1644
      %v2111 = vsel %vm2088, %v2062, %v1646
      %v2112 = vsel %vm2088, %v2063, %v1648
      %v2113 = vsel %vm2088, %v2064, %v1650
      %v2114 = vsel %vm2088, %v2065, %v1652
      %v2115 = vsel %vm2088, %v2066, %v1654
      %v2116 = vsel %vm2088, %v2067, %v1656
      %v2117 = vsel %vm2088, %v2068, %v1658
      %v2118 = vsel %vm2088, %v2069, %v1660
      %v2119 = vsel %vm2088, %v2070, %v1662
      %v2120 = vsel %vm2088, %v2071, %v1664
      %v2121 = vsel %vm2088, %v2072, %v1666
      %v2122 = vsel %vm2088, %v2073, %v1668
      %v2123 = vsel %vm2088, %v2074, %v1670
      %v2124 = vsel %vm2088, %v2075, %v1672
      %v2125 = vsel %vm2088, %v2076, %v1674
      %v2126 = vsel %vm2088, %v2077, %v1676
      %v2127 = vsel %vm2088, %v2078, %v1678
      %v2128 = vsel %vm2088, %v2079, %v1680
      %v2129 = vsel %vm2088, %v2080, %v1682
      %v2130 = vsel %vm2088, %v2081, %v1684
      %v2131 = vsel %vm2088, %v2082, %v1686
      %v2132 = vsel %vm2088, %v2083, %v1688
      %v2133 = vsel %vm2088, %v2084, %v1690
      %v2134 = vsel %vm2088, %v2085, %v1692
      %v2135 = vsel %vm2088, %v2086, %v1694
      %v2136 = vsel %vm2088, %v2087, %v1696
      %v2137 = vld [vmem:[%s1] sm:$0xff]
      %v2138 = vld [vmem:[%s1 + $0x8] sm:$0xff]
      %v2139 = vld [vmem:[%s1 + $0x10] sm:$0xff]
      %v2140 = vld [vmem:[%s1 + $0x18] sm:$0xff]
      %v2141 = vld [vmem:[%s1 + $0x20] sm:$0xf]
      %v2142 = vld [vmem:[%s2] sm:$0x1]
      %v2144 = vlaneseq
      %v2145 = vshrl.u32 %v2144, 7
      %v2146 = vsub.s32 0, %v2145
      %v2147 = vrot.slane %v2142, %v2146
      %vm2149 = vcmask 293888
      %v2151 = vsel %vm2149, %v2089, 0
      %v2154 = vsel %vm2149, %v2090, 0
      %v2157 = vsel %vm2149, %v2091, 0
      %v2160 = vsel %vm2149, %v2092, 0
      %v2163 = vsel %vm2149, %v2093, 0
      %v2166 = vsel %vm2149, %v2094, 0
      %v2169 = vsel %vm2149, %v2095, 0
      %v2172 = vsel %vm2149, %v2096, 0
      %v2175 = vsel %vm2149, %v2097, 0
      %v2178 = vsel %vm2149, %v2098, 0
      %v2181 = vsel %vm2149, %v2099, 0
      %v2184 = vsel %vm2149, %v2100, 0
      %v2187 = vsel %vm2149, %v2101, 0
      %v2190 = vsel %vm2149, %v2102, 0
      %v2193 = vsel %vm2149, %v2103, 0
      %v2196 = vsel %vm2149, %v2104, 0
      %v2199 = vsel %vm2149, %v2105, 0
      %v2202 = vsel %vm2149, %v2106, 0
      %v2205 = vsel %vm2149, %v2107, 0
      %v2208 = vsel %vm2149, %v2108, 0
      %v2211 = vsel %vm2149, %v2109, 0
      %v2214 = vsel %vm2149, %v2110, 0
      %v2217 = vsel %vm2149, %v2111, 0
      %v2220 = vsel %vm2149, %v2112, 0
      %v2223 = vsel %vm2149, %v2113, 0
      %v2226 = vsel %vm2149, %v2114, 0
      %v2229 = vsel %vm2149, %v2115, 0
      %v2232 = vsel %vm2149, %v2116, 0
      %v2235 = vsel %vm2149, %v2117, 0
      %v2238 = vsel %vm2149, %v2118, 0
      %v2241 = vsel %vm2149, %v2119, 0
      %v2244 = vsel %vm2149, %v2120, 0
      %v2247 = vsel %vm2149, %v2121, 0
      %v2250 = vsel %vm2149, %v2122, 0
      %v2253 = vsel %vm2149, %v2123, 0
      %v2256 = vsel %vm2149, %v2124, 0
      %v2259 = vsel %vm2149, %v2125, 0
      %v2262 = vsel %vm2149, %v2126, 0
      %v2265 = vsel %vm2149, %v2127, 0
      %v2268 = vsel %vm2149, %v2128, 0
      %v2271 = vsel %vm2149, %v2129, 0
      %v2274 = vsel %vm2149, %v2130, 0
      %v2277 = vsel %vm2149, %v2131, 0
      %v2280 = vsel %vm2149, %v2132, 0
      %v2283 = vsel %vm2149, %v2133, 0
      %v2286 = vsel %vm2149, %v2134, 0
      %v2289 = vsel %vm2149, %v2135, 0
      %v2292 = vsel %vm2149, %v2136, 0
      %vm2294 = vcmask 1043456
      %v2296 = vsel %vm2294, %v2141, 0
      %2298 = vmatprep.subr.mxu0 0.0
      %2299 = vmatpush1.msra.mxu0 %v2137
      %2300 = vmatprep.subr.mxu0 0.0
      %2301 = vmatpush1.msra.mxu0 %v2138
      %2302 = vmatprep.subr.mxu0 0.0
      %2303 = vmatpush1.msra.mxu0 %v2139
      %2304 = vmatprep.subr.mxu0 0.0
      %2305 = vmatpush1.msra.mxu0 %v2140
      %2306 = vmatprep.subr.mxu0 0.0
      %2307 = vmatpush1.msra.mxu0 %v2296
      %2308 = vmatprep.subr.mxu0 0.0
      %2309 = vmatpush1.msra.mxu0 0.0
      %2310 = vmatprep.subr.mxu0 0.0
      %2311 = vmatpush1.msra.mxu0 0.0
      %2312 = vmatprep.subr.mxu0 0.0
      %2313 = vmatpush1.msra.mxu0 0.0
      %2314 = vmatprep.subr.mxu0 0.0
      %2315 = vmatpush1.msra.mxu0 0.0
      %2316 = vmatprep.subr.mxu0 0.0
      %2317 = vmatpush1.msra.mxu0 0.0
      %2318 = vmatprep.subr.mxu0 0.0
      %2319 = vmatpush1.msra.mxu0 0.0
      %2320 = vmatprep.subr.mxu0 0.0
      %2321 = vmatpush1.msra.mxu0 0.0
      %2322 = vmatprep.subr.mxu0 0.0
      %2323 = vmatpush1.msra.mxu0 0.0
      %2324 = vmatprep.subr.mxu0 0.0
      %2325 = vmatpush1.msra.mxu0 0.0
      %2326 = vmatprep.subr.mxu0 0.0
      %2327 = vmatpush1.msra.mxu0 0.0
      %2328 = vmatprep.subr.mxu0 0.0
      %2329 = vmatpush1.msra.mxu0 0.0
      %2330 = vmatprep.subr.mxu0 0.0
      %2331 = vmatpush1.msra.mxu0 0.0
      %2332 = vmatprep.subr.mxu0 0.0
      %2333 = vmatpush1.msra.mxu0 0.0
      %2334 = vmatprep.subr.mxu0 0.0
      %2335 = vmatpush1.msra.mxu0 0.0
      %2336 = vmatprep.subr.mxu0 0.0
      %2337 = vmatpush1.msra.mxu0 0.0
      %2338 = vmatprep.subr.mxu0 0.0
      %2339 = vmatpush1.msra.mxu0 0.0
      %2340 = vmatprep.subr.mxu0 0.0
      %2341 = vmatpush1.msra.mxu0 0.0
      %2342 = vmatprep.subr.mxu0 0.0
      %2343 = vmatpush1.msra.mxu0 0.0
      %2344 = vmatprep.subr.mxu0 0.0
      %2345 = vmatpush1.msra.mxu0 0.0
      %2346 = vmatprep.subr.mxu0 0.0
      %2347 = vmatpush1.msra.mxu0 0.0
      %2348 = vmatprep.subr.mxu0 0.0
      %2349 = vmatpush1.msra.mxu0 0.0
      %2350 = vmatprep.subr.mxu0 0.0
      %2351 = vmatpush1.msra.mxu0 0.0
      %2352 = vmatprep.subr.mxu0 0.0
      %2353 = vmatpush1.msra.mxu0 0.0
      %2354 = vmatprep.subr.mxu0 0.0
      %2355 = vmatpush1.msra.mxu0 0.0
      %2356 = vmatprep.subr.mxu0 0.0
      %2357 = vmatpush1.msra.mxu0 0.0
      %2358 = vmatprep.subr.mxu0 0.0
      %2359 = vmatpush1.msra.mxu0 0.0
      %2360 = vmatprep.subr.mxu0 0.0
      %2361 = vmatpush1.msra.mxu0 0.0
      %2362 = vmatprep.mubr.f32.mxu0 0.0
      %2363 = vmatmul.mubr.f32.gmra.mrb[0].mxu0 %v2151
      %v2364 = vpop.f32.mrb[0].mxu0
      %v2365 = vadd.f32 %v2147, %v2364
      %v2366 = vpop.f32.mrb[0].mxu0
      %2367 = vmatprep.mubr.f32.mxu0 0.0
      %2368 = vmatmul.mubr.f32.gmra.mrb[0].mxu0 %v2154
      %v2369 = vpop.f32.mrb[0].mxu0
      %v2370 = vadd.f32 %v2147, %v2369
      %v2371 = vpop.f32.mrb[0].mxu0
      %2372 = vmatprep.mubr.f32.mxu0 0.0
      %2373 = vmatmul.mubr.f32.gmra.mrb[0].mxu0 %v2157
      %v2374 = vpop.f32.mrb[0].mxu0
      %v2375 = vpop.f32.mrb[0].mxu0
      %2376 = vmatprep.mubr.f32.mxu0 0.0
      %2377 = vmatmul.mubr.f32.gmra.mrb[0].mxu0 %v2160
      %v2378 = vpop.f32.mrb[0].mxu0
      %v2379 = vadd.f32 %v2147, %v2378
      %v2380 = vpop.f32.mrb[0].mxu0
      %2381 = vmatprep.mubr.f32.mxu0 0.0
      %2382 = vmatmul.mubr.f32.gmra.mrb[0].mxu0 %v2163
      %v2383 = vpop.f32.mrb[0].mxu0
      %v2384 = vadd.f32 %v2147, %v2383
      %v2385 = vpop.f32.mrb[0].mxu0
      %2386 = vmatprep.mubr.f32.mxu0 0.0
      %2387 = vmatmul.mubr.f32.gmra.mrb[0].mxu0 %v2166
      %v2388 = vpop.f32.mrb[0].mxu0
      %v2389 = vpop.f32.mrb[0].mxu0
      %2390 = vmatprep.mubr.f32.mxu0 0.0
      %2391 = vmatmul.mubr.f32.gmra.mrb[0].mxu0 %v2169
      %v2392 = vpop.f32.mrb[0].mxu0
      %v2393 = vadd.f32 %v2147, %v2392
      %v2394 = vpop.f32.mrb[0].mxu0
      %2395 = vmatprep.mubr.f32.mxu0 0.0
      %2396 = vmatmul.mubr.f32.gmra.mrb[0].mxu0 %v2172
      %v2397 = vpop.f32.mrb[0].mxu0
      %v2398 = vadd.f32 %v2147, %v2397
      %v2399 = vpop.f32.mrb[0].mxu0
      %2400 = vmatprep.mubr.f32.mxu0 0.0
      %2401 = vmatmul.mubr.f32.gmra.mrb[0].mxu0 %v2175
      %v2402 = vpop.f32.mrb[0].mxu0
      %v2403 = vpop.f32.mrb[0].mxu0
      %2404 = vmatprep.mubr.f32.mxu0 0.0
      %2405 = vmatmul.mubr.f32.gmra.mrb[0].mxu0 %v2178
      %v2406 = vpop.f32.mrb[0].mxu0
      %v2407 = vadd.f32 %v2147, %v2406
      %v2408 = vpop.f32.mrb[0].mxu0
      %2409 = vmatprep.mubr.f32.mxu0 0.0
      %2410 = vmatmul.mubr.f32.gmra.mrb[0].mxu0 %v2181
      %v2411 = vpop.f32.mrb[0].mxu0
      %v2412 = vadd.f32 %v2147, %v2411
      %v2413 = vpop.f32.mrb[0].mxu0
      %2414 = vmatprep.mubr.f32.mxu0 0.0
      %2415 = vmatmul.mubr.f32.gmra.mrb[0].mxu0 %v2184
      %v2416 = vpop.f32.mrb[0].mxu0
      %v2417 = vpop.f32.mrb[0].mxu0
      %2418 = vmatprep.mubr.f32.mxu0 0.0
      %2419 = vmatmul.mubr.f32.gmra.mrb[0].mxu0 %v2187
      %v2420 = vpop.f32.mrb[0].mxu0
      %v2421 = vadd.f32 %v2147, %v2420
      %v2422 = vpop.f32.mrb[0].mxu0
      %2423 = vmatprep.mubr.f32.mxu0 0.0
      %2424 = vmatmul.mubr.f32.gmra.mrb[0].mxu0 %v2190
      %v2425 = vpop.f32.mrb[0].mxu0
      %v2426 = vadd.f32 %v2147, %v2425
      %v2427 = vpop.f32.mrb[0].mxu0
      %2428 = vmatprep.mubr.f32.mxu0 0.0
      %2429 = vmatmul.mubr.f32.gmra.mrb[0].mxu0 %v2193
      %v2430 = vpop.f32.mrb[0].mxu0
      %v2431 = vpop.f32.mrb[0].mxu0
      %2432 = vmatprep.mubr.f32.mxu0 0.0
      %2433 = vmatmul.mubr.f32.gmra.mrb[0].mxu0 %v2196
      %v2434 = vpop.f32.mrb[0].mxu0
      %v2435 = vadd.f32 %v2147, %v2434
      %v2436 = vpop.f32.mrb[0].mxu0
      %2437 = vmatprep.mubr.f32.mxu0 0.0
      %2438 = vmatmul.mubr.f32.gmra.mrb[0].mxu0 %v2199
      %v2439 = vpop.f32.mrb[0].mxu0
      %v2440 = vadd.f32 %v2147, %v2439
      %v2441 = vpop.f32.mrb[0].mxu0
      %2442 = vmatprep.mubr.f32.mxu0 0.0
      %2443 = vmatmul.mubr.f32.gmra.mrb[0].mxu0 %v2202
      %v2444 = vpop.f32.mrb[0].mxu0
      %v2445 = vpop.f32.mrb[0].mxu0
      %2446 = vmatprep.mubr.f32.mxu0 0.0
      %2447 = vmatmul.mubr.f32.gmra.mrb[0].mxu0 %v2205
      %v2448 = vpop.f32.mrb[0].mxu0
      %v2449 = vadd.f32 %v2147, %v2448
      %v2450 = vpop.f32.mrb[0].mxu0
      %2451 = vmatprep.mubr.f32.mxu0 0.0
      %2452 = vmatmul.mubr.f32.gmra.mrb[0].mxu0 %v2208
      %v2453 = vpop.f32.mrb[0].mxu0
      %v2454 = vadd.f32 %v2147, %v2453
      %v2455 = vpop.f32.mrb[0].mxu0
      %2456 = vmatprep.mubr.f32.mxu0 0.0
      %2457 = vmatmul.mubr.f32.gmra.mrb[0].mxu0 %v2211
      %v2458 = vpop.f32.mrb[0].mxu0
      %v2459 = vpop.f32.mrb[0].mxu0
      %2460 = vmatprep.mubr.f32.mxu0 0.0
      %2461 = vmatmul.mubr.f32.gmra.mrb[0].mxu0 %v2214
      %v2462 = vpop.f32.mrb[0].mxu0
      %v2463 = vadd.f32 %v2147, %v2462
      %v2464 = vpop.f32.mrb[0].mxu0
      %2465 = vmatprep.mubr.f32.mxu0 0.0
      %2466 = vmatmul.mubr.f32.gmra.mrb[0].mxu0 %v2217
      %v2467 = vpop.f32.mrb[0].mxu0
      %v2468 = vadd.f32 %v2147, %v2467
      %v2469 = vpop.f32.mrb[0].mxu0
      %2470 = vmatprep.mubr.f32.mxu0 0.0
      %2471 = vmatmul.mubr.f32.gmra.mrb[0].mxu0 %v2220
      %v2472 = vpop.f32.mrb[0].mxu0
      %v2473 = vpop.f32.mrb[0].mxu0
      %2474 = vmatprep.mubr.f32.mxu0 0.0
      %2475 = vmatmul.mubr.f32.gmra.mrb[0].mxu0 %v2223
      %v2476 = vpop.f32.mrb[0].mxu0
      %v2477 = vadd.f32 %v2147, %v2476
      %v2478 = vpop.f32.mrb[0].mxu0
      %2479 = vmatprep.mubr.f32.mxu0 0.0
      %2480 = vmatmul.mubr.f32.gmra.mrb[0].mxu0 %v2226
      %v2481 = vpop.f32.mrb[0].mxu0
      %v2482 = vadd.f32 %v2147, %v2481
      %v2483 = vpop.f32.mrb[0].mxu0
      %2484 = vmatprep.mubr.f32.mxu0 0.0
      %2485 = vmatmul.mubr.f32.gmra.mrb[0].mxu0 %v2229
      %v2486 = vpop.f32.mrb[0].mxu0
      %v2487 = vpop.f32.mrb[0].mxu0
      %2488 = vmatprep.mubr.f32.mxu0 0.0
      %2489 = vmatmul.mubr.f32.gmra.mrb[0].mxu0 %v2232
      %v2490 = vpop.f32.mrb[0].mxu0
      %v2491 = vadd.f32 %v2147, %v2490
      %v2492 = vpop.f32.mrb[0].mxu0
      %2493 = vmatprep.mubr.f32.mxu0 0.0
      %2494 = vmatmul.mubr.f32.gmra.mrb[0].mxu0 %v2235
      %v2495 = vpop.f32.mrb[0].mxu0
      %v2496 = vadd.f32 %v2147, %v2495
      %v2497 = vpop.f32.mrb[0].mxu0
      %2498 = vmatprep.mubr.f32.mxu0 0.0
      %2499 = vmatmul.mubr.f32.gmra.mrb[0].mxu0 %v2238
      %v2500 = vpop.f32.mrb[0].mxu0
      %v2501 = vpop.f32.mrb[0].mxu0
      %2502 = vmatprep.mubr.f32.mxu0 0.0
      %2503 = vmatmul.mubr.f32.gmra.mrb[0].mxu0 %v2241
      %v2504 = vpop.f32.mrb[0].mxu0
      %v2505 = vadd.f32 %v2147, %v2504
      %v2506 = vpop.f32.mrb[0].mxu0
      %2507 = vmatprep.mubr.f32.mxu0 0.0
      %2508 = vmatmul.mubr.f32.gmra.mrb[0].mxu0 %v2244
      %v2509 = vpop.f32.mrb[0].mxu0
      %v2510 = vadd.f32 %v2147, %v2509
      %v2511 = vpop.f32.mrb[0].mxu0
      %2512 = vmatprep.mubr.f32.mxu0 0.0
      %2513 = vmatmul.mubr.f32.gmra.mrb[0].mxu0 %v2247
      %v2514 = vpop.f32.mrb[0].mxu0
      %v2515 = vpop.f32.mrb[0].mxu0
      %2516 = vmatprep.mubr.f32.mxu0 0.0
      %2517 = vmatmul.mubr.f32.gmra.mrb[0].mxu0 %v2250
      %v2518 = vpop.f32.mrb[0].mxu0
      %v2519 = vadd.f32 %v2147, %v2518
      %v2520 = vpop.f32.mrb[0].mxu0
      %2521 = vmatprep.mubr.f32.mxu0 0.0
      %2522 = vmatmul.mubr.f32.gmra.mrb[0].mxu0 %v2253
      %v2523 = vpop.f32.mrb[0].mxu0
      %v2524 = vadd.f32 %v2147, %v2523
      %v2525 = vpop.f32.mrb[0].mxu0
      %2526 = vmatprep.mubr.f32.mxu0 0.0
      %2527 = vmatmul.mubr.f32.gmra.mrb[0].mxu0 %v2256
      %v2528 = vpop.f32.mrb[0].mxu0
      %v2529 = vpop.f32.mrb[0].mxu0
      %2530 = vmatprep.mubr.f32.mxu0 0.0
      %2531 = vmatmul.mubr.f32.gmra.mrb[0].mxu0 %v2259
      %v2532 = vpop.f32.mrb[0].mxu0
      %v2533 = vadd.f32 %v2147, %v2532
      %v2534 = vpop.f32.mrb[0].mxu0
      %2535 = vmatprep.mubr.f32.mxu0 0.0
      %2536 = vmatmul.mubr.f32.gmra.mrb[0].mxu0 %v2262
      %v2537 = vpop.f32.mrb[0].mxu0
      %v2538 = vadd.f32 %v2147, %v2537
      %v2539 = vpop.f32.mrb[0].mxu0
      %2540 = vmatprep.mubr.f32.mxu0 0.0
      %2541 = vmatmul.mubr.f32.gmra.mrb[0].mxu0 %v2265
      %v2542 = vpop.f32.mrb[0].mxu0
      %v2543 = vpop.f32.mrb[0].mxu0
      %2544 = vmatprep.mubr.f32.mxu0 0.0
      %2545 = vmatmul.mubr.f32.gmra.mrb[0].mxu0 %v2268
      %v2546 = vpop.f32.mrb[0].mxu0
      %v2547 = vadd.f32 %v2147, %v2546
      %v2548 = vpop.f32.mrb[0].mxu0
      %2549 = vmatprep.mubr.f32.mxu0 0.0
      %2550 = vmatmul.mubr.f32.gmra.mrb[0].mxu0 %v2271
      %v2551 = vpop.f32.mrb[0].mxu0
      %v2552 = vadd.f32 %v2147, %v2551
      %v2553 = vpop.f32.mrb[0].mxu0
      %2554 = vmatprep.mubr.f32.mxu0 0.0
      %2555 = vmatmul.mubr.f32.gmra.mrb[0].mxu0 %v2274
      %v2556 = vpop.f32.mrb[0].mxu0
      %v2557 = vpop.f32.mrb[0].mxu0
      %2558 = vmatprep.mubr.f32.mxu0 0.0
      %2559 = vmatmul.mubr.f32.gmra.mrb[0].mxu0 %v2277
      %v2560 = vpop.f32.mrb[0].mxu0
      %v2561 = vadd.f32 %v2147, %v2560
      %v2562 = vpop.f32.mrb[0].mxu0
      %2563 = vmatprep.mubr.f32.mxu0 0.0
      %2564 = vmatmul.mubr.f32.gmra.mrb[0].mxu0 %v2280
      %v2565 = vpop.f32.mrb[0].mxu0
      %v2566 = vadd.f32 %v2147, %v2565
      %v2567 = vpop.f32.mrb[0].mxu0
      %2568 = vmatprep.mubr.f32.mxu0 0.0
      %2569 = vmatmul.mubr.f32.gmra.mrb[0].mxu0 %v2283
      %v2570 = vpop.f32.mrb[0].mxu0
      %v2571 = vpop.f32.mrb[0].mxu0
      %2572 = vmatprep.mubr.f32.mxu0 0.0
      %2573 = vmatmul.mubr.f32.gmra.mrb[0].mxu0 %v2286
      %v2574 = vpop.f32.mrb[0].mxu0
      %v2575 = vadd.f32 %v2147, %v2574
      %v2576 = vpop.f32.mrb[0].mxu0
      %2577 = vmatprep.mubr.f32.mxu0 0.0
      %2578 = vmatmul.mubr.f32.gmra.mrb[0].mxu0 %v2289
      %v2579 = vpop.f32.mrb[0].mxu0
      %v2580 = vadd.f32 %v2147, %v2579
      %v2581 = vpop.f32.mrb[0].mxu0
      %2582 = vmatprep.mubr.f32.mxu0 0.0
      %2583 = vmatmul.mubr.f32.gmra.mrb[0].mxu0 %v2292
      %v2584 = vpop.f32.mrb[0].mxu0
      %v2585 = vpop.f32.mrb[0].mxu0
      %2586 = vdwg.mxu0
      %vm2587 = vcmp.ge.f32.partialorder %v2365, 0.0
      %vm2588 = vcmp.ge.f32.partialorder %v2370, 0.0
      %vm2589 = vcmp.ge.f32.partialorder %v2379, 0.0
      %vm2590 = vcmp.ge.f32.partialorder %v2384, 0.0
      %vm2591 = vcmp.ge.f32.partialorder %v2393, 0.0
      %vm2592 = vcmp.ge.f32.partialorder %v2398, 0.0
      %vm2593 = vcmp.ge.f32.partialorder %v2407, 0.0
      %vm2594 = vcmp.ge.f32.partialorder %v2412, 0.0
      %vm2595 = vcmp.ge.f32.partialorder %v2421, 0.0
      %vm2596 = vcmp.ge.f32.partialorder %v2426, 0.0
      %vm2597 = vcmp.ge.f32.partialorder %v2435, 0.0
      %vm2598 = vcmp.ge.f32.partialorder %v2440, 0.0
      %vm2599 = vcmp.ge.f32.partialorder %v2449, 0.0
      %vm2600 = vcmp.ge.f32.partialorder %v2454, 0.0
      %vm2601 = vcmp.ge.f32.partialorder %v2463, 0.0
      %vm2602 = vcmp.ge.f32.partialorder %v2468, 0.0
      %vm2603 = vcmp.ge.f32.partialorder %v2477, 0.0
      %vm2604 = vcmp.ge.f32.partialorder %v2482, 0.0
      %vm2605 = vcmp.ge.f32.partialorder %v2491, 0.0
      %vm2606 = vcmp.ge.f32.partialorder %v2496, 0.0
      %vm2607 = vcmp.ge.f32.partialorder %v2505, 0.0
      %vm2608 = vcmp.ge.f32.partialorder %v2510, 0.0
      %vm2609 = vcmp.ge.f32.partialorder %v2519, 0.0
      %vm2610 = vcmp.ge.f32.partialorder %v2524, 0.0
      %vm2611 = vcmp.ge.f32.partialorder %v2533, 0.0
      %vm2612 = vcmp.ge.f32.partialorder %v2538, 0.0
      %vm2613 = vcmp.ge.f32.partialorder %v2547, 0.0
      %vm2614 = vcmp.ge.f32.partialorder %v2552, 0.0
      %vm2615 = vcmp.ge.f32.partialorder %v2561, 0.0
      %vm2616 = vcmp.ge.f32.partialorder %v2566, 0.0
      %vm2617 = vcmp.ge.f32.partialorder %v2575, 0.0
      %vm2618 = vcmp.ge.f32.partialorder %v2580, 0.0
      %v2619 = vmul.f32 %v2365, 0.2
      %v2620 = vmul.f32 %v2370, 0.2
      %v2621 = vmul.f32 %v2379, 0.2
      %v2622 = vmul.f32 %v2384, 0.2
      %v2623 = vmul.f32 %v2393, 0.2
      %v2624 = vmul.f32 %v2398, 0.2
      %v2625 = vmul.f32 %v2407, 0.2
      %v2626 = vmul.f32 %v2412, 0.2
      %v2627 = vmul.f32 %v2421, 0.2
      %v2628 = vmul.f32 %v2426, 0.2
      %v2629 = vmul.f32 %v2435, 0.2
      %v2630 = vmul.f32 %v2440, 0.2
      %v2631 = vmul.f32 %v2449, 0.2
      %v2632 = vmul.f32 %v2454, 0.2
      %v2633 = vmul.f32 %v2463, 0.2
      %v2634 = vmul.f32 %v2468, 0.2
      %v2635 = vmul.f32 %v2477, 0.2
      %v2636 = vmul.f32 %v2482, 0.2
      %v2637 = vmul.f32 %v2491, 0.2
      %v2638 = vmul.f32 %v2496, 0.2
      %v2639 = vmul.f32 %v2505, 0.2
      %v2640 = vmul.f32 %v2510, 0.2
      %v2641 = vmul.f32 %v2519, 0.2
      %v2642 = vmul.f32 %v2524, 0.2
      %v2643 = vmul.f32 %v2533, 0.2
      %v2644 = vmul.f32 %v2538, 0.2
      %v2645 = vmul.f32 %v2547, 0.2
      %v2646 = vmul.f32 %v2552, 0.2
      %v2647 = vmul.f32 %v2561, 0.2
      %v2648 = vmul.f32 %v2566, 0.2
      %v2649 = vmul.f32 %v2575, 0.2
      %v2650 = vmul.f32 %v2580, 0.2
      %v2651 = vsel %vm2587, %v2365, %v2619
      %v2652 = vsel %vm2588, %v2370, %v2620
      %v2653 = vsel %vm2589, %v2379, %v2621
      %v2654 = vsel %vm2590, %v2384, %v2622
      %v2655 = vsel %vm2591, %v2393, %v2623
      %v2656 = vsel %vm2592, %v2398, %v2624
      %v2657 = vsel %vm2593, %v2407, %v2625
      %v2658 = vsel %vm2594, %v2412, %v2626
      %v2659 = vsel %vm2595, %v2421, %v2627
      %v2660 = vsel %vm2596, %v2426, %v2628
      %v2661 = vsel %vm2597, %v2435, %v2629
      %v2662 = vsel %vm2598, %v2440, %v2630
      %v2663 = vsel %vm2599, %v2449, %v2631
      %v2664 = vsel %vm2600, %v2454, %v2632
      %v2665 = vsel %vm2601, %v2463, %v2633
      %v2666 = vsel %vm2602, %v2468, %v2634
      %v2667 = vsel %vm2603, %v2477, %v2635
      %v2668 = vsel %vm2604, %v2482, %v2636
      %v2669 = vsel %vm2605, %v2491, %v2637
      %v2670 = vsel %vm2606, %v2496, %v2638
      %v2671 = vsel %vm2607, %v2505, %v2639
      %v2672 = vsel %vm2608, %v2510, %v2640
      %v2673 = vsel %vm2609, %v2519, %v2641
      %v2674 = vsel %vm2610, %v2524, %v2642
      %v2675 = vsel %vm2611, %v2533, %v2643
      %v2676 = vsel %vm2612, %v2538, %v2644
      %v2677 = vsel %vm2613, %v2547, %v2645
      %v2678 = vsel %vm2614, %v2552, %v2646
      %v2679 = vsel %vm2615, %v2561, %v2647
      %v2680 = vsel %vm2616, %v2566, %v2648
      %v2681 = vsel %vm2617, %v2575, %v2649
      %v2682 = vsel %vm2618, %v2580, %v2650
      %v2715 = vcombine.high %v2651, %v2651
      %v2717 = vunpack.c.l.s4 1983009808
      %v2718 = vunpack.c.0.s8 %v2717
      %v2719 = vlaneseq
      %v2720 = vshrl.u32 %v2719, 7
      %v2721 = vsub.s32 %v2718, %v2720
      %v2722 = vrot.slane %v2651, %v2721
      %v2724 = vunpack.c.l.s4 1983009808
      %v2725 = vunpack.c.0.s8 %v2724
      %v2726 = vlaneseq
      %v2727 = vshrl.u32 %v2726, 7
      %v2728 = vsub.s32 %v2725, %v2727
      %v2729 = vrot.slane %v2715, %v2728
      %v2730 = vcombine.high %v2722, %v2722
      %v2731 = vcombine.high %v2729, %v2729
      %v2732 = vcombine.high %v2652, %v2652
      %v2734 = vunpack.c.l.s4 1983009808
      %v2735 = vunpack.c.0.s8 %v2734
      %v2736 = vlaneseq
      %v2737 = vshrl.u32 %v2736, 7
      %v2738 = vsub.s32 %v2735, %v2737
      %v2739 = vrot.slane %v2652, %v2738
      %v2741 = vunpack.c.l.s4 1983009808
      %v2742 = vunpack.c.0.s8 %v2741
      %v2743 = vlaneseq
      %v2744 = vshrl.u32 %v2743, 7
      %v2745 = vsub.s32 %v2742, %v2744
      %v2746 = vrot.slane %v2732, %v2745
      %v2747 = vcombine.high %v2739, %v2739
      %v2748 = vcombine.high %v2746, %v2746
      %v2749 = vcombine.high %v2653, %v2653
      %v2751 = vunpack.c.l.s4 1983009808
      %v2752 = vunpack.c.0.s8 %v2751
      %v2753 = vlaneseq
      %v2754 = vshrl.u32 %v2753, 7
      %v2755 = vsub.s32 %v2752, %v2754
      %v2756 = vrot.slane %v2653, %v2755
      %v2758 = vunpack.c.l.s4 1983009808
      %v2759 = vunpack.c.0.s8 %v2758
      %v2760 = vlaneseq
      %v2761 = vshrl.u32 %v2760, 7
      %v2762 = vsub.s32 %v2759, %v2761
      %v2763 = vrot.slane %v2749, %v2762
      %v2764 = vcombine.high %v2756, %v2756
      %v2765 = vcombine.high %v2763, %v2763
      %v2766 = vcombine.high %v2654, %v2654
      %v2768 = vunpack.c.l.s4 1983009808
      %v2769 = vunpack.c.0.s8 %v2768
      %v2770 = vlaneseq
      %v2771 = vshrl.u32 %v2770, 7
      %v2772 = vsub.s32 %v2769, %v2771
      %v2773 = vrot.slane %v2654, %v2772
      %v2775 = vunpack.c.l.s4 1983009808
      %v2776 = vunpack.c.0.s8 %v2775
      %v2777 = vlaneseq
      %v2778 = vshrl.u32 %v2777, 7
      %v2779 = vsub.s32 %v2776, %v2778
      %v2780 = vrot.slane %v2766, %v2779
      %v2781 = vcombine.high %v2773, %v2773
      %v2782 = vcombine.high %v2780, %v2780
      %v2783 = vcombine.high %v2655, %v2655
      %v2785 = vunpack.c.l.s4 1983009808
      %v2786 = vunpack.c.0.s8 %v2785
      %v2787 = vlaneseq
      %v2788 = vshrl.u32 %v2787, 7
      %v2789 = vsub.s32 %v2786, %v2788
      %v2790 = vrot.slane %v2655, %v2789
      %v2792 = vunpack.c.l.s4 1983009808
      %v2793 = vunpack.c.0.s8 %v2792
      %v2794 = vlaneseq
      %v2795 = vshrl.u32 %v2794, 7
      %v2796 = vsub.s32 %v2793, %v2795
      %v2797 = vrot.slane %v2783, %v2796
      %v2798 = vcombine.high %v2790, %v2790
      %v2799 = vcombine.high %v2797, %v2797
      %v2800 = vcombine.high %v2656, %v2656
      %v2802 = vunpack.c.l.s4 1983009808
      %v2803 = vunpack.c.0.s8 %v2802
      %v2804 = vlaneseq
      %v2805 = vshrl.u32 %v2804, 7
      %v2806 = vsub.s32 %v2803, %v2805
      %v2807 = vrot.slane %v2656, %v2806
      %v2809 = vunpack.c.l.s4 1983009808
      %v2810 = vunpack.c.0.s8 %v2809
      %v2811 = vlaneseq
      %v2812 = vshrl.u32 %v2811, 7
      %v2813 = vsub.s32 %v2810, %v2812
      %v2814 = vrot.slane %v2800, %v2813
      %v2815 = vcombine.high %v2807, %v2807
      %v2816 = vcombine.high %v2814, %v2814
      %v2817 = vcombine.high %v2657, %v2657
      %v2819 = vunpack.c.l.s4 1983009808
      %v2820 = vunpack.c.0.s8 %v2819
      %v2821 = vlaneseq
      %v2822 = vshrl.u32 %v2821, 7
      %v2823 = vsub.s32 %v2820, %v2822
      %v2824 = vrot.slane %v2657, %v2823
      %v2826 = vunpack.c.l.s4 1983009808
      %v2827 = vunpack.c.0.s8 %v2826
      %v2828 = vlaneseq
      %v2829 = vshrl.u32 %v2828, 7
      %v2830 = vsub.s32 %v2827, %v2829
      %v2831 = vrot.slane %v2817, %v2830
      %v2832 = vcombine.high %v2824, %v2824
      %v2833 = vcombine.high %v2831, %v2831
      %v2834 = vcombine.high %v2658, %v2658
      %v2836 = vunpack.c.l.s4 1983009808
      %v2837 = vunpack.c.0.s8 %v2836
      %v2838 = vlaneseq
      %v2839 = vshrl.u32 %v2838, 7
      %v2840 = vsub.s32 %v2837, %v2839
      %v2841 = vrot.slane %v2658, %v2840
      %v2843 = vunpack.c.l.s4 1983009808
      %v2844 = vunpack.c.0.s8 %v2843
      %v2845 = vlaneseq
      %v2846 = vshrl.u32 %v2845, 7
      %v2847 = vsub.s32 %v2844, %v2846
      %v2848 = vrot.slane %v2834, %v2847
      %v2849 = vcombine.high %v2841, %v2841
      %v2850 = vcombine.high %v2848, %v2848
      %v2851 = vcombine.high %v2659, %v2659
      %v2853 = vunpack.c.l.s4 1983009808
      %v2854 = vunpack.c.0.s8 %v2853
      %v2855 = vlaneseq
      %v2856 = vshrl.u32 %v2855, 7
      %v2857 = vsub.s32 %v2854, %v2856
      %v2858 = vrot.slane %v2659, %v2857
      %v2860 = vunpack.c.l.s4 1983009808
      %v2861 = vunpack.c.0.s8 %v2860
      %v2862 = vlaneseq
      %v2863 = vshrl.u32 %v2862, 7
      %v2864 = vsub.s32 %v2861, %v2863
      %v2865 = vrot.slane %v2851, %v2864
      %v2866 = vcombine.high %v2858, %v2858
      %v2867 = vcombine.high %v2865, %v2865
      %v2868 = vcombine.high %v2660, %v2660
      %v2870 = vunpack.c.l.s4 1983009808
      %v2871 = vunpack.c.0.s8 %v2870
      %v2872 = vlaneseq
      %v2873 = vshrl.u32 %v2872, 7
      %v2874 = vsub.s32 %v2871, %v2873
      %v2875 = vrot.slane %v2660, %v2874
      %v2877 = vunpack.c.l.s4 1983009808
      %v2878 = vunpack.c.0.s8 %v2877
      %v2879 = vlaneseq
      %v2880 = vshrl.u32 %v2879, 7
      %v2881 = vsub.s32 %v2878, %v2880
      %v2882 = vrot.slane %v2868, %v2881
      %v2883 = vcombine.high %v2875, %v2875
      %v2884 = vcombine.high %v2882, %v2882
      %v2885 = vcombine.high %v2661, %v2661
      %v2887 = vunpack.c.l.s4 1983009808
      %v2888 = vunpack.c.0.s8 %v2887
      %v2889 = vlaneseq
      %v2890 = vshrl.u32 %v2889, 7
      %v2891 = vsub.s32 %v2888, %v2890
      %v2892 = vrot.slane %v2661, %v2891
      %v2894 = vunpack.c.l.s4 1983009808
      %v2895 = vunpack.c.0.s8 %v2894
      %v2896 = vlaneseq
      %v2897 = vshrl.u32 %v2896, 7
      %v2898 = vsub.s32 %v2895, %v2897
      %v2899 = vrot.slane %v2885, %v2898
      %v2900 = vcombine.high %v2892, %v2892
      %v2901 = vcombine.high %v2899, %v2899
      %v2902 = vcombine.high %v2662, %v2662
      %v2904 = vunpack.c.l.s4 1983009808
      %v2905 = vunpack.c.0.s8 %v2904
      %v2906 = vlaneseq
      %v2907 = vshrl.u32 %v2906, 7
      %v2908 = vsub.s32 %v2905, %v2907
      %v2909 = vrot.slane %v2662, %v2908
      %v2911 = vunpack.c.l.s4 1983009808
      %v2912 = vunpack.c.0.s8 %v2911
      %v2913 = vlaneseq
      %v2914 = vshrl.u32 %v2913, 7
      %v2915 = vsub.s32 %v2912, %v2914
      %v2916 = vrot.slane %v2902, %v2915
      %v2917 = vcombine.high %v2909, %v2909
      %v2918 = vcombine.high %v2916, %v2916
      %v2919 = vcombine.high %v2663, %v2663
      %v2921 = vunpack.c.l.s4 1983009808
      %v2922 = vunpack.c.0.s8 %v2921
      %v2923 = vlaneseq
      %v2924 = vshrl.u32 %v2923, 7
      %v2925 = vsub.s32 %v2922, %v2924
      %v2926 = vrot.slane %v2663, %v2925
      %v2928 = vunpack.c.l.s4 1983009808
      %v2929 = vunpack.c.0.s8 %v2928
      %v2930 = vlaneseq
      %v2931 = vshrl.u32 %v2930, 7
      %v2932 = vsub.s32 %v2929, %v2931
      %v2933 = vrot.slane %v2919, %v2932
      %v2934 = vcombine.high %v2926, %v2926
      %v2935 = vcombine.high %v2933, %v2933
      %v2936 = vcombine.high %v2664, %v2664
      %v2938 = vunpack.c.l.s4 1983009808
      %v2939 = vunpack.c.0.s8 %v2938
      %v2940 = vlaneseq
      %v2941 = vshrl.u32 %v2940, 7
      %v2942 = vsub.s32 %v2939, %v2941
      %v2943 = vrot.slane %v2664, %v2942
      %v2945 = vunpack.c.l.s4 1983009808
      %v2946 = vunpack.c.0.s8 %v2945
      %v2947 = vlaneseq
      %v2948 = vshrl.u32 %v2947, 7
      %v2949 = vsub.s32 %v2946, %v2948
      %v2950 = vrot.slane %v2936, %v2949
      %v2951 = vcombine.high %v2943, %v2943
      %v2952 = vcombine.high %v2950, %v2950
      %v2953 = vcombine.high %v2665, %v2665
      %v2955 = vunpack.c.l.s4 1983009808
      %v2956 = vunpack.c.0.s8 %v2955
      %v2957 = vlaneseq
      %v2958 = vshrl.u32 %v2957, 7
      %v2959 = vsub.s32 %v2956, %v2958
      %v2960 = vrot.slane %v2665, %v2959
      %v2962 = vunpack.c.l.s4 1983009808
      %v2963 = vunpack.c.0.s8 %v2962
      %v2964 = vlaneseq
      %v2965 = vshrl.u32 %v2964, 7
      %v2966 = vsub.s32 %v2963, %v2965
      %v2967 = vrot.slane %v2953, %v2966
      %v2968 = vcombine.high %v2960, %v2960
      %v2969 = vcombine.high %v2967, %v2967
      %v2970 = vcombine.high %v2666, %v2666
      %v2972 = vunpack.c.l.s4 1983009808
      %v2973 = vunpack.c.0.s8 %v2972
      %v2974 = vlaneseq
      %v2975 = vshrl.u32 %v2974, 7
      %v2976 = vsub.s32 %v2973, %v2975
      %v2977 = vrot.slane %v2666, %v2976
      %v2979 = vunpack.c.l.s4 1983009808
      %v2980 = vunpack.c.0.s8 %v2979
      %v2981 = vlaneseq
      %v2982 = vshrl.u32 %v2981, 7
      %v2983 = vsub.s32 %v2980, %v2982
      %v2984 = vrot.slane %v2970, %v2983
      %v2985 = vcombine.high %v2977, %v2977
      %v2986 = vcombine.high %v2984, %v2984
      %v2987 = vcombine.high %v2667, %v2667
      %v2989 = vunpack.c.l.s4 1983009808
      %v2990 = vunpack.c.0.s8 %v2989
      %v2991 = vlaneseq
      %v2992 = vshrl.u32 %v2991, 7
      %v2993 = vsub.s32 %v2990, %v2992
      %v2994 = vrot.slane %v2667, %v2993
      %v2996 = vunpack.c.l.s4 1983009808
      %v2997 = vunpack.c.0.s8 %v2996
      %v2998 = vlaneseq
      %v2999 = vshrl.u32 %v2998, 7
      %v3000 = vsub.s32 %v2997, %v2999
      %v3001 = vrot.slane %v2987, %v3000
      %v3002 = vcombine.high %v2994, %v2994
      %v3003 = vcombine.high %v3001, %v3001
      %v3004 = vcombine.high %v2668, %v2668
      %v3006 = vunpack.c.l.s4 1983009808
      %v3007 = vunpack.c.0.s8 %v3006
      %v3008 = vlaneseq
      %v3009 = vshrl.u32 %v3008, 7
      %v3010 = vsub.s32 %v3007, %v3009
      %v3011 = vrot.slane %v2668, %v3010
      %v3013 = vunpack.c.l.s4 1983009808
      %v3014 = vunpack.c.0.s8 %v3013
      %v3015 = vlaneseq
      %v3016 = vshrl.u32 %v3015, 7
      %v3017 = vsub.s32 %v3014, %v3016
      %v3018 = vrot.slane %v3004, %v3017
      %v3019 = vcombine.high %v3011, %v3011
      %v3020 = vcombine.high %v3018, %v3018
      %v3021 = vcombine.high %v2669, %v2669
      %v3023 = vunpack.c.l.s4 1983009808
      %v3024 = vunpack.c.0.s8 %v3023
      %v3025 = vlaneseq
      %v3026 = vshrl.u32 %v3025, 7
      %v3027 = vsub.s32 %v3024, %v3026
      %v3028 = vrot.slane %v2669, %v3027
      %v3030 = vunpack.c.l.s4 1983009808
      %v3031 = vunpack.c.0.s8 %v3030
      %v3032 = vlaneseq
      %v3033 = vshrl.u32 %v3032, 7
      %v3034 = vsub.s32 %v3031, %v3033
      %v3035 = vrot.slane %v3021, %v3034
      %v3036 = vcombine.high %v3028, %v3028
      %v3037 = vcombine.high %v3035, %v3035
      %v3038 = vcombine.high %v2670, %v2670
      %v3040 = vunpack.c.l.s4 1983009808
      %v3041 = vunpack.c.0.s8 %v3040
      %v3042 = vlaneseq
      %v3043 = vshrl.u32 %v3042, 7
      %v3044 = vsub.s32 %v3041, %v3043
      %v3045 = vrot.slane %v2670, %v3044
      %v3047 = vunpack.c.l.s4 1983009808
      %v3048 = vunpack.c.0.s8 %v3047
      %v3049 = vlaneseq
      %v3050 = vshrl.u32 %v3049, 7
      %v3051 = vsub.s32 %v3048, %v3050
      %v3052 = vrot.slane %v3038, %v3051
      %v3053 = vcombine.high %v3045, %v3045
      %v3054 = vcombine.high %v3052, %v3052
      %v3055 = vcombine.high %v2671, %v2671
      %v3057 = vunpack.c.l.s4 1983009808
      %v3058 = vunpack.c.0.s8 %v3057
      %v3059 = vlaneseq
      %v3060 = vshrl.u32 %v3059, 7
      %v3061 = vsub.s32 %v3058, %v3060
      %v3062 = vrot.slane %v2671, %v3061
      %v3064 = vunpack.c.l.s4 1983009808
      %v3065 = vunpack.c.0.s8 %v3064
      %v3066 = vlaneseq
      %v3067 = vshrl.u32 %v3066, 7
      %v3068 = vsub.s32 %v3065, %v3067
      %v3069 = vrot.slane %v3055, %v3068
      %v3070 = vcombine.high %v3062, %v3062
      %v3071 = vcombine.high %v3069, %v3069
      %v3072 = vcombine.high %v2672, %v2672
      %v3074 = vunpack.c.l.s4 1983009808
      %v3075 = vunpack.c.0.s8 %v3074
      %v3076 = vlaneseq
      %v3077 = vshrl.u32 %v3076, 7
      %v3078 = vsub.s32 %v3075, %v3077
      %v3079 = vrot.slane %v2672, %v3078
      %v3081 = vunpack.c.l.s4 1983009808
      %v3082 = vunpack.c.0.s8 %v3081
      %v3083 = vlaneseq
      %v3084 = vshrl.u32 %v3083, 7
      %v3085 = vsub.s32 %v3082, %v3084
      %v3086 = vrot.slane %v3072, %v3085
      %v3087 = vcombine.high %v3079, %v3079
      %v3088 = vcombine.high %v3086, %v3086
      %v3089 = vcombine.high %v2673, %v2673
      %v3091 = vunpack.c.l.s4 1983009808
      %v3092 = vunpack.c.0.s8 %v3091
      %v3093 = vlaneseq
      %v3094 = vshrl.u32 %v3093, 7
      %v3095 = vsub.s32 %v3092, %v3094
      %v3096 = vrot.slane %v2673, %v3095
      %v3098 = vunpack.c.l.s4 1983009808
      %v3099 = vunpack.c.0.s8 %v3098
      %v3100 = vlaneseq
      %v3101 = vshrl.u32 %v3100, 7
      %v3102 = vsub.s32 %v3099, %v3101
      %v3103 = vrot.slane %v3089, %v3102
      %v3104 = vcombine.high %v3096, %v3096
      %v3105 = vcombine.high %v3103, %v3103
      %v3106 = vcombine.high %v2674, %v2674
      %v3108 = vunpack.c.l.s4 1983009808
      %v3109 = vunpack.c.0.s8 %v3108
      %v3110 = vlaneseq
      %v3111 = vshrl.u32 %v3110, 7
      %v3112 = vsub.s32 %v3109, %v3111
      %v3113 = vrot.slane %v2674, %v3112
      %v3115 = vunpack.c.l.s4 1983009808
      %v3116 = vunpack.c.0.s8 %v3115
      %v3117 = vlaneseq
      %v3118 = vshrl.u32 %v3117, 7
      %v3119 = vsub.s32 %v3116, %v3118
      %v3120 = vrot.slane %v3106, %v3119
      %v3121 = vcombine.high %v3113, %v3113
      %v3122 = vcombine.high %v3120, %v3120
      %v3123 = vcombine.high %v2675, %v2675
      %v3125 = vunpack.c.l.s4 1983009808
      %v3126 = vunpack.c.0.s8 %v3125
      %v3127 = vlaneseq
      %v3128 = vshrl.u32 %v3127, 7
      %v3129 = vsub.s32 %v3126, %v3128
      %v3130 = vrot.slane %v2675, %v3129
      %v3132 = vunpack.c.l.s4 1983009808
      %v3133 = vunpack.c.0.s8 %v3132
      %v3134 = vlaneseq
      %v3135 = vshrl.u32 %v3134, 7
      %v3136 = vsub.s32 %v3133, %v3135
      %v3137 = vrot.slane %v3123, %v3136
      %v3138 = vcombine.high %v3130, %v3130
      %v3139 = vcombine.high %v3137, %v3137
      %v3140 = vcombine.high %v2676, %v2676
      %v3142 = vunpack.c.l.s4 1983009808
      %v3143 = vunpack.c.0.s8 %v3142
      %v3144 = vlaneseq
      %v3145 = vshrl.u32 %v3144, 7
      %v3146 = vsub.s32 %v3143, %v3145
      %v3147 = vrot.slane %v2676, %v3146
      %v3149 = vunpack.c.l.s4 1983009808
      %v3150 = vunpack.c.0.s8 %v3149
      %v3151 = vlaneseq
      %v3152 = vshrl.u32 %v3151, 7
      %v3153 = vsub.s32 %v3150, %v3152
      %v3154 = vrot.slane %v3140, %v3153
      %v3155 = vcombine.high %v3147, %v3147
      %v3156 = vcombine.high %v3154, %v3154
      %v3157 = vcombine.high %v2677, %v2677
      %v3159 = vunpack.c.l.s4 1983009808
      %v3160 = vunpack.c.0.s8 %v3159
      %v3161 = vlaneseq
      %v3162 = vshrl.u32 %v3161, 7
      %v3163 = vsub.s32 %v3160, %v3162
      %v3164 = vrot.slane %v2677, %v3163
      %v3166 = vunpack.c.l.s4 1983009808
      %v3167 = vunpack.c.0.s8 %v3166
      %v3168 = vlaneseq
      %v3169 = vshrl.u32 %v3168, 7
      %v3170 = vsub.s32 %v3167, %v3169
      %v3171 = vrot.slane %v3157, %v3170
      %v3172 = vcombine.high %v3164, %v3164
      %v3173 = vcombine.high %v3171, %v3171
      %v3174 = vcombine.high %v2678, %v2678
      %v3176 = vunpack.c.l.s4 1983009808
      %v3177 = vunpack.c.0.s8 %v3176
      %v3178 = vlaneseq
      %v3179 = vshrl.u32 %v3178, 7
      %v3180 = vsub.s32 %v3177, %v3179
      %v3181 = vrot.slane %v2678, %v3180
      %v3183 = vunpack.c.l.s4 1983009808
      %v3184 = vunpack.c.0.s8 %v3183
      %v3185 = vlaneseq
      %v3186 = vshrl.u32 %v3185, 7
      %v3187 = vsub.s32 %v3184, %v3186
      %v3188 = vrot.slane %v3174, %v3187
      %v3189 = vcombine.high %v3181, %v3181
      %v3190 = vcombine.high %v3188, %v3188
      %v3191 = vcombine.high %v2679, %v2679
      %v3193 = vunpack.c.l.s4 1983009808
      %v3194 = vunpack.c.0.s8 %v3193
      %v3195 = vlaneseq
      %v3196 = vshrl.u32 %v3195, 7
      %v3197 = vsub.s32 %v3194, %v3196
      %v3198 = vrot.slane %v2679, %v3197
      %v3200 = vunpack.c.l.s4 1983009808
      %v3201 = vunpack.c.0.s8 %v3200
      %v3202 = vlaneseq
      %v3203 = vshrl.u32 %v3202, 7
      %v3204 = vsub.s32 %v3201, %v3203
      %v3205 = vrot.slane %v3191, %v3204
      %v3206 = vcombine.high %v3198, %v3198
      %v3207 = vcombine.high %v3205, %v3205
      %v3208 = vcombine.high %v2680, %v2680
      %v3210 = vunpack.c.l.s4 1983009808
      %v3211 = vunpack.c.0.s8 %v3210
      %v3212 = vlaneseq
      %v3213 = vshrl.u32 %v3212, 7
      %v3214 = vsub.s32 %v3211, %v3213
      %v3215 = vrot.slane %v2680, %v3214
      %v3217 = vunpack.c.l.s4 1983009808
      %v3218 = vunpack.c.0.s8 %v3217
      %v3219 = vlaneseq
      %v3220 = vshrl.u32 %v3219, 7
      %v3221 = vsub.s32 %v3218, %v3220
      %v3222 = vrot.slane %v3208, %v3221
      %v3223 = vcombine.high %v3215, %v3215
      %v3224 = vcombine.high %v3222, %v3222
      %v3225 = vcombine.high %v2681, %v2681
      %v3227 = vunpack.c.l.s4 1983009808
      %v3228 = vunpack.c.0.s8 %v3227
      %v3229 = vlaneseq
      %v3230 = vshrl.u32 %v3229, 7
      %v3231 = vsub.s32 %v3228, %v3230
      %v3232 = vrot.slane %v2681, %v3231
      %v3234 = vunpack.c.l.s4 1983009808
      %v3235 = vunpack.c.0.s8 %v3234
      %v3236 = vlaneseq
      %v3237 = vshrl.u32 %v3236, 7
      %v3238 = vsub.s32 %v3235, %v3237
      %v3239 = vrot.slane %v3225, %v3238
      %v3240 = vcombine.high %v3232, %v3232
      %v3241 = vcombine.high %v3239, %v3239
      %v3242 = vcombine.high %v2682, %v2682
      %v3244 = vunpack.c.l.s4 1983009808
      %v3245 = vunpack.c.0.s8 %v3244
      %v3246 = vlaneseq
      %v3247 = vshrl.u32 %v3246, 7
      %v3248 = vsub.s32 %v3245, %v3247
      %v3249 = vrot.slane %v2682, %v3248
      %v3251 = vunpack.c.l.s4 1983009808
      %v3252 = vunpack.c.0.s8 %v3251
      %v3253 = vlaneseq
      %v3254 = vshrl.u32 %v3253, 7
      %v3255 = vsub.s32 %v3252, %v3254
      %v3256 = vrot.slane %v3242, %v3255
      %v3257 = vcombine.high %v3249, %v3249
      %v3258 = vcombine.high %v3256, %v3256
      %v3387 = vrot.slane %v2722, 7
      %v3388 = vrot.slane %v3387, 2
      %v3389 = vrot.slane %v2730, 7
      %v3390 = vrot.slane %v3389, 2
      %v3391 = vrot.slane %v2729, 7
      %v3392 = vrot.slane %v3391, 2
      %v3393 = vrot.slane %v2731, 7
      %v3394 = vrot.slane %v3393, 2
      %v3395 = vrot.slane %v2739, 7
      %v3396 = vrot.slane %v3395, 2
      %v3397 = vrot.slane %v2747, 7
      %v3398 = vrot.slane %v3397, 2
      %v3399 = vrot.slane %v2746, 7
      %v3400 = vrot.slane %v3399, 2
      %v3401 = vrot.slane %v2748, 7
      %v3402 = vrot.slane %v3401, 2
      %v3403 = vrot.slane %v2756, 7
      %v3404 = vrot.slane %v3403, 2
      %v3405 = vrot.slane %v2764, 7
      %v3406 = vrot.slane %v3405, 2
      %v3407 = vrot.slane %v2763, 7
      %v3408 = vrot.slane %v3407, 2
      %v3409 = vrot.slane %v2765, 7
      %v3410 = vrot.slane %v3409, 2
      %v3411 = vrot.slane %v2773, 7
      %v3412 = vrot.slane %v3411, 2
      %v3413 = vrot.slane %v2781, 7
      %v3414 = vrot.slane %v3413, 2
      %v3415 = vrot.slane %v2780, 7
      %v3416 = vrot.slane %v3415, 2
      %v3417 = vrot.slane %v2782, 7
      %v3418 = vrot.slane %v3417, 2
      %v3419 = vrot.slane %v2790, 7
      %v3420 = vrot.slane %v3419, 2
      %v3421 = vrot.slane %v2798, 7
      %v3422 = vrot.slane %v3421, 2
      %v3423 = vrot.slane %v2797, 7
      %v3424 = vrot.slane %v3423, 2
      %v3425 = vrot.slane %v2799, 7
      %v3426 = vrot.slane %v3425, 2
      %v3427 = vrot.slane %v2807, 7
      %v3428 = vrot.slane %v3427, 2
      %v3429 = vrot.slane %v2815, 7
      %v3430 = vrot.slane %v3429, 2
      %v3431 = vrot.slane %v2814, 7
      %v3432 = vrot.slane %v3431, 2
      %v3433 = vrot.slane %v2816, 7
      %v3434 = vrot.slane %v3433, 2
      %v3435 = vrot.slane %v2824, 7
      %v3436 = vrot.slane %v3435, 2
      %v3437 = vrot.slane %v2832, 7
      %v3438 = vrot.slane %v3437, 2
      %v3439 = vrot.slane %v2831, 7
      %v3440 = vrot.slane %v3439, 2
      %v3441 = vrot.slane %v2833, 7
      %v3442 = vrot.slane %v3441, 2
      %v3443 = vrot.slane %v2841, 7
      %v3444 = vrot.slane %v3443, 2
      %v3445 = vrot.slane %v2849, 7
      %v3446 = vrot.slane %v3445, 2
      %v3447 = vrot.slane %v2848, 7
      %v3448 = vrot.slane %v3447, 2
      %v3449 = vrot.slane %v2850, 7
      %v3450 = vrot.slane %v3449, 2
      %v3451 = vrot.slane %v2858, 7
      %v3452 = vrot.slane %v3451, 2
      %v3453 = vrot.slane %v2866, 7
      %v3454 = vrot.slane %v3453, 2
      %v3455 = vrot.slane %v2865, 7
      %v3456 = vrot.slane %v3455, 2
      %v3457 = vrot.slane %v2867, 7
      %v3458 = vrot.slane %v3457, 2
      %v3459 = vrot.slane %v2875, 7
      %v3460 = vrot.slane %v3459, 2
      %v3461 = vrot.slane %v2883, 7
      %v3462 = vrot.slane %v3461, 2
      %v3463 = vrot.slane %v2882, 7
      %v3464 = vrot.slane %v3463, 2
      %v3465 = vrot.slane %v2884, 7
      %v3466 = vrot.slane %v3465, 2
      %v3467 = vrot.slane %v2892, 7
      %v3468 = vrot.slane %v3467, 2
      %v3469 = vrot.slane %v2900, 7
      %v3470 = vrot.slane %v3469, 2
      %v3471 = vrot.slane %v2899, 7
      %v3472 = vrot.slane %v3471, 2
      %v3473 = vrot.slane %v2901, 7
      %v3474 = vrot.slane %v3473, 2
      %v3475 = vrot.slane %v2909, 7
      %v3476 = vrot.slane %v3475, 2
      %v3477 = vrot.slane %v2917, 7
      %v3478 = vrot.slane %v3477, 2
      %v3479 = vrot.slane %v2916, 7
      %v3480 = vrot.slane %v3479, 2
      %v3481 = vrot.slane %v2918, 7
      %v3482 = vrot.slane %v3481, 2
      %v3483 = vrot.slane %v2926, 7
      %v3484 = vrot.slane %v3483, 2
      %v3485 = vrot.slane %v2934, 7
      %v3486 = vrot.slane %v3485, 2
      %v3487 = vrot.slane %v2933, 7
      %v3488 = vrot.slane %v3487, 2
      %v3489 = vrot.slane %v2935, 7
      %v3490 = vrot.slane %v3489, 2
      %v3491 = vrot.slane %v2943, 7
      %v3492 = vrot.slane %v3491, 2
      %v3493 = vrot.slane %v2951, 7
      %v3494 = vrot.slane %v3493, 2
      %v3495 = vrot.slane %v2950, 7
      %v3496 = vrot.slane %v3495, 2
      %v3497 = vrot.slane %v2952, 7
      %v3498 = vrot.slane %v3497, 2
      %v3499 = vrot.slane %v2960, 7
      %v3500 = vrot.slane %v3499, 2
      %v3501 = vrot.slane %v2968, 7
      %v3502 = vrot.slane %v3501, 2
      %v3503 = vrot.slane %v2967, 7
      %v3504 = vrot.slane %v3503, 2
      %v3505 = vrot.slane %v2969, 7
      %v3506 = vrot.slane %v3505, 2
      %v3507 = vrot.slane %v2977, 7
      %v3508 = vrot.slane %v3507, 2
      %v3509 = vrot.slane %v2985, 7
      %v3510 = vrot.slane %v3509, 2
      %v3511 = vrot.slane %v2984, 7
      %v3512 = vrot.slane %v3511, 2
      %v3513 = vrot.slane %v2986, 7
      %v3514 = vrot.slane %v3513, 2
      %v3515 = vrot.slane %v2994, 7
      %v3516 = vrot.slane %v3515, 2
      %v3517 = vrot.slane %v3002, 7
      %v3518 = vrot.slane %v3517, 2
      %v3519 = vrot.slane %v3001, 7
      %v3520 = vrot.slane %v3519, 2
      %v3521 = vrot.slane %v3003, 7
      %v3522 = vrot.slane %v3521, 2
      %v3523 = vrot.slane %v3011, 7
      %v3524 = vrot.slane %v3523, 2
      %v3525 = vrot.slane %v3019, 7
      %v3526 = vrot.slane %v3525, 2
      %v3527 = vrot.slane %v3018, 7
      %v3528 = vrot.slane %v3527, 2
      %v3529 = vrot.slane %v3020, 7
      %v3530 = vrot.slane %v3529, 2
      %v3531 = vrot.slane %v3028, 7
      %v3532 = vrot.slane %v3531, 2
      %v3533 = vrot.slane %v3036, 7
      %v3534 = vrot.slane %v3533, 2
      %v3535 = vrot.slane %v3035, 7
      %v3536 = vrot.slane %v3535, 2
      %v3537 = vrot.slane %v3037, 7
      %v3538 = vrot.slane %v3537, 2
      %v3539 = vrot.slane %v3045, 7
      %v3540 = vrot.slane %v3539, 2
      %v3541 = vrot.slane %v3053, 7
      %v3542 = vrot.slane %v3541, 2
      %v3543 = vrot.slane %v3052, 7
      %v3544 = vrot.slane %v3543, 2
      %v3545 = vrot.slane %v3054, 7
      %v3546 = vrot.slane %v3545, 2
      %v3547 = vrot.slane %v3062, 7
      %v3548 = vrot.slane %v3547, 2
      %v3549 = vrot.slane %v3070, 7
      %v3550 = vrot.slane %v3549, 2
      %v3551 = vrot.slane %v3069, 7
      %v3552 = vrot.slane %v3551, 2
      %v3553 = vrot.slane %v3071, 7
      %v3554 = vrot.slane %v3553, 2
      %v3555 = vrot.slane %v3079, 7
      %v3556 = vrot.slane %v3555, 2
      %v3557 = vrot.slane %v3087, 7
      %v3558 = vrot.slane %v3557, 2
      %v3559 = vrot.slane %v3086, 7
      %v3560 = vrot.slane %v3559, 2
      %v3561 = vrot.slane %v3088, 7
      %v3562 = vrot.slane %v3561, 2
      %v3563 = vrot.slane %v3096, 7
      %v3564 = vrot.slane %v3563, 2
      %v3565 = vrot.slane %v3104, 7
      %v3566 = vrot.slane %v3565, 2
      %v3567 = vrot.slane %v3103, 7
      %v3568 = vrot.slane %v3567, 2
      %v3569 = vrot.slane %v3105, 7
      %v3570 = vrot.slane %v3569, 2
      %v3571 = vrot.slane %v3113, 7
      %v3572 = vrot.slane %v3571, 2
      %v3573 = vrot.slane %v3121, 7
      %v3574 = vrot.slane %v3573, 2
      %v3575 = vrot.slane %v3120, 7
      %v3576 = vrot.slane %v3575, 2
      %v3577 = vrot.slane %v3122, 7
      %v3578 = vrot.slane %v3577, 2
      %v3579 = vrot.slane %v3130, 7
      %v3580 = vrot.slane %v3579, 2
      %v3581 = vrot.slane %v3138, 7
      %v3582 = vrot.slane %v3581, 2
      %v3583 = vrot.slane %v3137, 7
      %v3584 = vrot.slane %v3583, 2
      %v3585 = vrot.slane %v3139, 7
      %v3586 = vrot.slane %v3585, 2
      %v3587 = vrot.slane %v3147, 7
      %v3588 = vrot.slane %v3587, 2
      %v3589 = vrot.slane %v3155, 7
      %v3590 = vrot.slane %v3589, 2
      %v3591 = vrot.slane %v3154, 7
      %v3592 = vrot.slane %v3591, 2
      %v3593 = vrot.slane %v3156, 7
      %v3594 = vrot.slane %v3593, 2
      %v3595 = vrot.slane %v3164, 7
      %v3596 = vrot.slane %v3595, 2
      %v3597 = vrot.slane %v3172, 7
      %v3598 = vrot.slane %v3597, 2
      %v3599 = vrot.slane %v3171, 7
      %v3600 = vrot.slane %v3599, 2
      %v3601 = vrot.slane %v3173, 7
      %v3602 = vrot.slane %v3601, 2
      %v3603 = vrot.slane %v3181, 7
      %v3604 = vrot.slane %v3603, 2
      %v3605 = vrot.slane %v3189, 7
      %v3606 = vrot.slane %v3605, 2
      %v3607 = vrot.slane %v3188, 7
      %v3608 = vrot.slane %v3607, 2
      %v3609 = vrot.slane %v3190, 7
      %v3610 = vrot.slane %v3609, 2
      %v3611 = vrot.slane %v3198, 7
      %v3612 = vrot.slane %v3611, 2
      %v3613 = vrot.slane %v3206, 7
      %v3614 = vrot.slane %v3613, 2
      %v3615 = vrot.slane %v3205, 7
      %v3616 = vrot.slane %v3615, 2
      %v3617 = vrot.slane %v3207, 7
      %v3618 = vrot.slane %v3617, 2
      %v3619 = vrot.slane %v3215, 7
      %v3620 = vrot.slane %v3619, 2
      %v3621 = vrot.slane %v3223, 7
      %v3622 = vrot.slane %v3621, 2
      %v3623 = vrot.slane %v3222, 7
      %v3624 = vrot.slane %v3623, 2
      %v3625 = vrot.slane %v3224, 7
      %v3626 = vrot.slane %v3625, 2
      %v3627 = vrot.slane %v3232, 7
      %v3628 = vrot.slane %v3627, 2
      %v3629 = vrot.slane %v3240, 7
      %v3630 = vrot.slane %v3629, 2
      %v3631 = vrot.slane %v3239, 7
      %v3632 = vrot.slane %v3631, 2
      %v3633 = vrot.slane %v3241, 7
      %v3634 = vrot.slane %v3633, 2
      %v3635 = vrot.slane %v3249, 7
      %v3636 = vrot.slane %v3635, 2
      %v3637 = vrot.slane %v3257, 7
      %v3638 = vrot.slane %v3637, 2
      %v3639 = vrot.slane %v3256, 7
      %v3640 = vrot.slane %v3639, 2
      %v3641 = vrot.slane %v3258, 7
      %v3642 = vrot.slane %v3641, 2
      %v3771 = vadd.f32 %v2722, %v3388
      %v3772 = vadd.f32 %v2730, %v3390
      %v3773 = vadd.f32 %v2729, %v3392
      %v3774 = vadd.f32 %v2731, %v3394
      %v3775 = vadd.f32 %v2739, %v3396
      %v3776 = vadd.f32 %v2747, %v3398
      %v3777 = vadd.f32 %v2746, %v3400
      %v3778 = vadd.f32 %v2748, %v3402
      %v3779 = vadd.f32 %v2756, %v3404
      %v3780 = vadd.f32 %v2764, %v3406
      %v3781 = vadd.f32 %v2763, %v3408
      %v3782 = vadd.f32 %v2765, %v3410
      %v3783 = vadd.f32 %v2773, %v3412
      %v3784 = vadd.f32 %v2781, %v3414
      %v3785 = vadd.f32 %v2780, %v3416
      %v3786 = vadd.f32 %v2782, %v3418
      %v3787 = vadd.f32 %v2790, %v3420
      %v3788 = vadd.f32 %v2798, %v3422
      %v3789 = vadd.f32 %v2797, %v3424
      %v3790 = vadd.f32 %v2799, %v3426
      %v3791 = vadd.f32 %v2807, %v3428
      %v3792 = vadd.f32 %v2815, %v3430
      %v3793 = vadd.f32 %v2814, %v3432
      %v3794 = vadd.f32 %v2816, %v3434
      %v3795 = vadd.f32 %v2824, %v3436
      %v3796 = vadd.f32 %v2832, %v3438
      %v3797 = vadd.f32 %v2831, %v3440
      %v3798 = vadd.f32 %v2833, %v3442
      %v3799 = vadd.f32 %v2841, %v3444
      %v3800 = vadd.f32 %v2849, %v3446
      %v3801 = vadd.f32 %v2848, %v3448
      %v3802 = vadd.f32 %v2850, %v3450
      %v3803 = vadd.f32 %v2858, %v3452
      %v3804 = vadd.f32 %v2866, %v3454
      %v3805 = vadd.f32 %v2865, %v3456
      %v3806 = vadd.f32 %v2867, %v3458
      %v3807 = vadd.f32 %v2875, %v3460
      %v3808 = vadd.f32 %v2883, %v3462
      %v3809 = vadd.f32 %v2882, %v3464
      %v3810 = vadd.f32 %v2884, %v3466
      %v3811 = vadd.f32 %v2892, %v3468
      %v3812 = vadd.f32 %v2900, %v3470
      %v3813 = vadd.f32 %v2899, %v3472
      %v3814 = vadd.f32 %v2901, %v3474
      %v3815 = vadd.f32 %v2909, %v3476
      %v3816 = vadd.f32 %v2917, %v3478
      %v3817 = vadd.f32 %v2916, %v3480
      %v3818 = vadd.f32 %v2918, %v3482
      %v3819 = vadd.f32 %v2926, %v3484
      %v3820 = vadd.f32 %v2934, %v3486
      %v3821 = vadd.f32 %v2933, %v3488
      %v3822 = vadd.f32 %v2935, %v3490
      %v3823 = vadd.f32 %v2943, %v3492
      %v3824 = vadd.f32 %v2951, %v3494
      %v3825 = vadd.f32 %v2950, %v3496
      %v3826 = vadd.f32 %v2952, %v3498
      %v3827 = vadd.f32 %v2960, %v3500
      %v3828 = vadd.f32 %v2968, %v3502
      %v3829 = vadd.f32 %v2967, %v3504
      %v3830 = vadd.f32 %v2969, %v3506
      %v3831 = vadd.f32 %v2977, %v3508
      %v3832 = vadd.f32 %v2985, %v3510
      %v3833 = vadd.f32 %v2984, %v3512
      %v3834 = vadd.f32 %v2986, %v3514
      %v3835 = vadd.f32 %v2994, %v3516
      %v3836 = vadd.f32 %v3002, %v3518
      %v3837 = vadd.f32 %v3001, %v3520
      %v3838 = vadd.f32 %v3003, %v3522
      %v3839 = vadd.f32 %v3011, %v3524
      %v3840 = vadd.f32 %v3019, %v3526
      %v3841 = vadd.f32 %v3018, %v3528
      %v3842 = vadd.f32 %v3020, %v3530
      %v3843 = vadd.f32 %v3028, %v3532
      %v3844 = vadd.f32 %v3036, %v3534
      %v3845 = vadd.f32 %v3035, %v3536
      %v3846 = vadd.f32 %v3037, %v3538
      %v3847 = vadd.f32 %v3045, %v3540
      %v3848 = vadd.f32 %v3053, %v3542
      %v3849 = vadd.f32 %v3052, %v3544
      %v3850 = vadd.f32 %v3054, %v3546
      %v3851 = vadd.f32 %v3062, %v3548
      %v3852 = vadd.f32 %v3070, %v3550
      %v3853 = vadd.f32 %v3069, %v3552
      %v3854 = vadd.f32 %v3071, %v3554
      %v3855 = vadd.f32 %v3079, %v3556
      %v3856 = vadd.f32 %v3087, %v3558
      %v3857 = vadd.f32 %v3086, %v3560
      %v3858 = vadd.f32 %v3088, %v3562
      %v3859 = vadd.f32 %v3096, %v3564
      %v3860 = vadd.f32 %v3104, %v3566
      %v3861 = vadd.f32 %v3103, %v3568
      %v3862 = vadd.f32 %v3105, %v3570
      %v3863 = vadd.f32 %v3113, %v3572
      %v3864 = vadd.f32 %v3121, %v3574
      %v3865 = vadd.f32 %v3120, %v3576
      %v3866 = vadd.f32 %v3122, %v3578
      %v3867 = vadd.f32 %v3130, %v3580
      %v3868 = vadd.f32 %v3138, %v3582
      %v3869 = vadd.f32 %v3137, %v3584
      %v3870 = vadd.f32 %v3139, %v3586
      %v3871 = vadd.f32 %v3147, %v3588
      %v3872 = vadd.f32 %v3155, %v3590
      %v3873 = vadd.f32 %v3154, %v3592
      %v3874 = vadd.f32 %v3156, %v3594
      %v3875 = vadd.f32 %v3164, %v3596
      %v3876 = vadd.f32 %v3172, %v3598
      %v3877 = vadd.f32 %v3171, %v3600
      %v3878 = vadd.f32 %v3173, %v3602
      %v3879 = vadd.f32 %v3181, %v3604
      %v3880 = vadd.f32 %v3189, %v3606
      %v3881 = vadd.f32 %v3188, %v3608
      %v3882 = vadd.f32 %v3190, %v3610
      %v3883 = vadd.f32 %v3198, %v3612
      %v3884 = vadd.f32 %v3206, %v3614
      %v3885 = vadd.f32 %v3205, %v3616
      %v3886 = vadd.f32 %v3207, %v3618
      %v3887 = vadd.f32 %v3215, %v3620
      %v3888 = vadd.f32 %v3223, %v3622
      %v3889 = vadd.f32 %v3222, %v3624
      %v3890 = vadd.f32 %v3224, %v3626
      %v3891 = vadd.f32 %v3232, %v3628
      %v3892 = vadd.f32 %v3240, %v3630
      %v3893 = vadd.f32 %v3239, %v3632
      %v3894 = vadd.f32 %v3241, %v3634
      %v3895 = vadd.f32 %v3249, %v3636
      %v3896 = vadd.f32 %v3257, %v3638
      %v3897 = vadd.f32 %v3256, %v3640
      %v3898 = vadd.f32 %v3258, %v3642
      %v3899 = vadd.f32 %v3771, %v3779
      %v3900 = vadd.f32 %v3772, %v3780
      %v3901 = vadd.f32 %v3773, %v3781
      %v3902 = vadd.f32 %v3774, %v3782
      %v3903 = vadd.f32 %v3775, %v3783
      %v3904 = vadd.f32 %v3776, %v3784
      %v3905 = vadd.f32 %v3777, %v3785
      %v3906 = vadd.f32 %v3778, %v3786
      %v3907 = vadd.f32 %v3787, %v3795
      %v3908 = vadd.f32 %v3788, %v3796
      %v3909 = vadd.f32 %v3789, %v3797
      %v3910 = vadd.f32 %v3790, %v3798
      %v3911 = vadd.f32 %v3791, %v3799
      %v3912 = vadd.f32 %v3792, %v3800
      %v3913 = vadd.f32 %v3793, %v3801
      %v3914 = vadd.f32 %v3794, %v3802
      %v3915 = vadd.f32 %v3803, %v3811
      %v3916 = vadd.f32 %v3804, %v3812
      %v3917 = vadd.f32 %v3805, %v3813
      %v3918 = vadd.f32 %v3806, %v3814
      %v3919 = vadd.f32 %v3807, %v3815
      %v3920 = vadd.f32 %v3808, %v3816
      %v3921 = vadd.f32 %v3809, %v3817
      %v3922 = vadd.f32 %v3810, %v3818
      %v3923 = vadd.f32 %v3819, %v3827
      %v3924 = vadd.f32 %v3820, %v3828
      %v3925 = vadd.f32 %v3821, %v3829
      %v3926 = vadd.f32 %v3822, %v3830
      %v3927 = vadd.f32 %v3823, %v3831
      %v3928 = vadd.f32 %v3824, %v3832
      %v3929 = vadd.f32 %v3825, %v3833
      %v3930 = vadd.f32 %v3826, %v3834
      %v3931 = vadd.f32 %v3835, %v3843
      %v3932 = vadd.f32 %v3836, %v3844
      %v3933 = vadd.f32 %v3837, %v3845
      %v3934 = vadd.f32 %v3838, %v3846
      %v3935 = vadd.f32 %v3839, %v3847
      %v3936 = vadd.f32 %v3840, %v3848
      %v3937 = vadd.f32 %v3841, %v3849
      %v3938 = vadd.f32 %v3842, %v3850
      %v3939 = vadd.f32 %v3851, %v3859
      %v3940 = vadd.f32 %v3852, %v3860
      %v3941 = vadd.f32 %v3853, %v3861
      %v3942 = vadd.f32 %v3854, %v3862
      %v3943 = vadd.f32 %v3855, %v3863
      %v3944 = vadd.f32 %v3856, %v3864
      %v3945 = vadd.f32 %v3857, %v3865
      %v3946 = vadd.f32 %v3858, %v3866
      %v3947 = vadd.f32 %v3867, %v3875
      %v3948 = vadd.f32 %v3868, %v3876
      %v3949 = vadd.f32 %v3869, %v3877
      %v3950 = vadd.f32 %v3870, %v3878
      %v3951 = vadd.f32 %v3871, %v3879
      %v3952 = vadd.f32 %v3872, %v3880
      %v3953 = vadd.f32 %v3873, %v3881
      %v3954 = vadd.f32 %v3874, %v3882
      %v3955 = vadd.f32 %v3883, %v3891
      %v3956 = vadd.f32 %v3884, %v3892
      %v3957 = vadd.f32 %v3885, %v3893
      %v3958 = vadd.f32 %v3886, %v3894
      %v3959 = vadd.f32 %v3887, %v3895
      %v3960 = vadd.f32 %v3888, %v3896
      %v3961 = vadd.f32 %v3889, %v3897
      %v3962 = vadd.f32 %v3890, %v3898
      %v3963 = vmul.f32 %v3899, 0.25
      %v3964 = vmul.f32 %v3900, 0.25
      %v3965 = vmul.f32 %v3901, 0.25
      %v3966 = vmul.f32 %v3902, 0.25
      %v3967 = vmul.f32 %v3903, 0.25
      %v3968 = vmul.f32 %v3904, 0.25
      %v3969 = vmul.f32 %v3905, 0.25
      %v3970 = vmul.f32 %v3906, 0.25
      %v3971 = vmul.f32 %v3907, 0.25
      %v3972 = vmul.f32 %v3908, 0.25
      %v3973 = vmul.f32 %v3909, 0.25
      %v3974 = vmul.f32 %v3910, 0.25
      %v3975 = vmul.f32 %v3911, 0.25
      %v3976 = vmul.f32 %v3912, 0.25
      %v3977 = vmul.f32 %v3913, 0.25
      %v3978 = vmul.f32 %v3914, 0.25
      %v3979 = vmul.f32 %v3915, 0.25
      %v3980 = vmul.f32 %v3916, 0.25
      %v3981 = vmul.f32 %v3917, 0.25
      %v3982 = vmul.f32 %v3918, 0.25
      %v3983 = vmul.f32 %v3919, 0.25
      %v3984 = vmul.f32 %v3920, 0.25
      %v3985 = vmul.f32 %v3921, 0.25
      %v3986 = vmul.f32 %v3922, 0.25
      %v3987 = vmul.f32 %v3923, 0.25
      %v3988 = vmul.f32 %v3924, 0.25
      %v3989 = vmul.f32 %v3925, 0.25
      %v3990 = vmul.f32 %v3926, 0.25
      %v3991 = vmul.f32 %v3927, 0.25
      %v3992 = vmul.f32 %v3928, 0.25
      %v3993 = vmul.f32 %v3929, 0.25
      %v3994 = vmul.f32 %v3930, 0.25
      %v3995 = vmul.f32 %v3931, 0.25
      %v3996 = vmul.f32 %v3932, 0.25
      %v3997 = vmul.f32 %v3933, 0.25
      %v3998 = vmul.f32 %v3934, 0.25
      %v3999 = vmul.f32 %v3935, 0.25
      %v4000 = vmul.f32 %v3936, 0.25
      %v4001 = vmul.f32 %v3937, 0.25
      %v4002 = vmul.f32 %v3938, 0.25
      %v4003 = vmul.f32 %v3939, 0.25
      %v4004 = vmul.f32 %v3940, 0.25
      %v4005 = vmul.f32 %v3941, 0.25
      %v4006 = vmul.f32 %v3942, 0.25
      %v4007 = vmul.f32 %v3943, 0.25
      %v4008 = vmul.f32 %v3944, 0.25
      %v4009 = vmul.f32 %v3945, 0.25
      %v4010 = vmul.f32 %v3946, 0.25
      %v4011 = vmul.f32 %v3947, 0.25
      %v4012 = vmul.f32 %v3948, 0.25
      %v4013 = vmul.f32 %v3949, 0.25
      %v4014 = vmul.f32 %v3950, 0.25
      %v4015 = vmul.f32 %v3951, 0.25
      %v4016 = vmul.f32 %v3952, 0.25
      %v4017 = vmul.f32 %v3953, 0.25
      %v4018 = vmul.f32 %v3954, 0.25
      %v4019 = vmul.f32 %v3955, 0.25
      %v4020 = vmul.f32 %v3956, 0.25
      %v4021 = vmul.f32 %v3957, 0.25
      %v4022 = vmul.f32 %v3958, 0.25
      %v4023 = vmul.f32 %v3959, 0.25
      %v4024 = vmul.f32 %v3960, 0.25
      %v4025 = vmul.f32 %v3961, 0.25
      %v4026 = vmul.f32 %v3962, 0.25
      %v4027 = vld [vmem:[%s266] sm:$0xff]
      %v4028 = vld [vmem:[%s266 + $0x8] sm:$0xff]
      %v4029 = vld [vmem:[%s266 + $0x10] sm:$0xff]
      %v4030 = vld [vmem:[%s266 + $0x18] sm:$0xff]
      %v4031 = vld [vmem:[%s266 + $0x20] sm:$0xff]
      %v4032 = vld [vmem:[%s266 + $0x28] sm:$0xff]
      %v4033 = vld [vmem:[%s266 + $0x30] sm:$0xff]
      %v4034 = vld [vmem:[%s266 + $0x38] sm:$0xff]
      %v4035 = vld [vmem:[%s4] sm:$0xf]
      %v4036 = vld [vmem:[%s5] sm:$0x1]
      %v4038 = vlaneseq
      %v4039 = vshrl.u32 %v4038, 7
      %v4040 = vsub.s32 0, %v4039
      %v4041 = vrot.slane %v4036, %v4040
      %v4044 = vsel %vm1745, %v4027, 0
      %v4047 = vsel %vm1745, %v4028, 0
      %v4050 = vsel %vm1745, %v4029, 0
      %v4053 = vsel %vm1745, %v4030, 0
      %v4056 = vsel %vm1745, %v4031, 0
      %v4059 = vsel %vm1745, %v4032, 0
      %v4062 = vsel %vm1745, %v4033, 0
      %v4065 = vsel %vm1745, %v4034, 0
      %v4068 = vsel %vm2294, %v4035, 0
      %4070 = vmatprep.subr.mxu0 0.0
      %4071 = vmatpush1.msra.mxu0 %v4068
      %4072 = vmatprep.subr.mxu0 0.0
      %4073 = vmatpush1.msra.mxu0 0.0
      %4074 = vmatprep.subr.mxu0 0.0
      %4075 = vmatpush1.msra.mxu0 0.0
      %4076 = vmatprep.subr.mxu0 0.0
      %4077 = vmatpush1.msra.mxu0 0.0
      %4078 = vmatprep.subr.mxu0 0.0
      %4079 = vmatpush1.msra.mxu0 0.0
      %4080 = vmatprep.subr.mxu0 0.0
      %4081 = vmatpush1.msra.mxu0 0.0
      %4082 = vmatprep.subr.mxu0 0.0
      %4083 = vmatpush1.msra.mxu0 0.0
      %4084 = vmatprep.subr.mxu0 0.0
      %4085 = vmatpush1.msra.mxu0 0.0
      %4086 = vmatprep.subr.mxu0 0.0
      %4087 = vmatpush1.msra.mxu0 0.0
      %4088 = vmatprep.subr.mxu0 0.0
      %4089 = vmatpush1.msra.mxu0 0.0
      %4090 = vmatprep.subr.mxu0 0.0
      %4091 = vmatpush1.msra.mxu0 0.0
      %4092 = vmatprep.subr.mxu0 0.0
      %4093 = vmatpush1.msra.mxu0 0.0
      %4094 = vmatprep.subr.mxu0 0.0
      %4095 = vmatpush1.msra.mxu0 0.0
      %4096 = vmatprep.subr.mxu0 0.0
      %4097 = vmatpush1.msra.mxu0 0.0
      %4098 = vmatprep.subr.mxu0 0.0
      %4099 = vmatpush1.msra.mxu0 0.0
      %4100 = vmatprep.subr.mxu0 0.0
      %4101 = vmatpush1.msra.mxu0 0.0
      %4102 = vmatprep.subr.mxu0 0.0
      %4103 = vmatpush1.msra.mxu0 0.0
      %4104 = vmatprep.subr.mxu0 0.0
      %4105 = vmatpush1.msra.mxu0 0.0
      %4106 = vmatprep.subr.mxu0 0.0
      %4107 = vmatpush1.msra.mxu0 0.0
      %4108 = vmatprep.subr.mxu0 0.0
      %4109 = vmatpush1.msra.mxu0 0.0
      %4110 = vmatprep.subr.mxu0 0.0
      %4111 = vmatpush1.msra.mxu0 0.0
      %4112 = vmatprep.subr.mxu0 0.0
      %4113 = vmatpush1.msra.mxu0 0.0
      %4114 = vmatprep.subr.mxu0 0.0
      %4115 = vmatpush1.msra.mxu0 0.0
      %4116 = vmatprep.subr.mxu0 0.0
      %4117 = vmatpush1.msra.mxu0 0.0
      %4118 = vmatprep.subr.mxu0 0.0
      %4119 = vmatpush1.msra.mxu0 0.0
      %4120 = vmatprep.subr.mxu0 0.0
      %4121 = vmatpush1.msra.mxu0 0.0
      %4122 = vmatprep.subr.mxu0 0.0
      %4123 = vmatpush1.msra.mxu0 0.0
      %4124 = vmatprep.subr.mxu0 0.0
      %4125 = vmatpush1.msra.mxu0 0.0
      %4126 = vmatprep.subr.mxu0 0.0
      %4127 = vmatpush1.msra.mxu0 0.0
      %4128 = vmatprep.subr.mxu0 0.0
      %4129 = vmatpush1.msra.mxu0 0.0
      %4130 = vmatprep.subr.mxu0 0.0
      %4131 = vmatpush1.msra.mxu0 0.0
      %4132 = vmatprep.subr.mxu0 0.0
      %4133 = vmatpush1.msra.mxu0 0.0
      %4134 = vmatprep.mubr.f32.mxu0 0.0
      %4135 = vmatmul.mubr.f32.gmra.mrb[0].mxu0 %v4044
      %v4136 = vpop.f32.mrb[0].mxu0
      %v4137 = vadd.f32 %v4041, %v4136
      %v4138 = vpop.f32.mrb[0].mxu0
      %4139 = vmatprep.mubr.f32.mxu0 0.0
      %4140 = vmatmul.mubr.f32.gmra.mrb[0].mxu0 %v4047
      %v4141 = vpop.f32.mrb[0].mxu0
      %v4142 = vadd.f32 %v4041, %v4141
      %v4143 = vpop.f32.mrb[0].mxu0
      %4144 = vmatprep.mubr.f32.mxu0 0.0
      %4145 = vmatmul.mubr.f32.gmra.mrb[0].mxu0 %v4050
      %v4146 = vpop.f32.mrb[0].mxu0
      %v4147 = vadd.f32 %v4041, %v4146
      %v4148 = vpop.f32.mrb[0].mxu0
      %4149 = vmatprep.mubr.f32.mxu0 0.0
      %4150 = vmatmul.mubr.f32.gmra.mrb[0].mxu0 %v4053
      %v4151 = vpop.f32.mrb[0].mxu0
      %v4152 = vadd.f32 %v4041, %v4151
      %v4153 = vpop.f32.mrb[0].mxu0
      %4154 = vmatprep.mubr.f32.mxu0 0.0
      %4155 = vmatmul.mubr.f32.gmra.mrb[0].mxu0 %v4056
      %v4156 = vpop.f32.mrb[0].mxu0
      %v4157 = vadd.f32 %v4041, %v4156
      %v4158 = vpop.f32.mrb[0].mxu0
      %4159 = vmatprep.mubr.f32.mxu0 0.0
      %4160 = vmatmul.mubr.f32.gmra.mrb[0].mxu0 %v4059
      %v4161 = vpop.f32.mrb[0].mxu0
      %v4162 = vadd.f32 %v4041, %v4161
      %v4163 = vpop.f32.mrb[0].mxu0
      %4164 = vmatprep.mubr.f32.mxu0 0.0
      %4165 = vmatmul.mubr.f32.gmra.mrb[0].mxu0 %v4062
      %v4166 = vpop.f32.mrb[0].mxu0
      %v4167 = vadd.f32 %v4041, %v4166
      %v4168 = vpop.f32.mrb[0].mxu0
      %4169 = vmatprep.mubr.f32.mxu0 0.0
      %4170 = vmatmul.mubr.f32.gmra.mrb[0].mxu0 %v4065
      %v4171 = vpop.f32.mrb[0].mxu0
      %v4172 = vadd.f32 %v4041, %v4171
      %v4173 = vpop.f32.mrb[0].mxu0
      %4174 = vdwg.mxu0
      %v4183 = vcombine.high %v4137, %v4137
      %v4185 = vunpack.c.l.s4 1983009808
      %v4186 = vunpack.c.0.s8 %v4185
      %v4187 = vlaneseq
      %v4188 = vshrl.u32 %v4187, 7
      %v4189 = vsub.s32 %v4186, %v4188
      %v4190 = vrot.slane %v4137, %v4189
      %v4192 = vunpack.c.l.s4 1983009808
      %v4193 = vunpack.c.0.s8 %v4192
      %v4194 = vlaneseq
      %v4195 = vshrl.u32 %v4194, 7
      %v4196 = vsub.s32 %v4193, %v4195
      %v4197 = vrot.slane %v4183, %v4196
      %v4198 = vcombine.high %v4190, %v4190
      %v4199 = vcombine.high %v4197, %v4197
      %v4200 = vcombine.high %v4142, %v4142
      %v4202 = vunpack.c.l.s4 1983009808
      %v4203 = vunpack.c.0.s8 %v4202
      %v4204 = vlaneseq
      %v4205 = vshrl.u32 %v4204, 7
      %v4206 = vsub.s32 %v4203, %v4205
      %v4207 = vrot.slane %v4142, %v4206
      %v4209 = vunpack.c.l.s4 1983009808
      %v4210 = vunpack.c.0.s8 %v4209
      %v4211 = vlaneseq
      %v4212 = vshrl.u32 %v4211, 7
      %v4213 = vsub.s32 %v4210, %v4212
      %v4214 = vrot.slane %v4200, %v4213
      %v4215 = vcombine.high %v4207, %v4207
      %v4216 = vcombine.high %v4214, %v4214
      %v4217 = vcombine.high %v4147, %v4147
      %v4219 = vunpack.c.l.s4 1983009808
      %v4220 = vunpack.c.0.s8 %v4219
      %v4221 = vlaneseq
      %v4222 = vshrl.u32 %v4221, 7
      %v4223 = vsub.s32 %v4220, %v4222
      %v4224 = vrot.slane %v4147, %v4223
      %v4226 = vunpack.c.l.s4 1983009808
      %v4227 = vunpack.c.0.s8 %v4226
      %v4228 = vlaneseq
      %v4229 = vshrl.u32 %v4228, 7
      %v4230 = vsub.s32 %v4227, %v4229
      %v4231 = vrot.slane %v4217, %v4230
      %v4232 = vcombine.high %v4224, %v4224
      %v4233 = vcombine.high %v4231, %v4231
      %v4234 = vcombine.high %v4152, %v4152
      %v4236 = vunpack.c.l.s4 1983009808
      %v4237 = vunpack.c.0.s8 %v4236
      %v4238 = vlaneseq
      %v4239 = vshrl.u32 %v4238, 7
      %v4240 = vsub.s32 %v4237, %v4239
      %v4241 = vrot.slane %v4152, %v4240
      %v4243 = vunpack.c.l.s4 1983009808
      %v4244 = vunpack.c.0.s8 %v4243
      %v4245 = vlaneseq
      %v4246 = vshrl.u32 %v4245, 7
      %v4247 = vsub.s32 %v4244, %v4246
      %v4248 = vrot.slane %v4234, %v4247
      %v4249 = vcombine.high %v4241, %v4241
      %v4250 = vcombine.high %v4248, %v4248
      %v4251 = vcombine.high %v4157, %v4157
      %v4253 = vunpack.c.l.s4 1983009808
      %v4254 = vunpack.c.0.s8 %v4253
      %v4255 = vlaneseq
      %v4256 = vshrl.u32 %v4255, 7
      %v4257 = vsub.s32 %v4254, %v4256
      %v4258 = vrot.slane %v4157, %v4257
      %v4260 = vunpack.c.l.s4 1983009808
      %v4261 = vunpack.c.0.s8 %v4260
      %v4262 = vlaneseq
      %v4263 = vshrl.u32 %v4262, 7
      %v4264 = vsub.s32 %v4261, %v4263
      %v4265 = vrot.slane %v4251, %v4264
      %v4266 = vcombine.high %v4258, %v4258
      %v4267 = vcombine.high %v4265, %v4265
      %v4268 = vcombine.high %v4162, %v4162
      %v4270 = vunpack.c.l.s4 1983009808
      %v4271 = vunpack.c.0.s8 %v4270
      %v4272 = vlaneseq
      %v4273 = vshrl.u32 %v4272, 7
      %v4274 = vsub.s32 %v4271, %v4273
      %v4275 = vrot.slane %v4162, %v4274
      %v4277 = vunpack.c.l.s4 1983009808
      %v4278 = vunpack.c.0.s8 %v4277
      %v4279 = vlaneseq
      %v4280 = vshrl.u32 %v4279, 7
      %v4281 = vsub.s32 %v4278, %v4280
      %v4282 = vrot.slane %v4268, %v4281
      %v4283 = vcombine.high %v4275, %v4275
      %v4284 = vcombine.high %v4282, %v4282
      %v4285 = vcombine.high %v4167, %v4167
      %v4287 = vunpack.c.l.s4 1983009808
      %v4288 = vunpack.c.0.s8 %v4287
      %v4289 = vlaneseq
      %v4290 = vshrl.u32 %v4289, 7
      %v4291 = vsub.s32 %v4288, %v4290
      %v4292 = vrot.slane %v4167, %v4291
      %v4294 = vunpack.c.l.s4 1983009808
      %v4295 = vunpack.c.0.s8 %v4294
      %v4296 = vlaneseq
      %v4297 = vshrl.u32 %v4296, 7
      %v4298 = vsub.s32 %v4295, %v4297
      %v4299 = vrot.slane %v4285, %v4298
      %v4300 = vcombine.high %v4292, %v4292
      %v4301 = vcombine.high %v4299, %v4299
      %v4302 = vcombine.high %v4172, %v4172
      %v4304 = vunpack.c.l.s4 1983009808
      %v4305 = vunpack.c.0.s8 %v4304
      %v4306 = vlaneseq
      %v4307 = vshrl.u32 %v4306, 7
      %v4308 = vsub.s32 %v4305, %v4307
      %v4309 = vrot.slane %v4172, %v4308
      %v4311 = vunpack.c.l.s4 1983009808
      %v4312 = vunpack.c.0.s8 %v4311
      %v4313 = vlaneseq
      %v4314 = vshrl.u32 %v4313, 7
      %v4315 = vsub.s32 %v4312, %v4314
      %v4316 = vrot.slane %v4302, %v4315
      %v4317 = vcombine.high %v4309, %v4309
      %v4318 = vcombine.high %v4316, %v4316
      %v4319 = vrot.slane %v4190, 1
      %v4320 = vrot.slane %v4198, 1
      %v4321 = vrot.slane %v4197, 1
      %v4322 = vrot.slane %v4199, 1
      %v4323 = vrot.slane %v4207, 1
      %v4324 = vrot.slane %v4215, 1
      %v4325 = vrot.slane %v4214, 1
      %v4326 = vrot.slane %v4216, 1
      %v4327 = vrot.slane %v4224, 1
      %v4328 = vrot.slane %v4232, 1
      %v4329 = vrot.slane %v4231, 1
      %v4330 = vrot.slane %v4233, 1
      %v4331 = vrot.slane %v4241, 1
      %v4332 = vrot.slane %v4249, 1
      %v4333 = vrot.slane %v4248, 1
      %v4334 = vrot.slane %v4250, 1
      %v4335 = vrot.slane %v4258, 1
      %v4336 = vrot.slane %v4266, 1
      %v4337 = vrot.slane %v4265, 1
      %v4338 = vrot.slane %v4267, 1
      %v4339 = vrot.slane %v4275, 1
      %v4340 = vrot.slane %v4283, 1
      %v4341 = vrot.slane %v4282, 1
      %v4342 = vrot.slane %v4284, 1
      %v4343 = vrot.slane %v4292, 1
      %v4344 = vrot.slane %v4300, 1
      %v4345 = vrot.slane %v4299, 1
      %v4346 = vrot.slane %v4301, 1
      %v4347 = vrot.slane %v4309, 1
      %v4348 = vrot.slane %v4317, 1
      %v4349 = vrot.slane %v4316, 1
      %v4350 = vrot.slane %v4318, 1
      %v4415 = vadd.f32 %v3963, %v4190
      %v4416 = vadd.f32 %v3964, %v4319
      %v4417 = vadd.f32 %v3965, %v4198
      %v4418 = vadd.f32 %v3966, %v4320
      %v4419 = vadd.f32 %v3967, %v4197
      %v4420 = vadd.f32 %v3968, %v4321
      %v4421 = vadd.f32 %v3969, %v4199
      %v4422 = vadd.f32 %v3970, %v4322
      %v4423 = vadd.f32 %v3971, %v4207
      %v4424 = vadd.f32 %v3972, %v4323
      %v4425 = vadd.f32 %v3973, %v4215
      %v4426 = vadd.f32 %v3974, %v4324
      %v4427 = vadd.f32 %v3975, %v4214
      %v4428 = vadd.f32 %v3976, %v4325
      %v4429 = vadd.f32 %v3977, %v4216
      %v4430 = vadd.f32 %v3978, %v4326
      %v4431 = vadd.f32 %v3979, %v4224
      %v4432 = vadd.f32 %v3980, %v4327
      %v4433 = vadd.f32 %v3981, %v4232
      %v4434 = vadd.f32 %v3982, %v4328
      %v4435 = vadd.f32 %v3983, %v4231
      %v4436 = vadd.f32 %v3984, %v4329
      %v4437 = vadd.f32 %v3985, %v4233
      %v4438 = vadd.f32 %v3986, %v4330
      %v4439 = vadd.f32 %v3987, %v4241
      %v4440 = vadd.f32 %v3988, %v4331
      %v4441 = vadd.f32 %v3989, %v4249
      %v4442 = vadd.f32 %v3990, %v4332
      %v4443 = vadd.f32 %v3991, %v4248
      %v4444 = vadd.f32 %v3992, %v4333
      %v4445 = vadd.f32 %v3993, %v4250
      %v4446 = vadd.f32 %v3994, %v4334
      %v4447 = vadd.f32 %v3995, %v4258
      %v4448 = vadd.f32 %v3996, %v4335
      %v4449 = vadd.f32 %v3997, %v4266
      %v4450 = vadd.f32 %v3998, %v4336
      %v4451 = vadd.f32 %v3999, %v4265
      %v4452 = vadd.f32 %v4000, %v4337
      %v4453 = vadd.f32 %v4001, %v4267
      %v4454 = vadd.f32 %v4002, %v4338
      %v4455 = vadd.f32 %v4003, %v4275
      %v4456 = vadd.f32 %v4004, %v4339
      %v4457 = vadd.f32 %v4005, %v4283
      %v4458 = vadd.f32 %v4006, %v4340
      %v4459 = vadd.f32 %v4007, %v4282
      %v4460 = vadd.f32 %v4008, %v4341
      %v4461 = vadd.f32 %v4009, %v4284
      %v4462 = vadd.f32 %v4010, %v4342
      %v4463 = vadd.f32 %v4011, %v4292
      %v4464 = vadd.f32 %v4012, %v4343
      %v4465 = vadd.f32 %v4013, %v4300
      %v4466 = vadd.f32 %v4014, %v4344
      %v4467 = vadd.f32 %v4015, %v4299
      %v4468 = vadd.f32 %v4016, %v4345
      %v4469 = vadd.f32 %v4017, %v4301
      %v4470 = vadd.f32 %v4018, %v4346
      %v4471 = vadd.f32 %v4019, %v4309
      %v4472 = vadd.f32 %v4020, %v4347
      %v4473 = vadd.f32 %v4021, %v4317
      %v4474 = vadd.f32 %v4022, %v4348
      %v4475 = vadd.f32 %v4023, %v4316
      %v4476 = vadd.f32 %v4024, %v4349
      %v4477 = vadd.f32 %v4025, %v4318
      %v4478 = vadd.f32 %v4026, %v4350
      %v4479 = vmul.f32 %v4415, 0.70710677
      %v4480 = vmul.f32 %v4416, 0.70710677
      %v4481 = vmul.f32 %v4417, 0.70710677
      %v4482 = vmul.f32 %v4418, 0.70710677
      %v4483 = vmul.f32 %v4419, 0.70710677
      %v4484 = vmul.f32 %v4420, 0.70710677
      %v4485 = vmul.f32 %v4421, 0.70710677
      %v4486 = vmul.f32 %v4422, 0.70710677
      %v4487 = vmul.f32 %v4423, 0.70710677
      %v4488 = vmul.f32 %v4424, 0.70710677
      %v4489 = vmul.f32 %v4425, 0.70710677
      %v4490 = vmul.f32 %v4426, 0.70710677
      %v4491 = vmul.f32 %v4427, 0.70710677
      %v4492 = vmul.f32 %v4428, 0.70710677
      %v4493 = vmul.f32 %v4429, 0.70710677
      %v4494 = vmul.f32 %v4430, 0.70710677
      %v4495 = vmul.f32 %v4431, 0.70710677
      %v4496 = vmul.f32 %v4432, 0.70710677
      %v4497 = vmul.f32 %v4433, 0.70710677
      %v4498 = vmul.f32 %v4434, 0.70710677
      %v4499 = vmul.f32 %v4435, 0.70710677
      %v4500 = vmul.f32 %v4436, 0.70710677
      %v4501 = vmul.f32 %v4437, 0.70710677
      %v4502 = vmul.f32 %v4438, 0.70710677
      %v4503 = vmul.f32 %v4439, 0.70710677
      %v4504 = vmul.f32 %v4440, 0.70710677
      %v4505 = vmul.f32 %v4441, 0.70710677
      %v4506 = vmul.f32 %v4442, 0.70710677
      %v4507 = vmul.f32 %v4443, 0.70710677
      %v4508 = vmul.f32 %v4444, 0.70710677
      %v4509 = vmul.f32 %v4445, 0.70710677
      %v4510 = vmul.f32 %v4446, 0.70710677
      %v4511 = vmul.f32 %v4447, 0.70710677
      %v4512 = vmul.f32 %v4448, 0.70710677
      %v4513 = vmul.f32 %v4449, 0.70710677
      %v4514 = vmul.f32 %v4450, 0.70710677
      %v4515 = vmul.f32 %v4451, 0.70710677
      %v4516 = vmul.f32 %v4452, 0.70710677
      %v4517 = vmul.f32 %v4453, 0.70710677
      %v4518 = vmul.f32 %v4454, 0.70710677
      %v4519 = vmul.f32 %v4455, 0.70710677
      %v4520 = vmul.f32 %v4456, 0.70710677
      %v4521 = vmul.f32 %v4457, 0.70710677
      %v4522 = vmul.f32 %v4458, 0.70710677
      %v4523 = vmul.f32 %v4459, 0.70710677
      %v4524 = vmul.f32 %v4460, 0.70710677
      %v4525 = vmul.f32 %v4461, 0.70710677
      %v4526 = vmul.f32 %v4462, 0.70710677
      %v4527 = vmul.f32 %v4463, 0.70710677
      %v4528 = vmul.f32 %v4464, 0.70710677
      %v4529 = vmul.f32 %v4465, 0.70710677
      %v4530 = vmul.f32 %v4466, 0.70710677
      %v4531 = vmul.f32 %v4467, 0.70710677
      %v4532 = vmul.f32 %v4468, 0.70710677
      %v4533 = vmul.f32 %v4469, 0.70710677
      %v4534 = vmul.f32 %v4470, 0.70710677
      %v4535 = vmul.f32 %v4471, 0.70710677
      %v4536 = vmul.f32 %v4472, 0.70710677
      %v4537 = vmul.f32 %v4473, 0.70710677
      %v4538 = vmul.f32 %v4474, 0.70710677
      %v4539 = vmul.f32 %v4475, 0.70710677
      %v4540 = vmul.f32 %v4476, 0.70710677
      %v4541 = vmul.f32 %v4477, 0.70710677
      %v4542 = vmul.f32 %v4478, 0.70710677
      %v4607 = vlaneseq
      %v4608 = vshrl.u32 %v4607, 7
      %v4609 = vsub.s32 0, %v4608
      %v4610 = vrot.slane %v4479, %v4609
      %v4611 = vlaneseq
      %v4612 = vshrl.u32 %v4611, 7
      %v4613 = vsub.s32 0, %v4612
      %v4614 = vrot.slane %v4480, %v4613
      %v4615 = vlaneseq
      %v4616 = vshrl.u32 %v4615, 7
      %v4617 = vsub.s32 0, %v4616
      %v4618 = vrot.slane %v4481, %v4617
      %v4619 = vlaneseq
      %v4620 = vshrl.u32 %v4619, 7
      %v4621 = vsub.s32 0, %v4620
      %v4622 = vrot.slane %v4482, %v4621
      %v4623 = vlaneseq
      %v4624 = vshrl.u32 %v4623, 7
      %v4625 = vsub.s32 0, %v4624
      %v4626 = vrot.slane %v4483, %v4625
      %v4627 = vlaneseq
      %v4628 = vshrl.u32 %v4627, 7
      %v4629 = vsub.s32 0, %v4628
      %v4630 = vrot.slane %v4484, %v4629
      %v4631 = vlaneseq
      %v4632 = vshrl.u32 %v4631, 7
      %v4633 = vsub.s32 0, %v4632
      %v4634 = vrot.slane %v4485, %v4633
      %v4635 = vlaneseq
      %v4636 = vshrl.u32 %v4635, 7
      %v4637 = vsub.s32 0, %v4636
      %v4638 = vrot.slane %v4486, %v4637
      %v4639 = vlaneseq
      %v4640 = vshrl.u32 %v4639, 7
      %v4641 = vsub.s32 0, %v4640
      %v4642 = vrot.slane %v4487, %v4641
      %v4643 = vlaneseq
      %v4644 = vshrl.u32 %v4643, 7
      %v4645 = vsub.s32 0, %v4644
      %v4646 = vrot.slane %v4488, %v4645
      %v4647 = vlaneseq
      %v4648 = vshrl.u32 %v4647, 7
      %v4649 = vsub.s32 0, %v4648
      %v4650 = vrot.slane %v4489, %v4649
      %v4651 = vlaneseq
      %v4652 = vshrl.u32 %v4651, 7
      %v4653 = vsub.s32 0, %v4652
      %v4654 = vrot.slane %v4490, %v4653
      %v4655 = vlaneseq
      %v4656 = vshrl.u32 %v4655, 7
      %v4657 = vsub.s32 0, %v4656
      %v4658 = vrot.slane %v4491, %v4657
      %v4659 = vlaneseq
      %v4660 = vshrl.u32 %v4659, 7
      %v4661 = vsub.s32 0, %v4660
      %v4662 = vrot.slane %v4492, %v4661
      %v4663 = vlaneseq
      %v4664 = vshrl.u32 %v4663, 7
      %v4665 = vsub.s32 0, %v4664
      %v4666 = vrot.slane %v4493, %v4665
      %v4667 = vlaneseq
      %v4668 = vshrl.u32 %v4667, 7
      %v4669 = vsub.s32 0, %v4668
      %v4670 = vrot.slane %v4494, %v4669
      %v4671 = vlaneseq
      %v4672 = vshrl.u32 %v4671, 7
      %v4673 = vsub.s32 0, %v4672
      %v4674 = vrot.slane %v4495, %v4673
      %v4675 = vlaneseq
      %v4676 = vshrl.u32 %v4675, 7
      %v4677 = vsub.s32 0, %v4676
      %v4678 = vrot.slane %v4496, %v4677
      %v4679 = vlaneseq
      %v4680 = vshrl.u32 %v4679, 7
      %v4681 = vsub.s32 0, %v4680
      %v4682 = vrot.slane %v4497, %v4681
      %v4683 = vlaneseq
      %v4684 = vshrl.u32 %v4683, 7
      %v4685 = vsub.s32 0, %v4684
      %v4686 = vrot.slane %v4498, %v4685
      %v4687 = vlaneseq
      %v4688 = vshrl.u32 %v4687, 7
      %v4689 = vsub.s32 0, %v4688
      %v4690 = vrot.slane %v4499, %v4689
      %v4691 = vlaneseq
      %v4692 = vshrl.u32 %v4691, 7
      %v4693 = vsub.s32 0, %v4692
      %v4694 = vrot.slane %v4500, %v4693
      %v4695 = vlaneseq
      %v4696 = vshrl.u32 %v4695, 7
      %v4697 = vsub.s32 0, %v4696
      %v4698 = vrot.slane %v4501, %v4697
      %v4699 = vlaneseq
      %v4700 = vshrl.u32 %v4699, 7
      %v4701 = vsub.s32 0, %v4700
      %v4702 = vrot.slane %v4502, %v4701
      %v4703 = vlaneseq
      %v4704 = vshrl.u32 %v4703, 7
      %v4705 = vsub.s32 0, %v4704
      %v4706 = vrot.slane %v4503, %v4705
      %v4707 = vlaneseq
      %v4708 = vshrl.u32 %v4707, 7
      %v4709 = vsub.s32 0, %v4708
      %v4710 = vrot.slane %v4504, %v4709
      %v4711 = vlaneseq
      %v4712 = vshrl.u32 %v4711, 7
      %v4713 = vsub.s32 0, %v4712
      %v4714 = vrot.slane %v4505, %v4713
      %v4715 = vlaneseq
      %v4716 = vshrl.u32 %v4715, 7
      %v4717 = vsub.s32 0, %v4716
      %v4718 = vrot.slane %v4506, %v4717
      %v4719 = vlaneseq
      %v4720 = vshrl.u32 %v4719, 7
      %v4721 = vsub.s32 0, %v4720
      %v4722 = vrot.slane %v4507, %v4721
      %v4723 = vlaneseq
      %v4724 = vshrl.u32 %v4723, 7
      %v4725 = vsub.s32 0, %v4724
      %v4726 = vrot.slane %v4508, %v4725
      %v4727 = vlaneseq
      %v4728 = vshrl.u32 %v4727, 7
      %v4729 = vsub.s32 0, %v4728
      %v4730 = vrot.slane %v4509, %v4729
      %v4731 = vlaneseq
      %v4732 = vshrl.u32 %v4731, 7
      %v4733 = vsub.s32 0, %v4732
      %v4734 = vrot.slane %v4510, %v4733
      %v4735 = vlaneseq
      %v4736 = vshrl.u32 %v4735, 7
      %v4737 = vsub.s32 0, %v4736
      %v4738 = vrot.slane %v4511, %v4737
      %v4739 = vlaneseq
      %v4740 = vshrl.u32 %v4739, 7
      %v4741 = vsub.s32 0, %v4740
      %v4742 = vrot.slane %v4512, %v4741
      %v4743 = vlaneseq
      %v4744 = vshrl.u32 %v4743, 7
      %v4745 = vsub.s32 0, %v4744
      %v4746 = vrot.slane %v4513, %v4745
      %v4747 = vlaneseq
      %v4748 = vshrl.u32 %v4747, 7
      %v4749 = vsub.s32 0, %v4748
      %v4750 = vrot.slane %v4514, %v4749
      %v4751 = vlaneseq
      %v4752 = vshrl.u32 %v4751, 7
      %v4753 = vsub.s32 0, %v4752
      %v4754 = vrot.slane %v4515, %v4753
      %v4755 = vlaneseq
      %v4756 = vshrl.u32 %v4755, 7
      %v4757 = vsub.s32 0, %v4756
      %v4758 = vrot.slane %v4516, %v4757
      %v4759 = vlaneseq
      %v4760 = vshrl.u32 %v4759, 7
      %v4761 = vsub.s32 0, %v4760
      %v4762 = vrot.slane %v4517, %v4761
      %v4763 = vlaneseq
      %v4764 = vshrl.u32 %v4763, 7
      %v4765 = vsub.s32 0, %v4764
      %v4766 = vrot.slane %v4518, %v4765
      %v4767 = vlaneseq
      %v4768 = vshrl.u32 %v4767, 7
      %v4769 = vsub.s32 0, %v4768
      %v4770 = vrot.slane %v4519, %v4769
      %v4771 = vlaneseq
      %v4772 = vshrl.u32 %v4771, 7
      %v4773 = vsub.s32 0, %v4772
      %v4774 = vrot.slane %v4520, %v4773
      %v4775 = vlaneseq
      %v4776 = vshrl.u32 %v4775, 7
      %v4777 = vsub.s32 0, %v4776
      %v4778 = vrot.slane %v4521, %v4777
      %v4779 = vlaneseq
      %v4780 = vshrl.u32 %v4779, 7
      %v4781 = vsub.s32 0, %v4780
      %v4782 = vrot.slane %v4522, %v4781
      %v4783 = vlaneseq
      %v4784 = vshrl.u32 %v4783, 7
      %v4785 = vsub.s32 0, %v4784
      %v4786 = vrot.slane %v4523, %v4785
      %v4787 = vlaneseq
      %v4788 = vshrl.u32 %v4787, 7
      %v4789 = vsub.s32 0, %v4788
      %v4790 = vrot.slane %v4524, %v4789
      %v4791 = vlaneseq
      %v4792 = vshrl.u32 %v4791, 7
      %v4793 = vsub.s32 0, %v4792
      %v4794 = vrot.slane %v4525, %v4793
      %v4795 = vlaneseq
      %v4796 = vshrl.u32 %v4795, 7
      %v4797 = vsub.s32 0, %v4796
      %v4798 = vrot.slane %v4526, %v4797
      %v4799 = vlaneseq
      %v4800 = vshrl.u32 %v4799, 7
      %v4801 = vsub.s32 0, %v4800
      %v4802 = vrot.slane %v4527, %v4801
      %v4803 = vlaneseq
      %v4804 = vshrl.u32 %v4803, 7
      %v4805 = vsub.s32 0, %v4804
      %v4806 = vrot.slane %v4528, %v4805
      %v4807 = vlaneseq
      %v4808 = vshrl.u32 %v4807, 7
      %v4809 = vsub.s32 0, %v4808
      %v4810 = vrot.slane %v4529, %v4809
      %v4811 = vlaneseq
      %v4812 = vshrl.u32 %v4811, 7
      %v4813 = vsub.s32 0, %v4812
      %v4814 = vrot.slane %v4530, %v4813
      %v4815 = vlaneseq
      %v4816 = vshrl.u32 %v4815, 7
      %v4817 = vsub.s32 0, %v4816
      %v4818 = vrot.slane %v4531, %v4817
      %v4819 = vlaneseq
      %v4820 = vshrl.u32 %v4819, 7
      %v4821 = vsub.s32 0, %v4820
      %v4822 = vrot.slane %v4532, %v4821
      %v4823 = vlaneseq
      %v4824 = vshrl.u32 %v4823, 7
      %v4825 = vsub.s32 0, %v4824
      %v4826 = vrot.slane %v4533, %v4825
      %v4827 = vlaneseq
      %v4828 = vshrl.u32 %v4827, 7
      %v4829 = vsub.s32 0, %v4828
      %v4830 = vrot.slane %v4534, %v4829
      %v4831 = vlaneseq
      %v4832 = vshrl.u32 %v4831, 7
      %v4833 = vsub.s32 0, %v4832
      %v4834 = vrot.slane %v4535, %v4833
      %v4835 = vlaneseq
      %v4836 = vshrl.u32 %v4835, 7
      %v4837 = vsub.s32 0, %v4836
      %v4838 = vrot.slane %v4536, %v4837
      %v4839 = vlaneseq
      %v4840 = vshrl.u32 %v4839, 7
      %v4841 = vsub.s32 0, %v4840
      %v4842 = vrot.slane %v4537, %v4841
      %v4843 = vlaneseq
      %v4844 = vshrl.u32 %v4843, 7
      %v4845 = vsub.s32 0, %v4844
      %v4846 = vrot.slane %v4538, %v4845
      %v4847 = vlaneseq
      %v4848 = vshrl.u32 %v4847, 7
      %v4849 = vsub.s32 0, %v4848
      %v4850 = vrot.slane %v4539, %v4849
      %v4851 = vlaneseq
      %v4852 = vshrl.u32 %v4851, 7
      %v4853 = vsub.s32 0, %v4852
      %v4854 = vrot.slane %v4540, %v4853
      %v4855 = vlaneseq
      %v4856 = vshrl.u32 %v4855, 7
      %v4857 = vsub.s32 0, %v4856
      %v4858 = vrot.slane %v4541, %v4857
      %v4859 = vlaneseq
      %v4860 = vshrl.u32 %v4859, 7
      %v4861 = vsub.s32 0, %v4860
      %v4862 = vrot.slane %v4542, %v4861
      %vm4863 = vcmask 1041409
      %v4864 = vsel %vm4863, %v4614, %v4610
      %vm4865 = vcmask 1042434
      %v4866 = vsel %vm4865, %v4618, %v4864
      %vm4867 = vcmask 1043459
      %v4868 = vsel %vm4867, %v4622, %v4866
      %vm4869 = vcmask 1044484
      %v4870 = vsel %vm4869, %v4626, %v4868
      %vm4871 = vcmask 1045509
      %v4872 = vsel %vm4871, %v4630, %v4870
      %vm4873 = vcmask 1046534
      %v4874 = vsel %vm4873, %v4634, %v4872
      %vm4875 = vcmask 1047559
      %v4876 = vsel %vm4875, %v4638, %v4874
      %v4877 = vsel %vm4863, %v4646, %v4642
      %v4878 = vsel %vm4865, %v4650, %v4877
      %v4879 = vsel %vm4867, %v4654, %v4878
      %v4880 = vsel %vm4869, %v4658, %v4879
      %v4881 = vsel %vm4871, %v4662, %v4880
      %v4882 = vsel %vm4873, %v4666, %v4881
      %v4883 = vsel %vm4875, %v4670, %v4882
      %v4884 = vsel %vm4863, %v4678, %v4674
      %v4885 = vsel %vm4865, %v4682, %v4884
      %v4886 = vsel %vm4867, %v4686, %v4885
      %v4887 = vsel %vm4869, %v4690, %v4886
      %v4888 = vsel %vm4871, %v4694, %v4887
      %v4889 = vsel %vm4873, %v4698, %v4888
      %v4890 = vsel %vm4875, %v4702, %v4889
      %v4891 = vsel %vm4863, %v4710, %v4706
      %v4892 = vsel %vm4865, %v4714, %v4891
      %v4893 = vsel %vm4867, %v4718, %v4892
      %v4894 = vsel %vm4869, %v4722, %v4893
      %v4895 = vsel %vm4871, %v4726, %v4894
      %v4896 = vsel %vm4873, %v4730, %v4895
      %v4897 = vsel %vm4875, %v4734, %v4896
      %v4898 = vsel %vm4863, %v4742, %v4738
      %v4899 = vsel %vm4865, %v4746, %v4898
      %v4900 = vsel %vm4867, %v4750, %v4899
      %v4901 = vsel %vm4869, %v4754, %v4900
      %v4902 = vsel %vm4871, %v4758, %v4901
      %v4903 = vsel %vm4873, %v4762, %v4902
      %v4904 = vsel %vm4875, %v4766, %v4903
      %v4905 = vsel %vm4863, %v4774, %v4770
      %v4906 = vsel %vm4865, %v4778, %v4905
      %v4907 = vsel %vm4867, %v4782, %v4906
      %v4908 = vsel %vm4869, %v4786, %v4907
      %v4909 = vsel %vm4871, %v4790, %v4908
      %v4910 = vsel %vm4873, %v4794, %v4909
      %v4911 = vsel %vm4875, %v4798, %v4910
      %v4912 = vsel %vm4863, %v4806, %v4802
      %v4913 = vsel %vm4865, %v4810, %v4912
      %v4914 = vsel %vm4867, %v4814, %v4913
      %v4915 = vsel %vm4869, %v4818, %v4914
      %v4916 = vsel %vm4871, %v4822, %v4915
      %v4917 = vsel %vm4873, %v4826, %v4916
      %v4918 = vsel %vm4875, %v4830, %v4917
      %v4919 = vsel %vm4863, %v4838, %v4834
      %v4920 = vsel %vm4865, %v4842, %v4919
      %v4921 = vsel %vm4867, %v4846, %v4920
      %v4922 = vsel %vm4869, %v4850, %v4921
      %v4923 = vsel %vm4871, %v4854, %v4922
      %v4924 = vsel %vm4873, %v4858, %v4923
      %v4925 = vsel %vm4875, %v4862, %v4924
      %4934 = vst.msk [vmem:[%s271] sm:$0xff] %vm1794, %v4876
      %4935 = vst.msk [vmem:[%s271 + $0x8] sm:$0xff] %vm1794, %v4883
      %4936 = vst.msk [vmem:[%s271 + $0x10] sm:$0xff] %vm1794, %v4890
      %4937 = vst.msk [vmem:[%s271 + $0x18] sm:$0xff] %vm1794, %v4897
      %4938 = vst.msk [vmem:[%s271 + $0x20] sm:$0xff] %vm1794, %v4904
      %4939 = vst.msk [vmem:[%s271 + $0x28] sm:$0xff] %vm1794, %v4911
      %4940 = vst.msk [vmem:[%s271 + $0x30] sm:$0xff] %vm1794, %v4918
      %4941 = vst.msk [vmem:[%s271 + $0x38] sm:$0xff] %vm1794, %v4925
      %p4942 = scmp.lt.s32.totalorder %s17, 1
      %s4943 = scalar_select %p4942, %s17, 1
      %s4944 = smul.addr %s4943, 8
      %s4945 = smul.addr %s4944, 8
      %s4946 = scalar_lea.vmem %s6, %s4945
      // Predicated region
      $region45: #{discriminator_forward.6} parent=43 // pred_check
        %p4947 = pneg %p171
      $region46: #{discriminator_forward.6} parent=43 // pred_check_branch
        %4949 = sbr.rel (%p4947) target = $region48
      $region47: #{discriminator_forward.6} parent=43 // pred_region
        _
      $region48: #{discriminator_forward.6} parent=43 // pred_fallthru
        _
    $region44: #{discriminator_forward.6} parent=5 // pred_fallthru
      _
    %p4950 = scmp.le.s32.totalorder 2, %s12
    // Predicated region
    $region49: #{discriminator_forward.6} parent=5 // pred_check
      %p4951 = pneg %p4950
    $region50: #{discriminator_forward.6} parent=5 // pred_check_branch
      %4953 = sbr.rel (%p4951) target = $region52
    $region51: #{discriminator_forward.6} parent=5 // pred_region
      %s4954 = ssub.s32 %s12, 2
      // Predicated region
      $region53: #{discriminator_forward.6} parent=51 // pred_check
        %p4955 = pneg %p177
      $region54: #{discriminator_forward.6} parent=51 // pred_check_branch
        %4957 = sbr.rel (%p4955) target = $region56
      $region55: #{discriminator_forward.6} parent=51 // pred_region
        %p4958 = scmp.lt.s32.totalorder %s18, 1
        %s4959 = scalar_select %p4958, %s18, 1
        %s4960 = smul.addr %s4959, 8
        %s4961 = smul.addr %s4960, 8
        %s4962 = scalar_lea.vmem %s6, %s4961
      $region56: #{discriminator_forward.6} parent=51 // pred_fallthru
        _
    $region52: #{discriminator_forward.6} parent=5 // pred_fallthru
      _
  $region6: #{discriminator_forward.6} parent=0 // loop_footer
    %s16 = sadd.s32 1, %s12
  $region7: #{discriminator_forward.6} parent=0 // loop_footer_branch
    %11 = sbr.rel target = $region3
  $region8: #{discriminator_forward.6} parent=0 // loop_exit
    _

// kernel: discriminator_forward.9
$region0: #{discriminator_forward.9}
  #allocation0 [shape = 'u32[]', space=smem, size = 0x4, offset = 0x4, fixed_abs, tag = 'smem constant byte address 0x4 - core index']
  #allocation1 [shape = 'u32[144,128]{1,0:T(1,128)}', space=vmem, size = 0x12000, scoped, tag = 'internal scratch']
  %s0 = inlined_call_operand.vmem [shape: f32[2,40,9], index: 0, kind: input, shape index: {}]
  %s1 = inlined_call_operand.vmem [shape: f32[81,9], index: 1, kind: input, shape index: {}]
  %s2 = inlined_call_operand.vmem [shape: f32[1,9], index: 2, kind: input, shape index: {}]
  %s3 = inlined_call_operand.vmem [shape: f32[2,16,9], index: 3, kind: output, shape index: {}]
  %s4 = sld [smem:[#allocation0]]
  $region45: #{discriminator_forward.9} parent=0
    _
  %s6 = ssub.s32 1, %s4
  %s7 = scalar_select 0, %s6, %s4
  loop: start=0, step=1, limit=4
  $region2: #{discriminator_forward.9} parent=0 // loop_pre_header
    _
  $region3: #{discriminator_forward.9} parent=0 // loop_header
    %s9 = sphi 0, %s13
    %p10 = scmp.ge.s32.totalorder %s9, 4
    %s19 = sphi 0, %s21
    %s22 = sphi 0, %s19
    %s23 = sphi 0, %s22
    %s39 = sphi 0, %s23
    %s43 = sphi 0, %s43
    %s45 = sphi 0, %s43
    %s46 = sphi 0, %s45
    %s60 = sphi 0, %s46
    %s64 = sphi 0, %s64
    %s66 = sphi 0, %s64
    %s67 = sphi 0, %s66
    %s81 = sphi 0, %s67
    %s87 = sphi 0, %s89
    %s90 = sphi 0, %s87
    %s91 = sphi 0, %s90
    %s107 = sphi 0, %s91
  $region4: #{discriminator_forward.9} parent=0 // loop_header_branch
    %12 = sbr.rel (%p10) target = $region8
  $region5: #{discriminator_forward.9} parent=0 // loop_body
    %s14 = ssub.s32 %s9, 1
    %s15 = ssub.s32 %s9, 2
    %s16 = sadd.s32 %s9, 1
    %s17 = ssub.s32 %s9, %s16
    %p18 = scmp.eq.s32.totalorder %s17, 0
    %s20 = sadd.s32 %s19, 1
    %s21 = scalar_select %p18, %s19, %s20
    %p24 = pneg %p18
    %p25 = scmp.eq.s32.totalorder %s9, 1
    %p26 = por %p24, %p25
    %p27 = scmp.ne.s32.totalorder %s19, %s22
    %p28 = scmp.eq.s32.totalorder %s9, 0
    %p29 = por %p27, %p28
    %p30 = scmp.ne.s32.totalorder %s19, %s22
    %p31 = scmp.eq.s32.totalorder %s14, 1
    %p32 = por %p30, %p31
    %p33 = scmp.ne.s32.totalorder %s22, %s23
    %p34 = scmp.eq.s32.totalorder %s14, 0
    %p35 = por %p33, %p34
    %p36 = scmp.ne.s32.totalorder %s22, %s23
    %p37 = scmp.eq.s32.totalorder %s15, 1
    %p38 = por %p36, %p37
    %p40 = scmp.ne.s32.totalorder %s23, %s39
    %p41 = scmp.eq.s32.totalorder %s15, 0
    %p42 = por %p40, %p41
    %s44 = sadd.s32 %s43, 1
    %p47 = scmp.eq.s32.totalorder %s9, 1
    %p48 = scmp.ne.s32.totalorder %s43, %s45
    %p49 = scmp.eq.s32.totalorder %s9, 0
    %p50 = por %p48, %p49
    %p51 = scmp.ne.s32.totalorder %s43, %s45
    %p52 = scmp.eq.s32.totalorder %s14, 1
    %p53 = por %p51, %p52
    %p54 = scmp.ne.s32.totalorder %s45, %s46
    %p55 = scmp.eq.s32.totalorder %s14, 0
    %p56 = por %p54, %p55
    %p57 = scmp.ne.s32.totalorder %s45, %s46
    %p58 = scmp.eq.s32.totalorder %s15, 1
    %p59 = por %p57, %p58
    %p61 = scmp.ne.s32.totalorder %s46, %s60
    %p62 = scmp.eq.s32.totalorder %s15, 0
    %p63 = por %p61, %p62
    %s65 = sadd.s32 %s64, 1
    %p68 = scmp.eq.s32.totalorder %s9, 1
    %p69 = scmp.ne.s32.totalorder %s64, %s66
    %p70 = scmp.eq.s32.totalorder %s9, 0
    %p71 = por %p69, %p70
    %p72 = scmp.ne.s32.totalorder %s64, %s66
    %p73 = scmp.eq.s32.totalorder %s14, 1
    %p74 = por %p72, %p73
    %p75 = scmp.ne.s32.totalorder %s66, %s67
    %p76 = scmp.eq.s32.totalorder %s14, 0
    %p77 = por %p75, %p76
    %p78 = scmp.ne.s32.totalorder %s66, %s67
    %p79 = scmp.eq.s32.totalorder %s15, 1
    %p80 = por %p78, %p79
    %p82 = scmp.ne.s32.totalorder %s67, %s81
    %p83 = scmp.eq.s32.totalorder %s15, 0
    %p84 = por %p82, %p83
    %s85 = ssub.s32 %s9, %s16
    %p86 = scmp.eq.s32.totalorder %s85, 0
    %s88 = sadd.s32 %s87, 1
    %s89 = scalar_select %p86, %s87, %s88
    %p92 = pneg %p86
    %p93 = scmp.eq.s32.totalorder %s9, 1
    %p94 = por %p92, %p93
    %p95 = scmp.ne.s32.totalorder %s87, %s90
    %p96 = scmp.eq.s32.totalorder %s9, 0
    %p97 = por %p95, %p96
    %p98 = scmp.ne.s32.totalorder %s87, %s90
    %p99 = scmp.eq.s32.totalorder %s14, 1
    %p100 = por %p98, %p99
    %p101 = scmp.ne.s32.totalorder %s90, %s91
    %p102 = scmp.eq.s32.totalorder %s14, 0
    %p103 = por %p101, %p102
    %p104 = scmp.ne.s32.totalorder %s90, %s91
    %p105 = scmp.eq.s32.totalorder %s15, 1
    %p106 = por %p104, %p105
    %p108 = scmp.ne.s32.totalorder %s91, %s107
    %p109 = scmp.eq.s32.totalorder %s15, 0
    %p110 = por %p108, %p109
    %p111 = scmp.le.s32.totalorder 1, %s9
    %p112 = scmp.lt.s32.totalorder %s9, 3
    %p113 = pnand %p111, %p112
    %p114 = pneg %p113
    // Predicated region
    $region9: #{discriminator_forward.9} parent=5 // pred_check
      _
    $region10: #{discriminator_forward.9} parent=5 // pred_check_branch
      %116 = sbr.rel (%p113) target = $region12
    $region11: #{discriminator_forward.9} parent=5 // pred_region
      %s117 = ssub.s32 %s9, 1
      // Predicated region
      $region13: #{discriminator_forward.9} parent=11 // pred_check
        %p118 = pneg %p56
      $region14: #{discriminator_forward.9} parent=11 // pred_check_branch
        %120 = sbr.rel (%p118) target = $region16
      $region15: #{discriminator_forward.9} parent=11 // pred_region
        _
      $region16: #{discriminator_forward.9} parent=11 // pred_fallthru
        _
      // Predicated region
      $region17: #{discriminator_forward.9} parent=11 // pred_check
        %p121 = pneg %p77
      $region18: #{discriminator_forward.9} parent=11 // pred_check_branch
        %123 = sbr.rel (%p121) target = $region20
      $region19: #{discriminator_forward.9} parent=11 // pred_region
        _
      $region20: #{discriminator_forward.9} parent=11 // pred_fallthru
        _
    $region12: #{discriminator_forward.9} parent=5 // pred_fallthru
      _
    %p124 = scmp.lt.s32.totalorder %s9, 2
    // Predicated region
    $region21: #{discriminator_forward.9} parent=5 // pred_check
      %p125 = pneg %p124
    $region22: #{discriminator_forward.9} parent=5 // pred_check_branch
      %127 = sbr.rel (%p125) target = $region24
    $region23: #{discriminator_forward.9} parent=5 // pred_region
      // Predicated region
      $region25: #{discriminator_forward.9} parent=23 // pred_check
        %p128 = pneg %p29
      $region26: #{discriminator_forward.9} parent=23 // pred_check_branch
        %130 = sbr.rel (%p128) target = $region28
      $region27: #{discriminator_forward.9} parent=23 // pred_region
        %p131 = scmp.lt.s32.totalorder %s9, 1
        %s132 = scalar_select %p131, %s9, 1
        %s133 = smul.addr %s132, 5
        %s134 = smul.addr %s133, 8
        %s135 = scalar_lea.vmem %s0, %s134
      $region28: #{discriminator_forward.9} parent=23 // pred_fallthru
        _
    $region24: #{discriminator_forward.9} parent=5 // pred_fallthru
      _
    %p136 = scmp.le.s32.totalorder 1, %s9
    %p137 = scmp.lt.s32.totalorder %s9, 3
    %p138 = pnand %p136, %p137
    %p139 = pneg %p138
    // Predicated region
    $region29: #{discriminator_forward.9} parent=5 // pred_check
      _
    $region30: #{discriminator_forward.9} parent=5 // pred_check_branch
      %141 = sbr.rel (%p138) target = $region32
    $region31: #{discriminator_forward.9} parent=5 // pred_region
      %s142 = ssub.s32 %s9, 1
      %p143 = scmp.lt.s32.totalorder %s14, 1
      %s144 = scalar_select %p143, %s14, 1
      %s145 = smul.addr %s144, 5
      %s146 = smul.addr %s145, 8
      %s147 = scalar_lea.vmem %s0, %s146
      %p148 = pneg %p35
      %p149 = pneg %p32
      %p150 = pneg %p56
      %p151 = pneg %p53
      %p152 = pneg %p77
      %p153 = pneg %p74
      %p154 = pneg %p103
      %p155 = pneg %p100
      %p156 = scmp.lt.s32.totalorder %s14, 1
      %s157 = scalar_select %p156, %s14, 1
      %s158 = smul.addr %s157, 2
      %s159 = smul.addr %s158, 8
      %s160 = scalar_lea.vmem %s3, %s159
      %p161 = scmp.lt.s32.totalorder %s14, 1
      %s162 = scalar_select %p161, %s14, 1
      %s163 = smul.addr %s162, 5
      %s164 = smul.addr %s163, 8
      %s165 = scalar_lea.vmem %s0, %s164
      %p166 = scmp.lt.s32.totalorder %s14, 1
      %s167 = scalar_select %p166, %s14, 1
      %s168 = smul.addr %s167, 2
      %s169 = smul.addr %s168, 8
      %s170 = scalar_lea.vmem %s3, %s169
      %v171 = vld [vmem:[%s165] sm:$0xff]
      %v172 = vld [vmem:[%s165 + $0x8] sm:$0xff]
      %v173 = vld [vmem:[%s165 + $0x1] sm:$0xff]
      %v174 = vld [vmem:[%s165 + $0x9] sm:$0xff]
      %v175 = vld [vmem:[%s165 + $0x2] sm:$0xff]
      %v176 = vld [vmem:[%s165 + $0xa] sm:$0xff]
      %v177 = vld [vmem:[%s165 + $0x10] sm:$0xff]
      %v178 = vld [vmem:[%s165 + $0x11] sm:$0xff]
      %v179 = vld [vmem:[%s165 + $0x12] sm:$0xff]
      %v180 = vld [vmem:[%s165 + $0x18] sm:$0xff]
      %v181 = vld [vmem:[%s165 + $0x19] sm:$0xff]
      %v182 = vld [vmem:[%s165 + $0x1a] sm:$0xff]
      %185 = vrot.lane.b32.xlu0 %v173, 9
      %v186 = vpop.permute.xlu0 %185
      %187 = vrot.lane.b32.xlu0 %v174, 9
      %v188 = vpop.permute.xlu0 %187
      %193 = vrot.lane.b32.xlu0 %v175, 18
      %v194 = vpop.permute.xlu0 %193
      %195 = vrot.lane.b32.xlu0 %v176, 18
      %v196 = vpop.permute.xlu0 %195
      %201 = vrot.lane.b32.xlu0 %v172, 27
      %v202 = vpop.permute.xlu0 %201
      %203 = vrot.lane.b32.xlu0 %v177, 27
      %v204 = vpop.permute.xlu0 %203
      %208 = vrot.lane.b32.xlu0 %v174, 36
      %v209 = vpop.permute.xlu0 %208
      %210 = vrot.lane.b32.xlu0 %v178, 36
      %v211 = vpop.permute.xlu0 %210
      %215 = vrot.lane.b32.xlu0 %v176, 45
      %v216 = vpop.permute.xlu0 %215
      %217 = vrot.lane.b32.xlu0 %v179, 45
      %v218 = vpop.permute.xlu0 %217
      %222 = vrot.lane.b32.xlu0 %v177, 54
      %v223 = vpop.permute.xlu0 %222
      %224 = vrot.lane.b32.xlu0 %v180, 54
      %v225 = vpop.permute.xlu0 %224
      %229 = vrot.lane.b32.xlu0 %v178, 63
      %v230 = vpop.permute.xlu0 %229
      %231 = vrot.lane.b32.xlu0 %v181, 63
      %v232 = vpop.permute.xlu0 %231
      %236 = vrot.lane.b32.xlu0 %v179, 72
      %v237 = vpop.permute.xlu0 %236
      %238 = vrot.lane.b32.xlu0 %v182, 72
      %v239 = vpop.permute.xlu0 %238
      %vm242 = vcmask 72704
      %v243 = vsel %vm242, %v171, %v186
      %v244 = vsel %vm242, %v172, %v188
      %vm245 = vcmask 146432
      %v246 = vsel %vm245, %v243, %v194
      %v247 = vsel %vm245, %v244, %v196
      %vm248 = vcmask 220160
      %v249 = vsel %vm248, %v246, %v202
      %v250 = vsel %vm248, %v247, %v204
      %vm251 = vcmask 293888
      %v252 = vsel %vm251, %v249, %v209
      %v253 = vsel %vm251, %v250, %v211
      %vm254 = vcmask 367616
      %v255 = vsel %vm254, %v252, %v216
      %v256 = vsel %vm254, %v253, %v218
      %vm257 = vcmask 441344
      %v258 = vsel %vm257, %v255, %v223
      %v259 = vsel %vm257, %v256, %v225
      %vm260 = vcmask 515072
      %v261 = vsel %vm260, %v258, %v230
      %v262 = vsel %vm260, %v259, %v232
      %vm263 = vcmask 588800
      %v264 = vsel %vm263, %v261, %v237
      %v265 = vsel %vm263, %v262, %v239
      %v266 = vld [vmem:[%s1] sm:$0xff]
      %v267 = vld [vmem:[%s1 + $0x8] sm:$0xff]
      %v268 = vld [vmem:[%s1 + $0x10] sm:$0xff]
      %v269 = vld [vmem:[%s1 + $0x18] sm:$0xff]
      %v270 = vld [vmem:[%s1 + $0x20] sm:$0xff]
      %v271 = vld [vmem:[%s1 + $0x28] sm:$0xff]
      %v272 = vld [vmem:[%s1 + $0x30] sm:$0xff]
      %v273 = vld [vmem:[%s1 + $0x38] sm:$0xff]
      %v274 = vld [vmem:[%s1 + $0x40] sm:$0xff]
      %v275 = vld [vmem:[%s1 + $0x48] sm:$0xff]
      %v276 = vld [vmem:[%s1 + $0x50] sm:$0x1]
      %v277 = vld [vmem:[%s2] sm:$0x1]
      %v279 = vlaneseq
      %v280 = vshrl.u32 %v279, 7
      %v281 = vsub.s32 0, %v280
      %v282 = vrot.slane %v277, %v281
      %vm284 = vcmask 662528
      %v286 = vsel %vm284, %v264, 0
      %v289 = vsel %vm284, %v265, 0
      %vm291 = vcmask 1040384
      %v293 = vsel %vm291, %v276, 0
      %295 = vmatprep.subr.mxu0 0.0
      %296 = vmatpush1.msra.mxu0 %v266
      %297 = vmatprep.subr.mxu0 0.0
      %298 = vmatpush1.msra.mxu0 %v267
      %299 = vmatprep.subr.mxu0 0.0
      %300 = vmatpush1.msra.mxu0 %v268
      %301 = vmatprep.subr.mxu0 0.0
      %302 = vmatpush1.msra.mxu0 %v269
      %303 = vmatprep.subr.mxu0 0.0
      %304 = vmatpush1.msra.mxu0 %v270
      %305 = vmatprep.subr.mxu0 0.0
      %306 = vmatpush1.msra.mxu0 %v271
      %307 = vmatprep.subr.mxu0 0.0
      %308 = vmatpush1.msra.mxu0 %v272
      %309 = vmatprep.subr.mxu0 0.0
      %310 = vmatpush1.msra.mxu0 %v273
      %311 = vmatprep.subr.mxu0 0.0
      %312 = vmatpush1.msra.mxu0 %v274
      %313 = vmatprep.subr.mxu0 0.0
      %314 = vmatpush1.msra.mxu0 %v275
      %315 = vmatprep.subr.mxu0 0.0
      %316 = vmatpush1.msra.mxu0 %v293
      %317 = vmatprep.subr.mxu0 0.0
      %318 = vmatpush1.msra.mxu0 0.0
      %319 = vmatprep.subr.mxu0 0.0
      %320 = vmatpush1.msra.mxu0 0.0
      %321 = vmatprep.subr.mxu0 0.0
      %322 = vmatpush1.msra.mxu0 0.0
      %323 = vmatprep.subr.mxu0 0.0
      %324 = vmatpush1.msra.mxu0 0.0
      %325 = vmatprep.subr.mxu0 0.0
      %326 = vmatpush1.msra.mxu0 0.0
      %327 = vmatprep.subr.mxu0 0.0
      %328 = vmatpush1.msra.mxu0 0.0
      %329 = vmatprep.subr.mxu0 0.0
      %330 = vmatpush1.msra.mxu0 0.0
      %331 = vmatprep.subr.mxu0 0.0
      %332 = vmatpush1.msra.mxu0 0.0
      %333 = vmatprep.subr.mxu0 0.0
      %334 = vmatpush1.msra.mxu0 0.0
      %335 = vmatprep.subr.mxu0 0.0
      %336 = vmatpush1.msra.mxu0 0.0
      %337 = vmatprep.subr.mxu0 0.0
      %338 = vmatpush1.msra.mxu0 0.0
      %339 = vmatprep.subr.mxu0 0.0
      %340 = vmatpush1.msra.mxu0 0.0
      %341 = vmatprep.subr.mxu0 0.0
      %342 = vmatpush1.msra.mxu0 0.0
      %343 = vmatprep.subr.mxu0 0.0
      %344 = vmatpush1.msra.mxu0 0.0
      %345 = vmatprep.subr.mxu0 0.0
      %346 = vmatpush1.msra.mxu0 0.0
      %347 = vmatprep.subr.mxu0 0.0
      %348 = vmatpush1.msra.mxu0 0.0
      %349 = vmatprep.subr.mxu0 0.0
      %350 = vmatpush1.msra.mxu0 0.0
      %351 = vmatprep.subr.mxu0 0.0
      %352 = vmatpush1.msra.mxu0 0.0
      %353 = vmatprep.subr.mxu0 0.0
      %354 = vmatpush1.msra.mxu0 0.0
      %355 = vmatprep.subr.mxu0 0.0
      %356 = vmatpush1.msra.mxu0 0.0
      %357 = vmatprep.subr.mxu0 0.0
      %358 = vmatpush1.msra.mxu0 0.0
      %359 = vmatprep.mubr.f32.mxu0 0.0
      %360 = vmatmul.mubr.f32.gmra.mrb[0].mxu0 %v286
      %v361 = vpop.f32.mrb[0].mxu0
      %v362 = vadd.f32 %v282, %v361
      %v363 = vpop.f32.mrb[0].mxu0
      %364 = vmatprep.mubr.f32.mxu0 0.0
      %365 = vmatmul.mubr.f32.gmra.mrb[0].mxu0 %v289
      %v366 = vpop.f32.mrb[0].mxu0
      %v367 = vadd.f32 %v282, %v366
      %v368 = vpop.f32.mrb[0].mxu0
      %369 = vdwg.mxu0
      %370 = vst.msk [vmem:[%s170] sm:$0xff] %vm242, %v362
      %371 = vst.msk [vmem:[%s170 + $0x8] sm:$0xff] %vm242, %v367
      %p372 = scmp.lt.s32.totalorder %s14, 1
      %s373 = scalar_select %p372, %s14, 1
      %s374 = smul.addr %s373, 2
      %s375 = smul.addr %s374, 8
      %s376 = scalar_lea.vmem %s3, %s375
      // Predicated region
      $region33: #{discriminator_forward.9} parent=31 // pred_check
        %p377 = pneg %p100
      $region34: #{discriminator_forward.9} parent=31 // pred_check_branch
        %379 = sbr.rel (%p377) target = $region36
      $region35: #{discriminator_forward.9} parent=31 // pred_region
        _
      $region36: #{discriminator_forward.9} parent=31 // pred_fallthru
        _
    $region32: #{discriminator_forward.9} parent=5 // pred_fallthru
      _
    %p380 = scmp.le.s32.totalorder 2, %s9
    // Predicated region
    $region37: #{discriminator_forward.9} parent=5 // pred_check
      %p381 = pneg %p380
    $region38: #{discriminator_forward.9} parent=5 // pred_check_branch
      %383 = sbr.rel (%p381) target = $region40
    $region39: #{discriminator_forward.9} parent=5 // pred_region
      %s384 = ssub.s32 %s9, 2
      // Predicated region
      $region41: #{discriminator_forward.9} parent=39 // pred_check
        %p385 = pneg %p106
      $region42: #{discriminator_forward.9} parent=39 // pred_check_branch
        %387 = sbr.rel (%p385) target = $region44
      $region43: #{discriminator_forward.9} parent=39 // pred_region
        %p388 = scmp.lt.s32.totalorder %s15, 1
        %s389 = scalar_select %p388, %s15, 1
        %s390 = smul.addr %s389, 2
        %s391 = smul.addr %s390, 8
        %s392 = scalar_lea.vmem %s3, %s391
      $region44: #{discriminator_forward.9} parent=39 // pred_fallthru
        _
    $region40: #{discriminator_forward.9} parent=5 // pred_fallthru
      _
  $region6: #{discriminator_forward.9} parent=0 // loop_footer
    %s13 = sadd.s32 1, %s9
  $region7: #{discriminator_forward.9} parent=0 // loop_footer_branch
    %8 = sbr.rel target = $region3
  $region8: #{discriminator_forward.9} parent=0 // loop_exit
    _

</llo_original>
